<compile_context>
chip_gen: v7x
topology: tpu7x:2x2x1
jax: 0.10.0
libtpu: 0.0.40
codegen_flags: <defaults>
</compile_context>

<pallas_src>
import functools

import jax
import jax.numpy as jnp
from jax.experimental import pallas as pl
from jax.experimental.pallas import tpu as pltpu

EPS = 1e-5


# ------------------------- in-kernel helper math ---------------------------

def _in_rows(x):
    """InstanceNorm2d (affine=False): normalize each row over the lane axis."""
    mean = jnp.mean(x, axis=-1, keepdims=True)
    xc = x - mean
    var = jnp.mean(xc * xc, axis=-1, keepdims=True)
    return xc * jax.lax.rsqrt(var + EPS)


def _hardswish(x):
    return x * jnp.clip(x + 3.0, 0.0, 6.0) * (1.0 / 6.0)


def _dwconv3x3_from_pad(pad_ref, w_ref, mask_ref, H, W):
    """3x3 / stride-1 / pad-1 depthwise conv from a row-padded flat buffer.

    pad_ref : (C, (H+2)*W + 2) VMEM scratch holding
              [0 | zero-row | rows 0..H-1 | zero-row | 0] flattened.
    w_ref   : (9, C, 1) per-channel taps, t = kh*3 + kw.
    mask_ref: (2, H*W) column-validity masks (row 0: kw==0, row 1: kw==2).
    """
    HW = H * W
    C = pad_ref.shape[0]
    acc = jnp.zeros((C, HW), jnp.float32)
    for kh in range(3):                      # static unroll over kernel taps
        for kw in range(3):
            off = kh * W + kw
            tap = pad_ref[:, off:off + HW]
            if kw == 0:
                tap = tap * mask_ref[0:1, :]
            elif kw == 2:
                tap = tap * mask_ref[1:2, :]
            acc = acc + tap * w_ref[kh * 3 + kw]
    return acc


# ----------------------------- Pallas kernels ------------------------------

def _norm_qkv_kernel(x_ref, w_ref, xn_ref, qkv_ref):
    """IN(x) and merged q/k0/v0 1x1 projections (each followed by IN)."""
    xn = _in_rows(x_ref[0])                                    # (dim, HW)
    xn_ref[0] = xn
    y = jnp.dot(w_ref[...], xn, preferred_element_type=jnp.float32)
    qkv_ref[0] = _in_rows(y)                                   # (2*ed+edv, HW)


def _downsample_kv_kernel(taps_ref, dsw_ref, wkv_ref, kv_ref):
    """Strided depthwise conv (from pre-sliced taps) + IN + merged k/v + IN."""
    T = taps_ref.shape[1]
    C = taps_ref.shape[2]
    L = taps_ref.shape[3]
    acc = jnp.zeros((C, L), jnp.float32)
    for t in range(T):                       # static unroll over kernel taps
        acc = acc + taps_ref[0, t] * dsw_ref[t]
    xd = _in_rows(acc)
    y = jnp.dot(wkv_ref[...], xd, preferred_element_type=jnp.float32)
    kv_ref[0] = _in_rows(y)                                    # (ed+edv, L)


def _attn_tail_kernel(q_ref, k_ref, v_ref, v0_ref, mask_ref, dww_ref, dwb_ref,
                      pw_ref, pb_ref, xres_ref, o_ref, pad_ref, *,
                      scale, H, W):
    """Attention + v_conv + attn_norm + hardswish + proj + residual."""
    HW = H * W
    nh = q_ref.shape[1]

    # --- multi-head attention, all heads in one grid step; output (edv, HW)
    outs = []
    for h in range(nh):
        qh = q_ref[0, h] * scale                               # (HW, hd)
        s = jnp.dot(qh, k_ref[0, h], preferred_element_type=jnp.float32)
        s = s - jnp.max(s, axis=-1, keepdims=True)
        p = jnp.exp(s)
        p = p * pl.reciprocal(jnp.sum(p, axis=-1, keepdims=True), approx=True)
        # o_h = v_h @ p^T -> (hdv, HW): spatial stays on lanes (lane-dense out)
        outs.append(jax.lax.dot_general(
            v_ref[0, h], p, (((1,), (1,)), ((), ())),
            preferred_element_type=jnp.float32))
    o = jnp.concatenate(outs, axis=0)                          # (edv, HW)

    # --- v_conv branch: hardswish -> depthwise 3x3 (pad 1) + bias
    hs = _hardswish(v0_ref[0])                                 # (edv, HW)
    pad_ref[...] = jnp.zeros_like(pad_ref)
    pad_ref[:, W + 1:W + 1 + HW] = hs
    vc = _dwconv3x3_from_pad(pad_ref, dww_ref, mask_ref, H, W) + dwb_ref[...]

    # --- attn_norm -> hardswish -> proj (+bias) -> + BlockMix residual
    y = _hardswish(_in_rows(o + vc))
    out = jnp.dot(pw_ref[...], y, preferred_element_type=jnp.float32)
    o_ref[0] = out + pb_ref[...] + xres_ref[0]


def _mlp_kernel(x_ref, w1_ref, b1_ref, dww_ref, dwb_ref, mask_ref,
                w2_ref, b2_ref, o_ref, pad_ref, *, H, W):
    """IN -> fc1 -> IN -> depthwise 3x3 -> ReLU6 -> fc2 -> + residual."""
    HW = H * W
    x = x_ref[0]                                               # (Cin, HW)
    h1 = jnp.dot(w1_ref[...], _in_rows(x),
                 preferred_element_type=jnp.float32) + b1_ref[...]
    h1 = _in_rows(h1)
    pad_ref[...] = jnp.zeros_like(pad_ref)
    pad_ref[:, W + 1:W + 1 + HW] = h1
    h2 = _dwconv3x3_from_pad(pad_ref, dww_ref, mask_ref, H, W) + dwb_ref[...]
    h2 = jnp.clip(h2, 0.0, 6.0)                                # ReLU6
    out = jnp.dot(w2_ref[...], h2, preferred_element_type=jnp.float32)
    o_ref[0] = out + b2_ref[...] + x                           # residual folded


# ------------------------------ call wrappers -------------------------------

def _parallel():
    return pltpu.CompilerParams(dimension_semantics=("parallel",))


def norm_qkv(xf, w):
    B, C, L = xf.shape
    Cout = w.shape[0]
    return pl.pallas_call(
        _norm_qkv_kernel,
        grid=(B,),
        in_specs=[pl.BlockSpec((1, C, L), lambda b: (b, 0, 0)),
                  pl.BlockSpec((Cout, C), lambda b: (0, 0))],
        out_specs=(pl.BlockSpec((1, C, L), lambda b: (b, 0, 0)),
                   pl.BlockSpec((1, Cout, L), lambda b: (b, 0, 0))),
        out_shape=(jax.ShapeDtypeStruct((B, C, L), jnp.float32),
                   jax.ShapeDtypeStruct((B, Cout, L), jnp.float32)),
        compiler_params=_parallel(),
    )(xf, w)


def downsample_kv(taps, dsw, wkv):
    B, T, C, L = taps.shape
    Cout = wkv.shape[0]
    return pl.pallas_call(
        _downsample_kv_kernel,
        grid=(B,),
        in_specs=[pl.BlockSpec((1, T, C, L), lambda b: (b, 0, 0, 0)),
                  pl.BlockSpec((T, C, 1), lambda b: (0, 0, 0)),
                  pl.BlockSpec((Cout, C), lambda b: (0, 0))],
        out_specs=pl.BlockSpec((1, Cout, L), lambda b: (b, 0, 0)),
        out_shape=jax.ShapeDtypeStruct((B, Cout, L), jnp.float32),
        compiler_params=_parallel(),
    )(taps, dsw, wkv)


def attn_tail(q, k, v, v0, masks, dww, dwb, pw, pb, xres, *, scale, H, W):
    B, nh, HW, hd = q.shape
    Lk = k.shape[-1]
    hdv = v.shape[2]
    edv = nh * hdv
    dim = pw.shape[0]
    P = (H + 2) * W + 2
    return pl.pallas_call(
        functools.partial(_attn_tail_kernel, scale=scale, H=H, W=W),
        grid=(B,),
        in_specs=[pl.BlockSpec((1, nh, HW, hd), lambda b: (b, 0, 0, 0)),
                  pl.BlockSpec((1, nh, hd, Lk), lambda b: (b, 0, 0, 0)),
                  pl.BlockSpec((1, nh, hdv, Lk), lambda b: (b, 0, 0, 0)),
                  pl.BlockSpec((1, edv, HW), lambda b: (b, 0, 0)),
                  pl.BlockSpec((2, HW), lambda b: (0, 0)),
                  pl.BlockSpec((9, edv, 1), lambda b: (0, 0, 0)),
                  pl.BlockSpec((edv, 1), lambda b: (0, 0)),
                  pl.BlockSpec((dim, edv), lambda b: (0, 0)),
                  pl.BlockSpec((dim, 1), lambda b: (0, 0)),
                  pl.BlockSpec((1, dim, HW), lambda b: (b, 0, 0))],
        out_specs=pl.BlockSpec((1, dim, HW), lambda b: (b, 0, 0)),
        out_shape=jax.ShapeDtypeStruct((B, dim, HW), jnp.float32),
        scratch_shapes=[pltpu.VMEM((edv, P), jnp.float32)],
        compiler_params=_parallel(),
    )(q, k, v, v0, masks, dww, dwb, pw, pb, xres)


def mlp_fused(xf, w1, b1, dww, dwb, masks, w2, b2, *, H, W):
    B, C, HW = xf.shape
    hidden = w1.shape[0]
    P = (H + 2) * W + 2
    return pl.pallas_call(
        functools.partial(_mlp_kernel, H=H, W=W),
        grid=(B,),
        in_specs=[pl.BlockSpec((1, C, HW), lambda b: (b, 0, 0)),
                  pl.BlockSpec((hidden, C), lambda b: (0, 0)),
                  pl.BlockSpec((hidden, 1), lambda b: (0, 0)),
                  pl.BlockSpec((9, hidden, 1), lambda b: (0, 0, 0)),
                  pl.BlockSpec((hidden, 1), lambda b: (0, 0)),
                  pl.BlockSpec((2, HW), lambda b: (0, 0)),
                  pl.BlockSpec((C, hidden), lambda b: (0, 0)),
                  pl.BlockSpec((C, 1), lambda b: (0, 0))],
        out_specs=pl.BlockSpec((1, C, HW), lambda b: (b, 0, 0)),
        out_shape=jax.ShapeDtypeStruct((B, C, HW), jnp.float32),
        scratch_shapes=[pltpu.VMEM((hidden, P), jnp.float32)],
        compiler_params=_parallel(),
    )(xf, w1, b1, dww, dwb, masks, w2, b2)


# ------------------------------ host-side glue ------------------------------

def _col_masks(H, W):
    col = jnp.arange(H * W, dtype=jnp.int32) % W
    m_left = (col != 0).astype(jnp.float32)        # tap reads column w-1
    m_right = (col != W - 1).astype(jnp.float32)   # tap reads column w+1
    return jnp.stack([m_left, m_right], axis=0)    # (2, H*W)


def _strided_taps(x, k, stride, pad):
    """im2col phases for a strided depthwise conv (taps are downsampled size).

    x: (B, C, H, W) -> (B, k*k, C, Hout*Wout), tap order t = kh*k + kw.
    """
    # TODO(synk): generate these in-kernel (strided DMA / gather) for large
    #             resolutions instead of materializing k*k downsampled copies.
    B, C, H, W = x.shape
    Hout = (H + 2 * pad - k) // stride + 1
    Wout = (W + 2 * pad - k) // stride + 1
    xp = jnp.pad(x, ((0, 0), (0, 0), (pad, pad), (pad, pad)))
    taps = [xp[:, :, kh:kh + stride * Hout:stride, kw:kw + stride * Wout:stride]
            for kh in range(k) for kw in range(k)]
    return jnp.stack(taps, axis=1).reshape(B, k * k, C, Hout * Wout)


def attention_forward(x, p, cfg):
    """x + AttentionLocationCSwinMultiScale2SeparateConvNonShare(x)."""
    B, dim, H, W = x.shape
    HW = H * W
    nh, hd, hdv = cfg['num_heads'], cfg['head_dim'], cfg['head_dim_v']
    ed, edv = nh * hd, nh * hdv
    scale = float(hd) ** -0.5

    xf = x.reshape(B, dim, HW)

    # stage 1: IN(x) + merged q/k0/v0 projections (each followed by IN)
    w_qkv0 = jnp.concatenate([p['q_w'], p['k0_w'], p['v0_w']], axis=0)
    xn, qkv0 = norm_qkv(xf, w_qkv0)
    q = qkv0[:, :ed]
    k0 = qkv0[:, ed:2 * ed]
    v0 = qkv0[:, 2 * ed:]

    # stage 2: strided depthwise downsamples + merged k/v projections
    xn4 = xn.reshape(B, dim, H, W)
    kv1 = downsample_kv(_strided_taps(xn4, 3, 2, 1), p['ds1_w'],
                        jnp.concatenate([p['k1_w'], p['v1_w']], axis=0))
    kv2 = downsample_kv(_strided_taps(xn4, 5, 3, 2), p['ds2_w'],
                        jnp.concatenate([p['k2_w'], p['v2_w']], axis=0))

    # multi-scale K / V (head split is a free reshape; concats are tiny)
    k_cat = jnp.concatenate([k0.reshape(B, nh, hd, HW),
                             kv1[:, :ed].reshape(B, nh, hd, -1),
                             kv2[:, :ed].reshape(B, nh, hd, -1)], axis=-1)
    v_cat = jnp.concatenate([v0.reshape(B, nh, hdv, HW),
                             kv1[:, ed:].reshape(B, nh, hdv, -1),
                             kv2[:, ed:].reshape(B, nh, hdv, -1)], axis=-1)
    q_t = q.reshape(B, nh, hd, HW).transpose(0, 1, 3, 2)       # (B, nh, HW, hd)

    # stage 3: attention + v_conv + attn_norm + hardswish + proj + residual
    out = attn_tail(q_t, k_cat, v_cat, v0, _col_masks(H, W),
                    p['vconv_w'], p['vconv_b'], p['proj_w'], p['proj_b'], xf,
                    scale=scale, H=H, W=W)
    return out.reshape(B, dim, H, W)


def mlp_channel_forward(x, p):
    """x + MlpChannel(x)."""
    B, C, H, W = x.shape
    y = mlp_fused(x.reshape(B, C, H * W), p['fc1_w'], p['fc1_b'],
                  p['dw_w'], p['dw_b'], _col_masks(H, W),
                  p['fc2_w'], p['fc2_b'], H=H, W=W)
    return y.reshape(B, C, H, W)


def mlp_split_forward(x, plist, channels):
    """x + MlpSplit(x); the per-slice residual equals the full residual."""
    B, C, H, W = x.shape
    masks = _col_masks(H, W)
    outs, start = [], 0
    for ci, pi in zip(channels, plist):
        xs = x[:, start:start + ci].reshape(B, ci, H * W)
        outs.append(mlp_fused(xs, pi['fc1_w'], pi['fc1_b'], pi['dw_w'],
                              pi['dw_b'], masks, pi['fc2_w'], pi['fc2_b'],
                              H=H, W=W))
        start += ci
    return jnp.concatenate(outs, axis=1).reshape(B, C, H, W)


def block_mix_forward(x, params, cfg):
    # drop_path prob = 0.0 -> DropPath is identity; residual adds are folded
    # into the fused kernels' epilogues.
    x = attention_forward(x, params['attn1'], cfg)
    x = mlp_channel_forward(x, params['mlp1'])
    x = attention_forward(x, params['attn2'], cfg)
    x = mlp_split_forward(x, params['mlp2'], cfg['channels'])
    return x


# ----------------------------- parameter setup -----------------------------

def make_params(key, cfg):
    state = [key]

    def nxt(shape, scale=0.2):
        state[0], sub = jax.random.split(state[0])
        return (scale * jax.random.normal(sub, shape)).astype(jnp.float32)

    dim, ed, edv = cfg['dim'], cfg['embed_dim'], cfg['embed_dim_v']

    def attn_params():
        p = {'q_w': nxt((ed, dim)),             # 1x1 convs stored (Cout, Cin)
             'ds1_w': nxt((9, dim, 1)),         # depthwise taps (kh*k+kw, C, 1)
             'ds2_w': nxt((25, dim, 1)),
             'vconv_w': nxt((9, edv, 1)),
             'vconv_b': nxt((edv, 1)),
             'proj_w': nxt((dim, edv)),
             'proj_b': nxt((dim, 1))}
        for i in range(3):
            p[f'k{i}_w'] = nxt((ed, dim))
            p[f'v{i}_w'] = nxt((edv, dim))
        return p

    def mlp_params(ch, hidden):
        return {'fc1_w': nxt((hidden, ch)), 'fc1_b': nxt((hidden, 1)),
                'dw_w': nxt((9, hidden, 1)), 'dw_b': nxt((hidden, 1)),
                'fc2_w': nxt((ch, hidden)), 'fc2_b': nxt((ch, 1))}

    return {
        'attn1': attn_params(),
        'attn2': attn_params(),
        'mlp1': mlp_params(dim, int(dim * cfg['mlp_ratio'])),
        'mlp2': [mlp_params(c, int(c * cfg['mlp_ratio']))
                 for c in cfg['channels']],
    }


# --------------------------------- main -------------------------------------

if __name__ == "__main__":
    cfg = dict(channels=(2, 2, 4), num_heads=2, head_dim=4,
               head_attn_ratio=2.0, mlp_ratio=4.0)
    cfg['dim'] = sum(cfg['channels'])
    cfg['head_dim_v'] = int(cfg['head_attn_ratio'] * cfg['head_dim'])
    cfg['embed_dim'] = cfg['num_heads'] * cfg['head_dim']
    cfg['embed_dim_v'] = cfg['num_heads'] * cfg['head_dim_v']

    key = jax.random.PRNGKey(0)
    kx, kp = jax.random.split(key)
    B, H, W = 2, 12, 12
    x = jax.random.normal(kx, (B, cfg['dim'], H, W), dtype=jnp.float32)
    params = make_params(kp, cfg)

    fwd = jax.jit(functools.partial(block_mix_forward, cfg=cfg))
    y = fwd(x, params)
    jax.block_until_ready(y)
    assert y.shape == x.shape
    assert bool(jnp.all(jnp.isfinite(y)))
    print("KERNEL_OK")
</pallas_src>

<mosaic_0001>
module attributes {stable_mosaic.version = 11 : i64} {
  func.func @_norm_qkv_kernel(%arg0: i32, %arg1: memref<1x8x144xf32, #tpu.memory_space<vmem>>, %arg2: memref<32x8xf32, #tpu.memory_space<vmem>>, %arg3: memref<1x8x144xf32, #tpu.memory_space<vmem>>, %arg4: memref<1x32x144xf32, #tpu.memory_space<vmem>>) attributes {dimension_semantics = [#tpu.dimension_semantics<parallel>], iteration_bounds = array<i64: 2>, scalar_prefetch = 0 : i64, scratch_operands = 0 : i64, tpu.core_type = #tpu.core_type<tc>, window_params = [{transform_indices = @transform_0, window_bounds = array<i64: 1, 8, 144>}, {pipeline_mode = #tpu.pipeline_mode<synchronous>, transform_indices = @transform_1, window_bounds = array<i64: 32, 8>}, {transform_indices = @transform_2, window_bounds = array<i64: 1, 8, 144>}, {transform_indices = @transform_3, window_bounds = array<i64: 1, 32, 144>}]} {
    %c0 = arith.constant 0 : index
    %c0_0 = arith.constant 0 : index
    %c0_1 = arith.constant 0 : index
    %0 = vector.load %arg1[%c0, %c0_0, %c0_1] : memref<1x8x144xf32, #tpu.memory_space<vmem>>, vector<1x8x144xf32>
    %1 = vector.shape_cast %0 : vector<1x8x144xf32> to vector<8x144xf32>
    %cst = arith.constant dense<0.000000e+00> : vector<8xf32>
    %2 = vector.multi_reduction <add>, %1, %cst [1] : vector<8x144xf32> to vector<8xf32>
    %3 = vector.shape_cast %2 : vector<8xf32> to vector<8x1xf32>
    %cst_2 = arith.constant 1.440000e+02 : f32
    %4 = vector.broadcast %cst_2 : f32 to vector<8x1xf32>
    %5 = arith.divf %3, %4 : vector<8x1xf32>
    %6 = vector.broadcast %5 : vector<8x1xf32> to vector<8x144xf32>
    %7 = arith.subf %1, %6 : vector<8x144xf32>
    %8 = arith.mulf %7, %7 : vector<8x144xf32>
    %cst_3 = arith.constant dense<0.000000e+00> : vector<8xf32>
    %9 = vector.multi_reduction <add>, %8, %cst_3 [1] : vector<8x144xf32> to vector<8xf32>
    %10 = vector.shape_cast %9 : vector<8xf32> to vector<8x1xf32>
    %cst_4 = arith.constant 1.440000e+02 : f32
    %11 = vector.broadcast %cst_4 : f32 to vector<8x1xf32>
    %12 = arith.divf %10, %11 : vector<8x1xf32>
    %cst_5 = arith.constant 9.99999974E-6 : f32
    %13 = vector.broadcast %cst_5 : f32 to vector<8x1xf32>
    %14 = arith.addf %12, %13 : vector<8x1xf32>
    %15 = math.rsqrt %14 : vector<8x1xf32>
    %16 = vector.broadcast %15 : vector<8x1xf32> to vector<8x144xf32>
    %17 = arith.mulf %7, %16 : vector<8x144xf32>
    %c0_6 = arith.constant 0 : index
    %c0_7 = arith.constant 0 : index
    %c0_8 = arith.constant 0 : index
    %18 = vector.load %arg3[%c0_6, %c0_7, %c0_8] : memref<1x8x144xf32, #tpu.memory_space<vmem>>, vector<1x8x144xf32>
    %19 = vector.shape_cast %18 : vector<1x8x144xf32> to vector<8x144xf32>
    %20 = vector.shape_cast %17 : vector<8x144xf32> to vector<1x8x144xf32>
    tpu.vector_store %arg3[%c0_6, %c0_7, %c0_8], %20 {strides = array<i32>} : memref<1x8x144xf32, #tpu.memory_space<vmem>>, vector<1x8x144xf32>,
    %c0_9 = arith.constant 0 : index
    %c0_10 = arith.constant 0 : index
    %21 = vector.load %arg2[%c0_9, %c0_10] : memref<32x8xf32, #tpu.memory_space<vmem>>, vector<32x8xf32>
    %cst_11 = arith.constant dense<0.000000e+00> : vector<32x144xf32>
    %22 = tpu.matmul %21, %17, %cst_11 {dimension_numbers = #tpu.dot_dimension_numbers<[1], [0], [0], [1], [0, 0, 1, 1], [], []>} : vector<32x8xf32>, vector<8x144xf32>, vector<32x144xf32> -> vector<32x144xf32>
    %cst_12 = arith.constant dense<0.000000e+00> : vector<32xf32>
    %23 = vector.multi_reduction <add>, %22, %cst_12 [1] : vector<32x144xf32> to vector<32xf32>
    %24 = vector.shape_cast %23 : vector<32xf32> to vector<32x1xf32>
    %cst_13 = arith.constant 1.440000e+02 : f32
    %25 = vector.broadcast %cst_13 : f32 to vector<32x1xf32>
    %26 = arith.divf %24, %25 : vector<32x1xf32>
    %27 = vector.broadcast %26 : vector<32x1xf32> to vector<32x144xf32>
    %28 = arith.subf %22, %27 : vector<32x144xf32>
    %29 = arith.mulf %28, %28 : vector<32x144xf32>
    %cst_14 = arith.constant dense<0.000000e+00> : vector<32xf32>
    %30 = vector.multi_reduction <add>, %29, %cst_14 [1] : vector<32x144xf32> to vector<32xf32>
    %31 = vector.shape_cast %30 : vector<32xf32> to vector<32x1xf32>
    %cst_15 = arith.constant 1.440000e+02 : f32
    %32 = vector.broadcast %cst_15 : f32 to vector<32x1xf32>
    %33 = arith.divf %31, %32 : vector<32x1xf32>
    %cst_16 = arith.constant 9.99999974E-6 : f32
    %34 = vector.broadcast %cst_16 : f32 to vector<32x1xf32>
    %35 = arith.addf %33, %34 : vector<32x1xf32>
    %36 = math.rsqrt %35 : vector<32x1xf32>
    %37 = vector.broadcast %36 : vector<32x1xf32> to vector<32x144xf32>
    %38 = arith.mulf %28, %37 : vector<32x144xf32>
    %c0_17 = arith.constant 0 : index
    %c0_18 = arith.constant 0 : index
    %c0_19 = arith.constant 0 : index
    %39 = vector.load %arg4[%c0_17, %c0_18, %c0_19] : memref<1x32x144xf32, #tpu.memory_space<vmem>>, vector<1x32x144xf32>
    %40 = vector.shape_cast %39 : vector<1x32x144xf32> to vector<32x144xf32>
    %41 = vector.shape_cast %38 : vector<32x144xf32> to vector<1x32x144xf32>
    tpu.vector_store %arg4[%c0_17, %c0_18, %c0_19], %41 {strides = array<i32>} : memref<1x32x144xf32, #tpu.memory_space<vmem>>, vector<1x32x144xf32>,
    return
  }
  func.func @transform_0(%arg0: i32) -> (i32, i32, i32) {
    %c0_i32 = arith.constant 0 : i32
    %c0_i32_0 = arith.constant 0 : i32
    %c0_i32_1 = arith.constant 0 : i32
    return %arg0, %c0_i32, %c0_i32_0 : i32, i32, i32
  }
  func.func @transform_1(%arg0: i32) -> (i32, i32) {
    %c0_i32 = arith.constant 0 : i32
    %c0_i32_0 = arith.constant 0 : i32
    %c0_i32_1 = arith.constant 0 : i32
    return %c0_i32, %c0_i32_0 : i32, i32
  }
  func.func @transform_2(%arg0: i32) -> (i32, i32, i32) {
    %c0_i32 = arith.constant 0 : i32
    %c0_i32_0 = arith.constant 0 : i32
    %c0_i32_1 = arith.constant 0 : i32
    return %arg0, %c0_i32, %c0_i32_0 : i32, i32, i32
  }
  func.func @transform_3(%arg0: i32) -> (i32, i32, i32) {
    %c0_i32 = arith.constant 0 : i32
    %c0_i32_0 = arith.constant 0 : i32
    %c0_i32_1 = arith.constant 0 : i32
    return %arg0, %c0_i32, %c0_i32_0 : i32, i32, i32
  }
}

module attributes {stable_mosaic.version = 11 : i64} {
  func.func @_downsample_kv_kernel(%arg0: i32, %arg1: memref<1x25x8x16xf32, #tpu.memory_space<vmem>>, %arg2: memref<25x8x1xf32, #tpu.memory_space<vmem>>, %arg3: memref<24x8xf32, #tpu.memory_space<vmem>>, %arg4: memref<1x24x16xf32, #tpu.memory_space<vmem>>) attributes {dimension_semantics = [#tpu.dimension_semantics<parallel>], iteration_bounds = array<i64: 2>, scalar_prefetch = 0 : i64, scratch_operands = 0 : i64, tpu.core_type = #tpu.core_type<tc>, window_params = [{transform_indices = @transform_0, window_bounds = array<i64: 1, 25, 8, 16>}, {pipeline_mode = #tpu.pipeline_mode<synchronous>, transform_indices = @transform_1, window_bounds = array<i64: 25, 8, 1>}, {pipeline_mode = #tpu.pipeline_mode<synchronous>, transform_indices = @transform_2, window_bounds = array<i64: 24, 8>}, {transform_indices = @transform_3, window_bounds = array<i64: 1, 24, 16>}]} {
    %cst = arith.constant 0.000000e+00 : f32
    %0 = vector.broadcast %cst : f32 to vector<8x16xf32>
    %c0 = arith.constant 0 : index
    %c0_0 = arith.constant 0 : index
    %c0_1 = arith.constant 0 : index
    %c0_2 = arith.constant 0 : index
    %1 = vector.load %arg1[%c0, %c0_0, %c0_1, %c0_2] : memref<1x25x8x16xf32, #tpu.memory_space<vmem>>, vector<1x1x8x16xf32>
    %2 = vector.shape_cast %1 : vector<1x1x8x16xf32> to vector<8x16xf32>
    %c0_3 = arith.constant 0 : index
    %c0_4 = arith.constant 0 : index
    %c0_5 = arith.constant 0 : index
    %3 = vector.load %arg2[%c0_3, %c0_4, %c0_5] : memref<25x8x1xf32, #tpu.memory_space<vmem>>, vector<1x8x1xf32>
    %4 = vector.shape_cast %3 : vector<1x8x1xf32> to vector<8x1xf32>
    %5 = vector.broadcast %4 : vector<8x1xf32> to vector<8x16xf32>
    %6 = arith.mulf %2, %5 : vector<8x16xf32>
    %7 = arith.addf %0, %6 : vector<8x16xf32>
    %c0_6 = arith.constant 0 : index
    %c1 = arith.constant 1 : index
    %c0_7 = arith.constant 0 : index
    %c0_8 = arith.constant 0 : index
    %8 = vector.load %arg1[%c0_6, %c1, %c0_7, %c0_8] : memref<1x25x8x16xf32, #tpu.memory_space<vmem>>, vector<1x1x8x16xf32>
    %9 = vector.shape_cast %8 : vector<1x1x8x16xf32> to vector<8x16xf32>
    %c1_9 = arith.constant 1 : index
    %c0_10 = arith.constant 0 : index
    %c0_11 = arith.constant 0 : index
    %10 = vector.load %arg2[%c1_9, %c0_10, %c0_11] : memref<25x8x1xf32, #tpu.memory_space<vmem>>, vector<1x8x1xf32>
    %11 = vector.shape_cast %10 : vector<1x8x1xf32> to vector<8x1xf32>
    %12 = vector.broadcast %11 : vector<8x1xf32> to vector<8x16xf32>
    %13 = arith.mulf %9, %12 : vector<8x16xf32>
    %14 = arith.addf %7, %13 : vector<8x16xf32>
    %c0_12 = arith.constant 0 : index
    %c2 = arith.constant 2 : index
    %c0_13 = arith.constant 0 : index
    %c0_14 = arith.constant 0 : index
    %15 = vector.load %arg1[%c0_12, %c2, %c0_13, %c0_14] : memref<1x25x8x16xf32, #tpu.memory_space<vmem>>, vector<1x1x8x16xf32>
    %16 = vector.shape_cast %15 : vector<1x1x8x16xf32> to vector<8x16xf32>
    %c2_15 = arith.constant 2 : index
    %c0_16 = arith.constant 0 : index
    %c0_17 = arith.constant 0 : index
    %17 = vector.load %arg2[%c2_15, %c0_16, %c0_17] : memref<25x8x1xf32, #tpu.memory_space<vmem>>, vector<1x8x1xf32>
    %18 = vector.shape_cast %17 : vector<1x8x1xf32> to vector<8x1xf32>
    %19 = vector.broadcast %18 : vector<8x1xf32> to vector<8x16xf32>
    %20 = arith.mulf %16, %19 : vector<8x16xf32>
    %21 = arith.addf %14, %20 : vector<8x16xf32>
    %c0_18 = arith.constant 0 : index
    %c3 = arith.constant 3 : index
    %c0_19 = arith.constant 0 : index
    %c0_20 = arith.constant 0 : index
    %22 = vector.load %arg1[%c0_18, %c3, %c0_19, %c0_20] : memref<1x25x8x16xf32, #tpu.memory_space<vmem>>, vector<1x1x8x16xf32>
    %23 = vector.shape_cast %22 : vector<1x1x8x16xf32> to vector<8x16xf32>
    %c3_21 = arith.constant 3 : index
    %c0_22 = arith.constant 0 : index
    %c0_23 = arith.constant 0 : index
    %24 = vector.load %arg2[%c3_21, %c0_22, %c0_23] : memref<25x8x1xf32, #tpu.memory_space<vmem>>, vector<1x8x1xf32>
    %25 = vector.shape_cast %24 : vector<1x8x1xf32> to vector<8x1xf32>
    %26 = vector.broadcast %25 : vector<8x1xf32> to vector<8x16xf32>
    %27 = arith.mulf %23, %26 : vector<8x16xf32>
    %28 = arith.addf %21, %27 : vector<8x16xf32>
    %c0_24 = arith.constant 0 : index
    %c4 = arith.constant 4 : index
    %c0_25 = arith.constant 0 : index
    %c0_26 = arith.constant 0 : index
    %29 = vector.load %arg1[%c0_24, %c4, %c0_25, %c0_26] : memref<1x25x8x16xf32, #tpu.memory_space<vmem>>, vector<1x1x8x16xf32>
    %30 = vector.shape_cast %29 : vector<1x1x8x16xf32> to vector<8x16xf32>
    %c4_27 = arith.constant 4 : index
    %c0_28 = arith.constant 0 : index
    %c0_29 = arith.constant 0 : index
    %31 = vector.load %arg2[%c4_27, %c0_28, %c0_29] : memref<25x8x1xf32, #tpu.memory_space<vmem>>, vector<1x8x1xf32>
    %32 = vector.shape_cast %31 : vector<1x8x1xf32> to vector<8x1xf32>
    %33 = vector.broadcast %32 : vector<8x1xf32> to vector<8x16xf32>
    %34 = arith.mulf %30, %33 : vector<8x16xf32>
    %35 = arith.addf %28, %34 : vector<8x16xf32>
    %c0_30 = arith.constant 0 : index
    %c5 = arith.constant 5 : index
    %c0_31 = arith.constant 0 : index
    %c0_32 = arith.constant 0 : index
    %36 = vector.load %arg1[%c0_30, %c5, %c0_31, %c0_32] : memref<1x25x8x16xf32, #tpu.memory_space<vmem>>, vector<1x1x8x16xf32>
    %37 = vector.shape_cast %36 : vector<1x1x8x16xf32> to vector<8x16xf32>
    %c5_33 = arith.constant 5 : index
    %c0_34 = arith.constant 0 : index
    %c0_35 = arith.constant 0 : index
    %38 = vector.load %arg2[%c5_33, %c0_34, %c0_35] : memref<25x8x1xf32, #tpu.memory_space<vmem>>, vector<1x8x1xf32>
    %39 = vector.shape_cast %38 : vector<1x8x1xf32> to vector<8x1xf32>
    %40 = vector.broadcast %39 : vector<8x1xf32> to vector<8x16xf32>
    %41 = arith.mulf %37, %40 : vector<8x16xf32>
    %42 = arith.addf %35, %41 : vector<8x16xf32>
    %c0_36 = arith.constant 0 : index
    %c6 = arith.constant 6 : index
    %c0_37 = arith.constant 0 : index
    %c0_38 = arith.constant 0 : index
    %43 = vector.load %arg1[%c0_36, %c6, %c0_37, %c0_38] : memref<1x25x8x16xf32, #tpu.memory_space<vmem>>, vector<1x1x8x16xf32>
    %44 = vector.shape_cast %43 : vector<1x1x8x16xf32> to vector<8x16xf32>
    %c6_39 = arith.constant 6 : index
    %c0_40 = arith.constant 0 : index
    %c0_41 = arith.constant 0 : index
    %45 = vector.load %arg2[%c6_39, %c0_40, %c0_41] : memref<25x8x1xf32, #tpu.memory_space<vmem>>, vector<1x8x1xf32>
    %46 = vector.shape_cast %45 : vector<1x8x1xf32> to vector<8x1xf32>
    %47 = vector.broadcast %46 : vector<8x1xf32> to vector<8x16xf32>
    %48 = arith.mulf %44, %47 : vector<8x16xf32>
    %49 = arith.addf %42, %48 : vector<8x16xf32>
    %c0_42 = arith.constant 0 : index
    %c7 = arith.constant 7 : index
    %c0_43 = arith.constant 0 : index
    %c0_44 = arith.constant 0 : index
    %50 = vector.load %arg1[%c0_42, %c7, %c0_43, %c0_44] : memref<1x25x8x16xf32, #tpu.memory_space<vmem>>, vector<1x1x8x16xf32>
    %51 = vector.shape_cast %50 : vector<1x1x8x16xf32> to vector<8x16xf32>
    %c7_45 = arith.constant 7 : index
    %c0_46 = arith.constant 0 : index
    %c0_47 = arith.constant 0 : index
    %52 = vector.load %arg2[%c7_45, %c0_46, %c0_47] : memref<25x8x1xf32, #tpu.memory_space<vmem>>, vector<1x8x1xf32>
    %53 = vector.shape_cast %52 : vector<1x8x1xf32> to vector<8x1xf32>
    %54 = vector.broadcast %53 : vector<8x1xf32> to vector<8x16xf32>
    %55 = arith.mulf %51, %54 : vector<8x16xf32>
    %56 = arith.addf %49, %55 : vector<8x16xf32>
    %c0_48 = arith.constant 0 : index
    %c8 = arith.constant 8 : index
    %c0_49 = arith.constant 0 : index
    %c0_50 = arith.constant 0 : index
    %57 = vector.load %arg1[%c0_48, %c8, %c0_49, %c0_50] : memref<1x25x8x16xf32, #tpu.memory_space<vmem>>, vector<1x1x8x16xf32>
    %58 = vector.shape_cast %57 : vector<1x1x8x16xf32> to vector<8x16xf32>
    %c8_51 = arith.constant 8 : index
    %c0_52 = arith.constant 0 : index
    %c0_53 = arith.constant 0 : index
    %59 = vector.load %arg2[%c8_51, %c0_52, %c0_53] : memref<25x8x1xf32, #tpu.memory_space<vmem>>, vector<1x8x1xf32>
    %60 = vector.shape_cast %59 : vector<1x8x1xf32> to vector<8x1xf32>
    %61 = vector.broadcast %60 : vector<8x1xf32> to vector<8x16xf32>
    %62 = arith.mulf %58, %61 : vector<8x16xf32>
    %63 = arith.addf %56, %62 : vector<8x16xf32>
    %c0_54 = arith.constant 0 : index
    %c9 = arith.constant 9 : index
    %c0_55 = arith.constant 0 : index
    %c0_56 = arith.constant 0 : index
    %64 = vector.load %arg1[%c0_54, %c9, %c0_55, %c0_56] : memref<1x25x8x16xf32, #tpu.memory_space<vmem>>, vector<1x1x8x16xf32>
    %65 = vector.shape_cast %64 : vector<1x1x8x16xf32> to vector<8x16xf32>
    %c9_57 = arith.constant 9 : index
    %c0_58 = arith.constant 0 : index
    %c0_59 = arith.constant 0 : index
    %66 = vector.load %arg2[%c9_57, %c0_58, %c0_59] : memref<25x8x1xf32, #tpu.memory_space<vmem>>, vector<1x8x1xf32>
    %67 = vector.shape_cast %66 : vector<1x8x1xf32> to vector<8x1xf32>
    %68 = vector.broadcast %67 : vector<8x1xf32> to vector<8x16xf32>
    %69 = arith.mulf %65, %68 : vector<8x16xf32>
    %70 = arith.addf %63, %69 : vector<8x16xf32>
    %c0_60 = arith.constant 0 : index
    %c10 = arith.constant 10 : index
    %c0_61 = arith.constant 0 : index
    %c0_62 = arith.constant 0 : index
    %71 = vector.load %arg1[%c0_60, %c10, %c0_61, %c0_62] : memref<1x25x8x16xf32, #tpu.memory_space<vmem>>, vector<1x1x8x16xf32>
    %72 = vector.shape_cast %71 : vector<1x1x8x16xf32> to vector<8x16xf32>
    %c10_63 = arith.constant 10 : index
    %c0_64 = arith.constant 0 : index
    %c0_65 = arith.constant 0 : index
    %73 = vector.load %arg2[%c10_63, %c0_64, %c0_65] : memref<25x8x1xf32, #tpu.memory_space<vmem>>, vector<1x8x1xf32>
    %74 = vector.shape_cast %73 : vector<1x8x1xf32> to vector<8x1xf32>
    %75 = vector.broadcast %74 : vector<8x1xf32> to vector<8x16xf32>
    %76 = arith.mulf %72, %75 : vector<8x16xf32>
    %77 = arith.addf %70, %76 : vector<8x16xf32>
    %c0_66 = arith.constant 0 : index
    %c11 = arith.constant 11 : index
    %c0_67 = arith.constant 0 : index
    %c0_68 = arith.constant 0 : index
    %78 = vector.load %arg1[%c0_66, %c11, %c0_67, %c0_68] : memref<1x25x8x16xf32, #tpu.memory_space<vmem>>, vector<1x1x8x16xf32>
    %79 = vector.shape_cast %78 : vector<1x1x8x16xf32> to vector<8x16xf32>
    %c11_69 = arith.constant 11 : index
    %c0_70 = arith.constant 0 : index
    %c0_71 = arith.constant 0 : index
    %80 = vector.load %arg2[%c11_69, %c0_70, %c0_71] : memref<25x8x1xf32, #tpu.memory_space<vmem>>, vector<1x8x1xf32>
    %81 = vector.shape_cast %80 : vector<1x8x1xf32> to vector<8x1xf32>
    %82 = vector.broadcast %81 : vector<8x1xf32> to vector<8x16xf32>
    %83 = arith.mulf %79, %82 : vector<8x16xf32>
    %84 = arith.addf %77, %83 : vector<8x16xf32>
    %c0_72 = arith.constant 0 : index
    %c12 = arith.constant 12 : index
    %c0_73 = arith.constant 0 : index
    %c0_74 = arith.constant 0 : index
    %85 = vector.load %arg1[%c0_72, %c12, %c0_73, %c0_74] : memref<1x25x8x16xf32, #tpu.memory_space<vmem>>, vector<1x1x8x16xf32>
    %86 = vector.shape_cast %85 : vector<1x1x8x16xf32> to vector<8x16xf32>
    %c12_75 = arith.constant 12 : index
    %c0_76 = arith.constant 0 : index
    %c0_77 = arith.constant 0 : index
    %87 = vector.load %arg2[%c12_75, %c0_76, %c0_77] : memref<25x8x1xf32, #tpu.memory_space<vmem>>, vector<1x8x1xf32>
    %88 = vector.shape_cast %87 : vector<1x8x1xf32> to vector<8x1xf32>
    %89 = vector.broadcast %88 : vector<8x1xf32> to vector<8x16xf32>
    %90 = arith.mulf %86, %89 : vector<8x16xf32>
    %91 = arith.addf %84, %90 : vector<8x16xf32>
    %c0_78 = arith.constant 0 : index
    %c13 = arith.constant 13 : index
    %c0_79 = arith.constant 0 : index
    %c0_80 = arith.constant 0 : index
    %92 = vector.load %arg1[%c0_78, %c13, %c0_79, %c0_80] : memref<1x25x8x16xf32, #tpu.memory_space<vmem>>, vector<1x1x8x16xf32>
    %93 = vector.shape_cast %92 : vector<1x1x8x16xf32> to vector<8x16xf32>
    %c13_81 = arith.constant 13 : index
    %c0_82 = arith.constant 0 : index
    %c0_83 = arith.constant 0 : index
    %94 = vector.load %arg2[%c13_81, %c0_82, %c0_83] : memref<25x8x1xf32, #tpu.memory_space<vmem>>, vector<1x8x1xf32>
    %95 = vector.shape_cast %94 : vector<1x8x1xf32> to vector<8x1xf32>
    %96 = vector.broadcast %95 : vector<8x1xf32> to vector<8x16xf32>
    %97 = arith.mulf %93, %96 : vector<8x16xf32>
    %98 = arith.addf %91, %97 : vector<8x16xf32>
    %c0_84 = arith.constant 0 : index
    %c14 = arith.constant 14 : index
    %c0_85 = arith.constant 0 : index
    %c0_86 = arith.constant 0 : index
    %99 = vector.load %arg1[%c0_84, %c14, %c0_85, %c0_86] : memref<1x25x8x16xf32, #tpu.memory_space<vmem>>, vector<1x1x8x16xf32>
    %100 = vector.shape_cast %99 : vector<1x1x8x16xf32> to vector<8x16xf32>
    %c14_87 = arith.constant 14 : index
    %c0_88 = arith.constant 0 : index
    %c0_89 = arith.constant 0 : index
    %101 = vector.load %arg2[%c14_87, %c0_88, %c0_89] : memref<25x8x1xf32, #tpu.memory_space<vmem>>, vector<1x8x1xf32>
    %102 = vector.shape_cast %101 : vector<1x8x1xf32> to vector<8x1xf32>
    %103 = vector.broadcast %102 : vector<8x1xf32> to vector<8x16xf32>
    %104 = arith.mulf %100, %103 : vector<8x16xf32>
    %105 = arith.addf %98, %104 : vector<8x16xf32>
    %c0_90 = arith.constant 0 : index
    %c15 = arith.constant 15 : index
    %c0_91 = arith.constant 0 : index
    %c0_92 = arith.constant 0 : index
    %106 = vector.load %arg1[%c0_90, %c15, %c0_91, %c0_92] : memref<1x25x8x16xf32, #tpu.memory_space<vmem>>, vector<1x1x8x16xf32>
    %107 = vector.shape_cast %106 : vector<1x1x8x16xf32> to vector<8x16xf32>
    %c15_93 = arith.constant 15 : index
    %c0_94 = arith.constant 0 : index
    %c0_95 = arith.constant 0 : index
    %108 = vector.load %arg2[%c15_93, %c0_94, %c0_95] : memref<25x8x1xf32, #tpu.memory_space<vmem>>, vector<1x8x1xf32>
    %109 = vector.shape_cast %108 : vector<1x8x1xf32> to vector<8x1xf32>
    %110 = vector.broadcast %109 : vector<8x1xf32> to vector<8x16xf32>
    %111 = arith.mulf %107, %110 : vector<8x16xf32>
    %112 = arith.addf %105, %111 : vector<8x16xf32>
    %c0_96 = arith.constant 0 : index
    %c16 = arith.constant 16 : index
    %c0_97 = arith.constant 0 : index
    %c0_98 = arith.constant 0 : index
    %113 = vector.load %arg1[%c0_96, %c16, %c0_97, %c0_98] : memref<1x25x8x16xf32, #tpu.memory_space<vmem>>, vector<1x1x8x16xf32>
    %114 = vector.shape_cast %113 : vector<1x1x8x16xf32> to vector<8x16xf32>
    %c16_99 = arith.constant 16 : index
    %c0_100 = arith.constant 0 : index
    %c0_101 = arith.constant 0 : index
    %115 = vector.load %arg2[%c16_99, %c0_100, %c0_101] : memref<25x8x1xf32, #tpu.memory_space<vmem>>, vector<1x8x1xf32>
    %116 = vector.shape_cast %115 : vector<1x8x1xf32> to vector<8x1xf32>
    %117 = vector.broadcast %116 : vector<8x1xf32> to vector<8x16xf32>
    %118 = arith.mulf %114, %117 : vector<8x16xf32>
    %119 = arith.addf %112, %118 : vector<8x16xf32>
    %c0_102 = arith.constant 0 : index
    %c17 = arith.constant 17 : index
    %c0_103 = arith.constant 0 : index
    %c0_104 = arith.constant 0 : index
    %120 = vector.load %arg1[%c0_102, %c17, %c0_103, %c0_104] : memref<1x25x8x16xf32, #tpu.memory_space<vmem>>, vector<1x1x8x16xf32>
    %121 = vector.shape_cast %120 : vector<1x1x8x16xf32> to vector<8x16xf32>
    %c17_105 = arith.constant 17 : index
    %c0_106 = arith.constant 0 : index
    %c0_107 = arith.constant 0 : index
    %122 = vector.load %arg2[%c17_105, %c0_106, %c0_107] : memref<25x8x1xf32, #tpu.memory_space<vmem>>, vector<1x8x1xf32>
    %123 = vector.shape_cast %122 : vector<1x8x1xf32> to vector<8x1xf32>
    %124 = vector.broadcast %123 : vector<8x1xf32> to vector<8x16xf32>
    %125 = arith.mulf %121, %124 : vector<8x16xf32>
    %126 = arith.addf %119, %125 : vector<8x16xf32>
    %c0_108 = arith.constant 0 : index
    %c18 = arith.constant 18 : index
    %c0_109 = arith.constant 0 : index
    %c0_110 = arith.constant 0 : index
    %127 = vector.load %arg1[%c0_108, %c18, %c0_109, %c0_110] : memref<1x25x8x16xf32, #tpu.memory_space<vmem>>, vector<1x1x8x16xf32>
    %128 = vector.shape_cast %127 : vector<1x1x8x16xf32> to vector<8x16xf32>
    %c18_111 = arith.constant 18 : index
    %c0_112 = arith.constant 0 : index
    %c0_113 = arith.constant 0 : index
    %129 = vector.load %arg2[%c18_111, %c0_112, %c0_113] : memref<25x8x1xf32, #tpu.memory_space<vmem>>, vector<1x8x1xf32>
    %130 = vector.shape_cast %129 : vector<1x8x1xf32> to vector<8x1xf32>
    %131 = vector.broadcast %130 : vector<8x1xf32> to vector<8x16xf32>
    %132 = arith.mulf %128, %131 : vector<8x16xf32>
    %133 = arith.addf %126, %132 : vector<8x16xf32>
    %c0_114 = arith.constant 0 : index
    %c19 = arith.constant 19 : index
    %c0_115 = arith.constant 0 : index
    %c0_116 = arith.constant 0 : index
    %134 = vector.load %arg1[%c0_114, %c19, %c0_115, %c0_116] : memref<1x25x8x16xf32, #tpu.memory_space<vmem>>, vector<1x1x8x16xf32>
    %135 = vector.shape_cast %134 : vector<1x1x8x16xf32> to vector<8x16xf32>
    %c19_117 = arith.constant 19 : index
    %c0_118 = arith.constant 0 : index
    %c0_119 = arith.constant 0 : index
    %136 = vector.load %arg2[%c19_117, %c0_118, %c0_119] : memref<25x8x1xf32, #tpu.memory_space<vmem>>, vector<1x8x1xf32>
    %137 = vector.shape_cast %136 : vector<1x8x1xf32> to vector<8x1xf32>
    %138 = vector.broadcast %137 : vector<8x1xf32> to vector<8x16xf32>
    %139 = arith.mulf %135, %138 : vector<8x16xf32>
    %140 = arith.addf %133, %139 : vector<8x16xf32>
    %c0_120 = arith.constant 0 : index
    %c20 = arith.constant 20 : index
    %c0_121 = arith.constant 0 : index
    %c0_122 = arith.constant 0 : index
    %141 = vector.load %arg1[%c0_120, %c20, %c0_121, %c0_122] : memref<1x25x8x16xf32, #tpu.memory_space<vmem>>, vector<1x1x8x16xf32>
    %142 = vector.shape_cast %141 : vector<1x1x8x16xf32> to vector<8x16xf32>
    %c20_123 = arith.constant 20 : index
    %c0_124 = arith.constant 0 : index
    %c0_125 = arith.constant 0 : index
    %143 = vector.load %arg2[%c20_123, %c0_124, %c0_125] : memref<25x8x1xf32, #tpu.memory_space<vmem>>, vector<1x8x1xf32>
    %144 = vector.shape_cast %143 : vector<1x8x1xf32> to vector<8x1xf32>
    %145 = vector.broadcast %144 : vector<8x1xf32> to vector<8x16xf32>
    %146 = arith.mulf %142, %145 : vector<8x16xf32>
    %147 = arith.addf %140, %146 : vector<8x16xf32>
    %c0_126 = arith.constant 0 : index
    %c21 = arith.constant 21 : index
    %c0_127 = arith.constant 0 : index
    %c0_128 = arith.constant 0 : index
    %148 = vector.load %arg1[%c0_126, %c21, %c0_127, %c0_128] : memref<1x25x8x16xf32, #tpu.memory_space<vmem>>, vector<1x1x8x16xf32>
    %149 = vector.shape_cast %148 : vector<1x1x8x16xf32> to vector<8x16xf32>
    %c21_129 = arith.constant 21 : index
    %c0_130 = arith.constant 0 : index
    %c0_131 = arith.constant 0 : index
    %150 = vector.load %arg2[%c21_129, %c0_130, %c0_131] : memref<25x8x1xf32, #tpu.memory_space<vmem>>, vector<1x8x1xf32>
    %151 = vector.shape_cast %150 : vector<1x8x1xf32> to vector<8x1xf32>
    %152 = vector.broadcast %151 : vector<8x1xf32> to vector<8x16xf32>
    %153 = arith.mulf %149, %152 : vector<8x16xf32>
    %154 = arith.addf %147, %153 : vector<8x16xf32>
    %c0_132 = arith.constant 0 : index
    %c22 = arith.constant 22 : index
    %c0_133 = arith.constant 0 : index
    %c0_134 = arith.constant 0 : index
    %155 = vector.load %arg1[%c0_132, %c22, %c0_133, %c0_134] : memref<1x25x8x16xf32, #tpu.memory_space<vmem>>, vector<1x1x8x16xf32>
    %156 = vector.shape_cast %155 : vector<1x1x8x16xf32> to vector<8x16xf32>
    %c22_135 = arith.constant 22 : index
    %c0_136 = arith.constant 0 : index
    %c0_137 = arith.constant 0 : index
    %157 = vector.load %arg2[%c22_135, %c0_136, %c0_137] : memref<25x8x1xf32, #tpu.memory_space<vmem>>, vector<1x8x1xf32>
    %158 = vector.shape_cast %157 : vector<1x8x1xf32> to vector<8x1xf32>
    %159 = vector.broadcast %158 : vector<8x1xf32> to vector<8x16xf32>
    %160 = arith.mulf %156, %159 : vector<8x16xf32>
    %161 = arith.addf %154, %160 : vector<8x16xf32>
    %c0_138 = arith.constant 0 : index
    %c23 = arith.constant 23 : index
    %c0_139 = arith.constant 0 : index
    %c0_140 = arith.constant 0 : index
    %162 = vector.load %arg1[%c0_138, %c23, %c0_139, %c0_140] : memref<1x25x8x16xf32, #tpu.memory_space<vmem>>, vector<1x1x8x16xf32>
    %163 = vector.shape_cast %162 : vector<1x1x8x16xf32> to vector<8x16xf32>
    %c23_141 = arith.constant 23 : index
    %c0_142 = arith.constant 0 : index
    %c0_143 = arith.constant 0 : index
    %164 = vector.load %arg2[%c23_141, %c0_142, %c0_143] : memref<25x8x1xf32, #tpu.memory_space<vmem>>, vector<1x8x1xf32>
    %165 = vector.shape_cast %164 : vector<1x8x1xf32> to vector<8x1xf32>
    %166 = vector.broadcast %165 : vector<8x1xf32> to vector<8x16xf32>
    %167 = arith.mulf %163, %166 : vector<8x16xf32>
    %168 = arith.addf %161, %167 : vector<8x16xf32>
    %c0_144 = arith.constant 0 : index
    %c24 = arith.constant 24 : index
    %c0_145 = arith.constant 0 : index
    %c0_146 = arith.constant 0 : index
    %169 = vector.load %arg1[%c0_144, %c24, %c0_145, %c0_146] : memref<1x25x8x16xf32, #tpu.memory_space<vmem>>, vector<1x1x8x16xf32>
    %170 = vector.shape_cast %169 : vector<1x1x8x16xf32> to vector<8x16xf32>
    %c24_147 = arith.constant 24 : index
    %c0_148 = arith.constant 0 : index
    %c0_149 = arith.constant 0 : index
    %171 = vector.load %arg2[%c24_147, %c0_148, %c0_149] : memref<25x8x1xf32, #tpu.memory_space<vmem>>, vector<1x8x1xf32>
    %172 = vector.shape_cast %171 : vector<1x8x1xf32> to vector<8x1xf32>
    %173 = vector.broadcast %172 : vector<8x1xf32> to vector<8x16xf32>
    %174 = arith.mulf %170, %173 : vector<8x16xf32>
    %175 = arith.addf %168, %174 : vector<8x16xf32>
    %cst_150 = arith.constant dense<0.000000e+00> : vector<8xf32>
    %176 = vector.multi_reduction <add>, %175, %cst_150 [1] : vector<8x16xf32> to vector<8xf32>
    %177 = vector.shape_cast %176 : vector<8xf32> to vector<8x1xf32>
    %cst_151 = arith.constant 1.600000e+01 : f32
    %178 = vector.broadcast %cst_151 : f32 to vector<8x1xf32>
    %179 = arith.divf %177, %178 : vector<8x1xf32>
    %180 = vector.broadcast %179 : vector<8x1xf32> to vector<8x16xf32>
    %181 = arith.subf %175, %180 : vector<8x16xf32>
    %182 = arith.mulf %181, %181 : vector<8x16xf32>
    %cst_152 = arith.constant dense<0.000000e+00> : vector<8xf32>
    %183 = vector.multi_reduction <add>, %182, %cst_152 [1] : vector<8x16xf32> to vector<8xf32>
    %184 = vector.shape_cast %183 : vector<8xf32> to vector<8x1xf32>
    %cst_153 = arith.constant 1.600000e+01 : f32
    %185 = vector.broadcast %cst_153 : f32 to vector<8x1xf32>
    %186 = arith.divf %184, %185 : vector<8x1xf32>
    %cst_154 = arith.constant 9.99999974E-6 : f32
    %187 = vector.broadcast %cst_154 : f32 to vector<8x1xf32>
    %188 = arith.addf %186, %187 : vector<8x1xf32>
    %189 = math.rsqrt %188 : vector<8x1xf32>
    %190 = vector.broadcast %189 : vector<8x1xf32> to vector<8x16xf32>
    %191 = arith.mulf %181, %190 : vector<8x16xf32>
    %c0_155 = arith.constant 0 : index
    %c0_156 = arith.constant 0 : index
    %192 = vector.load %arg3[%c0_155, %c0_156] : memref<24x8xf32, #tpu.memory_space<vmem>>, vector<24x8xf32>
    %cst_157 = arith.constant dense<0.000000e+00> : vector<24x16xf32>
    %193 = tpu.matmul %192, %191, %cst_157 {dimension_numbers = #tpu.dot_dimension_numbers<[1], [0], [0], [1], [0, 0, 1, 1], [], []>} : vector<24x8xf32>, vector<8x16xf32>, vector<24x16xf32> -> vector<24x16xf32>
    %cst_158 = arith.constant dense<0.000000e+00> : vector<24xf32>
    %194 = vector.multi_reduction <add>, %193, %cst_158 [1] : vector<24x16xf32> to vector<24xf32>
    %195 = vector.shape_cast %194 : vector<24xf32> to vector<24x1xf32>
    %cst_159 = arith.constant 1.600000e+01 : f32
    %196 = vector.broadcast %cst_159 : f32 to vector<24x1xf32>
    %197 = arith.divf %195, %196 : vector<24x1xf32>
    %198 = vector.broadcast %197 : vector<24x1xf32> to vector<24x16xf32>
    %199 = arith.subf %193, %198 : vector<24x16xf32>
    %200 = arith.mulf %199, %199 : vector<24x16xf32>
    %cst_160 = arith.constant dense<0.000000e+00> : vector<24xf32>
    %201 = vector.multi_reduction <add>, %200, %cst_160 [1] : vector<24x16xf32> to vector<24xf32>
    %202 = vector.shape_cast %201 : vector<24xf32> to vector<24x1xf32>
    %cst_161 = arith.constant 1.600000e+01 : f32
    %203 = vector.broadcast %cst_161 : f32 to vector<24x1xf32>
    %204 = arith.divf %202, %203 : vector<24x1xf32>
    %cst_162 = arith.constant 9.99999974E-6 : f32
    %205 = vector.broadcast %cst_162 : f32 to vector<24x1xf32>
    %206 = arith.addf %204, %205 : vector<24x1xf32>
    %207 = math.rsqrt %206 : vector<24x1xf32>
    %208 = vector.broadcast %207 : vector<24x1xf32> to vector<24x16xf32>
    %209 = arith.mulf %199, %208 : vector<24x16xf32>
    %c0_163 = arith.constant 0 : index
    %c0_164 = arith.constant 0 : index
    %c0_165 = arith.constant 0 : index
    %210 = vector.load %arg4[%c0_163, %c0_164, %c0_165] : memref<1x24x16xf32, #tpu.memory_space<vmem>>, vector<1x24x16xf32>
    %211 = vector.shape_cast %210 : vector<1x24x16xf32> to vector<24x16xf32>
    %212 = vector.shape_cast %209 : vector<24x16xf32> to vector<1x24x16xf32>
    tpu.vector_store %arg4[%c0_163, %c0_164, %c0_165], %212 {strides = array<i32>} : memref<1x24x16xf32, #tpu.memory_space<vmem>>, vector<1x24x16xf32>,
    return
  }
  func.func @transform_0(%arg0: i32) -> (i32, i32, i32, i32) {
    %c0_i32 = arith.constant 0 : i32
    %c0_i32_0 = arith.constant 0 : i32
    %c0_i32_1 = arith.constant 0 : i32
    %c0_i32_2 = arith.constant 0 : i32
    return %arg0, %c0_i32, %c0_i32_0, %c0_i32_1 : i32, i32, i32, i32
  }
  func.func @transform_1(%arg0: i32) -> (i32, i32, i32) {
    %c0_i32 = arith.constant 0 : i32
    %c0_i32_0 = arith.constant 0 : i32
    %c0_i32_1 = arith.constant 0 : i32
    %c0_i32_2 = arith.constant 0 : i32
    return %c0_i32, %c0_i32_0, %c0_i32_1 : i32, i32, i32
  }
  func.func @transform_2(%arg0: i32) -> (i32, i32) {
    %c0_i32 = arith.constant 0 : i32
    %c0_i32_0 = arith.constant 0 : i32
    %c0_i32_1 = arith.constant 0 : i32
    return %c0_i32, %c0_i32_0 : i32, i32
  }
  func.func @transform_3(%arg0: i32) -> (i32, i32, i32) {
    %c0_i32 = arith.constant 0 : i32
    %c0_i32_0 = arith.constant 0 : i32
    %c0_i32_1 = arith.constant 0 : i32
    return %arg0, %c0_i32, %c0_i32_0 : i32, i32, i32
  }
}

module attributes {stable_mosaic.version = 11 : i64} {
  func.func @_downsample_kv_kernel(%arg0: i32, %arg1: memref<1x9x8x36xf32, #tpu.memory_space<vmem>>, %arg2: memref<9x8x1xf32, #tpu.memory_space<vmem>>, %arg3: memref<24x8xf32, #tpu.memory_space<vmem>>, %arg4: memref<1x24x36xf32, #tpu.memory_space<vmem>>) attributes {dimension_semantics = [#tpu.dimension_semantics<parallel>], iteration_bounds = array<i64: 2>, scalar_prefetch = 0 : i64, scratch_operands = 0 : i64, tpu.core_type = #tpu.core_type<tc>, window_params = [{transform_indices = @transform_0, window_bounds = array<i64: 1, 9, 8, 36>}, {pipeline_mode = #tpu.pipeline_mode<synchronous>, transform_indices = @transform_1, window_bounds = array<i64: 9, 8, 1>}, {pipeline_mode = #tpu.pipeline_mode<synchronous>, transform_indices = @transform_2, window_bounds = array<i64: 24, 8>}, {transform_indices = @transform_3, window_bounds = array<i64: 1, 24, 36>}]} {
    %cst = arith.constant 0.000000e+00 : f32
    %0 = vector.broadcast %cst : f32 to vector<8x36xf32>
    %c0 = arith.constant 0 : index
    %c0_0 = arith.constant 0 : index
    %c0_1 = arith.constant 0 : index
    %c0_2 = arith.constant 0 : index
    %1 = vector.load %arg1[%c0, %c0_0, %c0_1, %c0_2] : memref<1x9x8x36xf32, #tpu.memory_space<vmem>>, vector<1x1x8x36xf32>
    %2 = vector.shape_cast %1 : vector<1x1x8x36xf32> to vector<8x36xf32>
    %c0_3 = arith.constant 0 : index
    %c0_4 = arith.constant 0 : index
    %c0_5 = arith.constant 0 : index
    %3 = vector.load %arg2[%c0_3, %c0_4, %c0_5] : memref<9x8x1xf32, #tpu.memory_space<vmem>>, vector<1x8x1xf32>
    %4 = vector.shape_cast %3 : vector<1x8x1xf32> to vector<8x1xf32>
    %5 = vector.broadcast %4 : vector<8x1xf32> to vector<8x36xf32>
    %6 = arith.mulf %2, %5 : vector<8x36xf32>
    %7 = arith.addf %0, %6 : vector<8x36xf32>
    %c0_6 = arith.constant 0 : index
    %c1 = arith.constant 1 : index
    %c0_7 = arith.constant 0 : index
    %c0_8 = arith.constant 0 : index
    %8 = vector.load %arg1[%c0_6, %c1, %c0_7, %c0_8] : memref<1x9x8x36xf32, #tpu.memory_space<vmem>>, vector<1x1x8x36xf32>
    %9 = vector.shape_cast %8 : vector<1x1x8x36xf32> to vector<8x36xf32>
    %c1_9 = arith.constant 1 : index
    %c0_10 = arith.constant 0 : index
    %c0_11 = arith.constant 0 : index
    %10 = vector.load %arg2[%c1_9, %c0_10, %c0_11] : memref<9x8x1xf32, #tpu.memory_space<vmem>>, vector<1x8x1xf32>
    %11 = vector.shape_cast %10 : vector<1x8x1xf32> to vector<8x1xf32>
    %12 = vector.broadcast %11 : vector<8x1xf32> to vector<8x36xf32>
    %13 = arith.mulf %9, %12 : vector<8x36xf32>
    %14 = arith.addf %7, %13 : vector<8x36xf32>
    %c0_12 = arith.constant 0 : index
    %c2 = arith.constant 2 : index
    %c0_13 = arith.constant 0 : index
    %c0_14 = arith.constant 0 : index
    %15 = vector.load %arg1[%c0_12, %c2, %c0_13, %c0_14] : memref<1x9x8x36xf32, #tpu.memory_space<vmem>>, vector<1x1x8x36xf32>
    %16 = vector.shape_cast %15 : vector<1x1x8x36xf32> to vector<8x36xf32>
    %c2_15 = arith.constant 2 : index
    %c0_16 = arith.constant 0 : index
    %c0_17 = arith.constant 0 : index
    %17 = vector.load %arg2[%c2_15, %c0_16, %c0_17] : memref<9x8x1xf32, #tpu.memory_space<vmem>>, vector<1x8x1xf32>
    %18 = vector.shape_cast %17 : vector<1x8x1xf32> to vector<8x1xf32>
    %19 = vector.broadcast %18 : vector<8x1xf32> to vector<8x36xf32>
    %20 = arith.mulf %16, %19 : vector<8x36xf32>
    %21 = arith.addf %14, %20 : vector<8x36xf32>
    %c0_18 = arith.constant 0 : index
    %c3 = arith.constant 3 : index
    %c0_19 = arith.constant 0 : index
    %c0_20 = arith.constant 0 : index
    %22 = vector.load %arg1[%c0_18, %c3, %c0_19, %c0_20] : memref<1x9x8x36xf32, #tpu.memory_space<vmem>>, vector<1x1x8x36xf32>
    %23 = vector.shape_cast %22 : vector<1x1x8x36xf32> to vector<8x36xf32>
    %c3_21 = arith.constant 3 : index
    %c0_22 = arith.constant 0 : index
    %c0_23 = arith.constant 0 : index
    %24 = vector.load %arg2[%c3_21, %c0_22, %c0_23] : memref<9x8x1xf32, #tpu.memory_space<vmem>>, vector<1x8x1xf32>
    %25 = vector.shape_cast %24 : vector<1x8x1xf32> to vector<8x1xf32>
    %26 = vector.broadcast %25 : vector<8x1xf32> to vector<8x36xf32>
    %27 = arith.mulf %23, %26 : vector<8x36xf32>
    %28 = arith.addf %21, %27 : vector<8x36xf32>
    %c0_24 = arith.constant 0 : index
    %c4 = arith.constant 4 : index
    %c0_25 = arith.constant 0 : index
    %c0_26 = arith.constant 0 : index
    %29 = vector.load %arg1[%c0_24, %c4, %c0_25, %c0_26] : memref<1x9x8x36xf32, #tpu.memory_space<vmem>>, vector<1x1x8x36xf32>
    %30 = vector.shape_cast %29 : vector<1x1x8x36xf32> to vector<8x36xf32>
    %c4_27 = arith.constant 4 : index
    %c0_28 = arith.constant 0 : index
    %c0_29 = arith.constant 0 : index
    %31 = vector.load %arg2[%c4_27, %c0_28, %c0_29] : memref<9x8x1xf32, #tpu.memory_space<vmem>>, vector<1x8x1xf32>
    %32 = vector.shape_cast %31 : vector<1x8x1xf32> to vector<8x1xf32>
    %33 = vector.broadcast %32 : vector<8x1xf32> to vector<8x36xf32>
    %34 = arith.mulf %30, %33 : vector<8x36xf32>
    %35 = arith.addf %28, %34 : vector<8x36xf32>
    %c0_30 = arith.constant 0 : index
    %c5 = arith.constant 5 : index
    %c0_31 = arith.constant 0 : index
    %c0_32 = arith.constant 0 : index
    %36 = vector.load %arg1[%c0_30, %c5, %c0_31, %c0_32] : memref<1x9x8x36xf32, #tpu.memory_space<vmem>>, vector<1x1x8x36xf32>
    %37 = vector.shape_cast %36 : vector<1x1x8x36xf32> to vector<8x36xf32>
    %c5_33 = arith.constant 5 : index
    %c0_34 = arith.constant 0 : index
    %c0_35 = arith.constant 0 : index
    %38 = vector.load %arg2[%c5_33, %c0_34, %c0_35] : memref<9x8x1xf32, #tpu.memory_space<vmem>>, vector<1x8x1xf32>
    %39 = vector.shape_cast %38 : vector<1x8x1xf32> to vector<8x1xf32>
    %40 = vector.broadcast %39 : vector<8x1xf32> to vector<8x36xf32>
    %41 = arith.mulf %37, %40 : vector<8x36xf32>
    %42 = arith.addf %35, %41 : vector<8x36xf32>
    %c0_36 = arith.constant 0 : index
    %c6 = arith.constant 6 : index
    %c0_37 = arith.constant 0 : index
    %c0_38 = arith.constant 0 : index
    %43 = vector.load %arg1[%c0_36, %c6, %c0_37, %c0_38] : memref<1x9x8x36xf32, #tpu.memory_space<vmem>>, vector<1x1x8x36xf32>
    %44 = vector.shape_cast %43 : vector<1x1x8x36xf32> to vector<8x36xf32>
    %c6_39 = arith.constant 6 : index
    %c0_40 = arith.constant 0 : index
    %c0_41 = arith.constant 0 : index
    %45 = vector.load %arg2[%c6_39, %c0_40, %c0_41] : memref<9x8x1xf32, #tpu.memory_space<vmem>>, vector<1x8x1xf32>
    %46 = vector.shape_cast %45 : vector<1x8x1xf32> to vector<8x1xf32>
    %47 = vector.broadcast %46 : vector<8x1xf32> to vector<8x36xf32>
    %48 = arith.mulf %44, %47 : vector<8x36xf32>
    %49 = arith.addf %42, %48 : vector<8x36xf32>
    %c0_42 = arith.constant 0 : index
    %c7 = arith.constant 7 : index
    %c0_43 = arith.constant 0 : index
    %c0_44 = arith.constant 0 : index
    %50 = vector.load %arg1[%c0_42, %c7, %c0_43, %c0_44] : memref<1x9x8x36xf32, #tpu.memory_space<vmem>>, vector<1x1x8x36xf32>
    %51 = vector.shape_cast %50 : vector<1x1x8x36xf32> to vector<8x36xf32>
    %c7_45 = arith.constant 7 : index
    %c0_46 = arith.constant 0 : index
    %c0_47 = arith.constant 0 : index
    %52 = vector.load %arg2[%c7_45, %c0_46, %c0_47] : memref<9x8x1xf32, #tpu.memory_space<vmem>>, vector<1x8x1xf32>
    %53 = vector.shape_cast %52 : vector<1x8x1xf32> to vector<8x1xf32>
    %54 = vector.broadcast %53 : vector<8x1xf32> to vector<8x36xf32>
    %55 = arith.mulf %51, %54 : vector<8x36xf32>
    %56 = arith.addf %49, %55 : vector<8x36xf32>
    %c0_48 = arith.constant 0 : index
    %c8 = arith.constant 8 : index
    %c0_49 = arith.constant 0 : index
    %c0_50 = arith.constant 0 : index
    %57 = vector.load %arg1[%c0_48, %c8, %c0_49, %c0_50] : memref<1x9x8x36xf32, #tpu.memory_space<vmem>>, vector<1x1x8x36xf32>
    %58 = vector.shape_cast %57 : vector<1x1x8x36xf32> to vector<8x36xf32>
    %c8_51 = arith.constant 8 : index
    %c0_52 = arith.constant 0 : index
    %c0_53 = arith.constant 0 : index
    %59 = vector.load %arg2[%c8_51, %c0_52, %c0_53] : memref<9x8x1xf32, #tpu.memory_space<vmem>>, vector<1x8x1xf32>
    %60 = vector.shape_cast %59 : vector<1x8x1xf32> to vector<8x1xf32>
    %61 = vector.broadcast %60 : vector<8x1xf32> to vector<8x36xf32>
    %62 = arith.mulf %58, %61 : vector<8x36xf32>
    %63 = arith.addf %56, %62 : vector<8x36xf32>
    %cst_54 = arith.constant dense<0.000000e+00> : vector<8xf32>
    %64 = vector.multi_reduction <add>, %63, %cst_54 [1] : vector<8x36xf32> to vector<8xf32>
    %65 = vector.shape_cast %64 : vector<8xf32> to vector<8x1xf32>
    %cst_55 = arith.constant 3.600000e+01 : f32
    %66 = vector.broadcast %cst_55 : f32 to vector<8x1xf32>
    %67 = arith.divf %65, %66 : vector<8x1xf32>
    %68 = vector.broadcast %67 : vector<8x1xf32> to vector<8x36xf32>
    %69 = arith.subf %63, %68 : vector<8x36xf32>
    %70 = arith.mulf %69, %69 : vector<8x36xf32>
    %cst_56 = arith.constant dense<0.000000e+00> : vector<8xf32>
    %71 = vector.multi_reduction <add>, %70, %cst_56 [1] : vector<8x36xf32> to vector<8xf32>
    %72 = vector.shape_cast %71 : vector<8xf32> to vector<8x1xf32>
    %cst_57 = arith.constant 3.600000e+01 : f32
    %73 = vector.broadcast %cst_57 : f32 to vector<8x1xf32>
    %74 = arith.divf %72, %73 : vector<8x1xf32>
    %cst_58 = arith.constant 9.99999974E-6 : f32
    %75 = vector.broadcast %cst_58 : f32 to vector<8x1xf32>
    %76 = arith.addf %74, %75 : vector<8x1xf32>
    %77 = math.rsqrt %76 : vector<8x1xf32>
    %78 = vector.broadcast %77 : vector<8x1xf32> to vector<8x36xf32>
    %79 = arith.mulf %69, %78 : vector<8x36xf32>
    %c0_59 = arith.constant 0 : index
    %c0_60 = arith.constant 0 : index
    %80 = vector.load %arg3[%c0_59, %c0_60] : memref<24x8xf32, #tpu.memory_space<vmem>>, vector<24x8xf32>
    %cst_61 = arith.constant dense<0.000000e+00> : vector<24x36xf32>
    %81 = tpu.matmul %80, %79, %cst_61 {dimension_numbers = #tpu.dot_dimension_numbers<[1], [0], [0], [1], [0, 0, 1, 1], [], []>} : vector<24x8xf32>, vector<8x36xf32>, vector<24x36xf32> -> vector<24x36xf32>
    %cst_62 = arith.constant dense<0.000000e+00> : vector<24xf32>
    %82 = vector.multi_reduction <add>, %81, %cst_62 [1] : vector<24x36xf32> to vector<24xf32>
    %83 = vector.shape_cast %82 : vector<24xf32> to vector<24x1xf32>
    %cst_63 = arith.constant 3.600000e+01 : f32
    %84 = vector.broadcast %cst_63 : f32 to vector<24x1xf32>
    %85 = arith.divf %83, %84 : vector<24x1xf32>
    %86 = vector.broadcast %85 : vector<24x1xf32> to vector<24x36xf32>
    %87 = arith.subf %81, %86 : vector<24x36xf32>
    %88 = arith.mulf %87, %87 : vector<24x36xf32>
    %cst_64 = arith.constant dense<0.000000e+00> : vector<24xf32>
    %89 = vector.multi_reduction <add>, %88, %cst_64 [1] : vector<24x36xf32> to vector<24xf32>
    %90 = vector.shape_cast %89 : vector<24xf32> to vector<24x1xf32>
    %cst_65 = arith.constant 3.600000e+01 : f32
    %91 = vector.broadcast %cst_65 : f32 to vector<24x1xf32>
    %92 = arith.divf %90, %91 : vector<24x1xf32>
    %cst_66 = arith.constant 9.99999974E-6 : f32
    %93 = vector.broadcast %cst_66 : f32 to vector<24x1xf32>
    %94 = arith.addf %92, %93 : vector<24x1xf32>
    %95 = math.rsqrt %94 : vector<24x1xf32>
    %96 = vector.broadcast %95 : vector<24x1xf32> to vector<24x36xf32>
    %97 = arith.mulf %87, %96 : vector<24x36xf32>
    %c0_67 = arith.constant 0 : index
    %c0_68 = arith.constant 0 : index
    %c0_69 = arith.constant 0 : index
    %98 = vector.load %arg4[%c0_67, %c0_68, %c0_69] : memref<1x24x36xf32, #tpu.memory_space<vmem>>, vector<1x24x36xf32>
    %99 = vector.shape_cast %98 : vector<1x24x36xf32> to vector<24x36xf32>
    %100 = vector.shape_cast %97 : vector<24x36xf32> to vector<1x24x36xf32>
    tpu.vector_store %arg4[%c0_67, %c0_68, %c0_69], %100 {strides = array<i32>} : memref<1x24x36xf32, #tpu.memory_space<vmem>>, vector<1x24x36xf32>,
    return
  }
  func.func @transform_0(%arg0: i32) -> (i32, i32, i32, i32) {
    %c0_i32 = arith.constant 0 : i32
    %c0_i32_0 = arith.constant 0 : i32
    %c0_i32_1 = arith.constant 0 : i32
    %c0_i32_2 = arith.constant 0 : i32
    return %arg0, %c0_i32, %c0_i32_0, %c0_i32_1 : i32, i32, i32, i32
  }
  func.func @transform_1(%arg0: i32) -> (i32, i32, i32) {
    %c0_i32 = arith.constant 0 : i32
    %c0_i32_0 = arith.constant 0 : i32
    %c0_i32_1 = arith.constant 0 : i32
    %c0_i32_2 = arith.constant 0 : i32
    return %c0_i32, %c0_i32_0, %c0_i32_1 : i32, i32, i32
  }
  func.func @transform_2(%arg0: i32) -> (i32, i32) {
    %c0_i32 = arith.constant 0 : i32
    %c0_i32_0 = arith.constant 0 : i32
    %c0_i32_1 = arith.constant 0 : i32
    return %c0_i32, %c0_i32_0 : i32, i32
  }
  func.func @transform_3(%arg0: i32) -> (i32, i32, i32) {
    %c0_i32 = arith.constant 0 : i32
    %c0_i32_0 = arith.constant 0 : i32
    %c0_i32_1 = arith.constant 0 : i32
    return %arg0, %c0_i32, %c0_i32_0 : i32, i32, i32
  }
}

module attributes {stable_mosaic.version = 11 : i64} {
  func.func @_attn_tail_kernel(%arg0: i32, %arg1: memref<1x2x144x4xf32, #tpu.memory_space<vmem>>, %arg2: memref<1x2x4x196xf32, #tpu.memory_space<vmem>>, %arg3: memref<1x2x8x196xf32, #tpu.memory_space<vmem>>, %arg4: memref<1x16x144xf32, #tpu.memory_space<vmem>>, %arg5: memref<2x144xf32, #tpu.memory_space<vmem>>, %arg6: memref<9x16x1xf32, #tpu.memory_space<vmem>>, %arg7: memref<16x1xf32, #tpu.memory_space<vmem>>, %arg8: memref<8x16xf32, #tpu.memory_space<vmem>>, %arg9: memref<8x1xf32, #tpu.memory_space<vmem>>, %arg10: memref<1x8x144xf32, #tpu.memory_space<vmem>>, %arg11: memref<1x8x144xf32, #tpu.memory_space<vmem>>, %arg12: memref<16x170xf32, #tpu.memory_space<vmem>>) attributes {dimension_semantics = [#tpu.dimension_semantics<parallel>], iteration_bounds = array<i64: 2>, scalar_prefetch = 0 : i64, scratch_operands = 1 : i64, tpu.core_type = #tpu.core_type<tc>, window_params = [{transform_indices = @transform_0, window_bounds = array<i64: 1, 2, 144, 4>}, {transform_indices = @transform_1, window_bounds = array<i64: 1, 2, 4, 196>}, {transform_indices = @transform_2, window_bounds = array<i64: 1, 2, 8, 196>}, {transform_indices = @transform_3, window_bounds = array<i64: 1, 16, 144>}, {pipeline_mode = #tpu.pipeline_mode<synchronous>, transform_indices = @transform_4, window_bounds = array<i64: 2, 144>}, {pipeline_mode = #tpu.pipeline_mode<synchronous>, transform_indices = @transform_5, window_bounds = array<i64: 9, 16, 1>}, {pipeline_mode = #tpu.pipeline_mode<synchronous>, transform_indices = @transform_6, window_bounds = array<i64: 16, 1>}, {pipeline_mode = #tpu.pipeline_mode<synchronous>, transform_indices = @transform_7, window_bounds = array<i64: 8, 16>}, {pipeline_mode = #tpu.pipeline_mode<synchronous>, transform_indices = @transform_8, window_bounds = array<i64: 8, 1>}, {transform_indices = @transform_9, window_bounds = array<i64: 1, 8, 144>}, {transform_indices = @transform_10, window_bounds = array<i64: 1, 8, 144>}]} {
    %c0 = arith.constant 0 : index
    %c0_0 = arith.constant 0 : index
    %c0_1 = arith.constant 0 : index
    %c0_2 = arith.constant 0 : index
    %0 = vector.load %arg1[%c0, %c0_0, %c0_1, %c0_2] : memref<1x2x144x4xf32, #tpu.memory_space<vmem>>, vector<1x1x144x4xf32>
    %1 = vector.shape_cast %0 : vector<1x1x144x4xf32> to vector<144x4xf32>
    %cst = arith.constant 5.000000e-01 : f32
    %2 = vector.broadcast %cst : f32 to vector<144x4xf32>
    %3 = arith.mulf %1, %2 : vector<144x4xf32>
    %c0_3 = arith.constant 0 : index
    %c0_4 = arith.constant 0 : index
    %c0_5 = arith.constant 0 : index
    %c0_6 = arith.constant 0 : index
    %4 = vector.load %arg2[%c0_3, %c0_4, %c0_5, %c0_6] : memref<1x2x4x196xf32, #tpu.memory_space<vmem>>, vector<1x1x4x196xf32>
    %5 = vector.shape_cast %4 : vector<1x1x4x196xf32> to vector<4x196xf32>
    %cst_7 = arith.constant dense<0.000000e+00> : vector<144x196xf32>
    %6 = tpu.matmul %3, %5, %cst_7 {dimension_numbers = #tpu.dot_dimension_numbers<[1], [0], [0], [1], [0, 0, 1, 1], [], []>} : vector<144x4xf32>, vector<4x196xf32>, vector<144x196xf32> -> vector<144x196xf32>
    %cst_8 = arith.constant dense<0xFF800000> : vector<144xf32>
    %7 = vector.multi_reduction <maximumf>, %6, %cst_8 [1] : vector<144x196xf32> to vector<144xf32>
    %8 = vector.shape_cast %7 : vector<144xf32> to vector<144x1xf32>
    %9 = vector.broadcast %8 : vector<144x1xf32> to vector<144x196xf32>
    %10 = arith.subf %6, %9 : vector<144x196xf32>
    %11 = math.exp %10 : vector<144x196xf32>
    %cst_9 = arith.constant dense<0.000000e+00> : vector<144xf32>
    %12 = vector.multi_reduction <add>, %11, %cst_9 [1] : vector<144x196xf32> to vector<144xf32>
    %13 = vector.shape_cast %12 : vector<144xf32> to vector<144x1xf32>
    %14 = tpu.reciprocal %13 {approx = true} : vector<144x1xf32> -> vector<144x1xf32>
    %15 = vector.broadcast %14 : vector<144x1xf32> to vector<144x196xf32>
    %16 = arith.mulf %11, %15 : vector<144x196xf32>
    %c0_10 = arith.constant 0 : index
    %c0_11 = arith.constant 0 : index
    %c0_12 = arith.constant 0 : index
    %c0_13 = arith.constant 0 : index
    %17 = vector.load %arg3[%c0_10, %c0_11, %c0_12, %c0_13] : memref<1x2x8x196xf32, #tpu.memory_space<vmem>>, vector<1x1x8x196xf32>
    %18 = vector.shape_cast %17 : vector<1x1x8x196xf32> to vector<8x196xf32>
    %cst_14 = arith.constant dense<0.000000e+00> : vector<8x144xf32>
    %19 = tpu.matmul %18, %16, %cst_14 {dimension_numbers = #tpu.dot_dimension_numbers<[1], [1], [0], [0], [0, 0, 1, 0], [], []>} : vector<8x196xf32>, vector<144x196xf32>, vector<8x144xf32> -> vector<8x144xf32>
    %c0_15 = arith.constant 0 : index
    %c1 = arith.constant 1 : index
    %c0_16 = arith.constant 0 : index
    %c0_17 = arith.constant 0 : index
    %20 = vector.load %arg1[%c0_15, %c1, %c0_16, %c0_17] : memref<1x2x144x4xf32, #tpu.memory_space<vmem>>, vector<1x1x144x4xf32>
    %21 = vector.shape_cast %20 : vector<1x1x144x4xf32> to vector<144x4xf32>
    %cst_18 = arith.constant 5.000000e-01 : f32
    %22 = vector.broadcast %cst_18 : f32 to vector<144x4xf32>
    %23 = arith.mulf %21, %22 : vector<144x4xf32>
    %c0_19 = arith.constant 0 : index
    %c1_20 = arith.constant 1 : index
    %c0_21 = arith.constant 0 : index
    %c0_22 = arith.constant 0 : index
    %24 = vector.load %arg2[%c0_19, %c1_20, %c0_21, %c0_22] : memref<1x2x4x196xf32, #tpu.memory_space<vmem>>, vector<1x1x4x196xf32>
    %25 = vector.shape_cast %24 : vector<1x1x4x196xf32> to vector<4x196xf32>
    %cst_23 = arith.constant dense<0.000000e+00> : vector<144x196xf32>
    %26 = tpu.matmul %23, %25, %cst_23 {dimension_numbers = #tpu.dot_dimension_numbers<[1], [0], [0], [1], [0, 0, 1, 1], [], []>} : vector<144x4xf32>, vector<4x196xf32>, vector<144x196xf32> -> vector<144x196xf32>
    %cst_24 = arith.constant dense<0xFF800000> : vector<144xf32>
    %27 = vector.multi_reduction <maximumf>, %26, %cst_24 [1] : vector<144x196xf32> to vector<144xf32>
    %28 = vector.shape_cast %27 : vector<144xf32> to vector<144x1xf32>
    %29 = vector.broadcast %28 : vector<144x1xf32> to vector<144x196xf32>
    %30 = arith.subf %26, %29 : vector<144x196xf32>
    %31 = math.exp %30 : vector<144x196xf32>
    %cst_25 = arith.constant dense<0.000000e+00> : vector<144xf32>
    %32 = vector.multi_reduction <add>, %31, %cst_25 [1] : vector<144x196xf32> to vector<144xf32>
    %33 = vector.shape_cast %32 : vector<144xf32> to vector<144x1xf32>
    %34 = tpu.reciprocal %33 {approx = true} : vector<144x1xf32> -> vector<144x1xf32>
    %35 = vector.broadcast %34 : vector<144x1xf32> to vector<144x196xf32>
    %36 = arith.mulf %31, %35 : vector<144x196xf32>
    %c0_26 = arith.constant 0 : index
    %c1_27 = arith.constant 1 : index
    %c0_28 = arith.constant 0 : index
    %c0_29 = arith.constant 0 : index
    %37 = vector.load %arg3[%c0_26, %c1_27, %c0_28, %c0_29] : memref<1x2x8x196xf32, #tpu.memory_space<vmem>>, vector<1x1x8x196xf32>
    %38 = vector.shape_cast %37 : vector<1x1x8x196xf32> to vector<8x196xf32>
    %cst_30 = arith.constant dense<0.000000e+00> : vector<8x144xf32>
    %39 = tpu.matmul %38, %36, %cst_30 {dimension_numbers = #tpu.dot_dimension_numbers<[1], [1], [0], [0], [0, 0, 1, 0], [], []>} : vector<8x196xf32>, vector<144x196xf32>, vector<8x144xf32> -> vector<8x144xf32>
    %40 = tpu.concatenate %19, %39 in 0 : vector<8x144xf32>, vector<8x144xf32> -> vector<16x144xf32>
    %c0_31 = arith.constant 0 : index
    %c0_32 = arith.constant 0 : index
    %c0_33 = arith.constant 0 : index
    %41 = vector.load %arg4[%c0_31, %c0_32, %c0_33] : memref<1x16x144xf32, #tpu.memory_space<vmem>>, vector<1x16x144xf32>
    %42 = vector.shape_cast %41 : vector<1x16x144xf32> to vector<16x144xf32>
    %cst_34 = arith.constant 3.000000e+00 : f32
    %43 = vector.broadcast %cst_34 : f32 to vector<16x144xf32>
    %44 = arith.addf %42, %43 : vector<16x144xf32>
    %cst_35 = arith.constant 0.000000e+00 : f32
    %cst_36 = arith.constant 6.000000e+00 : f32
    %45 = vector.broadcast %cst_35 : f32 to vector<16x144xf32>
    %46 = arith.maximumf %45, %44 : vector<16x144xf32>
    %47 = vector.broadcast %cst_36 : f32 to vector<16x144xf32>
    %48 = arith.minimumf %47, %46 : vector<16x144xf32>
    %49 = arith.mulf %42, %48 : vector<16x144xf32>
    %cst_37 = arith.constant 0.166666672 : f32
    %50 = vector.broadcast %cst_37 : f32 to vector<16x144xf32>
    %51 = arith.mulf %49, %50 : vector<16x144xf32>
    %cst_38 = arith.constant 0.000000e+00 : f32
    %52 = vector.broadcast %cst_38 : f32 to vector<16x170xf32>
    %c0_39 = arith.constant 0 : index
    %c0_40 = arith.constant 0 : index
    %53 = vector.load %arg12[%c0_39, %c0_40] : memref<16x170xf32, #tpu.memory_space<vmem>>, vector<16x170xf32>
    tpu.vector_store %arg12[%c0_39, %c0_40], %52 {strides = array<i32>} : memref<16x170xf32, #tpu.memory_space<vmem>>, vector<16x170xf32>,
    %c0_41 = arith.constant 0 : index
    %c13 = arith.constant 13 : index
    %54 = vector.load %arg12[%c0_41, %c13] : memref<16x170xf32, #tpu.memory_space<vmem>>, vector<16x144xf32>
    tpu.vector_store %arg12[%c0_41, %c13], %51 {strides = array<i32>} : memref<16x170xf32, #tpu.memory_space<vmem>>, vector<16x144xf32>,
    %cst_42 = arith.constant 0.000000e+00 : f32
    %55 = vector.broadcast %cst_42 : f32 to vector<16x144xf32>
    %c0_43 = arith.constant 0 : index
    %c0_44 = arith.constant 0 : index
    %56 = vector.load %arg12[%c0_43, %c0_44] : memref<16x170xf32, #tpu.memory_space<vmem>>, vector<16x144xf32>
    %c0_45 = arith.constant 0 : index
    %c0_46 = arith.constant 0 : index
    %57 = vector.load %arg5[%c0_45, %c0_46] : memref<2x144xf32, #tpu.memory_space<vmem>>, vector<1x144xf32>
    %58 = vector.broadcast %57 : vector<1x144xf32> to vector<16x144xf32>
    %59 = arith.mulf %56, %58 : vector<16x144xf32>
    %c0_47 = arith.constant 0 : index
    %c0_48 = arith.constant 0 : index
    %c0_49 = arith.constant 0 : index
    %60 = vector.load %arg6[%c0_47, %c0_48, %c0_49] : memref<9x16x1xf32, #tpu.memory_space<vmem>>, vector<1x16x1xf32>
    %61 = vector.shape_cast %60 : vector<1x16x1xf32> to vector<16x1xf32>
    %62 = vector.broadcast %61 : vector<16x1xf32> to vector<16x144xf32>
    %63 = arith.mulf %59, %62 : vector<16x144xf32>
    %64 = arith.addf %55, %63 : vector<16x144xf32>
    %c0_50 = arith.constant 0 : index
    %c1_51 = arith.constant 1 : index
    %65 = vector.load %arg12[%c0_50, %c1_51] : memref<16x170xf32, #tpu.memory_space<vmem>>, vector<16x144xf32>
    %c1_52 = arith.constant 1 : index
    %c0_53 = arith.constant 0 : index
    %c0_54 = arith.constant 0 : index
    %66 = vector.load %arg6[%c1_52, %c0_53, %c0_54] : memref<9x16x1xf32, #tpu.memory_space<vmem>>, vector<1x16x1xf32>
    %67 = vector.shape_cast %66 : vector<1x16x1xf32> to vector<16x1xf32>
    %68 = vector.broadcast %67 : vector<16x1xf32> to vector<16x144xf32>
    %69 = arith.mulf %65, %68 : vector<16x144xf32>
    %70 = arith.addf %64, %69 : vector<16x144xf32>
    %c0_55 = arith.constant 0 : index
    %c2 = arith.constant 2 : index
    %71 = vector.load %arg12[%c0_55, %c2] : memref<16x170xf32, #tpu.memory_space<vmem>>, vector<16x144xf32>
    %c1_56 = arith.constant 1 : index
    %c0_57 = arith.constant 0 : index
    %72 = vector.load %arg5[%c1_56, %c0_57] : memref<2x144xf32, #tpu.memory_space<vmem>>, vector<1x144xf32>
    %73 = vector.broadcast %72 : vector<1x144xf32> to vector<16x144xf32>
    %74 = arith.mulf %71, %73 : vector<16x144xf32>
    %c2_58 = arith.constant 2 : index
    %c0_59 = arith.constant 0 : index
    %c0_60 = arith.constant 0 : index
    %75 = vector.load %arg6[%c2_58, %c0_59, %c0_60] : memref<9x16x1xf32, #tpu.memory_space<vmem>>, vector<1x16x1xf32>
    %76 = vector.shape_cast %75 : vector<1x16x1xf32> to vector<16x1xf32>
    %77 = vector.broadcast %76 : vector<16x1xf32> to vector<16x144xf32>
    %78 = arith.mulf %74, %77 : vector<16x144xf32>
    %79 = arith.addf %70, %78 : vector<16x144xf32>
    %c0_61 = arith.constant 0 : index
    %c12 = arith.constant 12 : index
    %80 = vector.load %arg12[%c0_61, %c12] : memref<16x170xf32, #tpu.memory_space<vmem>>, vector<16x144xf32>
    %c0_62 = arith.constant 0 : index
    %c0_63 = arith.constant 0 : index
    %81 = vector.load %arg5[%c0_62, %c0_63] : memref<2x144xf32, #tpu.memory_space<vmem>>, vector<1x144xf32>
    %82 = vector.broadcast %81 : vector<1x144xf32> to vector<16x144xf32>
    %83 = arith.mulf %80, %82 : vector<16x144xf32>
    %c3 = arith.constant 3 : index
    %c0_64 = arith.constant 0 : index
    %c0_65 = arith.constant 0 : index
    %84 = vector.load %arg6[%c3, %c0_64, %c0_65] : memref<9x16x1xf32, #tpu.memory_space<vmem>>, vector<1x16x1xf32>
    %85 = vector.shape_cast %84 : vector<1x16x1xf32> to vector<16x1xf32>
    %86 = vector.broadcast %85 : vector<16x1xf32> to vector<16x144xf32>
    %87 = arith.mulf %83, %86 : vector<16x144xf32>
    %88 = arith.addf %79, %87 : vector<16x144xf32>
    %c0_66 = arith.constant 0 : index
    %c13_67 = arith.constant 13 : index
    %89 = vector.load %arg12[%c0_66, %c13_67] : memref<16x170xf32, #tpu.memory_space<vmem>>, vector<16x144xf32>
    %c4 = arith.constant 4 : index
    %c0_68 = arith.constant 0 : index
    %c0_69 = arith.constant 0 : index
    %90 = vector.load %arg6[%c4, %c0_68, %c0_69] : memref<9x16x1xf32, #tpu.memory_space<vmem>>, vector<1x16x1xf32>
    %91 = vector.shape_cast %90 : vector<1x16x1xf32> to vector<16x1xf32>
    %92 = vector.broadcast %91 : vector<16x1xf32> to vector<16x144xf32>
    %93 = arith.mulf %89, %92 : vector<16x144xf32>
    %94 = arith.addf %88, %93 : vector<16x144xf32>
    %c0_70 = arith.constant 0 : index
    %c14 = arith.constant 14 : index
    %95 = vector.load %arg12[%c0_70, %c14] : memref<16x170xf32, #tpu.memory_space<vmem>>, vector<16x144xf32>
    %c1_71 = arith.constant 1 : index
    %c0_72 = arith.constant 0 : index
    %96 = vector.load %arg5[%c1_71, %c0_72] : memref<2x144xf32, #tpu.memory_space<vmem>>, vector<1x144xf32>
    %97 = vector.broadcast %96 : vector<1x144xf32> to vector<16x144xf32>
    %98 = arith.mulf %95, %97 : vector<16x144xf32>
    %c5 = arith.constant 5 : index
    %c0_73 = arith.constant 0 : index
    %c0_74 = arith.constant 0 : index
    %99 = vector.load %arg6[%c5, %c0_73, %c0_74] : memref<9x16x1xf32, #tpu.memory_space<vmem>>, vector<1x16x1xf32>
    %100 = vector.shape_cast %99 : vector<1x16x1xf32> to vector<16x1xf32>
    %101 = vector.broadcast %100 : vector<16x1xf32> to vector<16x144xf32>
    %102 = arith.mulf %98, %101 : vector<16x144xf32>
    %103 = arith.addf %94, %102 : vector<16x144xf32>
    %c0_75 = arith.constant 0 : index
    %c24 = arith.constant 24 : index
    %104 = vector.load %arg12[%c0_75, %c24] : memref<16x170xf32, #tpu.memory_space<vmem>>, vector<16x144xf32>
    %c0_76 = arith.constant 0 : index
    %c0_77 = arith.constant 0 : index
    %105 = vector.load %arg5[%c0_76, %c0_77] : memref<2x144xf32, #tpu.memory_space<vmem>>, vector<1x144xf32>
    %106 = vector.broadcast %105 : vector<1x144xf32> to vector<16x144xf32>
    %107 = arith.mulf %104, %106 : vector<16x144xf32>
    %c6 = arith.constant 6 : index
    %c0_78 = arith.constant 0 : index
    %c0_79 = arith.constant 0 : index
    %108 = vector.load %arg6[%c6, %c0_78, %c0_79] : memref<9x16x1xf32, #tpu.memory_space<vmem>>, vector<1x16x1xf32>
    %109 = vector.shape_cast %108 : vector<1x16x1xf32> to vector<16x1xf32>
    %110 = vector.broadcast %109 : vector<16x1xf32> to vector<16x144xf32>
    %111 = arith.mulf %107, %110 : vector<16x144xf32>
    %112 = arith.addf %103, %111 : vector<16x144xf32>
    %c0_80 = arith.constant 0 : index
    %c25 = arith.constant 25 : index
    %113 = vector.load %arg12[%c0_80, %c25] : memref<16x170xf32, #tpu.memory_space<vmem>>, vector<16x144xf32>
    %c7 = arith.constant 7 : index
    %c0_81 = arith.constant 0 : index
    %c0_82 = arith.constant 0 : index
    %114 = vector.load %arg6[%c7, %c0_81, %c0_82] : memref<9x16x1xf32, #tpu.memory_space<vmem>>, vector<1x16x1xf32>
    %115 = vector.shape_cast %114 : vector<1x16x1xf32> to vector<16x1xf32>
    %116 = vector.broadcast %115 : vector<16x1xf32> to vector<16x144xf32>
    %117 = arith.mulf %113, %116 : vector<16x144xf32>
    %118 = arith.addf %112, %117 : vector<16x144xf32>
    %c0_83 = arith.constant 0 : index
    %c26 = arith.constant 26 : index
    %119 = vector.load %arg12[%c0_83, %c26] : memref<16x170xf32, #tpu.memory_space<vmem>>, vector<16x144xf32>
    %c1_84 = arith.constant 1 : index
    %c0_85 = arith.constant 0 : index
    %120 = vector.load %arg5[%c1_84, %c0_85] : memref<2x144xf32, #tpu.memory_space<vmem>>, vector<1x144xf32>
    %121 = vector.broadcast %120 : vector<1x144xf32> to vector<16x144xf32>
    %122 = arith.mulf %119, %121 : vector<16x144xf32>
    %c8 = arith.constant 8 : index
    %c0_86 = arith.constant 0 : index
    %c0_87 = arith.constant 0 : index
    %123 = vector.load %arg6[%c8, %c0_86, %c0_87] : memref<9x16x1xf32, #tpu.memory_space<vmem>>, vector<1x16x1xf32>
    %124 = vector.shape_cast %123 : vector<1x16x1xf32> to vector<16x1xf32>
    %125 = vector.broadcast %124 : vector<16x1xf32> to vector<16x144xf32>
    %126 = arith.mulf %122, %125 : vector<16x144xf32>
    %127 = arith.addf %118, %126 : vector<16x144xf32>
    %c0_88 = arith.constant 0 : index
    %c0_89 = arith.constant 0 : index
    %128 = vector.load %arg7[%c0_88, %c0_89] : memref<16x1xf32, #tpu.memory_space<vmem>>, vector<16x1xf32>
    %129 = vector.broadcast %128 : vector<16x1xf32> to vector<16x144xf32>
    %130 = arith.addf %127, %129 : vector<16x144xf32>
    %131 = arith.addf %40, %130 : vector<16x144xf32>
    %cst_90 = arith.constant dense<0.000000e+00> : vector<16xf32>
    %132 = vector.multi_reduction <add>, %131, %cst_90 [1] : vector<16x144xf32> to vector<16xf32>
    %133 = vector.shape_cast %132 : vector<16xf32> to vector<16x1xf32>
    %cst_91 = arith.constant 1.440000e+02 : f32
    %134 = vector.broadcast %cst_91 : f32 to vector<16x1xf32>
    %135 = arith.divf %133, %134 : vector<16x1xf32>
    %136 = vector.broadcast %135 : vector<16x1xf32> to vector<16x144xf32>
    %137 = arith.subf %131, %136 : vector<16x144xf32>
    %138 = arith.mulf %137, %137 : vector<16x144xf32>
    %cst_92 = arith.constant dense<0.000000e+00> : vector<16xf32>
    %139 = vector.multi_reduction <add>, %138, %cst_92 [1] : vector<16x144xf32> to vector<16xf32>
    %140 = vector.shape_cast %139 : vector<16xf32> to vector<16x1xf32>
    %cst_93 = arith.constant 1.440000e+02 : f32
    %141 = vector.broadcast %cst_93 : f32 to vector<16x1xf32>
    %142 = arith.divf %140, %141 : vector<16x1xf32>
    %cst_94 = arith.constant 9.99999974E-6 : f32
    %143 = vector.broadcast %cst_94 : f32 to vector<16x1xf32>
    %144 = arith.addf %142, %143 : vector<16x1xf32>
    %145 = math.rsqrt %144 : vector<16x1xf32>
    %146 = vector.broadcast %145 : vector<16x1xf32> to vector<16x144xf32>
    %147 = arith.mulf %137, %146 : vector<16x144xf32>
    %cst_95 = arith.constant 3.000000e+00 : f32
    %148 = vector.broadcast %cst_95 : f32 to vector<16x144xf32>
    %149 = arith.addf %147, %148 : vector<16x144xf32>
    %cst_96 = arith.constant 0.000000e+00 : f32
    %cst_97 = arith.constant 6.000000e+00 : f32
    %150 = vector.broadcast %cst_96 : f32 to vector<16x144xf32>
    %151 = arith.maximumf %150, %149 : vector<16x144xf32>
    %152 = vector.broadcast %cst_97 : f32 to vector<16x144xf32>
    %153 = arith.minimumf %152, %151 : vector<16x144xf32>
    %154 = arith.mulf %147, %153 : vector<16x144xf32>
    %cst_98 = arith.constant 0.166666672 : f32
    %155 = vector.broadcast %cst_98 : f32 to vector<16x144xf32>
    %156 = arith.mulf %154, %155 : vector<16x144xf32>
    %c0_99 = arith.constant 0 : index
    %c0_100 = arith.constant 0 : index
    %157 = vector.load %arg8[%c0_99, %c0_100] : memref<8x16xf32, #tpu.memory_space<vmem>>, vector<8x16xf32>
    %cst_101 = arith.constant dense<0.000000e+00> : vector<8x144xf32>
    %158 = tpu.matmul %157, %156, %cst_101 {dimension_numbers = #tpu.dot_dimension_numbers<[1], [0], [0], [1], [0, 0, 1, 1], [], []>} : vector<8x16xf32>, vector<16x144xf32>, vector<8x144xf32> -> vector<8x144xf32>
    %c0_102 = arith.constant 0 : index
    %c0_103 = arith.constant 0 : index
    %159 = vector.load %arg9[%c0_102, %c0_103] : memref<8x1xf32, #tpu.memory_space<vmem>>, vector<8x1xf32>
    %160 = vector.broadcast %159 : vector<8x1xf32> to vector<8x144xf32>
    %161 = arith.addf %158, %160 : vector<8x144xf32>
    %c0_104 = arith.constant 0 : index
    %c0_105 = arith.constant 0 : index
    %c0_106 = arith.constant 0 : index
    %162 = vector.load %arg10[%c0_104, %c0_105, %c0_106] : memref<1x8x144xf32, #tpu.memory_space<vmem>>, vector<1x8x144xf32>
    %163 = vector.shape_cast %162 : vector<1x8x144xf32> to vector<8x144xf32>
    %164 = arith.addf %161, %163 : vector<8x144xf32>
    %c0_107 = arith.constant 0 : index
    %c0_108 = arith.constant 0 : index
    %c0_109 = arith.constant 0 : index
    %165 = vector.load %arg11[%c0_107, %c0_108, %c0_109] : memref<1x8x144xf32, #tpu.memory_space<vmem>>, vector<1x8x144xf32>
    %166 = vector.shape_cast %165 : vector<1x8x144xf32> to vector<8x144xf32>
    %167 = vector.shape_cast %164 : vector<8x144xf32> to vector<1x8x144xf32>
    tpu.vector_store %arg11[%c0_107, %c0_108, %c0_109], %167 {strides = array<i32>} : memref<1x8x144xf32, #tpu.memory_space<vmem>>, vector<1x8x144xf32>,
    return
  }
  func.func @transform_0(%arg0: i32) -> (i32, i32, i32, i32) {
    %c0_i32 = arith.constant 0 : i32
    %c0_i32_0 = arith.constant 0 : i32
    %c0_i32_1 = arith.constant 0 : i32
    %c0_i32_2 = arith.constant 0 : i32
    return %arg0, %c0_i32, %c0_i32_0, %c0_i32_1 : i32, i32, i32, i32
  }
  func.func @transform_1(%arg0: i32) -> (i32, i32, i32, i32) {
    %c0_i32 = arith.constant 0 : i32
    %c0_i32_0 = arith.constant 0 : i32
    %c0_i32_1 = arith.constant 0 : i32
    %c0_i32_2 = arith.constant 0 : i32
    return %arg0, %c0_i32, %c0_i32_0, %c0_i32_1 : i32, i32, i32, i32
  }
  func.func @transform_2(%arg0: i32) -> (i32, i32, i32, i32) {
    %c0_i32 = arith.constant 0 : i32
    %c0_i32_0 = arith.constant 0 : i32
    %c0_i32_1 = arith.constant 0 : i32
    %c0_i32_2 = arith.constant 0 : i32
    return %arg0, %c0_i32, %c0_i32_0, %c0_i32_1 : i32, i32, i32, i32
  }
  func.func @transform_3(%arg0: i32) -> (i32, i32, i32) {
    %c0_i32 = arith.constant 0 : i32
    %c0_i32_0 = arith.constant 0 : i32
    %c0_i32_1 = arith.constant 0 : i32
    return %arg0, %c0_i32, %c0_i32_0 : i32, i32, i32
  }
  func.func @transform_4(%arg0: i32) -> (i32, i32) {
    %c0_i32 = arith.constant 0 : i32
    %c0_i32_0 = arith.constant 0 : i32
    %c0_i32_1 = arith.constant 0 : i32
    return %c0_i32, %c0_i32_0 : i32, i32
  }
  func.func @transform_5(%arg0: i32) -> (i32, i32, i32) {
    %c0_i32 = arith.constant 0 : i32
    %c0_i32_0 = arith.constant 0 : i32
    %c0_i32_1 = arith.constant 0 : i32
    %c0_i32_2 = arith.constant 0 : i32
    return %c0_i32, %c0_i32_0, %c0_i32_1 : i32, i32, i32
  }
  func.func @transform_6(%arg0: i32) -> (i32, i32) {
    %c0_i32 = arith.constant 0 : i32
    %c0_i32_0 = arith.constant 0 : i32
    %c0_i32_1 = arith.constant 0 : i32
    return %c0_i32, %c0_i32_0 : i32, i32
  }
  func.func @transform_7(%arg0: i32) -> (i32, i32) {
    %c0_i32 = arith.constant 0 : i32
    %c0_i32_0 = arith.constant 0 : i32
    %c0_i32_1 = arith.constant 0 : i32
    return %c0_i32, %c0_i32_0 : i32, i32
  }
  func.func @transform_8(%arg0: i32) -> (i32, i32) {
    %c0_i32 = arith.constant 0 : i32
    %c0_i32_0 = arith.constant 0 : i32
    %c0_i32_1 = arith.constant 0 : i32
    return %c0_i32, %c0_i32_0 : i32, i32
  }
  func.func @transform_9(%arg0: i32) -> (i32, i32, i32) {
    %c0_i32 = arith.constant 0 : i32
    %c0_i32_0 = arith.constant 0 : i32
    %c0_i32_1 = arith.constant 0 : i32
    return %arg0, %c0_i32, %c0_i32_0 : i32, i32, i32
  }
  func.func @transform_10(%arg0: i32) -> (i32, i32, i32) {
    %c0_i32 = arith.constant 0 : i32
    %c0_i32_0 = arith.constant 0 : i32
    %c0_i32_1 = arith.constant 0 : i32
    return %arg0, %c0_i32, %c0_i32_0 : i32, i32, i32
  }
}

module attributes {stable_mosaic.version = 11 : i64} {
  func.func @_mlp_kernel(%arg0: i32, %arg1: memref<1x8x144xf32, #tpu.memory_space<vmem>>, %arg2: memref<32x8xf32, #tpu.memory_space<vmem>>, %arg3: memref<32x1xf32, #tpu.memory_space<vmem>>, %arg4: memref<9x32x1xf32, #tpu.memory_space<vmem>>, %arg5: memref<32x1xf32, #tpu.memory_space<vmem>>, %arg6: memref<2x144xf32, #tpu.memory_space<vmem>>, %arg7: memref<8x32xf32, #tpu.memory_space<vmem>>, %arg8: memref<8x1xf32, #tpu.memory_space<vmem>>, %arg9: memref<1x8x144xf32, #tpu.memory_space<vmem>>, %arg10: memref<32x170xf32, #tpu.memory_space<vmem>>) attributes {dimension_semantics = [#tpu.dimension_semantics<parallel>], iteration_bounds = array<i64: 2>, scalar_prefetch = 0 : i64, scratch_operands = 1 : i64, tpu.core_type = #tpu.core_type<tc>, window_params = [{transform_indices = @transform_0, window_bounds = array<i64: 1, 8, 144>}, {pipeline_mode = #tpu.pipeline_mode<synchronous>, transform_indices = @transform_1, window_bounds = array<i64: 32, 8>}, {pipeline_mode = #tpu.pipeline_mode<synchronous>, transform_indices = @transform_2, window_bounds = array<i64: 32, 1>}, {pipeline_mode = #tpu.pipeline_mode<synchronous>, transform_indices = @transform_3, window_bounds = array<i64: 9, 32, 1>}, {pipeline_mode = #tpu.pipeline_mode<synchronous>, transform_indices = @transform_4, window_bounds = array<i64: 32, 1>}, {pipeline_mode = #tpu.pipeline_mode<synchronous>, transform_indices = @transform_5, window_bounds = array<i64: 2, 144>}, {pipeline_mode = #tpu.pipeline_mode<synchronous>, transform_indices = @transform_6, window_bounds = array<i64: 8, 32>}, {pipeline_mode = #tpu.pipeline_mode<synchronous>, transform_indices = @transform_7, window_bounds = array<i64: 8, 1>}, {transform_indices = @transform_8, window_bounds = array<i64: 1, 8, 144>}]} {
    %c0 = arith.constant 0 : index
    %c0_0 = arith.constant 0 : index
    %c0_1 = arith.constant 0 : index
    %0 = vector.load %arg1[%c0, %c0_0, %c0_1] : memref<1x8x144xf32, #tpu.memory_space<vmem>>, vector<1x8x144xf32>
    %1 = vector.shape_cast %0 : vector<1x8x144xf32> to vector<8x144xf32>
    %c0_2 = arith.constant 0 : index
    %c0_3 = arith.constant 0 : index
    %2 = vector.load %arg2[%c0_2, %c0_3] : memref<32x8xf32, #tpu.memory_space<vmem>>, vector<32x8xf32>
    %cst = arith.constant dense<0.000000e+00> : vector<8xf32>
    %3 = vector.multi_reduction <add>, %1, %cst [1] : vector<8x144xf32> to vector<8xf32>
    %4 = vector.shape_cast %3 : vector<8xf32> to vector<8x1xf32>
    %cst_4 = arith.constant 1.440000e+02 : f32
    %5 = vector.broadcast %cst_4 : f32 to vector<8x1xf32>
    %6 = arith.divf %4, %5 : vector<8x1xf32>
    %7 = vector.broadcast %6 : vector<8x1xf32> to vector<8x144xf32>
    %8 = arith.subf %1, %7 : vector<8x144xf32>
    %9 = arith.mulf %8, %8 : vector<8x144xf32>
    %cst_5 = arith.constant dense<0.000000e+00> : vector<8xf32>
    %10 = vector.multi_reduction <add>, %9, %cst_5 [1] : vector<8x144xf32> to vector<8xf32>
    %11 = vector.shape_cast %10 : vector<8xf32> to vector<8x1xf32>
    %cst_6 = arith.constant 1.440000e+02 : f32
    %12 = vector.broadcast %cst_6 : f32 to vector<8x1xf32>
    %13 = arith.divf %11, %12 : vector<8x1xf32>
    %cst_7 = arith.constant 9.99999974E-6 : f32
    %14 = vector.broadcast %cst_7 : f32 to vector<8x1xf32>
    %15 = arith.addf %13, %14 : vector<8x1xf32>
    %16 = math.rsqrt %15 : vector<8x1xf32>
    %17 = vector.broadcast %16 : vector<8x1xf32> to vector<8x144xf32>
    %18 = arith.mulf %8, %17 : vector<8x144xf32>
    %cst_8 = arith.constant dense<0.000000e+00> : vector<32x144xf32>
    %19 = tpu.matmul %2, %18, %cst_8 {dimension_numbers = #tpu.dot_dimension_numbers<[1], [0], [0], [1], [0, 0, 1, 1], [], []>} : vector<32x8xf32>, vector<8x144xf32>, vector<32x144xf32> -> vector<32x144xf32>
    %c0_9 = arith.constant 0 : index
    %c0_10 = arith.constant 0 : index
    %20 = vector.load %arg3[%c0_9, %c0_10] : memref<32x1xf32, #tpu.memory_space<vmem>>, vector<32x1xf32>
    %21 = vector.broadcast %20 : vector<32x1xf32> to vector<32x144xf32>
    %22 = arith.addf %19, %21 : vector<32x144xf32>
    %cst_11 = arith.constant dense<0.000000e+00> : vector<32xf32>
    %23 = vector.multi_reduction <add>, %22, %cst_11 [1] : vector<32x144xf32> to vector<32xf32>
    %24 = vector.shape_cast %23 : vector<32xf32> to vector<32x1xf32>
    %cst_12 = arith.constant 1.440000e+02 : f32
    %25 = vector.broadcast %cst_12 : f32 to vector<32x1xf32>
    %26 = arith.divf %24, %25 : vector<32x1xf32>
    %27 = vector.broadcast %26 : vector<32x1xf32> to vector<32x144xf32>
    %28 = arith.subf %22, %27 : vector<32x144xf32>
    %29 = arith.mulf %28, %28 : vector<32x144xf32>
    %cst_13 = arith.constant dense<0.000000e+00> : vector<32xf32>
    %30 = vector.multi_reduction <add>, %29, %cst_13 [1] : vector<32x144xf32> to vector<32xf32>
    %31 = vector.shape_cast %30 : vector<32xf32> to vector<32x1xf32>
    %cst_14 = arith.constant 1.440000e+02 : f32
    %32 = vector.broadcast %cst_14 : f32 to vector<32x1xf32>
    %33 = arith.divf %31, %32 : vector<32x1xf32>
    %cst_15 = arith.constant 9.99999974E-6 : f32
    %34 = vector.broadcast %cst_15 : f32 to vector<32x1xf32>
    %35 = arith.addf %33, %34 : vector<32x1xf32>
    %36 = math.rsqrt %35 : vector<32x1xf32>
    %37 = vector.broadcast %36 : vector<32x1xf32> to vector<32x144xf32>
    %38 = arith.mulf %28, %37 : vector<32x144xf32>
    %cst_16 = arith.constant 0.000000e+00 : f32
    %39 = vector.broadcast %cst_16 : f32 to vector<32x170xf32>
    %c0_17 = arith.constant 0 : index
    %c0_18 = arith.constant 0 : index
    %40 = vector.load %arg10[%c0_17, %c0_18] : memref<32x170xf32, #tpu.memory_space<vmem>>, vector<32x170xf32>
    tpu.vector_store %arg10[%c0_17, %c0_18], %39 {strides = array<i32>} : memref<32x170xf32, #tpu.memory_space<vmem>>, vector<32x170xf32>,
    %c0_19 = arith.constant 0 : index
    %c13 = arith.constant 13 : index
    %41 = vector.load %arg10[%c0_19, %c13] : memref<32x170xf32, #tpu.memory_space<vmem>>, vector<32x144xf32>
    tpu.vector_store %arg10[%c0_19, %c13], %38 {strides = array<i32>} : memref<32x170xf32, #tpu.memory_space<vmem>>, vector<32x144xf32>,
    %cst_20 = arith.constant 0.000000e+00 : f32
    %42 = vector.broadcast %cst_20 : f32 to vector<32x144xf32>
    %c0_21 = arith.constant 0 : index
    %c0_22 = arith.constant 0 : index
    %43 = vector.load %arg10[%c0_21, %c0_22] : memref<32x170xf32, #tpu.memory_space<vmem>>, vector<32x144xf32>
    %c0_23 = arith.constant 0 : index
    %c0_24 = arith.constant 0 : index
    %44 = vector.load %arg6[%c0_23, %c0_24] : memref<2x144xf32, #tpu.memory_space<vmem>>, vector<1x144xf32>
    %45 = vector.broadcast %44 : vector<1x144xf32> to vector<32x144xf32>
    %46 = arith.mulf %43, %45 : vector<32x144xf32>
    %c0_25 = arith.constant 0 : index
    %c0_26 = arith.constant 0 : index
    %c0_27 = arith.constant 0 : index
    %47 = vector.load %arg4[%c0_25, %c0_26, %c0_27] : memref<9x32x1xf32, #tpu.memory_space<vmem>>, vector<1x32x1xf32>
    %48 = vector.shape_cast %47 : vector<1x32x1xf32> to vector<32x1xf32>
    %49 = vector.broadcast %48 : vector<32x1xf32> to vector<32x144xf32>
    %50 = arith.mulf %46, %49 : vector<32x144xf32>
    %51 = arith.addf %42, %50 : vector<32x144xf32>
    %c0_28 = arith.constant 0 : index
    %c1 = arith.constant 1 : index
    %52 = vector.load %arg10[%c0_28, %c1] : memref<32x170xf32, #tpu.memory_space<vmem>>, vector<32x144xf32>
    %c1_29 = arith.constant 1 : index
    %c0_30 = arith.constant 0 : index
    %c0_31 = arith.constant 0 : index
    %53 = vector.load %arg4[%c1_29, %c0_30, %c0_31] : memref<9x32x1xf32, #tpu.memory_space<vmem>>, vector<1x32x1xf32>
    %54 = vector.shape_cast %53 : vector<1x32x1xf32> to vector<32x1xf32>
    %55 = vector.broadcast %54 : vector<32x1xf32> to vector<32x144xf32>
    %56 = arith.mulf %52, %55 : vector<32x144xf32>
    %57 = arith.addf %51, %56 : vector<32x144xf32>
    %c0_32 = arith.constant 0 : index
    %c2 = arith.constant 2 : index
    %58 = vector.load %arg10[%c0_32, %c2] : memref<32x170xf32, #tpu.memory_space<vmem>>, vector<32x144xf32>
    %c1_33 = arith.constant 1 : index
    %c0_34 = arith.constant 0 : index
    %59 = vector.load %arg6[%c1_33, %c0_34] : memref<2x144xf32, #tpu.memory_space<vmem>>, vector<1x144xf32>
    %60 = vector.broadcast %59 : vector<1x144xf32> to vector<32x144xf32>
    %61 = arith.mulf %58, %60 : vector<32x144xf32>
    %c2_35 = arith.constant 2 : index
    %c0_36 = arith.constant 0 : index
    %c0_37 = arith.constant 0 : index
    %62 = vector.load %arg4[%c2_35, %c0_36, %c0_37] : memref<9x32x1xf32, #tpu.memory_space<vmem>>, vector<1x32x1xf32>
    %63 = vector.shape_cast %62 : vector<1x32x1xf32> to vector<32x1xf32>
    %64 = vector.broadcast %63 : vector<32x1xf32> to vector<32x144xf32>
    %65 = arith.mulf %61, %64 : vector<32x144xf32>
    %66 = arith.addf %57, %65 : vector<32x144xf32>
    %c0_38 = arith.constant 0 : index
    %c12 = arith.constant 12 : index
    %67 = vector.load %arg10[%c0_38, %c12] : memref<32x170xf32, #tpu.memory_space<vmem>>, vector<32x144xf32>
    %c0_39 = arith.constant 0 : index
    %c0_40 = arith.constant 0 : index
    %68 = vector.load %arg6[%c0_39, %c0_40] : memref<2x144xf32, #tpu.memory_space<vmem>>, vector<1x144xf32>
    %69 = vector.broadcast %68 : vector<1x144xf32> to vector<32x144xf32>
    %70 = arith.mulf %67, %69 : vector<32x144xf32>
    %c3 = arith.constant 3 : index
    %c0_41 = arith.constant 0 : index
    %c0_42 = arith.constant 0 : index
    %71 = vector.load %arg4[%c3, %c0_41, %c0_42] : memref<9x32x1xf32, #tpu.memory_space<vmem>>, vector<1x32x1xf32>
    %72 = vector.shape_cast %71 : vector<1x32x1xf32> to vector<32x1xf32>
    %73 = vector.broadcast %72 : vector<32x1xf32> to vector<32x144xf32>
    %74 = arith.mulf %70, %73 : vector<32x144xf32>
    %75 = arith.addf %66, %74 : vector<32x144xf32>
    %c0_43 = arith.constant 0 : index
    %c13_44 = arith.constant 13 : index
    %76 = vector.load %arg10[%c0_43, %c13_44] : memref<32x170xf32, #tpu.memory_space<vmem>>, vector<32x144xf32>
    %c4 = arith.constant 4 : index
    %c0_45 = arith.constant 0 : index
    %c0_46 = arith.constant 0 : index
    %77 = vector.load %arg4[%c4, %c0_45, %c0_46] : memref<9x32x1xf32, #tpu.memory_space<vmem>>, vector<1x32x1xf32>
    %78 = vector.shape_cast %77 : vector<1x32x1xf32> to vector<32x1xf32>
    %79 = vector.broadcast %78 : vector<32x1xf32> to vector<32x144xf32>
    %80 = arith.mulf %76, %79 : vector<32x144xf32>
    %81 = arith.addf %75, %80 : vector<32x144xf32>
    %c0_47 = arith.constant 0 : index
    %c14 = arith.constant 14 : index
    %82 = vector.load %arg10[%c0_47, %c14] : memref<32x170xf32, #tpu.memory_space<vmem>>, vector<32x144xf32>
    %c1_48 = arith.constant 1 : index
    %c0_49 = arith.constant 0 : index
    %83 = vector.load %arg6[%c1_48, %c0_49] : memref<2x144xf32, #tpu.memory_space<vmem>>, vector<1x144xf32>
    %84 = vector.broadcast %83 : vector<1x144xf32> to vector<32x144xf32>
    %85 = arith.mulf %82, %84 : vector<32x144xf32>
    %c5 = arith.constant 5 : index
    %c0_50 = arith.constant 0 : index
    %c0_51 = arith.constant 0 : index
    %86 = vector.load %arg4[%c5, %c0_50, %c0_51] : memref<9x32x1xf32, #tpu.memory_space<vmem>>, vector<1x32x1xf32>
    %87 = vector.shape_cast %86 : vector<1x32x1xf32> to vector<32x1xf32>
    %88 = vector.broadcast %87 : vector<32x1xf32> to vector<32x144xf32>
    %89 = arith.mulf %85, %88 : vector<32x144xf32>
    %90 = arith.addf %81, %89 : vector<32x144xf32>
    %c0_52 = arith.constant 0 : index
    %c24 = arith.constant 24 : index
    %91 = vector.load %arg10[%c0_52, %c24] : memref<32x170xf32, #tpu.memory_space<vmem>>, vector<32x144xf32>
    %c0_53 = arith.constant 0 : index
    %c0_54 = arith.constant 0 : index
    %92 = vector.load %arg6[%c0_53, %c0_54] : memref<2x144xf32, #tpu.memory_space<vmem>>, vector<1x144xf32>
    %93 = vector.broadcast %92 : vector<1x144xf32> to vector<32x144xf32>
    %94 = arith.mulf %91, %93 : vector<32x144xf32>
    %c6 = arith.constant 6 : index
    %c0_55 = arith.constant 0 : index
    %c0_56 = arith.constant 0 : index
    %95 = vector.load %arg4[%c6, %c0_55, %c0_56] : memref<9x32x1xf32, #tpu.memory_space<vmem>>, vector<1x32x1xf32>
    %96 = vector.shape_cast %95 : vector<1x32x1xf32> to vector<32x1xf32>
    %97 = vector.broadcast %96 : vector<32x1xf32> to vector<32x144xf32>
    %98 = arith.mulf %94, %97 : vector<32x144xf32>
    %99 = arith.addf %90, %98 : vector<32x144xf32>
    %c0_57 = arith.constant 0 : index
    %c25 = arith.constant 25 : index
    %100 = vector.load %arg10[%c0_57, %c25] : memref<32x170xf32, #tpu.memory_space<vmem>>, vector<32x144xf32>
    %c7 = arith.constant 7 : index
    %c0_58 = arith.constant 0 : index
    %c0_59 = arith.constant 0 : index
    %101 = vector.load %arg4[%c7, %c0_58, %c0_59] : memref<9x32x1xf32, #tpu.memory_space<vmem>>, vector<1x32x1xf32>
    %102 = vector.shape_cast %101 : vector<1x32x1xf32> to vector<32x1xf32>
    %103 = vector.broadcast %102 : vector<32x1xf32> to vector<32x144xf32>
    %104 = arith.mulf %100, %103 : vector<32x144xf32>
    %105 = arith.addf %99, %104 : vector<32x144xf32>
    %c0_60 = arith.constant 0 : index
    %c26 = arith.constant 26 : index
    %106 = vector.load %arg10[%c0_60, %c26] : memref<32x170xf32, #tpu.memory_space<vmem>>, vector<32x144xf32>
    %c1_61 = arith.constant 1 : index
    %c0_62 = arith.constant 0 : index
    %107 = vector.load %arg6[%c1_61, %c0_62] : memref<2x144xf32, #tpu.memory_space<vmem>>, vector<1x144xf32>
    %108 = vector.broadcast %107 : vector<1x144xf32> to vector<32x144xf32>
    %109 = arith.mulf %106, %108 : vector<32x144xf32>
    %c8 = arith.constant 8 : index
    %c0_63 = arith.constant 0 : index
    %c0_64 = arith.constant 0 : index
    %110 = vector.load %arg4[%c8, %c0_63, %c0_64] : memref<9x32x1xf32, #tpu.memory_space<vmem>>, vector<1x32x1xf32>
    %111 = vector.shape_cast %110 : vector<1x32x1xf32> to vector<32x1xf32>
    %112 = vector.broadcast %111 : vector<32x1xf32> to vector<32x144xf32>
    %113 = arith.mulf %109, %112 : vector<32x144xf32>
    %114 = arith.addf %105, %113 : vector<32x144xf32>
    %c0_65 = arith.constant 0 : index
    %c0_66 = arith.constant 0 : index
    %115 = vector.load %arg5[%c0_65, %c0_66] : memref<32x1xf32, #tpu.memory_space<vmem>>, vector<32x1xf32>
    %116 = vector.broadcast %115 : vector<32x1xf32> to vector<32x144xf32>
    %117 = arith.addf %114, %116 : vector<32x144xf32>
    %cst_67 = arith.constant 0.000000e+00 : f32
    %cst_68 = arith.constant 6.000000e+00 : f32
    %118 = vector.broadcast %cst_67 : f32 to vector<32x144xf32>
    %119 = arith.maximumf %118, %117 : vector<32x144xf32>
    %120 = vector.broadcast %cst_68 : f32 to vector<32x144xf32>
    %121 = arith.minimumf %120, %119 : vector<32x144xf32>
    %c0_69 = arith.constant 0 : index
    %c0_70 = arith.constant 0 : index
    %122 = vector.load %arg7[%c0_69, %c0_70] : memref<8x32xf32, #tpu.memory_space<vmem>>, vector<8x32xf32>
    %cst_71 = arith.constant dense<0.000000e+00> : vector<8x144xf32>
    %123 = tpu.matmul %122, %121, %cst_71 {dimension_numbers = #tpu.dot_dimension_numbers<[1], [0], [0], [1], [0, 0, 1, 1], [], []>} : vector<8x32xf32>, vector<32x144xf32>, vector<8x144xf32> -> vector<8x144xf32>
    %c0_72 = arith.constant 0 : index
    %c0_73 = arith.constant 0 : index
    %124 = vector.load %arg8[%c0_72, %c0_73] : memref<8x1xf32, #tpu.memory_space<vmem>>, vector<8x1xf32>
    %125 = vector.broadcast %124 : vector<8x1xf32> to vector<8x144xf32>
    %126 = arith.addf %123, %125 : vector<8x144xf32>
    %127 = arith.addf %126, %1 : vector<8x144xf32>
    %c0_74 = arith.constant 0 : index
    %c0_75 = arith.constant 0 : index
    %c0_76 = arith.constant 0 : index
    %128 = vector.load %arg9[%c0_74, %c0_75, %c0_76] : memref<1x8x144xf32, #tpu.memory_space<vmem>>, vector<1x8x144xf32>
    %129 = vector.shape_cast %128 : vector<1x8x144xf32> to vector<8x144xf32>
    %130 = vector.shape_cast %127 : vector<8x144xf32> to vector<1x8x144xf32>
    tpu.vector_store %arg9[%c0_74, %c0_75, %c0_76], %130 {strides = array<i32>} : memref<1x8x144xf32, #tpu.memory_space<vmem>>, vector<1x8x144xf32>,
    return
  }
  func.func @transform_0(%arg0: i32) -> (i32, i32, i32) {
    %c0_i32 = arith.constant 0 : i32
    %c0_i32_0 = arith.constant 0 : i32
    %c0_i32_1 = arith.constant 0 : i32
    return %arg0, %c0_i32, %c0_i32_0 : i32, i32, i32
  }
  func.func @transform_1(%arg0: i32) -> (i32, i32) {
    %c0_i32 = arith.constant 0 : i32
    %c0_i32_0 = arith.constant 0 : i32
    %c0_i32_1 = arith.constant 0 : i32
    return %c0_i32, %c0_i32_0 : i32, i32
  }
  func.func @transform_2(%arg0: i32) -> (i32, i32) {
    %c0_i32 = arith.constant 0 : i32
    %c0_i32_0 = arith.constant 0 : i32
    %c0_i32_1 = arith.constant 0 : i32
    return %c0_i32, %c0_i32_0 : i32, i32
  }
  func.func @transform_3(%arg0: i32) -> (i32, i32, i32) {
    %c0_i32 = arith.constant 0 : i32
    %c0_i32_0 = arith.constant 0 : i32
    %c0_i32_1 = arith.constant 0 : i32
    %c0_i32_2 = arith.constant 0 : i32
    return %c0_i32, %c0_i32_0, %c0_i32_1 : i32, i32, i32
  }
  func.func @transform_4(%arg0: i32) -> (i32, i32) {
    %c0_i32 = arith.constant 0 : i32
    %c0_i32_0 = arith.constant 0 : i32
    %c0_i32_1 = arith.constant 0 : i32
    return %c0_i32, %c0_i32_0 : i32, i32
  }
  func.func @transform_5(%arg0: i32) -> (i32, i32) {
    %c0_i32 = arith.constant 0 : i32
    %c0_i32_0 = arith.constant 0 : i32
    %c0_i32_1 = arith.constant 0 : i32
    return %c0_i32, %c0_i32_0 : i32, i32
  }
  func.func @transform_6(%arg0: i32) -> (i32, i32) {
    %c0_i32 = arith.constant 0 : i32
    %c0_i32_0 = arith.constant 0 : i32
    %c0_i32_1 = arith.constant 0 : i32
    return %c0_i32, %c0_i32_0 : i32, i32
  }
  func.func @transform_7(%arg0: i32) -> (i32, i32) {
    %c0_i32 = arith.constant 0 : i32
    %c0_i32_0 = arith.constant 0 : i32
    %c0_i32_1 = arith.constant 0 : i32
    return %c0_i32, %c0_i32_0 : i32, i32
  }
  func.func @transform_8(%arg0: i32) -> (i32, i32, i32) {
    %c0_i32 = arith.constant 0 : i32
    %c0_i32_0 = arith.constant 0 : i32
    %c0_i32_1 = arith.constant 0 : i32
    return %arg0, %c0_i32, %c0_i32_0 : i32, i32, i32
  }
}

module attributes {stable_mosaic.version = 11 : i64} {
  func.func @_mlp_kernel(%arg0: i32, %arg1: memref<1x4x144xf32, #tpu.memory_space<vmem>>, %arg2: memref<16x4xf32, #tpu.memory_space<vmem>>, %arg3: memref<16x1xf32, #tpu.memory_space<vmem>>, %arg4: memref<9x16x1xf32, #tpu.memory_space<vmem>>, %arg5: memref<16x1xf32, #tpu.memory_space<vmem>>, %arg6: memref<2x144xf32, #tpu.memory_space<vmem>>, %arg7: memref<4x16xf32, #tpu.memory_space<vmem>>, %arg8: memref<4x1xf32, #tpu.memory_space<vmem>>, %arg9: memref<1x4x144xf32, #tpu.memory_space<vmem>>, %arg10: memref<16x170xf32, #tpu.memory_space<vmem>>) attributes {dimension_semantics = [#tpu.dimension_semantics<parallel>], iteration_bounds = array<i64: 2>, scalar_prefetch = 0 : i64, scratch_operands = 1 : i64, tpu.core_type = #tpu.core_type<tc>, window_params = [{transform_indices = @transform_0, window_bounds = array<i64: 1, 4, 144>}, {pipeline_mode = #tpu.pipeline_mode<synchronous>, transform_indices = @transform_1, window_bounds = array<i64: 16, 4>}, {pipeline_mode = #tpu.pipeline_mode<synchronous>, transform_indices = @transform_2, window_bounds = array<i64: 16, 1>}, {pipeline_mode = #tpu.pipeline_mode<synchronous>, transform_indices = @transform_3, window_bounds = array<i64: 9, 16, 1>}, {pipeline_mode = #tpu.pipeline_mode<synchronous>, transform_indices = @transform_4, window_bounds = array<i64: 16, 1>}, {pipeline_mode = #tpu.pipeline_mode<synchronous>, transform_indices = @transform_5, window_bounds = array<i64: 2, 144>}, {pipeline_mode = #tpu.pipeline_mode<synchronous>, transform_indices = @transform_6, window_bounds = array<i64: 4, 16>}, {pipeline_mode = #tpu.pipeline_mode<synchronous>, transform_indices = @transform_7, window_bounds = array<i64: 4, 1>}, {transform_indices = @transform_8, window_bounds = array<i64: 1, 4, 144>}]} {
    %c0 = arith.constant 0 : index
    %c0_0 = arith.constant 0 : index
    %c0_1 = arith.constant 0 : index
    %0 = vector.load %arg1[%c0, %c0_0, %c0_1] : memref<1x4x144xf32, #tpu.memory_space<vmem>>, vector<1x4x144xf32>
    %1 = vector.shape_cast %0 : vector<1x4x144xf32> to vector<4x144xf32>
    %c0_2 = arith.constant 0 : index
    %c0_3 = arith.constant 0 : index
    %2 = vector.load %arg2[%c0_2, %c0_3] : memref<16x4xf32, #tpu.memory_space<vmem>>, vector<16x4xf32>
    %cst = arith.constant dense<0.000000e+00> : vector<4xf32>
    %3 = vector.multi_reduction <add>, %1, %cst [1] : vector<4x144xf32> to vector<4xf32>
    %4 = vector.shape_cast %3 : vector<4xf32> to vector<4x1xf32>
    %cst_4 = arith.constant 1.440000e+02 : f32
    %5 = vector.broadcast %cst_4 : f32 to vector<4x1xf32>
    %6 = arith.divf %4, %5 : vector<4x1xf32>
    %7 = vector.broadcast %6 : vector<4x1xf32> to vector<4x144xf32>
    %8 = arith.subf %1, %7 : vector<4x144xf32>
    %9 = arith.mulf %8, %8 : vector<4x144xf32>
    %cst_5 = arith.constant dense<0.000000e+00> : vector<4xf32>
    %10 = vector.multi_reduction <add>, %9, %cst_5 [1] : vector<4x144xf32> to vector<4xf32>
    %11 = vector.shape_cast %10 : vector<4xf32> to vector<4x1xf32>
    %cst_6 = arith.constant 1.440000e+02 : f32
    %12 = vector.broadcast %cst_6 : f32 to vector<4x1xf32>
    %13 = arith.divf %11, %12 : vector<4x1xf32>
    %cst_7 = arith.constant 9.99999974E-6 : f32
    %14 = vector.broadcast %cst_7 : f32 to vector<4x1xf32>
    %15 = arith.addf %13, %14 : vector<4x1xf32>
    %16 = math.rsqrt %15 : vector<4x1xf32>
    %17 = vector.broadcast %16 : vector<4x1xf32> to vector<4x144xf32>
    %18 = arith.mulf %8, %17 : vector<4x144xf32>
    %cst_8 = arith.constant dense<0.000000e+00> : vector<16x144xf32>
    %19 = tpu.matmul %2, %18, %cst_8 {dimension_numbers = #tpu.dot_dimension_numbers<[1], [0], [0], [1], [0, 0, 1, 1], [], []>} : vector<16x4xf32>, vector<4x144xf32>, vector<16x144xf32> -> vector<16x144xf32>
    %c0_9 = arith.constant 0 : index
    %c0_10 = arith.constant 0 : index
    %20 = vector.load %arg3[%c0_9, %c0_10] : memref<16x1xf32, #tpu.memory_space<vmem>>, vector<16x1xf32>
    %21 = vector.broadcast %20 : vector<16x1xf32> to vector<16x144xf32>
    %22 = arith.addf %19, %21 : vector<16x144xf32>
    %cst_11 = arith.constant dense<0.000000e+00> : vector<16xf32>
    %23 = vector.multi_reduction <add>, %22, %cst_11 [1] : vector<16x144xf32> to vector<16xf32>
    %24 = vector.shape_cast %23 : vector<16xf32> to vector<16x1xf32>
    %cst_12 = arith.constant 1.440000e+02 : f32
    %25 = vector.broadcast %cst_12 : f32 to vector<16x1xf32>
    %26 = arith.divf %24, %25 : vector<16x1xf32>
    %27 = vector.broadcast %26 : vector<16x1xf32> to vector<16x144xf32>
    %28 = arith.subf %22, %27 : vector<16x144xf32>
    %29 = arith.mulf %28, %28 : vector<16x144xf32>
    %cst_13 = arith.constant dense<0.000000e+00> : vector<16xf32>
    %30 = vector.multi_reduction <add>, %29, %cst_13 [1] : vector<16x144xf32> to vector<16xf32>
    %31 = vector.shape_cast %30 : vector<16xf32> to vector<16x1xf32>
    %cst_14 = arith.constant 1.440000e+02 : f32
    %32 = vector.broadcast %cst_14 : f32 to vector<16x1xf32>
    %33 = arith.divf %31, %32 : vector<16x1xf32>
    %cst_15 = arith.constant 9.99999974E-6 : f32
    %34 = vector.broadcast %cst_15 : f32 to vector<16x1xf32>
    %35 = arith.addf %33, %34 : vector<16x1xf32>
    %36 = math.rsqrt %35 : vector<16x1xf32>
    %37 = vector.broadcast %36 : vector<16x1xf32> to vector<16x144xf32>
    %38 = arith.mulf %28, %37 : vector<16x144xf32>
    %cst_16 = arith.constant 0.000000e+00 : f32
    %39 = vector.broadcast %cst_16 : f32 to vector<16x170xf32>
    %c0_17 = arith.constant 0 : index
    %c0_18 = arith.constant 0 : index
    %40 = vector.load %arg10[%c0_17, %c0_18] : memref<16x170xf32, #tpu.memory_space<vmem>>, vector<16x170xf32>
    tpu.vector_store %arg10[%c0_17, %c0_18], %39 {strides = array<i32>} : memref<16x170xf32, #tpu.memory_space<vmem>>, vector<16x170xf32>,
    %c0_19 = arith.constant 0 : index
    %c13 = arith.constant 13 : index
    %41 = vector.load %arg10[%c0_19, %c13] : memref<16x170xf32, #tpu.memory_space<vmem>>, vector<16x144xf32>
    tpu.vector_store %arg10[%c0_19, %c13], %38 {strides = array<i32>} : memref<16x170xf32, #tpu.memory_space<vmem>>, vector<16x144xf32>,
    %cst_20 = arith.constant 0.000000e+00 : f32
    %42 = vector.broadcast %cst_20 : f32 to vector<16x144xf32>
    %c0_21 = arith.constant 0 : index
    %c0_22 = arith.constant 0 : index
    %43 = vector.load %arg10[%c0_21, %c0_22] : memref<16x170xf32, #tpu.memory_space<vmem>>, vector<16x144xf32>
    %c0_23 = arith.constant 0 : index
    %c0_24 = arith.constant 0 : index
    %44 = vector.load %arg6[%c0_23, %c0_24] : memref<2x144xf32, #tpu.memory_space<vmem>>, vector<1x144xf32>
    %45 = vector.broadcast %44 : vector<1x144xf32> to vector<16x144xf32>
    %46 = arith.mulf %43, %45 : vector<16x144xf32>
    %c0_25 = arith.constant 0 : index
    %c0_26 = arith.constant 0 : index
    %c0_27 = arith.constant 0 : index
    %47 = vector.load %arg4[%c0_25, %c0_26, %c0_27] : memref<9x16x1xf32, #tpu.memory_space<vmem>>, vector<1x16x1xf32>
    %48 = vector.shape_cast %47 : vector<1x16x1xf32> to vector<16x1xf32>
    %49 = vector.broadcast %48 : vector<16x1xf32> to vector<16x144xf32>
    %50 = arith.mulf %46, %49 : vector<16x144xf32>
    %51 = arith.addf %42, %50 : vector<16x144xf32>
    %c0_28 = arith.constant 0 : index
    %c1 = arith.constant 1 : index
    %52 = vector.load %arg10[%c0_28, %c1] : memref<16x170xf32, #tpu.memory_space<vmem>>, vector<16x144xf32>
    %c1_29 = arith.constant 1 : index
    %c0_30 = arith.constant 0 : index
    %c0_31 = arith.constant 0 : index
    %53 = vector.load %arg4[%c1_29, %c0_30, %c0_31] : memref<9x16x1xf32, #tpu.memory_space<vmem>>, vector<1x16x1xf32>
    %54 = vector.shape_cast %53 : vector<1x16x1xf32> to vector<16x1xf32>
    %55 = vector.broadcast %54 : vector<16x1xf32> to vector<16x144xf32>
    %56 = arith.mulf %52, %55 : vector<16x144xf32>
    %57 = arith.addf %51, %56 : vector<16x144xf32>
    %c0_32 = arith.constant 0 : index
    %c2 = arith.constant 2 : index
    %58 = vector.load %arg10[%c0_32, %c2] : memref<16x170xf32, #tpu.memory_space<vmem>>, vector<16x144xf32>
    %c1_33 = arith.constant 1 : index
    %c0_34 = arith.constant 0 : index
    %59 = vector.load %arg6[%c1_33, %c0_34] : memref<2x144xf32, #tpu.memory_space<vmem>>, vector<1x144xf32>
    %60 = vector.broadcast %59 : vector<1x144xf32> to vector<16x144xf32>
    %61 = arith.mulf %58, %60 : vector<16x144xf32>
    %c2_35 = arith.constant 2 : index
    %c0_36 = arith.constant 0 : index
    %c0_37 = arith.constant 0 : index
    %62 = vector.load %arg4[%c2_35, %c0_36, %c0_37] : memref<9x16x1xf32, #tpu.memory_space<vmem>>, vector<1x16x1xf32>
    %63 = vector.shape_cast %62 : vector<1x16x1xf32> to vector<16x1xf32>
    %64 = vector.broadcast %63 : vector<16x1xf32> to vector<16x144xf32>
    %65 = arith.mulf %61, %64 : vector<16x144xf32>
    %66 = arith.addf %57, %65 : vector<16x144xf32>
    %c0_38 = arith.constant 0 : index
    %c12 = arith.constant 12 : index
    %67 = vector.load %arg10[%c0_38, %c12] : memref<16x170xf32, #tpu.memory_space<vmem>>, vector<16x144xf32>
    %c0_39 = arith.constant 0 : index
    %c0_40 = arith.constant 0 : index
    %68 = vector.load %arg6[%c0_39, %c0_40] : memref<2x144xf32, #tpu.memory_space<vmem>>, vector<1x144xf32>
    %69 = vector.broadcast %68 : vector<1x144xf32> to vector<16x144xf32>
    %70 = arith.mulf %67, %69 : vector<16x144xf32>
    %c3 = arith.constant 3 : index
    %c0_41 = arith.constant 0 : index
    %c0_42 = arith.constant 0 : index
    %71 = vector.load %arg4[%c3, %c0_41, %c0_42] : memref<9x16x1xf32, #tpu.memory_space<vmem>>, vector<1x16x1xf32>
    %72 = vector.shape_cast %71 : vector<1x16x1xf32> to vector<16x1xf32>
    %73 = vector.broadcast %72 : vector<16x1xf32> to vector<16x144xf32>
    %74 = arith.mulf %70, %73 : vector<16x144xf32>
    %75 = arith.addf %66, %74 : vector<16x144xf32>
    %c0_43 = arith.constant 0 : index
    %c13_44 = arith.constant 13 : index
    %76 = vector.load %arg10[%c0_43, %c13_44] : memref<16x170xf32, #tpu.memory_space<vmem>>, vector<16x144xf32>
    %c4 = arith.constant 4 : index
    %c0_45 = arith.constant 0 : index
    %c0_46 = arith.constant 0 : index
    %77 = vector.load %arg4[%c4, %c0_45, %c0_46] : memref<9x16x1xf32, #tpu.memory_space<vmem>>, vector<1x16x1xf32>
    %78 = vector.shape_cast %77 : vector<1x16x1xf32> to vector<16x1xf32>
    %79 = vector.broadcast %78 : vector<16x1xf32> to vector<16x144xf32>
    %80 = arith.mulf %76, %79 : vector<16x144xf32>
    %81 = arith.addf %75, %80 : vector<16x144xf32>
    %c0_47 = arith.constant 0 : index
    %c14 = arith.constant 14 : index
    %82 = vector.load %arg10[%c0_47, %c14] : memref<16x170xf32, #tpu.memory_space<vmem>>, vector<16x144xf32>
    %c1_48 = arith.constant 1 : index
    %c0_49 = arith.constant 0 : index
    %83 = vector.load %arg6[%c1_48, %c0_49] : memref<2x144xf32, #tpu.memory_space<vmem>>, vector<1x144xf32>
    %84 = vector.broadcast %83 : vector<1x144xf32> to vector<16x144xf32>
    %85 = arith.mulf %82, %84 : vector<16x144xf32>
    %c5 = arith.constant 5 : index
    %c0_50 = arith.constant 0 : index
    %c0_51 = arith.constant 0 : index
    %86 = vector.load %arg4[%c5, %c0_50, %c0_51] : memref<9x16x1xf32, #tpu.memory_space<vmem>>, vector<1x16x1xf32>
    %87 = vector.shape_cast %86 : vector<1x16x1xf32> to vector<16x1xf32>
    %88 = vector.broadcast %87 : vector<16x1xf32> to vector<16x144xf32>
    %89 = arith.mulf %85, %88 : vector<16x144xf32>
    %90 = arith.addf %81, %89 : vector<16x144xf32>
    %c0_52 = arith.constant 0 : index
    %c24 = arith.constant 24 : index
    %91 = vector.load %arg10[%c0_52, %c24] : memref<16x170xf32, #tpu.memory_space<vmem>>, vector<16x144xf32>
    %c0_53 = arith.constant 0 : index
    %c0_54 = arith.constant 0 : index
    %92 = vector.load %arg6[%c0_53, %c0_54] : memref<2x144xf32, #tpu.memory_space<vmem>>, vector<1x144xf32>
    %93 = vector.broadcast %92 : vector<1x144xf32> to vector<16x144xf32>
    %94 = arith.mulf %91, %93 : vector<16x144xf32>
    %c6 = arith.constant 6 : index
    %c0_55 = arith.constant 0 : index
    %c0_56 = arith.constant 0 : index
    %95 = vector.load %arg4[%c6, %c0_55, %c0_56] : memref<9x16x1xf32, #tpu.memory_space<vmem>>, vector<1x16x1xf32>
    %96 = vector.shape_cast %95 : vector<1x16x1xf32> to vector<16x1xf32>
    %97 = vector.broadcast %96 : vector<16x1xf32> to vector<16x144xf32>
    %98 = arith.mulf %94, %97 : vector<16x144xf32>
    %99 = arith.addf %90, %98 : vector<16x144xf32>
    %c0_57 = arith.constant 0 : index
    %c25 = arith.constant 25 : index
    %100 = vector.load %arg10[%c0_57, %c25] : memref<16x170xf32, #tpu.memory_space<vmem>>, vector<16x144xf32>
    %c7 = arith.constant 7 : index
    %c0_58 = arith.constant 0 : index
    %c0_59 = arith.constant 0 : index
    %101 = vector.load %arg4[%c7, %c0_58, %c0_59] : memref<9x16x1xf32, #tpu.memory_space<vmem>>, vector<1x16x1xf32>
    %102 = vector.shape_cast %101 : vector<1x16x1xf32> to vector<16x1xf32>
    %103 = vector.broadcast %102 : vector<16x1xf32> to vector<16x144xf32>
    %104 = arith.mulf %100, %103 : vector<16x144xf32>
    %105 = arith.addf %99, %104 : vector<16x144xf32>
    %c0_60 = arith.constant 0 : index
    %c26 = arith.constant 26 : index
    %106 = vector.load %arg10[%c0_60, %c26] : memref<16x170xf32, #tpu.memory_space<vmem>>, vector<16x144xf32>
    %c1_61 = arith.constant 1 : index
    %c0_62 = arith.constant 0 : index
    %107 = vector.load %arg6[%c1_61, %c0_62] : memref<2x144xf32, #tpu.memory_space<vmem>>, vector<1x144xf32>
    %108 = vector.broadcast %107 : vector<1x144xf32> to vector<16x144xf32>
    %109 = arith.mulf %106, %108 : vector<16x144xf32>
    %c8 = arith.constant 8 : index
    %c0_63 = arith.constant 0 : index
    %c0_64 = arith.constant 0 : index
    %110 = vector.load %arg4[%c8, %c0_63, %c0_64] : memref<9x16x1xf32, #tpu.memory_space<vmem>>, vector<1x16x1xf32>
    %111 = vector.shape_cast %110 : vector<1x16x1xf32> to vector<16x1xf32>
    %112 = vector.broadcast %111 : vector<16x1xf32> to vector<16x144xf32>
    %113 = arith.mulf %109, %112 : vector<16x144xf32>
    %114 = arith.addf %105, %113 : vector<16x144xf32>
    %c0_65 = arith.constant 0 : index
    %c0_66 = arith.constant 0 : index
    %115 = vector.load %arg5[%c0_65, %c0_66] : memref<16x1xf32, #tpu.memory_space<vmem>>, vector<16x1xf32>
    %116 = vector.broadcast %115 : vector<16x1xf32> to vector<16x144xf32>
    %117 = arith.addf %114, %116 : vector<16x144xf32>
    %cst_67 = arith.constant 0.000000e+00 : f32
    %cst_68 = arith.constant 6.000000e+00 : f32
    %118 = vector.broadcast %cst_67 : f32 to vector<16x144xf32>
    %119 = arith.maximumf %118, %117 : vector<16x144xf32>
    %120 = vector.broadcast %cst_68 : f32 to vector<16x144xf32>
    %121 = arith.minimumf %120, %119 : vector<16x144xf32>
    %c0_69 = arith.constant 0 : index
    %c0_70 = arith.constant 0 : index
    %122 = vector.load %arg7[%c0_69, %c0_70] : memref<4x16xf32, #tpu.memory_space<vmem>>, vector<4x16xf32>
    %cst_71 = arith.constant dense<0.000000e+00> : vector<4x144xf32>
    %123 = tpu.matmul %122, %121, %cst_71 {dimension_numbers = #tpu.dot_dimension_numbers<[1], [0], [0], [1], [0, 0, 1, 1], [], []>} : vector<4x16xf32>, vector<16x144xf32>, vector<4x144xf32> -> vector<4x144xf32>
    %c0_72 = arith.constant 0 : index
    %c0_73 = arith.constant 0 : index
    %124 = vector.load %arg8[%c0_72, %c0_73] : memref<4x1xf32, #tpu.memory_space<vmem>>, vector<4x1xf32>
    %125 = vector.broadcast %124 : vector<4x1xf32> to vector<4x144xf32>
    %126 = arith.addf %123, %125 : vector<4x144xf32>
    %127 = arith.addf %126, %1 : vector<4x144xf32>
    %c0_74 = arith.constant 0 : index
    %c0_75 = arith.constant 0 : index
    %c0_76 = arith.constant 0 : index
    %128 = vector.load %arg9[%c0_74, %c0_75, %c0_76] : memref<1x4x144xf32, #tpu.memory_space<vmem>>, vector<1x4x144xf32>
    %129 = vector.shape_cast %128 : vector<1x4x144xf32> to vector<4x144xf32>
    %130 = vector.shape_cast %127 : vector<4x144xf32> to vector<1x4x144xf32>
    tpu.vector_store %arg9[%c0_74, %c0_75, %c0_76], %130 {strides = array<i32>} : memref<1x4x144xf32, #tpu.memory_space<vmem>>, vector<1x4x144xf32>,
    return
  }
  func.func @transform_0(%arg0: i32) -> (i32, i32, i32) {
    %c0_i32 = arith.constant 0 : i32
    %c0_i32_0 = arith.constant 0 : i32
    %c0_i32_1 = arith.constant 0 : i32
    return %arg0, %c0_i32, %c0_i32_0 : i32, i32, i32
  }
  func.func @transform_1(%arg0: i32) -> (i32, i32) {
    %c0_i32 = arith.constant 0 : i32
    %c0_i32_0 = arith.constant 0 : i32
    %c0_i32_1 = arith.constant 0 : i32
    return %c0_i32, %c0_i32_0 : i32, i32
  }
  func.func @transform_2(%arg0: i32) -> (i32, i32) {
    %c0_i32 = arith.constant 0 : i32
    %c0_i32_0 = arith.constant 0 : i32
    %c0_i32_1 = arith.constant 0 : i32
    return %c0_i32, %c0_i32_0 : i32, i32
  }
  func.func @transform_3(%arg0: i32) -> (i32, i32, i32) {
    %c0_i32 = arith.constant 0 : i32
    %c0_i32_0 = arith.constant 0 : i32
    %c0_i32_1 = arith.constant 0 : i32
    %c0_i32_2 = arith.constant 0 : i32
    return %c0_i32, %c0_i32_0, %c0_i32_1 : i32, i32, i32
  }
  func.func @transform_4(%arg0: i32) -> (i32, i32) {
    %c0_i32 = arith.constant 0 : i32
    %c0_i32_0 = arith.constant 0 : i32
    %c0_i32_1 = arith.constant 0 : i32
    return %c0_i32, %c0_i32_0 : i32, i32
  }
  func.func @transform_5(%arg0: i32) -> (i32, i32) {
    %c0_i32 = arith.constant 0 : i32
    %c0_i32_0 = arith.constant 0 : i32
    %c0_i32_1 = arith.constant 0 : i32
    return %c0_i32, %c0_i32_0 : i32, i32
  }
  func.func @transform_6(%arg0: i32) -> (i32, i32) {
    %c0_i32 = arith.constant 0 : i32
    %c0_i32_0 = arith.constant 0 : i32
    %c0_i32_1 = arith.constant 0 : i32
    return %c0_i32, %c0_i32_0 : i32, i32
  }
  func.func @transform_7(%arg0: i32) -> (i32, i32) {
    %c0_i32 = arith.constant 0 : i32
    %c0_i32_0 = arith.constant 0 : i32
    %c0_i32_1 = arith.constant 0 : i32
    return %c0_i32, %c0_i32_0 : i32, i32
  }
  func.func @transform_8(%arg0: i32) -> (i32, i32, i32) {
    %c0_i32 = arith.constant 0 : i32
    %c0_i32_0 = arith.constant 0 : i32
    %c0_i32_1 = arith.constant 0 : i32
    return %arg0, %c0_i32, %c0_i32_0 : i32, i32, i32
  }
}

module attributes {stable_mosaic.version = 11 : i64} {
  func.func @_mlp_kernel(%arg0: i32, %arg1: memref<1x2x144xf32, #tpu.memory_space<vmem>>, %arg2: memref<8x2xf32, #tpu.memory_space<vmem>>, %arg3: memref<8x1xf32, #tpu.memory_space<vmem>>, %arg4: memref<9x8x1xf32, #tpu.memory_space<vmem>>, %arg5: memref<8x1xf32, #tpu.memory_space<vmem>>, %arg6: memref<2x144xf32, #tpu.memory_space<vmem>>, %arg7: memref<2x8xf32, #tpu.memory_space<vmem>>, %arg8: memref<2x1xf32, #tpu.memory_space<vmem>>, %arg9: memref<1x2x144xf32, #tpu.memory_space<vmem>>, %arg10: memref<8x170xf32, #tpu.memory_space<vmem>>) attributes {dimension_semantics = [#tpu.dimension_semantics<parallel>], iteration_bounds = array<i64: 2>, scalar_prefetch = 0 : i64, scratch_operands = 1 : i64, tpu.core_type = #tpu.core_type<tc>, window_params = [{transform_indices = @transform_0, window_bounds = array<i64: 1, 2, 144>}, {pipeline_mode = #tpu.pipeline_mode<synchronous>, transform_indices = @transform_1, window_bounds = array<i64: 8, 2>}, {pipeline_mode = #tpu.pipeline_mode<synchronous>, transform_indices = @transform_2, window_bounds = array<i64: 8, 1>}, {pipeline_mode = #tpu.pipeline_mode<synchronous>, transform_indices = @transform_3, window_bounds = array<i64: 9, 8, 1>}, {pipeline_mode = #tpu.pipeline_mode<synchronous>, transform_indices = @transform_4, window_bounds = array<i64: 8, 1>}, {pipeline_mode = #tpu.pipeline_mode<synchronous>, transform_indices = @transform_5, window_bounds = array<i64: 2, 144>}, {pipeline_mode = #tpu.pipeline_mode<synchronous>, transform_indices = @transform_6, window_bounds = array<i64: 2, 8>}, {pipeline_mode = #tpu.pipeline_mode<synchronous>, transform_indices = @transform_7, window_bounds = array<i64: 2, 1>}, {transform_indices = @transform_8, window_bounds = array<i64: 1, 2, 144>}]} {
    %c0 = arith.constant 0 : index
    %c0_0 = arith.constant 0 : index
    %c0_1 = arith.constant 0 : index
    %0 = vector.load %arg1[%c0, %c0_0, %c0_1] : memref<1x2x144xf32, #tpu.memory_space<vmem>>, vector<1x2x144xf32>
    %1 = vector.shape_cast %0 : vector<1x2x144xf32> to vector<2x144xf32>
    %c0_2 = arith.constant 0 : index
    %c0_3 = arith.constant 0 : index
    %2 = vector.load %arg2[%c0_2, %c0_3] : memref<8x2xf32, #tpu.memory_space<vmem>>, vector<8x2xf32>
    %cst = arith.constant dense<0.000000e+00> : vector<2xf32>
    %3 = vector.multi_reduction <add>, %1, %cst [1] : vector<2x144xf32> to vector<2xf32>
    %4 = vector.shape_cast %3 : vector<2xf32> to vector<2x1xf32>
    %cst_4 = arith.constant 1.440000e+02 : f32
    %5 = vector.broadcast %cst_4 : f32 to vector<2x1xf32>
    %6 = arith.divf %4, %5 : vector<2x1xf32>
    %7 = vector.broadcast %6 : vector<2x1xf32> to vector<2x144xf32>
    %8 = arith.subf %1, %7 : vector<2x144xf32>
    %9 = arith.mulf %8, %8 : vector<2x144xf32>
    %cst_5 = arith.constant dense<0.000000e+00> : vector<2xf32>
    %10 = vector.multi_reduction <add>, %9, %cst_5 [1] : vector<2x144xf32> to vector<2xf32>
    %11 = vector.shape_cast %10 : vector<2xf32> to vector<2x1xf32>
    %cst_6 = arith.constant 1.440000e+02 : f32
    %12 = vector.broadcast %cst_6 : f32 to vector<2x1xf32>
    %13 = arith.divf %11, %12 : vector<2x1xf32>
    %cst_7 = arith.constant 9.99999974E-6 : f32
    %14 = vector.broadcast %cst_7 : f32 to vector<2x1xf32>
    %15 = arith.addf %13, %14 : vector<2x1xf32>
    %16 = math.rsqrt %15 : vector<2x1xf32>
    %17 = vector.broadcast %16 : vector<2x1xf32> to vector<2x144xf32>
    %18 = arith.mulf %8, %17 : vector<2x144xf32>
    %cst_8 = arith.constant dense<0.000000e+00> : vector<8x144xf32>
    %19 = tpu.matmul %2, %18, %cst_8 {dimension_numbers = #tpu.dot_dimension_numbers<[1], [0], [0], [1], [0, 0, 1, 1], [], []>} : vector<8x2xf32>, vector<2x144xf32>, vector<8x144xf32> -> vector<8x144xf32>
    %c0_9 = arith.constant 0 : index
    %c0_10 = arith.constant 0 : index
    %20 = vector.load %arg3[%c0_9, %c0_10] : memref<8x1xf32, #tpu.memory_space<vmem>>, vector<8x1xf32>
    %21 = vector.broadcast %20 : vector<8x1xf32> to vector<8x144xf32>
    %22 = arith.addf %19, %21 : vector<8x144xf32>
    %cst_11 = arith.constant dense<0.000000e+00> : vector<8xf32>
    %23 = vector.multi_reduction <add>, %22, %cst_11 [1] : vector<8x144xf32> to vector<8xf32>
    %24 = vector.shape_cast %23 : vector<8xf32> to vector<8x1xf32>
    %cst_12 = arith.constant 1.440000e+02 : f32
    %25 = vector.broadcast %cst_12 : f32 to vector<8x1xf32>
    %26 = arith.divf %24, %25 : vector<8x1xf32>
    %27 = vector.broadcast %26 : vector<8x1xf32> to vector<8x144xf32>
    %28 = arith.subf %22, %27 : vector<8x144xf32>
    %29 = arith.mulf %28, %28 : vector<8x144xf32>
    %cst_13 = arith.constant dense<0.000000e+00> : vector<8xf32>
    %30 = vector.multi_reduction <add>, %29, %cst_13 [1] : vector<8x144xf32> to vector<8xf32>
    %31 = vector.shape_cast %30 : vector<8xf32> to vector<8x1xf32>
    %cst_14 = arith.constant 1.440000e+02 : f32
    %32 = vector.broadcast %cst_14 : f32 to vector<8x1xf32>
    %33 = arith.divf %31, %32 : vector<8x1xf32>
    %cst_15 = arith.constant 9.99999974E-6 : f32
    %34 = vector.broadcast %cst_15 : f32 to vector<8x1xf32>
    %35 = arith.addf %33, %34 : vector<8x1xf32>
    %36 = math.rsqrt %35 : vector<8x1xf32>
    %37 = vector.broadcast %36 : vector<8x1xf32> to vector<8x144xf32>
    %38 = arith.mulf %28, %37 : vector<8x144xf32>
    %cst_16 = arith.constant 0.000000e+00 : f32
    %39 = vector.broadcast %cst_16 : f32 to vector<8x170xf32>
    %c0_17 = arith.constant 0 : index
    %c0_18 = arith.constant 0 : index
    %40 = vector.load %arg10[%c0_17, %c0_18] : memref<8x170xf32, #tpu.memory_space<vmem>>, vector<8x170xf32>
    tpu.vector_store %arg10[%c0_17, %c0_18], %39 {strides = array<i32>} : memref<8x170xf32, #tpu.memory_space<vmem>>, vector<8x170xf32>,
    %c0_19 = arith.constant 0 : index
    %c13 = arith.constant 13 : index
    %41 = vector.load %arg10[%c0_19, %c13] : memref<8x170xf32, #tpu.memory_space<vmem>>, vector<8x144xf32>
    tpu.vector_store %arg10[%c0_19, %c13], %38 {strides = array<i32>} : memref<8x170xf32, #tpu.memory_space<vmem>>, vector<8x144xf32>,
    %cst_20 = arith.constant 0.000000e+00 : f32
    %42 = vector.broadcast %cst_20 : f32 to vector<8x144xf32>
    %c0_21 = arith.constant 0 : index
    %c0_22 = arith.constant 0 : index
    %43 = vector.load %arg10[%c0_21, %c0_22] : memref<8x170xf32, #tpu.memory_space<vmem>>, vector<8x144xf32>
    %c0_23 = arith.constant 0 : index
    %c0_24 = arith.constant 0 : index
    %44 = vector.load %arg6[%c0_23, %c0_24] : memref<2x144xf32, #tpu.memory_space<vmem>>, vector<1x144xf32>
    %45 = vector.broadcast %44 : vector<1x144xf32> to vector<8x144xf32>
    %46 = arith.mulf %43, %45 : vector<8x144xf32>
    %c0_25 = arith.constant 0 : index
    %c0_26 = arith.constant 0 : index
    %c0_27 = arith.constant 0 : index
    %47 = vector.load %arg4[%c0_25, %c0_26, %c0_27] : memref<9x8x1xf32, #tpu.memory_space<vmem>>, vector<1x8x1xf32>
    %48 = vector.shape_cast %47 : vector<1x8x1xf32> to vector<8x1xf32>
    %49 = vector.broadcast %48 : vector<8x1xf32> to vector<8x144xf32>
    %50 = arith.mulf %46, %49 : vector<8x144xf32>
    %51 = arith.addf %42, %50 : vector<8x144xf32>
    %c0_28 = arith.constant 0 : index
    %c1 = arith.constant 1 : index
    %52 = vector.load %arg10[%c0_28, %c1] : memref<8x170xf32, #tpu.memory_space<vmem>>, vector<8x144xf32>
    %c1_29 = arith.constant 1 : index
    %c0_30 = arith.constant 0 : index
    %c0_31 = arith.constant 0 : index
    %53 = vector.load %arg4[%c1_29, %c0_30, %c0_31] : memref<9x8x1xf32, #tpu.memory_space<vmem>>, vector<1x8x1xf32>
    %54 = vector.shape_cast %53 : vector<1x8x1xf32> to vector<8x1xf32>
    %55 = vector.broadcast %54 : vector<8x1xf32> to vector<8x144xf32>
    %56 = arith.mulf %52, %55 : vector<8x144xf32>
    %57 = arith.addf %51, %56 : vector<8x144xf32>
    %c0_32 = arith.constant 0 : index
    %c2 = arith.constant 2 : index
    %58 = vector.load %arg10[%c0_32, %c2] : memref<8x170xf32, #tpu.memory_space<vmem>>, vector<8x144xf32>
    %c1_33 = arith.constant 1 : index
    %c0_34 = arith.constant 0 : index
    %59 = vector.load %arg6[%c1_33, %c0_34] : memref<2x144xf32, #tpu.memory_space<vmem>>, vector<1x144xf32>
    %60 = vector.broadcast %59 : vector<1x144xf32> to vector<8x144xf32>
    %61 = arith.mulf %58, %60 : vector<8x144xf32>
    %c2_35 = arith.constant 2 : index
    %c0_36 = arith.constant 0 : index
    %c0_37 = arith.constant 0 : index
    %62 = vector.load %arg4[%c2_35, %c0_36, %c0_37] : memref<9x8x1xf32, #tpu.memory_space<vmem>>, vector<1x8x1xf32>
    %63 = vector.shape_cast %62 : vector<1x8x1xf32> to vector<8x1xf32>
    %64 = vector.broadcast %63 : vector<8x1xf32> to vector<8x144xf32>
    %65 = arith.mulf %61, %64 : vector<8x144xf32>
    %66 = arith.addf %57, %65 : vector<8x144xf32>
    %c0_38 = arith.constant 0 : index
    %c12 = arith.constant 12 : index
    %67 = vector.load %arg10[%c0_38, %c12] : memref<8x170xf32, #tpu.memory_space<vmem>>, vector<8x144xf32>
    %c0_39 = arith.constant 0 : index
    %c0_40 = arith.constant 0 : index
    %68 = vector.load %arg6[%c0_39, %c0_40] : memref<2x144xf32, #tpu.memory_space<vmem>>, vector<1x144xf32>
    %69 = vector.broadcast %68 : vector<1x144xf32> to vector<8x144xf32>
    %70 = arith.mulf %67, %69 : vector<8x144xf32>
    %c3 = arith.constant 3 : index
    %c0_41 = arith.constant 0 : index
    %c0_42 = arith.constant 0 : index
    %71 = vector.load %arg4[%c3, %c0_41, %c0_42] : memref<9x8x1xf32, #tpu.memory_space<vmem>>, vector<1x8x1xf32>
    %72 = vector.shape_cast %71 : vector<1x8x1xf32> to vector<8x1xf32>
    %73 = vector.broadcast %72 : vector<8x1xf32> to vector<8x144xf32>
    %74 = arith.mulf %70, %73 : vector<8x144xf32>
    %75 = arith.addf %66, %74 : vector<8x144xf32>
    %c0_43 = arith.constant 0 : index
    %c13_44 = arith.constant 13 : index
    %76 = vector.load %arg10[%c0_43, %c13_44] : memref<8x170xf32, #tpu.memory_space<vmem>>, vector<8x144xf32>
    %c4 = arith.constant 4 : index
    %c0_45 = arith.constant 0 : index
    %c0_46 = arith.constant 0 : index
    %77 = vector.load %arg4[%c4, %c0_45, %c0_46] : memref<9x8x1xf32, #tpu.memory_space<vmem>>, vector<1x8x1xf32>
    %78 = vector.shape_cast %77 : vector<1x8x1xf32> to vector<8x1xf32>
    %79 = vector.broadcast %78 : vector<8x1xf32> to vector<8x144xf32>
    %80 = arith.mulf %76, %79 : vector<8x144xf32>
    %81 = arith.addf %75, %80 : vector<8x144xf32>
    %c0_47 = arith.constant 0 : index
    %c14 = arith.constant 14 : index
    %82 = vector.load %arg10[%c0_47, %c14] : memref<8x170xf32, #tpu.memory_space<vmem>>, vector<8x144xf32>
    %c1_48 = arith.constant 1 : index
    %c0_49 = arith.constant 0 : index
    %83 = vector.load %arg6[%c1_48, %c0_49] : memref<2x144xf32, #tpu.memory_space<vmem>>, vector<1x144xf32>
    %84 = vector.broadcast %83 : vector<1x144xf32> to vector<8x144xf32>
    %85 = arith.mulf %82, %84 : vector<8x144xf32>
    %c5 = arith.constant 5 : index
    %c0_50 = arith.constant 0 : index
    %c0_51 = arith.constant 0 : index
    %86 = vector.load %arg4[%c5, %c0_50, %c0_51] : memref<9x8x1xf32, #tpu.memory_space<vmem>>, vector<1x8x1xf32>
    %87 = vector.shape_cast %86 : vector<1x8x1xf32> to vector<8x1xf32>
    %88 = vector.broadcast %87 : vector<8x1xf32> to vector<8x144xf32>
    %89 = arith.mulf %85, %88 : vector<8x144xf32>
    %90 = arith.addf %81, %89 : vector<8x144xf32>
    %c0_52 = arith.constant 0 : index
    %c24 = arith.constant 24 : index
    %91 = vector.load %arg10[%c0_52, %c24] : memref<8x170xf32, #tpu.memory_space<vmem>>, vector<8x144xf32>
    %c0_53 = arith.constant 0 : index
    %c0_54 = arith.constant 0 : index
    %92 = vector.load %arg6[%c0_53, %c0_54] : memref<2x144xf32, #tpu.memory_space<vmem>>, vector<1x144xf32>
    %93 = vector.broadcast %92 : vector<1x144xf32> to vector<8x144xf32>
    %94 = arith.mulf %91, %93 : vector<8x144xf32>
    %c6 = arith.constant 6 : index
    %c0_55 = arith.constant 0 : index
    %c0_56 = arith.constant 0 : index
    %95 = vector.load %arg4[%c6, %c0_55, %c0_56] : memref<9x8x1xf32, #tpu.memory_space<vmem>>, vector<1x8x1xf32>
    %96 = vector.shape_cast %95 : vector<1x8x1xf32> to vector<8x1xf32>
    %97 = vector.broadcast %96 : vector<8x1xf32> to vector<8x144xf32>
    %98 = arith.mulf %94, %97 : vector<8x144xf32>
    %99 = arith.addf %90, %98 : vector<8x144xf32>
    %c0_57 = arith.constant 0 : index
    %c25 = arith.constant 25 : index
    %100 = vector.load %arg10[%c0_57, %c25] : memref<8x170xf32, #tpu.memory_space<vmem>>, vector<8x144xf32>
    %c7 = arith.constant 7 : index
    %c0_58 = arith.constant 0 : index
    %c0_59 = arith.constant 0 : index
    %101 = vector.load %arg4[%c7, %c0_58, %c0_59] : memref<9x8x1xf32, #tpu.memory_space<vmem>>, vector<1x8x1xf32>
    %102 = vector.shape_cast %101 : vector<1x8x1xf32> to vector<8x1xf32>
    %103 = vector.broadcast %102 : vector<8x1xf32> to vector<8x144xf32>
    %104 = arith.mulf %100, %103 : vector<8x144xf32>
    %105 = arith.addf %99, %104 : vector<8x144xf32>
    %c0_60 = arith.constant 0 : index
    %c26 = arith.constant 26 : index
    %106 = vector.load %arg10[%c0_60, %c26] : memref<8x170xf32, #tpu.memory_space<vmem>>, vector<8x144xf32>
    %c1_61 = arith.constant 1 : index
    %c0_62 = arith.constant 0 : index
    %107 = vector.load %arg6[%c1_61, %c0_62] : memref<2x144xf32, #tpu.memory_space<vmem>>, vector<1x144xf32>
    %108 = vector.broadcast %107 : vector<1x144xf32> to vector<8x144xf32>
    %109 = arith.mulf %106, %108 : vector<8x144xf32>
    %c8 = arith.constant 8 : index
    %c0_63 = arith.constant 0 : index
    %c0_64 = arith.constant 0 : index
    %110 = vector.load %arg4[%c8, %c0_63, %c0_64] : memref<9x8x1xf32, #tpu.memory_space<vmem>>, vector<1x8x1xf32>
    %111 = vector.shape_cast %110 : vector<1x8x1xf32> to vector<8x1xf32>
    %112 = vector.broadcast %111 : vector<8x1xf32> to vector<8x144xf32>
    %113 = arith.mulf %109, %112 : vector<8x144xf32>
    %114 = arith.addf %105, %113 : vector<8x144xf32>
    %c0_65 = arith.constant 0 : index
    %c0_66 = arith.constant 0 : index
    %115 = vector.load %arg5[%c0_65, %c0_66] : memref<8x1xf32, #tpu.memory_space<vmem>>, vector<8x1xf32>
    %116 = vector.broadcast %115 : vector<8x1xf32> to vector<8x144xf32>
    %117 = arith.addf %114, %116 : vector<8x144xf32>
    %cst_67 = arith.constant 0.000000e+00 : f32
    %cst_68 = arith.constant 6.000000e+00 : f32
    %118 = vector.broadcast %cst_67 : f32 to vector<8x144xf32>
    %119 = arith.maximumf %118, %117 : vector<8x144xf32>
    %120 = vector.broadcast %cst_68 : f32 to vector<8x144xf32>
    %121 = arith.minimumf %120, %119 : vector<8x144xf32>
    %c0_69 = arith.constant 0 : index
    %c0_70 = arith.constant 0 : index
    %122 = vector.load %arg7[%c0_69, %c0_70] : memref<2x8xf32, #tpu.memory_space<vmem>>, vector<2x8xf32>
    %cst_71 = arith.constant dense<0.000000e+00> : vector<2x144xf32>
    %123 = tpu.matmul %122, %121, %cst_71 {dimension_numbers = #tpu.dot_dimension_numbers<[1], [0], [0], [1], [0, 0, 1, 1], [], []>} : vector<2x8xf32>, vector<8x144xf32>, vector<2x144xf32> -> vector<2x144xf32>
    %c0_72 = arith.constant 0 : index
    %c0_73 = arith.constant 0 : index
    %124 = vector.load %arg8[%c0_72, %c0_73] : memref<2x1xf32, #tpu.memory_space<vmem>>, vector<2x1xf32>
    %125 = vector.broadcast %124 : vector<2x1xf32> to vector<2x144xf32>
    %126 = arith.addf %123, %125 : vector<2x144xf32>
    %127 = arith.addf %126, %1 : vector<2x144xf32>
    %c0_74 = arith.constant 0 : index
    %c0_75 = arith.constant 0 : index
    %c0_76 = arith.constant 0 : index
    %128 = vector.load %arg9[%c0_74, %c0_75, %c0_76] : memref<1x2x144xf32, #tpu.memory_space<vmem>>, vector<1x2x144xf32>
    %129 = vector.shape_cast %128 : vector<1x2x144xf32> to vector<2x144xf32>
    %130 = vector.shape_cast %127 : vector<2x144xf32> to vector<1x2x144xf32>
    tpu.vector_store %arg9[%c0_74, %c0_75, %c0_76], %130 {strides = array<i32>} : memref<1x2x144xf32, #tpu.memory_space<vmem>>, vector<1x2x144xf32>,
    return
  }
  func.func @transform_0(%arg0: i32) -> (i32, i32, i32) {
    %c0_i32 = arith.constant 0 : i32
    %c0_i32_0 = arith.constant 0 : i32
    %c0_i32_1 = arith.constant 0 : i32
    return %arg0, %c0_i32, %c0_i32_0 : i32, i32, i32
  }
  func.func @transform_1(%arg0: i32) -> (i32, i32) {
    %c0_i32 = arith.constant 0 : i32
    %c0_i32_0 = arith.constant 0 : i32
    %c0_i32_1 = arith.constant 0 : i32
    return %c0_i32, %c0_i32_0 : i32, i32
  }
  func.func @transform_2(%arg0: i32) -> (i32, i32) {
    %c0_i32 = arith.constant 0 : i32
    %c0_i32_0 = arith.constant 0 : i32
    %c0_i32_1 = arith.constant 0 : i32
    return %c0_i32, %c0_i32_0 : i32, i32
  }
  func.func @transform_3(%arg0: i32) -> (i32, i32, i32) {
    %c0_i32 = arith.constant 0 : i32
    %c0_i32_0 = arith.constant 0 : i32
    %c0_i32_1 = arith.constant 0 : i32
    %c0_i32_2 = arith.constant 0 : i32
    return %c0_i32, %c0_i32_0, %c0_i32_1 : i32, i32, i32
  }
  func.func @transform_4(%arg0: i32) -> (i32, i32) {
    %c0_i32 = arith.constant 0 : i32
    %c0_i32_0 = arith.constant 0 : i32
    %c0_i32_1 = arith.constant 0 : i32
    return %c0_i32, %c0_i32_0 : i32, i32
  }
  func.func @transform_5(%arg0: i32) -> (i32, i32) {
    %c0_i32 = arith.constant 0 : i32
    %c0_i32_0 = arith.constant 0 : i32
    %c0_i32_1 = arith.constant 0 : i32
    return %c0_i32, %c0_i32_0 : i32, i32
  }
  func.func @transform_6(%arg0: i32) -> (i32, i32) {
    %c0_i32 = arith.constant 0 : i32
    %c0_i32_0 = arith.constant 0 : i32
    %c0_i32_1 = arith.constant 0 : i32
    return %c0_i32, %c0_i32_0 : i32, i32
  }
  func.func @transform_7(%arg0: i32) -> (i32, i32) {
    %c0_i32 = arith.constant 0 : i32
    %c0_i32_0 = arith.constant 0 : i32
    %c0_i32_1 = arith.constant 0 : i32
    return %c0_i32, %c0_i32_0 : i32, i32
  }
  func.func @transform_8(%arg0: i32) -> (i32, i32, i32) {
    %c0_i32 = arith.constant 0 : i32
    %c0_i32_0 = arith.constant 0 : i32
    %c0_i32_1 = arith.constant 0 : i32
    return %arg0, %c0_i32, %c0_i32_0 : i32, i32, i32
  }
}

</mosaic_0001>

<llo_original>
// kernel: block_mix_forward.12
$region0: #{block_mix_forward.12}
  #allocation0 [shape = 'u32[]', space=smem, size = 0x4, offset = 0x4, fixed_abs, tag = 'smem constant byte address 0x4 - core index']
  #allocation1 [shape = 'u32[144,128]{1,0:T(1,128)}', space=vmem, size = 0x12000, scoped, tag = 'internal scratch']
  %s0 = inlined_call_operand.vmem [shape: f32[2,8,144], index: 0, kind: input, shape index: {}]
  %s1 = inlined_call_operand.vmem [shape: f32[32,8], index: 1, kind: input, shape index: {}]
  %s2 = inlined_call_operand.vmem [shape: f32[2,8,144], index: 2, kind: output, shape index: {0}]
  %s3 = inlined_call_operand.vmem [shape: f32[2,32,144], index: 3, kind: output, shape index: {1}]
  %4 = xla_tuple %s2, %s3
  %s5 = sld [smem:[#allocation0]]
  $region49: #{block_mix_forward.12} parent=0
    _
  %s7 = ssub.s32 1, %s5
  %s8 = scalar_select 0, %s7, %s5
  loop: start=0, step=1, limit=4
  $region2: #{block_mix_forward.12} parent=0 // loop_pre_header
    _
  $region3: #{block_mix_forward.12} parent=0 // loop_header
    %s10 = sphi 0, %s14
    %p11 = scmp.ge.s32.totalorder %s10, 4
    %s20 = sphi 0, %s22
    %s23 = sphi 0, %s20
    %s24 = sphi 0, %s23
    %s40 = sphi 0, %s24
    %s44 = sphi 0, %s44
    %s46 = sphi 0, %s44
    %s47 = sphi 0, %s46
    %s61 = sphi 0, %s47
    %s67 = sphi 0, %s69
    %s70 = sphi 0, %s67
    %s71 = sphi 0, %s70
    %s87 = sphi 0, %s71
    %s93 = sphi 0, %s95
    %s96 = sphi 0, %s93
    %s97 = sphi 0, %s96
    %s113 = sphi 0, %s97
  $region4: #{block_mix_forward.12} parent=0 // loop_header_branch
    %13 = sbr.rel (%p11) target = $region8
  $region5: #{block_mix_forward.12} parent=0 // loop_body
    %s15 = ssub.s32 %s10, 1
    %s16 = ssub.s32 %s10, 2
    %s17 = sadd.s32 %s10, 1
    %s18 = ssub.s32 %s10, %s17
    %p19 = scmp.eq.s32.totalorder %s18, 0
    %s21 = sadd.s32 %s20, 1
    %s22 = scalar_select %p19, %s20, %s21
    %p25 = pneg %p19
    %p26 = scmp.eq.s32.totalorder %s10, 1
    %p27 = por %p25, %p26
    %p28 = scmp.ne.s32.totalorder %s20, %s23
    %p29 = scmp.eq.s32.totalorder %s10, 0
    %p30 = por %p28, %p29
    %p31 = scmp.ne.s32.totalorder %s20, %s23
    %p32 = scmp.eq.s32.totalorder %s15, 1
    %p33 = por %p31, %p32
    %p34 = scmp.ne.s32.totalorder %s23, %s24
    %p35 = scmp.eq.s32.totalorder %s15, 0
    %p36 = por %p34, %p35
    %p37 = scmp.ne.s32.totalorder %s23, %s24
    %p38 = scmp.eq.s32.totalorder %s16, 1
    %p39 = por %p37, %p38
    %p41 = scmp.ne.s32.totalorder %s24, %s40
    %p42 = scmp.eq.s32.totalorder %s16, 0
    %p43 = por %p41, %p42
    %s45 = sadd.s32 %s44, 1
    %p48 = scmp.eq.s32.totalorder %s10, 1
    %p49 = scmp.ne.s32.totalorder %s44, %s46
    %p50 = scmp.eq.s32.totalorder %s10, 0
    %p51 = por %p49, %p50
    %p52 = scmp.ne.s32.totalorder %s44, %s46
    %p53 = scmp.eq.s32.totalorder %s15, 1
    %p54 = por %p52, %p53
    %p55 = scmp.ne.s32.totalorder %s46, %s47
    %p56 = scmp.eq.s32.totalorder %s15, 0
    %p57 = por %p55, %p56
    %p58 = scmp.ne.s32.totalorder %s46, %s47
    %p59 = scmp.eq.s32.totalorder %s16, 1
    %p60 = por %p58, %p59
    %p62 = scmp.ne.s32.totalorder %s47, %s61
    %p63 = scmp.eq.s32.totalorder %s16, 0
    %p64 = por %p62, %p63
    %s65 = ssub.s32 %s10, %s17
    %p66 = scmp.eq.s32.totalorder %s65, 0
    %s68 = sadd.s32 %s67, 1
    %s69 = scalar_select %p66, %s67, %s68
    %p72 = pneg %p66
    %p73 = scmp.eq.s32.totalorder %s10, 1
    %p74 = por %p72, %p73
    %p75 = scmp.ne.s32.totalorder %s67, %s70
    %p76 = scmp.eq.s32.totalorder %s10, 0
    %p77 = por %p75, %p76
    %p78 = scmp.ne.s32.totalorder %s67, %s70
    %p79 = scmp.eq.s32.totalorder %s15, 1
    %p80 = por %p78, %p79
    %p81 = scmp.ne.s32.totalorder %s70, %s71
    %p82 = scmp.eq.s32.totalorder %s15, 0
    %p83 = por %p81, %p82
    %p84 = scmp.ne.s32.totalorder %s70, %s71
    %p85 = scmp.eq.s32.totalorder %s16, 1
    %p86 = por %p84, %p85
    %p88 = scmp.ne.s32.totalorder %s71, %s87
    %p89 = scmp.eq.s32.totalorder %s16, 0
    %p90 = por %p88, %p89
    %s91 = ssub.s32 %s10, %s17
    %p92 = scmp.eq.s32.totalorder %s91, 0
    %s94 = sadd.s32 %s93, 1
    %s95 = scalar_select %p92, %s93, %s94
    %p98 = pneg %p92
    %p99 = scmp.eq.s32.totalorder %s10, 1
    %p100 = por %p98, %p99
    %p101 = scmp.ne.s32.totalorder %s93, %s96
    %p102 = scmp.eq.s32.totalorder %s10, 0
    %p103 = por %p101, %p102
    %p104 = scmp.ne.s32.totalorder %s93, %s96
    %p105 = scmp.eq.s32.totalorder %s15, 1
    %p106 = por %p104, %p105
    %p107 = scmp.ne.s32.totalorder %s96, %s97
    %p108 = scmp.eq.s32.totalorder %s15, 0
    %p109 = por %p107, %p108
    %p110 = scmp.ne.s32.totalorder %s96, %s97
    %p111 = scmp.eq.s32.totalorder %s16, 1
    %p112 = por %p110, %p111
    %p114 = scmp.ne.s32.totalorder %s97, %s113
    %p115 = scmp.eq.s32.totalorder %s16, 0
    %p116 = por %p114, %p115
    %p117 = scmp.le.s32.totalorder 1, %s10
    %p118 = scmp.lt.s32.totalorder %s10, 3
    %p119 = pnand %p117, %p118
    %p120 = pneg %p119
    // Predicated region
    $region9: #{block_mix_forward.12} parent=5 // pred_check
      _
    $region10: #{block_mix_forward.12} parent=5 // pred_check_branch
      %122 = sbr.rel (%p119) target = $region12
    $region11: #{block_mix_forward.12} parent=5 // pred_region
      %s123 = ssub.s32 %s10, 1
      // Predicated region
      $region13: #{block_mix_forward.12} parent=11 // pred_check
        %p124 = pneg %p57
      $region14: #{block_mix_forward.12} parent=11 // pred_check_branch
        %126 = sbr.rel (%p124) target = $region16
      $region15: #{block_mix_forward.12} parent=11 // pred_region
        _
      $region16: #{block_mix_forward.12} parent=11 // pred_fallthru
        _
    $region12: #{block_mix_forward.12} parent=5 // pred_fallthru
      _
    %p127 = scmp.lt.s32.totalorder %s10, 2
    // Predicated region
    $region17: #{block_mix_forward.12} parent=5 // pred_check
      %p128 = pneg %p127
    $region18: #{block_mix_forward.12} parent=5 // pred_check_branch
      %130 = sbr.rel (%p128) target = $region20
    $region19: #{block_mix_forward.12} parent=5 // pred_region
      // Predicated region
      $region21: #{block_mix_forward.12} parent=19 // pred_check
        %p131 = pneg %p30
      $region22: #{block_mix_forward.12} parent=19 // pred_check_branch
        %133 = sbr.rel (%p131) target = $region24
      $region23: #{block_mix_forward.12} parent=19 // pred_region
        %p134 = scmp.lt.s32.totalorder %s10, 1
        %s135 = scalar_select %p134, %s10, 1
        %s136 = smul.addr %s135, 2
        %s137 = smul.addr %s136, 8
        %s138 = scalar_lea.vmem %s0, %s137
      $region24: #{block_mix_forward.12} parent=19 // pred_fallthru
        _
    $region20: #{block_mix_forward.12} parent=5 // pred_fallthru
      _
    %p139 = scmp.le.s32.totalorder 1, %s10
    %p140 = scmp.lt.s32.totalorder %s10, 3
    %p141 = pnand %p139, %p140
    %p142 = pneg %p141
    // Predicated region
    $region25: #{block_mix_forward.12} parent=5 // pred_check
      _
    $region26: #{block_mix_forward.12} parent=5 // pred_check_branch
      %144 = sbr.rel (%p141) target = $region28
    $region27: #{block_mix_forward.12} parent=5 // pred_region
      %s145 = ssub.s32 %s10, 1
      %p146 = scmp.lt.s32.totalorder %s15, 1
      %s147 = scalar_select %p146, %s15, 1
      %s148 = smul.addr %s147, 2
      %s149 = smul.addr %s148, 8
      %s150 = scalar_lea.vmem %s0, %s149
      %p151 = pneg %p36
      %p152 = pneg %p33
      %p153 = pneg %p57
      %p154 = pneg %p54
      %p155 = pneg %p83
      %p156 = pneg %p80
      %p157 = scmp.lt.s32.totalorder %s15, 1
      %s158 = scalar_select %p157, %s15, 1
      %s159 = smul.addr %s158, 2
      %s160 = smul.addr %s159, 8
      %s161 = scalar_lea.vmem %s2, %s160
      %p162 = pneg %p109
      %p163 = pneg %p106
      %p164 = scmp.lt.s32.totalorder %s15, 1
      %s165 = scalar_select %p164, %s15, 1
      %s166 = smul.addr %s165, 8
      %s167 = smul.addr %s166, 8
      %s168 = scalar_lea.vmem %s3, %s167
      %p169 = scmp.lt.s32.totalorder %s15, 1
      %s170 = scalar_select %p169, %s15, 1
      %s171 = smul.addr %s170, 2
      %s172 = smul.addr %s171, 8
      %s173 = scalar_lea.vmem %s0, %s172
      %p174 = scmp.lt.s32.totalorder %s15, 1
      %s175 = scalar_select %p174, %s15, 1
      %s176 = smul.addr %s175, 2
      %s177 = smul.addr %s176, 8
      %s178 = scalar_lea.vmem %s2, %s177
      %p179 = scmp.lt.s32.totalorder %s15, 1
      %s180 = scalar_select %p179, %s15, 1
      %s181 = smul.addr %s180, 8
      %s182 = smul.addr %s181, 8
      %s183 = scalar_lea.vmem %s3, %s182
      %v184 = vld [vmem:[%s173] sm:$0xff]
      %v185 = vld [vmem:[%s173 + $0x8] sm:$0xff]
      %vm186 = vcmask 130048
      %v187 = vsel %vm186, %v185, 0.0
      %v188 = vadd.f32 %v184, %v187
      %189 = vadd.xlane.f32.xlu0 %v188
      %v190 = vpop.xlane.xlu0 %189
      %v191 = vrcp.pop 144.0
      %v192 = vmul.f32 %v190, %v191
      %v193 = vsub.f32 %v184, %v192
      %v194 = vsub.f32 %v185, %v192
      %v195 = vmul.f32 %v193, %v193
      %v196 = vmul.f32 %v194, %v194
      %v197 = vsel %vm186, %v196, 0.0
      %v198 = vadd.f32 %v195, %v197
      %199 = vadd.xlane.f32.xlu0 %v198
      %v200 = vpop.xlane.xlu0 %199
      %v201 = vmul.f32 %v200, %v191
      %v202 = vadd.f32 %v201, 1e-05
      %v203 = vrsqrt.pop %v202
      %v204 = vmul.f32 %v193, %v203
      %v205 = vmul.f32 %v194, %v203
      %206 = vst [vmem:[%s178] sm:$0xff] %v204
      %207 = vst.msk [vmem:[%s178 + $0x8] sm:$0xff] %vm186, %v205
      %v208 = vld [vmem:[%s1] sm:$0xff]
      %v209 = vld [vmem:[%s1 + $0x8] sm:$0xff]
      %v210 = vld [vmem:[%s1 + $0x10] sm:$0xff]
      %v211 = vld [vmem:[%s1 + $0x18] sm:$0xff]
      %vm212 = vcmask 64512
      %v214 = vsel %vm212, %v208, 0
      %v217 = vsel %vm212, %v209, 0
      %v220 = vsel %vm212, %v210, 0
      %v223 = vsel %vm212, %v211, 0
      %225 = vmatprep.subr.mxu0 %v205
      %226 = vmatpush1.msra.mxu0 %v204
      %227 = vmatprep.subr.mxu0 0.0
      %228 = vmatpush1.msra.mxu0 0.0
      %229 = vmatprep.subr.mxu0 0.0
      %230 = vmatpush1.msra.mxu0 0.0
      %231 = vmatprep.subr.mxu0 0.0
      %232 = vmatpush1.msra.mxu0 0.0
      %233 = vmatprep.subr.mxu0 0.0
      %234 = vmatpush1.msra.mxu0 0.0
      %235 = vmatprep.subr.mxu0 0.0
      %236 = vmatpush1.msra.mxu0 0.0
      %237 = vmatprep.subr.mxu0 0.0
      %238 = vmatpush1.msra.mxu0 0.0
      %239 = vmatprep.subr.mxu0 0.0
      %240 = vmatpush1.msra.mxu0 0.0
      %241 = vmatprep.subr.mxu0 0.0
      %242 = vmatpush1.msra.mxu0 0.0
      %243 = vmatprep.subr.mxu0 0.0
      %244 = vmatpush1.msra.mxu0 0.0
      %245 = vmatprep.subr.mxu0 0.0
      %246 = vmatpush1.msra.mxu0 0.0
      %247 = vmatprep.subr.mxu0 0.0
      %248 = vmatpush1.msra.mxu0 0.0
      %249 = vmatprep.subr.mxu0 0.0
      %250 = vmatpush1.msra.mxu0 0.0
      %251 = vmatprep.subr.mxu0 0.0
      %252 = vmatpush1.msra.mxu0 0.0
      %253 = vmatprep.subr.mxu0 0.0
      %254 = vmatpush1.msra.mxu0 0.0
      %255 = vmatprep.subr.mxu0 0.0
      %256 = vmatpush1.msra.mxu0 0.0
      %257 = vmatprep.subr.mxu0 0.0
      %258 = vmatpush1.msra.mxu0 0.0
      %259 = vmatprep.subr.mxu0 0.0
      %260 = vmatpush1.msra.mxu0 0.0
      %261 = vmatprep.subr.mxu0 0.0
      %262 = vmatpush1.msra.mxu0 0.0
      %263 = vmatprep.subr.mxu0 0.0
      %264 = vmatpush1.msra.mxu0 0.0
      %265 = vmatprep.subr.mxu0 0.0
      %266 = vmatpush1.msra.mxu0 0.0
      %267 = vmatprep.subr.mxu0 0.0
      %268 = vmatpush1.msra.mxu0 0.0
      %269 = vmatprep.subr.mxu0 0.0
      %270 = vmatpush1.msra.mxu0 0.0
      %271 = vmatprep.subr.mxu0 0.0
      %272 = vmatpush1.msra.mxu0 0.0
      %273 = vmatprep.subr.mxu0 0.0
      %274 = vmatpush1.msra.mxu0 0.0
      %275 = vmatprep.subr.mxu0 0.0
      %276 = vmatpush1.msra.mxu0 0.0
      %277 = vmatprep.subr.mxu0 0.0
      %278 = vmatpush1.msra.mxu0 0.0
      %279 = vmatprep.subr.mxu0 0.0
      %280 = vmatpush1.msra.mxu0 0.0
      %281 = vmatprep.subr.mxu0 0.0
      %282 = vmatpush1.msra.mxu0 0.0
      %283 = vmatprep.subr.mxu0 0.0
      %284 = vmatpush1.msra.mxu0 0.0
      %285 = vmatprep.subr.mxu0 0.0
      %286 = vmatpush1.msra.mxu0 0.0
      %287 = vmatprep.subr.mxu0 0.0
      %288 = vmatpush1.msra.mxu0 0.0
      %289 = vmatprep.mubr.f32.mxu0 0.0
      %290 = vmatmul.mubr.f32.gmra.mrb[0].mxu0 %v214
      %v291 = vpop.f32.mrb[0].mxu0
      %v292 = vadd.f32 0.0, %v291
      %v293 = vpop.f32.mrb[0].mxu0
      %v294 = vadd.f32 0.0, %v293
      %295 = vmatprep.mubr.f32.mxu0 0.0
      %296 = vmatmul.mubr.f32.gmra.mrb[0].mxu0 %v217
      %v297 = vpop.f32.mrb[0].mxu0
      %v298 = vadd.f32 0.0, %v297
      %v299 = vpop.f32.mrb[0].mxu0
      %v300 = vadd.f32 0.0, %v299
      %301 = vmatprep.mubr.f32.mxu0 0.0
      %302 = vmatmul.mubr.f32.gmra.mrb[0].mxu0 %v220
      %v303 = vpop.f32.mrb[0].mxu0
      %v304 = vadd.f32 0.0, %v303
      %v305 = vpop.f32.mrb[0].mxu0
      %v306 = vadd.f32 0.0, %v305
      %307 = vmatprep.mubr.f32.mxu0 0.0
      %308 = vmatmul.mubr.f32.gmra.mrb[0].mxu0 %v223
      %v309 = vpop.f32.mrb[0].mxu0
      %v310 = vadd.f32 0.0, %v309
      %v311 = vpop.f32.mrb[0].mxu0
      %v312 = vadd.f32 0.0, %v311
      %313 = vdwg.mxu0
      %v314 = vsel %vm186, %v294, 0.0
      %v315 = vadd.f32 %v292, %v314
      %316 = vadd.xlane.f32.xlu0 %v315
      %v317 = vpop.xlane.xlu0 %316
      %v318 = vsel %vm186, %v300, 0.0
      %v319 = vadd.f32 %v298, %v318
      %320 = vadd.xlane.f32.xlu0 %v319
      %v321 = vpop.xlane.xlu0 %320
      %v322 = vsel %vm186, %v306, 0.0
      %v323 = vadd.f32 %v304, %v322
      %324 = vadd.xlane.f32.xlu0 %v323
      %v325 = vpop.xlane.xlu0 %324
      %v326 = vsel %vm186, %v312, 0.0
      %v327 = vadd.f32 %v310, %v326
      %328 = vadd.xlane.f32.xlu0 %v327
      %v329 = vpop.xlane.xlu0 %328
      %v330 = vmul.f32 %v317, %v191
      %v331 = vmul.f32 %v321, %v191
      %v332 = vmul.f32 %v325, %v191
      %v333 = vmul.f32 %v329, %v191
      %v334 = vsub.f32 %v292, %v330
      %v335 = vsub.f32 %v294, %v330
      %v336 = vsub.f32 %v298, %v331
      %v337 = vsub.f32 %v300, %v331
      %v338 = vsub.f32 %v304, %v332
      %v339 = vsub.f32 %v306, %v332
      %v340 = vsub.f32 %v310, %v333
      %v341 = vsub.f32 %v312, %v333
      %v342 = vmul.f32 %v334, %v334
      %v343 = vmul.f32 %v335, %v335
      %v344 = vmul.f32 %v336, %v336
      %v345 = vmul.f32 %v337, %v337
      %v346 = vmul.f32 %v338, %v338
      %v347 = vmul.f32 %v339, %v339
      %v348 = vmul.f32 %v340, %v340
      %v349 = vmul.f32 %v341, %v341
      %v350 = vsel %vm186, %v343, 0.0
      %v351 = vadd.f32 %v342, %v350
      %352 = vadd.xlane.f32.xlu0 %v351
      %v353 = vpop.xlane.xlu0 %352
      %v354 = vsel %vm186, %v345, 0.0
      %v355 = vadd.f32 %v344, %v354
      %356 = vadd.xlane.f32.xlu0 %v355
      %v357 = vpop.xlane.xlu0 %356
      %v358 = vsel %vm186, %v347, 0.0
      %v359 = vadd.f32 %v346, %v358
      %360 = vadd.xlane.f32.xlu0 %v359
      %v361 = vpop.xlane.xlu0 %360
      %v362 = vsel %vm186, %v349, 0.0
      %v363 = vadd.f32 %v348, %v362
      %364 = vadd.xlane.f32.xlu0 %v363
      %v365 = vpop.xlane.xlu0 %364
      %v366 = vmul.f32 %v353, %v191
      %v367 = vmul.f32 %v357, %v191
      %v368 = vmul.f32 %v361, %v191
      %v369 = vmul.f32 %v365, %v191
      %v370 = vadd.f32 %v366, 1e-05
      %v371 = vadd.f32 %v367, 1e-05
      %v372 = vadd.f32 %v368, 1e-05
      %v373 = vadd.f32 %v369, 1e-05
      %v374 = vrsqrt.pop %v370
      %v375 = vrsqrt.pop %v371
      %v376 = vrsqrt.pop %v372
      %v377 = vrsqrt.pop %v373
      %v378 = vmul.f32 %v334, %v374
      %v379 = vmul.f32 %v335, %v374
      %v380 = vmul.f32 %v336, %v375
      %v381 = vmul.f32 %v337, %v375
      %v382 = vmul.f32 %v338, %v376
      %v383 = vmul.f32 %v339, %v376
      %v384 = vmul.f32 %v340, %v377
      %v385 = vmul.f32 %v341, %v377
      %386 = vst [vmem:[%s183] sm:$0xff] %v378
      %387 = vst.msk [vmem:[%s183 + $0x8] sm:$0xff] %vm186, %v379
      %388 = vst [vmem:[%s183 + $0x10] sm:$0xff] %v380
      %389 = vst.msk [vmem:[%s183 + $0x18] sm:$0xff] %vm186, %v381
      %390 = vst [vmem:[%s183 + $0x20] sm:$0xff] %v382
      %391 = vst.msk [vmem:[%s183 + $0x28] sm:$0xff] %vm186, %v383
      %392 = vst [vmem:[%s183 + $0x30] sm:$0xff] %v384
      %393 = vst.msk [vmem:[%s183 + $0x38] sm:$0xff] %vm186, %v385
      %p394 = scmp.lt.s32.totalorder %s15, 1
      %s395 = scalar_select %p394, %s15, 1
      %s396 = smul.addr %s395, 2
      %s397 = smul.addr %s396, 8
      %s398 = scalar_lea.vmem %s2, %s397
      %p399 = scmp.lt.s32.totalorder %s15, 1
      %s400 = scalar_select %p399, %s15, 1
      %s401 = smul.addr %s400, 8
      %s402 = smul.addr %s401, 8
      %s403 = scalar_lea.vmem %s3, %s402
      // Predicated region
      $region29: #{block_mix_forward.12} parent=27 // pred_check
        %p404 = pneg %p80
      $region30: #{block_mix_forward.12} parent=27 // pred_check_branch
        %406 = sbr.rel (%p404) target = $region32
      $region31: #{block_mix_forward.12} parent=27 // pred_region
        _
      $region32: #{block_mix_forward.12} parent=27 // pred_fallthru
        _
      // Predicated region
      $region33: #{block_mix_forward.12} parent=27 // pred_check
        %p407 = pneg %p106
      $region34: #{block_mix_forward.12} parent=27 // pred_check_branch
        %409 = sbr.rel (%p407) target = $region36
      $region35: #{block_mix_forward.12} parent=27 // pred_region
        _
      $region36: #{block_mix_forward.12} parent=27 // pred_fallthru
        _
    $region28: #{block_mix_forward.12} parent=5 // pred_fallthru
      _
    %p410 = scmp.le.s32.totalorder 2, %s10
    // Predicated region
    $region37: #{block_mix_forward.12} parent=5 // pred_check
      %p411 = pneg %p410
    $region38: #{block_mix_forward.12} parent=5 // pred_check_branch
      %413 = sbr.rel (%p411) target = $region40
    $region39: #{block_mix_forward.12} parent=5 // pred_region
      %s414 = ssub.s32 %s10, 2
      // Predicated region
      $region41: #{block_mix_forward.12} parent=39 // pred_check
        %p415 = pneg %p86
      $region42: #{block_mix_forward.12} parent=39 // pred_check_branch
        %417 = sbr.rel (%p415) target = $region44
      $region43: #{block_mix_forward.12} parent=39 // pred_region
        %p418 = scmp.lt.s32.totalorder %s16, 1
        %s419 = scalar_select %p418, %s16, 1
        %s420 = smul.addr %s419, 2
        %s421 = smul.addr %s420, 8
        %s422 = scalar_lea.vmem %s2, %s421
      $region44: #{block_mix_forward.12} parent=39 // pred_fallthru
        _
      // Predicated region
      $region45: #{block_mix_forward.12} parent=39 // pred_check
        %p423 = pneg %p112
      $region46: #{block_mix_forward.12} parent=39 // pred_check_branch
        %425 = sbr.rel (%p423) target = $region48
      $region47: #{block_mix_forward.12} parent=39 // pred_region
        %p426 = scmp.lt.s32.totalorder %s16, 1
        %s427 = scalar_select %p426, %s16, 1
        %s428 = smul.addr %s427, 8
        %s429 = smul.addr %s428, 8
        %s430 = scalar_lea.vmem %s3, %s429
      $region48: #{block_mix_forward.12} parent=39 // pred_fallthru
        _
    $region40: #{block_mix_forward.12} parent=5 // pred_fallthru
      _
  $region6: #{block_mix_forward.12} parent=0 // loop_footer
    %s14 = sadd.s32 1, %s10
  $region7: #{block_mix_forward.12} parent=0 // loop_footer_branch
    %9 = sbr.rel target = $region3
  $region8: #{block_mix_forward.12} parent=0 // loop_exit
    _

// kernel: block_mix_forward.14
$region0: #{block_mix_forward.14}
  #allocation0 [shape = 'u32[]', space=smem, size = 0x4, offset = 0x4, fixed_abs, tag = 'smem constant byte address 0x4 - core index']
  #allocation1 [shape = 'u32[144,128]{1,0:T(1,128)}', space=vmem, size = 0x12000, scoped, tag = 'internal scratch']
  %s0 = inlined_call_operand.vmem [shape: f32[2,25,8,16], index: 0, kind: input, shape index: {}]
  %s1 = inlined_call_operand.vmem [shape: f32[25,8,1], index: 1, kind: input, shape index: {}]
  %s2 = inlined_call_operand.vmem [shape: f32[24,8], index: 2, kind: input, shape index: {}]
  %s3 = inlined_call_operand.vmem [shape: f32[2,24,16], index: 3, kind: output, shape index: {}]
  %s4 = sld [smem:[#allocation0]]
  $region45: #{block_mix_forward.14} parent=0
    _
  %s6 = ssub.s32 1, %s4
  %s7 = scalar_select 0, %s6, %s4
  loop: start=0, step=1, limit=4
  $region2: #{block_mix_forward.14} parent=0 // loop_pre_header
    _
  $region3: #{block_mix_forward.14} parent=0 // loop_header
    %s9 = sphi 0, %s13
    %p10 = scmp.ge.s32.totalorder %s9, 4
    %s19 = sphi 0, %s21
    %s22 = sphi 0, %s19
    %s23 = sphi 0, %s22
    %s39 = sphi 0, %s23
    %s43 = sphi 0, %s43
    %s45 = sphi 0, %s43
    %s46 = sphi 0, %s45
    %s60 = sphi 0, %s46
    %s64 = sphi 0, %s64
    %s66 = sphi 0, %s64
    %s67 = sphi 0, %s66
    %s81 = sphi 0, %s67
    %s87 = sphi 0, %s89
    %s90 = sphi 0, %s87
    %s91 = sphi 0, %s90
    %s107 = sphi 0, %s91
  $region4: #{block_mix_forward.14} parent=0 // loop_header_branch
    %12 = sbr.rel (%p10) target = $region8
  $region5: #{block_mix_forward.14} parent=0 // loop_body
    %s14 = ssub.s32 %s9, 1
    %s15 = ssub.s32 %s9, 2
    %s16 = sadd.s32 %s9, 1
    %s17 = ssub.s32 %s9, %s16
    %p18 = scmp.eq.s32.totalorder %s17, 0
    %s20 = sadd.s32 %s19, 1
    %s21 = scalar_select %p18, %s19, %s20
    %p24 = pneg %p18
    %p25 = scmp.eq.s32.totalorder %s9, 1
    %p26 = por %p24, %p25
    %p27 = scmp.ne.s32.totalorder %s19, %s22
    %p28 = scmp.eq.s32.totalorder %s9, 0
    %p29 = por %p27, %p28
    %p30 = scmp.ne.s32.totalorder %s19, %s22
    %p31 = scmp.eq.s32.totalorder %s14, 1
    %p32 = por %p30, %p31
    %p33 = scmp.ne.s32.totalorder %s22, %s23
    %p34 = scmp.eq.s32.totalorder %s14, 0
    %p35 = por %p33, %p34
    %p36 = scmp.ne.s32.totalorder %s22, %s23
    %p37 = scmp.eq.s32.totalorder %s15, 1
    %p38 = por %p36, %p37
    %p40 = scmp.ne.s32.totalorder %s23, %s39
    %p41 = scmp.eq.s32.totalorder %s15, 0
    %p42 = por %p40, %p41
    %s44 = sadd.s32 %s43, 1
    %p47 = scmp.eq.s32.totalorder %s9, 1
    %p48 = scmp.ne.s32.totalorder %s43, %s45
    %p49 = scmp.eq.s32.totalorder %s9, 0
    %p50 = por %p48, %p49
    %p51 = scmp.ne.s32.totalorder %s43, %s45
    %p52 = scmp.eq.s32.totalorder %s14, 1
    %p53 = por %p51, %p52
    %p54 = scmp.ne.s32.totalorder %s45, %s46
    %p55 = scmp.eq.s32.totalorder %s14, 0
    %p56 = por %p54, %p55
    %p57 = scmp.ne.s32.totalorder %s45, %s46
    %p58 = scmp.eq.s32.totalorder %s15, 1
    %p59 = por %p57, %p58
    %p61 = scmp.ne.s32.totalorder %s46, %s60
    %p62 = scmp.eq.s32.totalorder %s15, 0
    %p63 = por %p61, %p62
    %s65 = sadd.s32 %s64, 1
    %p68 = scmp.eq.s32.totalorder %s9, 1
    %p69 = scmp.ne.s32.totalorder %s64, %s66
    %p70 = scmp.eq.s32.totalorder %s9, 0
    %p71 = por %p69, %p70
    %p72 = scmp.ne.s32.totalorder %s64, %s66
    %p73 = scmp.eq.s32.totalorder %s14, 1
    %p74 = por %p72, %p73
    %p75 = scmp.ne.s32.totalorder %s66, %s67
    %p76 = scmp.eq.s32.totalorder %s14, 0
    %p77 = por %p75, %p76
    %p78 = scmp.ne.s32.totalorder %s66, %s67
    %p79 = scmp.eq.s32.totalorder %s15, 1
    %p80 = por %p78, %p79
    %p82 = scmp.ne.s32.totalorder %s67, %s81
    %p83 = scmp.eq.s32.totalorder %s15, 0
    %p84 = por %p82, %p83
    %s85 = ssub.s32 %s9, %s16
    %p86 = scmp.eq.s32.totalorder %s85, 0
    %s88 = sadd.s32 %s87, 1
    %s89 = scalar_select %p86, %s87, %s88
    %p92 = pneg %p86
    %p93 = scmp.eq.s32.totalorder %s9, 1
    %p94 = por %p92, %p93
    %p95 = scmp.ne.s32.totalorder %s87, %s90
    %p96 = scmp.eq.s32.totalorder %s9, 0
    %p97 = por %p95, %p96
    %p98 = scmp.ne.s32.totalorder %s87, %s90
    %p99 = scmp.eq.s32.totalorder %s14, 1
    %p100 = por %p98, %p99
    %p101 = scmp.ne.s32.totalorder %s90, %s91
    %p102 = scmp.eq.s32.totalorder %s14, 0
    %p103 = por %p101, %p102
    %p104 = scmp.ne.s32.totalorder %s90, %s91
    %p105 = scmp.eq.s32.totalorder %s15, 1
    %p106 = por %p104, %p105
    %p108 = scmp.ne.s32.totalorder %s91, %s107
    %p109 = scmp.eq.s32.totalorder %s15, 0
    %p110 = por %p108, %p109
    %p111 = scmp.le.s32.totalorder 1, %s9
    %p112 = scmp.lt.s32.totalorder %s9, 3
    %p113 = pnand %p111, %p112
    %p114 = pneg %p113
    // Predicated region
    $region9: #{block_mix_forward.14} parent=5 // pred_check
      _
    $region10: #{block_mix_forward.14} parent=5 // pred_check_branch
      %116 = sbr.rel (%p113) target = $region12
    $region11: #{block_mix_forward.14} parent=5 // pred_region
      %s117 = ssub.s32 %s9, 1
      // Predicated region
      $region13: #{block_mix_forward.14} parent=11 // pred_check
        %p118 = pneg %p56
      $region14: #{block_mix_forward.14} parent=11 // pred_check_branch
        %120 = sbr.rel (%p118) target = $region16
      $region15: #{block_mix_forward.14} parent=11 // pred_region
        _
      $region16: #{block_mix_forward.14} parent=11 // pred_fallthru
        _
      // Predicated region
      $region17: #{block_mix_forward.14} parent=11 // pred_check
        %p121 = pneg %p77
      $region18: #{block_mix_forward.14} parent=11 // pred_check_branch
        %123 = sbr.rel (%p121) target = $region20
      $region19: #{block_mix_forward.14} parent=11 // pred_region
        _
      $region20: #{block_mix_forward.14} parent=11 // pred_fallthru
        _
    $region12: #{block_mix_forward.14} parent=5 // pred_fallthru
      _
    %p124 = scmp.lt.s32.totalorder %s9, 2
    // Predicated region
    $region21: #{block_mix_forward.14} parent=5 // pred_check
      %p125 = pneg %p124
    $region22: #{block_mix_forward.14} parent=5 // pred_check_branch
      %127 = sbr.rel (%p125) target = $region24
    $region23: #{block_mix_forward.14} parent=5 // pred_region
      // Predicated region
      $region25: #{block_mix_forward.14} parent=23 // pred_check
        %p128 = pneg %p29
      $region26: #{block_mix_forward.14} parent=23 // pred_check_branch
        %130 = sbr.rel (%p128) target = $region28
      $region27: #{block_mix_forward.14} parent=23 // pred_region
        %p131 = scmp.lt.s32.totalorder %s9, 1
        %s132 = scalar_select %p131, %s9, 1
        %s133 = smul.addr %s132, 25
        %s134 = smul.addr %s133, 8
        %s135 = scalar_lea.vmem %s0, %s134
      $region28: #{block_mix_forward.14} parent=23 // pred_fallthru
        _
    $region24: #{block_mix_forward.14} parent=5 // pred_fallthru
      _
    %p136 = scmp.le.s32.totalorder 1, %s9
    %p137 = scmp.lt.s32.totalorder %s9, 3
    %p138 = pnand %p136, %p137
    %p139 = pneg %p138
    // Predicated region
    $region29: #{block_mix_forward.14} parent=5 // pred_check
      _
    $region30: #{block_mix_forward.14} parent=5 // pred_check_branch
      %141 = sbr.rel (%p138) target = $region32
    $region31: #{block_mix_forward.14} parent=5 // pred_region
      %s142 = ssub.s32 %s9, 1
      %p143 = scmp.lt.s32.totalorder %s14, 1
      %s144 = scalar_select %p143, %s14, 1
      %s145 = smul.addr %s144, 25
      %s146 = smul.addr %s145, 8
      %s147 = scalar_lea.vmem %s0, %s146
      %p148 = pneg %p35
      %p149 = pneg %p32
      %p150 = pneg %p56
      %p151 = pneg %p53
      %p152 = pneg %p77
      %p153 = pneg %p74
      %p154 = pneg %p103
      %p155 = pneg %p100
      %p156 = scmp.lt.s32.totalorder %s14, 1
      %s157 = scalar_select %p156, %s14, 1
      %s158 = smul.addr %s157, 3
      %s159 = smul.addr %s158, 8
      %s160 = scalar_lea.vmem %s3, %s159
      %p161 = scmp.lt.s32.totalorder %s14, 1
      %s162 = scalar_select %p161, %s14, 1
      %s163 = smul.addr %s162, 25
      %s164 = smul.addr %s163, 8
      %s165 = scalar_lea.vmem %s0, %s164
      %p166 = scmp.lt.s32.totalorder %s14, 1
      %s167 = scalar_select %p166, %s14, 1
      %s168 = smul.addr %s167, 3
      %s169 = smul.addr %s168, 8
      %s170 = scalar_lea.vmem %s3, %s169
      %v171 = vld [vmem:[%s165] sm:$0xff]
      %v172 = vld [vmem:[%s1] sm:$0xff]
      %174 = vset.pattern.permute.xlu0 0
      %175 = vperm.xlu0 %174, %v172
      %v176 = vpop.permute.xlu0 %175
      %v178 = vmul.f32 %v171, %v176
      %v179 = vadd.f32 %v178, 0.0
      %s180 = scalar_lea.vmem %s165, 8
      %v181 = vld [vmem:[%s180] sm:$0xff]
      %s182 = scalar_lea.vmem %s1, 8
      %v183 = vld [vmem:[%s182] sm:$0xff]
      %185 = vset.pattern.permute.xlu0 0
      %186 = vperm.xlu0 %185, %v183
      %v187 = vpop.permute.xlu0 %186
      %v189 = vmul.f32 %v181, %v187
      %v190 = vadd.f32 %v179, %v189
      %s191 = scalar_lea.vmem %s165, 16
      %v192 = vld [vmem:[%s191] sm:$0xff]
      %s193 = scalar_lea.vmem %s1, 16
      %v194 = vld [vmem:[%s193] sm:$0xff]
      %196 = vset.pattern.permute.xlu0 0
      %197 = vperm.xlu0 %196, %v194
      %v198 = vpop.permute.xlu0 %197
      %v200 = vmul.f32 %v192, %v198
      %v201 = vadd.f32 %v190, %v200
      %s202 = scalar_lea.vmem %s165, 24
      %v203 = vld [vmem:[%s202] sm:$0xff]
      %s204 = scalar_lea.vmem %s1, 24
      %v205 = vld [vmem:[%s204] sm:$0xff]
      %207 = vset.pattern.permute.xlu0 0
      %208 = vperm.xlu0 %207, %v205
      %v209 = vpop.permute.xlu0 %208
      %v211 = vmul.f32 %v203, %v209
      %v212 = vadd.f32 %v201, %v211
      %s213 = scalar_lea.vmem %s165, 32
      %v214 = vld [vmem:[%s213] sm:$0xff]
      %s215 = scalar_lea.vmem %s1, 32
      %v216 = vld [vmem:[%s215] sm:$0xff]
      %218 = vset.pattern.permute.xlu0 0
      %219 = vperm.xlu0 %218, %v216
      %v220 = vpop.permute.xlu0 %219
      %v222 = vmul.f32 %v214, %v220
      %v223 = vadd.f32 %v212, %v222
      %s224 = scalar_lea.vmem %s165, 40
      %v225 = vld [vmem:[%s224] sm:$0xff]
      %s226 = scalar_lea.vmem %s1, 40
      %v227 = vld [vmem:[%s226] sm:$0xff]
      %229 = vset.pattern.permute.xlu0 0
      %230 = vperm.xlu0 %229, %v227
      %v231 = vpop.permute.xlu0 %230
      %v233 = vmul.f32 %v225, %v231
      %v234 = vadd.f32 %v223, %v233
      %s235 = scalar_lea.vmem %s165, 48
      %v236 = vld [vmem:[%s235] sm:$0xff]
      %s237 = scalar_lea.vmem %s1, 48
      %v238 = vld [vmem:[%s237] sm:$0xff]
      %240 = vset.pattern.permute.xlu0 0
      %241 = vperm.xlu0 %240, %v238
      %v242 = vpop.permute.xlu0 %241
      %v244 = vmul.f32 %v236, %v242
      %v245 = vadd.f32 %v234, %v244
      %s246 = scalar_lea.vmem %s165, 56
      %v247 = vld [vmem:[%s246] sm:$0xff]
      %s248 = scalar_lea.vmem %s1, 56
      %v249 = vld [vmem:[%s248] sm:$0xff]
      %251 = vset.pattern.permute.xlu0 0
      %252 = vperm.xlu0 %251, %v249
      %v253 = vpop.permute.xlu0 %252
      %v255 = vmul.f32 %v247, %v253
      %v256 = vadd.f32 %v245, %v255
      %s257 = scalar_lea.vmem %s165, 64
      %v258 = vld [vmem:[%s257] sm:$0xff]
      %s259 = scalar_lea.vmem %s1, 64
      %v260 = vld [vmem:[%s259] sm:$0xff]
      %262 = vset.pattern.permute.xlu0 0
      %263 = vperm.xlu0 %262, %v260
      %v264 = vpop.permute.xlu0 %263
      %v266 = vmul.f32 %v258, %v264
      %v267 = vadd.f32 %v256, %v266
      %s268 = scalar_lea.vmem %s165, 72
      %v269 = vld [vmem:[%s268] sm:$0xff]
      %s270 = scalar_lea.vmem %s1, 72
      %v271 = vld [vmem:[%s270] sm:$0xff]
      %273 = vset.pattern.permute.xlu0 0
      %274 = vperm.xlu0 %273, %v271
      %v275 = vpop.permute.xlu0 %274
      %v277 = vmul.f32 %v269, %v275
      %v278 = vadd.f32 %v267, %v277
      %s279 = scalar_lea.vmem %s165, 80
      %v280 = vld [vmem:[%s279] sm:$0xff]
      %s281 = scalar_lea.vmem %s1, 80
      %v282 = vld [vmem:[%s281] sm:$0xff]
      %284 = vset.pattern.permute.xlu0 0
      %285 = vperm.xlu0 %284, %v282
      %v286 = vpop.permute.xlu0 %285
      %v288 = vmul.f32 %v280, %v286
      %v289 = vadd.f32 %v278, %v288
      %s290 = scalar_lea.vmem %s165, 88
      %v291 = vld [vmem:[%s290] sm:$0xff]
      %s292 = scalar_lea.vmem %s1, 88
      %v293 = vld [vmem:[%s292] sm:$0xff]
      %295 = vset.pattern.permute.xlu0 0
      %296 = vperm.xlu0 %295, %v293
      %v297 = vpop.permute.xlu0 %296
      %v299 = vmul.f32 %v291, %v297
      %v300 = vadd.f32 %v289, %v299
      %s301 = scalar_lea.vmem %s165, 96
      %v302 = vld [vmem:[%s301] sm:$0xff]
      %s303 = scalar_lea.vmem %s1, 96
      %v304 = vld [vmem:[%s303] sm:$0xff]
      %306 = vset.pattern.permute.xlu0 0
      %307 = vperm.xlu0 %306, %v304
      %v308 = vpop.permute.xlu0 %307
      %v310 = vmul.f32 %v302, %v308
      %v311 = vadd.f32 %v300, %v310
      %s312 = scalar_lea.vmem %s165, 104
      %v313 = vld [vmem:[%s312] sm:$0xff]
      %s314 = scalar_lea.vmem %s1, 104
      %v315 = vld [vmem:[%s314] sm:$0xff]
      %317 = vset.pattern.permute.xlu0 0
      %318 = vperm.xlu0 %317, %v315
      %v319 = vpop.permute.xlu0 %318
      %v321 = vmul.f32 %v313, %v319
      %v322 = vadd.f32 %v311, %v321
      %s323 = scalar_lea.vmem %s165, 112
      %v324 = vld [vmem:[%s323] sm:$0xff]
      %s325 = scalar_lea.vmem %s1, 112
      %v326 = vld [vmem:[%s325] sm:$0xff]
      %328 = vset.pattern.permute.xlu0 0
      %329 = vperm.xlu0 %328, %v326
      %v330 = vpop.permute.xlu0 %329
      %v332 = vmul.f32 %v324, %v330
      %v333 = vadd.f32 %v322, %v332
      %s334 = scalar_lea.vmem %s165, 120
      %v335 = vld [vmem:[%s334] sm:$0xff]
      %s336 = scalar_lea.vmem %s1, 120
      %v337 = vld [vmem:[%s336] sm:$0xff]
      %339 = vset.pattern.permute.xlu0 0
      %340 = vperm.xlu0 %339, %v337
      %v341 = vpop.permute.xlu0 %340
      %v343 = vmul.f32 %v335, %v341
      %v344 = vadd.f32 %v333, %v343
      %s345 = scalar_lea.vmem %s165, 128
      %v346 = vld [vmem:[%s345] sm:$0xff]
      %s347 = scalar_lea.vmem %s1, 128
      %v348 = vld [vmem:[%s347] sm:$0xff]
      %350 = vset.pattern.permute.xlu0 0
      %351 = vperm.xlu0 %350, %v348
      %v352 = vpop.permute.xlu0 %351
      %v354 = vmul.f32 %v346, %v352
      %v355 = vadd.f32 %v344, %v354
      %s356 = scalar_lea.vmem %s165, 136
      %v357 = vld [vmem:[%s356] sm:$0xff]
      %s358 = scalar_lea.vmem %s1, 136
      %v359 = vld [vmem:[%s358] sm:$0xff]
      %361 = vset.pattern.permute.xlu0 0
      %362 = vperm.xlu0 %361, %v359
      %v363 = vpop.permute.xlu0 %362
      %v365 = vmul.f32 %v357, %v363
      %v366 = vadd.f32 %v355, %v365
      %s367 = scalar_lea.vmem %s165, 144
      %v368 = vld [vmem:[%s367] sm:$0xff]
      %s369 = scalar_lea.vmem %s1, 144
      %v370 = vld [vmem:[%s369] sm:$0xff]
      %372 = vset.pattern.permute.xlu0 0
      %373 = vperm.xlu0 %372, %v370
      %v374 = vpop.permute.xlu0 %373
      %v376 = vmul.f32 %v368, %v374
      %v377 = vadd.f32 %v366, %v376
      %s378 = scalar_lea.vmem %s165, 152
      %v379 = vld [vmem:[%s378] sm:$0xff]
      %s380 = scalar_lea.vmem %s1, 152
      %v381 = vld [vmem:[%s380] sm:$0xff]
      %383 = vset.pattern.permute.xlu0 0
      %384 = vperm.xlu0 %383, %v381
      %v385 = vpop.permute.xlu0 %384
      %v387 = vmul.f32 %v379, %v385
      %v388 = vadd.f32 %v377, %v387
      %s389 = scalar_lea.vmem %s165, 160
      %v390 = vld [vmem:[%s389] sm:$0xff]
      %s391 = scalar_lea.vmem %s1, 160
      %v392 = vld [vmem:[%s391] sm:$0xff]
      %394 = vset.pattern.permute.xlu0 0
      %395 = vperm.xlu0 %394, %v392
      %v396 = vpop.permute.xlu0 %395
      %v398 = vmul.f32 %v390, %v396
      %v399 = vadd.f32 %v388, %v398
      %s400 = scalar_lea.vmem %s165, 168
      %v401 = vld [vmem:[%s400] sm:$0xff]
      %s402 = scalar_lea.vmem %s1, 168
      %v403 = vld [vmem:[%s402] sm:$0xff]
      %405 = vset.pattern.permute.xlu0 0
      %406 = vperm.xlu0 %405, %v403
      %v407 = vpop.permute.xlu0 %406
      %v409 = vmul.f32 %v401, %v407
      %v410 = vadd.f32 %v399, %v409
      %s411 = scalar_lea.vmem %s165, 176
      %v412 = vld [vmem:[%s411] sm:$0xff]
      %s413 = scalar_lea.vmem %s1, 176
      %v414 = vld [vmem:[%s413] sm:$0xff]
      %416 = vset.pattern.permute.xlu0 0
      %417 = vperm.xlu0 %416, %v414
      %v418 = vpop.permute.xlu0 %417
      %v420 = vmul.f32 %v412, %v418
      %v421 = vadd.f32 %v410, %v420
      %s422 = scalar_lea.vmem %s165, 184
      %v423 = vld [vmem:[%s422] sm:$0xff]
      %s424 = scalar_lea.vmem %s1, 184
      %v425 = vld [vmem:[%s424] sm:$0xff]
      %427 = vset.pattern.permute.xlu0 0
      %428 = vperm.xlu0 %427, %v425
      %v429 = vpop.permute.xlu0 %428
      %v431 = vmul.f32 %v423, %v429
      %v432 = vadd.f32 %v421, %v431
      %s433 = scalar_lea.vmem %s165, 192
      %v434 = vld [vmem:[%s433] sm:$0xff]
      %s435 = scalar_lea.vmem %s1, 192
      %v436 = vld [vmem:[%s435] sm:$0xff]
      %438 = vset.pattern.permute.xlu0 0
      %439 = vperm.xlu0 %438, %v436
      %v440 = vpop.permute.xlu0 %439
      %v442 = vmul.f32 %v434, %v440
      %v443 = vadd.f32 %v432, %v442
      %vm444 = vcmask 130048
      %v445 = vsel %vm444, %v443, 0.0
      %446 = vadd.xlane.f32.xlu0 %v445
      %v447 = vpop.xlane.xlu0 %446
      %v448 = vrcp.pop 16.0
      %v449 = vmul.f32 %v447, %v448
      %v450 = vsub.f32 %v443, %v449
      %v451 = vmul.f32 %v450, %v450
      %v452 = vsel %vm444, %v451, 0.0
      %453 = vadd.xlane.f32.xlu0 %v452
      %v454 = vpop.xlane.xlu0 %453
      %v455 = vmul.f32 %v454, %v448
      %v456 = vadd.f32 %v455, 1e-05
      %v457 = vrsqrt.pop %v456
      %v458 = vmul.f32 %v450, %v457
      %v459 = vld [vmem:[%s2] sm:$0xff]
      %v460 = vld [vmem:[%s2 + $0x8] sm:$0xff]
      %v461 = vld [vmem:[%s2 + $0x10] sm:$0xff]
      %vm462 = vcmask 64512
      %v464 = vsel %vm462, %v459, 0
      %v467 = vsel %vm462, %v460, 0
      %v470 = vsel %vm462, %v461, 0
      %472 = vmatprep.subr.mxu0 0.0
      %473 = vmatpush1.msra.mxu0 %v458
      %474 = vmatprep.subr.mxu0 0.0
      %475 = vmatpush1.msra.mxu0 0.0
      %476 = vmatprep.subr.mxu0 0.0
      %477 = vmatpush1.msra.mxu0 0.0
      %478 = vmatprep.subr.mxu0 0.0
      %479 = vmatpush1.msra.mxu0 0.0
      %480 = vmatprep.subr.mxu0 0.0
      %481 = vmatpush1.msra.mxu0 0.0
      %482 = vmatprep.subr.mxu0 0.0
      %483 = vmatpush1.msra.mxu0 0.0
      %484 = vmatprep.subr.mxu0 0.0
      %485 = vmatpush1.msra.mxu0 0.0
      %486 = vmatprep.subr.mxu0 0.0
      %487 = vmatpush1.msra.mxu0 0.0
      %488 = vmatprep.subr.mxu0 0.0
      %489 = vmatpush1.msra.mxu0 0.0
      %490 = vmatprep.subr.mxu0 0.0
      %491 = vmatpush1.msra.mxu0 0.0
      %492 = vmatprep.subr.mxu0 0.0
      %493 = vmatpush1.msra.mxu0 0.0
      %494 = vmatprep.subr.mxu0 0.0
      %495 = vmatpush1.msra.mxu0 0.0
      %496 = vmatprep.subr.mxu0 0.0
      %497 = vmatpush1.msra.mxu0 0.0
      %498 = vmatprep.subr.mxu0 0.0
      %499 = vmatpush1.msra.mxu0 0.0
      %500 = vmatprep.subr.mxu0 0.0
      %501 = vmatpush1.msra.mxu0 0.0
      %502 = vmatprep.subr.mxu0 0.0
      %503 = vmatpush1.msra.mxu0 0.0
      %504 = vmatprep.subr.mxu0 0.0
      %505 = vmatpush1.msra.mxu0 0.0
      %506 = vmatprep.subr.mxu0 0.0
      %507 = vmatpush1.msra.mxu0 0.0
      %508 = vmatprep.subr.mxu0 0.0
      %509 = vmatpush1.msra.mxu0 0.0
      %510 = vmatprep.subr.mxu0 0.0
      %511 = vmatpush1.msra.mxu0 0.0
      %512 = vmatprep.subr.mxu0 0.0
      %513 = vmatpush1.msra.mxu0 0.0
      %514 = vmatprep.subr.mxu0 0.0
      %515 = vmatpush1.msra.mxu0 0.0
      %516 = vmatprep.subr.mxu0 0.0
      %517 = vmatpush1.msra.mxu0 0.0
      %518 = vmatprep.subr.mxu0 0.0
      %519 = vmatpush1.msra.mxu0 0.0
      %520 = vmatprep.subr.mxu0 0.0
      %521 = vmatpush1.msra.mxu0 0.0
      %522 = vmatprep.subr.mxu0 0.0
      %523 = vmatpush1.msra.mxu0 0.0
      %524 = vmatprep.subr.mxu0 0.0
      %525 = vmatpush1.msra.mxu0 0.0
      %526 = vmatprep.subr.mxu0 0.0
      %527 = vmatpush1.msra.mxu0 0.0
      %528 = vmatprep.subr.mxu0 0.0
      %529 = vmatpush1.msra.mxu0 0.0
      %530 = vmatprep.subr.mxu0 0.0
      %531 = vmatpush1.msra.mxu0 0.0
      %532 = vmatprep.subr.mxu0 0.0
      %533 = vmatpush1.msra.mxu0 0.0
      %534 = vmatprep.subr.mxu0 0.0
      %535 = vmatpush1.msra.mxu0 0.0
      %536 = vmatprep.mubr.f32.mxu0 0.0
      %537 = vmatmul.mubr.f32.gmra.mrb[0].mxu0 %v464
      %v538 = vpop.f32.mrb[0].mxu0
      %v539 = vadd.f32 0.0, %v538
      %v540 = vpop.f32.mrb[0].mxu0
      %541 = vmatprep.mubr.f32.mxu0 0.0
      %542 = vmatmul.mubr.f32.gmra.mrb[0].mxu0 %v467
      %v543 = vpop.f32.mrb[0].mxu0
      %v544 = vadd.f32 0.0, %v543
      %v545 = vpop.f32.mrb[0].mxu0
      %546 = vmatprep.mubr.f32.mxu0 0.0
      %547 = vmatmul.mubr.f32.gmra.mrb[0].mxu0 %v470
      %v548 = vpop.f32.mrb[0].mxu0
      %v549 = vadd.f32 0.0, %v548
      %v550 = vpop.f32.mrb[0].mxu0
      %551 = vdwg.mxu0
      %v552 = vsel %vm444, %v539, 0.0
      %553 = vadd.xlane.f32.xlu0 %v552
      %v554 = vpop.xlane.xlu0 %553
      %v555 = vsel %vm444, %v544, 0.0
      %556 = vadd.xlane.f32.xlu0 %v555
      %v557 = vpop.xlane.xlu0 %556
      %v558 = vsel %vm444, %v549, 0.0
      %559 = vadd.xlane.f32.xlu0 %v558
      %v560 = vpop.xlane.xlu0 %559
      %v561 = vmul.f32 %v554, %v448
      %v562 = vmul.f32 %v557, %v448
      %v563 = vmul.f32 %v560, %v448
      %v564 = vsub.f32 %v539, %v561
      %v565 = vsub.f32 %v544, %v562
      %v566 = vsub.f32 %v549, %v563
      %v567 = vmul.f32 %v564, %v564
      %v568 = vmul.f32 %v565, %v565
      %v569 = vmul.f32 %v566, %v566
      %v570 = vsel %vm444, %v567, 0.0
      %571 = vadd.xlane.f32.xlu0 %v570
      %v572 = vpop.xlane.xlu0 %571
      %v573 = vsel %vm444, %v568, 0.0
      %574 = vadd.xlane.f32.xlu0 %v573
      %v575 = vpop.xlane.xlu0 %574
      %v576 = vsel %vm444, %v569, 0.0
      %577 = vadd.xlane.f32.xlu0 %v576
      %v578 = vpop.xlane.xlu0 %577
      %v579 = vmul.f32 %v572, %v448
      %v580 = vmul.f32 %v575, %v448
      %v581 = vmul.f32 %v578, %v448
      %v582 = vadd.f32 %v579, 1e-05
      %v583 = vadd.f32 %v580, 1e-05
      %v584 = vadd.f32 %v581, 1e-05
      %v585 = vrsqrt.pop %v582
      %v586 = vrsqrt.pop %v583
      %v587 = vrsqrt.pop %v584
      %v588 = vmul.f32 %v564, %v585
      %v589 = vmul.f32 %v565, %v586
      %v590 = vmul.f32 %v566, %v587
      %591 = vst.msk [vmem:[%s170] sm:$0xff] %vm444, %v588
      %592 = vst.msk [vmem:[%s170 + $0x8] sm:$0xff] %vm444, %v589
      %593 = vst.msk [vmem:[%s170 + $0x10] sm:$0xff] %vm444, %v590
      %p594 = scmp.lt.s32.totalorder %s14, 1
      %s595 = scalar_select %p594, %s14, 1
      %s596 = smul.addr %s595, 3
      %s597 = smul.addr %s596, 8
      %s598 = scalar_lea.vmem %s3, %s597
      // Predicated region
      $region33: #{block_mix_forward.14} parent=31 // pred_check
        %p599 = pneg %p100
      $region34: #{block_mix_forward.14} parent=31 // pred_check_branch
        %601 = sbr.rel (%p599) target = $region36
      $region35: #{block_mix_forward.14} parent=31 // pred_region
        _
      $region36: #{block_mix_forward.14} parent=31 // pred_fallthru
        _
    $region32: #{block_mix_forward.14} parent=5 // pred_fallthru
      _
    %p602 = scmp.le.s32.totalorder 2, %s9
    // Predicated region
    $region37: #{block_mix_forward.14} parent=5 // pred_check
      %p603 = pneg %p602
    $region38: #{block_mix_forward.14} parent=5 // pred_check_branch
      %605 = sbr.rel (%p603) target = $region40
    $region39: #{block_mix_forward.14} parent=5 // pred_region
      %s606 = ssub.s32 %s9, 2
      // Predicated region
      $region41: #{block_mix_forward.14} parent=39 // pred_check
        %p607 = pneg %p106
      $region42: #{block_mix_forward.14} parent=39 // pred_check_branch
        %609 = sbr.rel (%p607) target = $region44
      $region43: #{block_mix_forward.14} parent=39 // pred_region
        %p610 = scmp.lt.s32.totalorder %s15, 1
        %s611 = scalar_select %p610, %s15, 1
        %s612 = smul.addr %s611, 3
        %s613 = smul.addr %s612, 8
        %s614 = scalar_lea.vmem %s3, %s613
      $region44: #{block_mix_forward.14} parent=39 // pred_fallthru
        _
    $region40: #{block_mix_forward.14} parent=5 // pred_fallthru
      _
  $region6: #{block_mix_forward.14} parent=0 // loop_footer
    %s13 = sadd.s32 1, %s9
  $region7: #{block_mix_forward.14} parent=0 // loop_footer_branch
    %8 = sbr.rel target = $region3
  $region8: #{block_mix_forward.14} parent=0 // loop_exit
    _

// kernel: block_mix_forward.13
$region0: #{block_mix_forward.13}
  #allocation0 [shape = 'u32[]', space=smem, size = 0x4, offset = 0x4, fixed_abs, tag = 'smem constant byte address 0x4 - core index']
  #allocation1 [shape = 'u32[144,128]{1,0:T(1,128)}', space=vmem, size = 0x12000, scoped, tag = 'internal scratch']
  %s0 = inlined_call_operand.vmem [shape: f32[2,9,8,36], index: 0, kind: input, shape index: {}]
  %s1 = inlined_call_operand.vmem [shape: f32[9,8,1], index: 1, kind: input, shape index: {}]
  %s2 = inlined_call_operand.vmem [shape: f32[24,8], index: 2, kind: input, shape index: {}]
  %s3 = inlined_call_operand.vmem [shape: f32[2,24,36], index: 3, kind: output, shape index: {}]
  %s4 = sld [smem:[#allocation0]]
  $region45: #{block_mix_forward.13} parent=0
    _
  %s6 = ssub.s32 1, %s4
  %s7 = scalar_select 0, %s6, %s4
  loop: start=0, step=1, limit=4
  $region2: #{block_mix_forward.13} parent=0 // loop_pre_header
    _
  $region3: #{block_mix_forward.13} parent=0 // loop_header
    %s9 = sphi 0, %s13
    %p10 = scmp.ge.s32.totalorder %s9, 4
    %s19 = sphi 0, %s21
    %s22 = sphi 0, %s19
    %s23 = sphi 0, %s22
    %s39 = sphi 0, %s23
    %s43 = sphi 0, %s43
    %s45 = sphi 0, %s43
    %s46 = sphi 0, %s45
    %s60 = sphi 0, %s46
    %s64 = sphi 0, %s64
    %s66 = sphi 0, %s64
    %s67 = sphi 0, %s66
    %s81 = sphi 0, %s67
    %s87 = sphi 0, %s89
    %s90 = sphi 0, %s87
    %s91 = sphi 0, %s90
    %s107 = sphi 0, %s91
  $region4: #{block_mix_forward.13} parent=0 // loop_header_branch
    %12 = sbr.rel (%p10) target = $region8
  $region5: #{block_mix_forward.13} parent=0 // loop_body
    %s14 = ssub.s32 %s9, 1
    %s15 = ssub.s32 %s9, 2
    %s16 = sadd.s32 %s9, 1
    %s17 = ssub.s32 %s9, %s16
    %p18 = scmp.eq.s32.totalorder %s17, 0
    %s20 = sadd.s32 %s19, 1
    %s21 = scalar_select %p18, %s19, %s20
    %p24 = pneg %p18
    %p25 = scmp.eq.s32.totalorder %s9, 1
    %p26 = por %p24, %p25
    %p27 = scmp.ne.s32.totalorder %s19, %s22
    %p28 = scmp.eq.s32.totalorder %s9, 0
    %p29 = por %p27, %p28
    %p30 = scmp.ne.s32.totalorder %s19, %s22
    %p31 = scmp.eq.s32.totalorder %s14, 1
    %p32 = por %p30, %p31
    %p33 = scmp.ne.s32.totalorder %s22, %s23
    %p34 = scmp.eq.s32.totalorder %s14, 0
    %p35 = por %p33, %p34
    %p36 = scmp.ne.s32.totalorder %s22, %s23
    %p37 = scmp.eq.s32.totalorder %s15, 1
    %p38 = por %p36, %p37
    %p40 = scmp.ne.s32.totalorder %s23, %s39
    %p41 = scmp.eq.s32.totalorder %s15, 0
    %p42 = por %p40, %p41
    %s44 = sadd.s32 %s43, 1
    %p47 = scmp.eq.s32.totalorder %s9, 1
    %p48 = scmp.ne.s32.totalorder %s43, %s45
    %p49 = scmp.eq.s32.totalorder %s9, 0
    %p50 = por %p48, %p49
    %p51 = scmp.ne.s32.totalorder %s43, %s45
    %p52 = scmp.eq.s32.totalorder %s14, 1
    %p53 = por %p51, %p52
    %p54 = scmp.ne.s32.totalorder %s45, %s46
    %p55 = scmp.eq.s32.totalorder %s14, 0
    %p56 = por %p54, %p55
    %p57 = scmp.ne.s32.totalorder %s45, %s46
    %p58 = scmp.eq.s32.totalorder %s15, 1
    %p59 = por %p57, %p58
    %p61 = scmp.ne.s32.totalorder %s46, %s60
    %p62 = scmp.eq.s32.totalorder %s15, 0
    %p63 = por %p61, %p62
    %s65 = sadd.s32 %s64, 1
    %p68 = scmp.eq.s32.totalorder %s9, 1
    %p69 = scmp.ne.s32.totalorder %s64, %s66
    %p70 = scmp.eq.s32.totalorder %s9, 0
    %p71 = por %p69, %p70
    %p72 = scmp.ne.s32.totalorder %s64, %s66
    %p73 = scmp.eq.s32.totalorder %s14, 1
    %p74 = por %p72, %p73
    %p75 = scmp.ne.s32.totalorder %s66, %s67
    %p76 = scmp.eq.s32.totalorder %s14, 0
    %p77 = por %p75, %p76
    %p78 = scmp.ne.s32.totalorder %s66, %s67
    %p79 = scmp.eq.s32.totalorder %s15, 1
    %p80 = por %p78, %p79
    %p82 = scmp.ne.s32.totalorder %s67, %s81
    %p83 = scmp.eq.s32.totalorder %s15, 0
    %p84 = por %p82, %p83
    %s85 = ssub.s32 %s9, %s16
    %p86 = scmp.eq.s32.totalorder %s85, 0
    %s88 = sadd.s32 %s87, 1
    %s89 = scalar_select %p86, %s87, %s88
    %p92 = pneg %p86
    %p93 = scmp.eq.s32.totalorder %s9, 1
    %p94 = por %p92, %p93
    %p95 = scmp.ne.s32.totalorder %s87, %s90
    %p96 = scmp.eq.s32.totalorder %s9, 0
    %p97 = por %p95, %p96
    %p98 = scmp.ne.s32.totalorder %s87, %s90
    %p99 = scmp.eq.s32.totalorder %s14, 1
    %p100 = por %p98, %p99
    %p101 = scmp.ne.s32.totalorder %s90, %s91
    %p102 = scmp.eq.s32.totalorder %s14, 0
    %p103 = por %p101, %p102
    %p104 = scmp.ne.s32.totalorder %s90, %s91
    %p105 = scmp.eq.s32.totalorder %s15, 1
    %p106 = por %p104, %p105
    %p108 = scmp.ne.s32.totalorder %s91, %s107
    %p109 = scmp.eq.s32.totalorder %s15, 0
    %p110 = por %p108, %p109
    %p111 = scmp.le.s32.totalorder 1, %s9
    %p112 = scmp.lt.s32.totalorder %s9, 3
    %p113 = pnand %p111, %p112
    %p114 = pneg %p113
    // Predicated region
    $region9: #{block_mix_forward.13} parent=5 // pred_check
      _
    $region10: #{block_mix_forward.13} parent=5 // pred_check_branch
      %116 = sbr.rel (%p113) target = $region12
    $region11: #{block_mix_forward.13} parent=5 // pred_region
      %s117 = ssub.s32 %s9, 1
      // Predicated region
      $region13: #{block_mix_forward.13} parent=11 // pred_check
        %p118 = pneg %p56
      $region14: #{block_mix_forward.13} parent=11 // pred_check_branch
        %120 = sbr.rel (%p118) target = $region16
      $region15: #{block_mix_forward.13} parent=11 // pred_region
        _
      $region16: #{block_mix_forward.13} parent=11 // pred_fallthru
        _
      // Predicated region
      $region17: #{block_mix_forward.13} parent=11 // pred_check
        %p121 = pneg %p77
      $region18: #{block_mix_forward.13} parent=11 // pred_check_branch
        %123 = sbr.rel (%p121) target = $region20
      $region19: #{block_mix_forward.13} parent=11 // pred_region
        _
      $region20: #{block_mix_forward.13} parent=11 // pred_fallthru
        _
    $region12: #{block_mix_forward.13} parent=5 // pred_fallthru
      _
    %p124 = scmp.lt.s32.totalorder %s9, 2
    // Predicated region
    $region21: #{block_mix_forward.13} parent=5 // pred_check
      %p125 = pneg %p124
    $region22: #{block_mix_forward.13} parent=5 // pred_check_branch
      %127 = sbr.rel (%p125) target = $region24
    $region23: #{block_mix_forward.13} parent=5 // pred_region
      // Predicated region
      $region25: #{block_mix_forward.13} parent=23 // pred_check
        %p128 = pneg %p29
      $region26: #{block_mix_forward.13} parent=23 // pred_check_branch
        %130 = sbr.rel (%p128) target = $region28
      $region27: #{block_mix_forward.13} parent=23 // pred_region
        %p131 = scmp.lt.s32.totalorder %s9, 1
        %s132 = scalar_select %p131, %s9, 1
        %s133 = smul.addr %s132, 9
        %s134 = smul.addr %s133, 8
        %s135 = scalar_lea.vmem %s0, %s134
      $region28: #{block_mix_forward.13} parent=23 // pred_fallthru
        _
    $region24: #{block_mix_forward.13} parent=5 // pred_fallthru
      _
    %p136 = scmp.le.s32.totalorder 1, %s9
    %p137 = scmp.lt.s32.totalorder %s9, 3
    %p138 = pnand %p136, %p137
    %p139 = pneg %p138
    // Predicated region
    $region29: #{block_mix_forward.13} parent=5 // pred_check
      _
    $region30: #{block_mix_forward.13} parent=5 // pred_check_branch
      %141 = sbr.rel (%p138) target = $region32
    $region31: #{block_mix_forward.13} parent=5 // pred_region
      %s142 = ssub.s32 %s9, 1
      %p143 = scmp.lt.s32.totalorder %s14, 1
      %s144 = scalar_select %p143, %s14, 1
      %s145 = smul.addr %s144, 9
      %s146 = smul.addr %s145, 8
      %s147 = scalar_lea.vmem %s0, %s146
      %p148 = pneg %p35
      %p149 = pneg %p32
      %p150 = pneg %p56
      %p151 = pneg %p53
      %p152 = pneg %p77
      %p153 = pneg %p74
      %p154 = pneg %p103
      %p155 = pneg %p100
      %p156 = scmp.lt.s32.totalorder %s14, 1
      %s157 = scalar_select %p156, %s14, 1
      %s158 = smul.addr %s157, 3
      %s159 = smul.addr %s158, 8
      %s160 = scalar_lea.vmem %s3, %s159
      %p161 = scmp.lt.s32.totalorder %s14, 1
      %s162 = scalar_select %p161, %s14, 1
      %s163 = smul.addr %s162, 9
      %s164 = smul.addr %s163, 8
      %s165 = scalar_lea.vmem %s0, %s164
      %p166 = scmp.lt.s32.totalorder %s14, 1
      %s167 = scalar_select %p166, %s14, 1
      %s168 = smul.addr %s167, 3
      %s169 = smul.addr %s168, 8
      %s170 = scalar_lea.vmem %s3, %s169
      %v171 = vld [vmem:[%s165] sm:$0xff]
      %v172 = vld [vmem:[%s1] sm:$0xff]
      %174 = vset.pattern.permute.xlu0 0
      %175 = vperm.xlu0 %174, %v172
      %v176 = vpop.permute.xlu0 %175
      %v178 = vmul.f32 %v171, %v176
      %v179 = vadd.f32 %v178, 0.0
      %s180 = scalar_lea.vmem %s165, 8
      %v181 = vld [vmem:[%s180] sm:$0xff]
      %s182 = scalar_lea.vmem %s1, 8
      %v183 = vld [vmem:[%s182] sm:$0xff]
      %185 = vset.pattern.permute.xlu0 0
      %186 = vperm.xlu0 %185, %v183
      %v187 = vpop.permute.xlu0 %186
      %v189 = vmul.f32 %v181, %v187
      %v190 = vadd.f32 %v179, %v189
      %s191 = scalar_lea.vmem %s165, 16
      %v192 = vld [vmem:[%s191] sm:$0xff]
      %s193 = scalar_lea.vmem %s1, 16
      %v194 = vld [vmem:[%s193] sm:$0xff]
      %196 = vset.pattern.permute.xlu0 0
      %197 = vperm.xlu0 %196, %v194
      %v198 = vpop.permute.xlu0 %197
      %v200 = vmul.f32 %v192, %v198
      %v201 = vadd.f32 %v190, %v200
      %s202 = scalar_lea.vmem %s165, 24
      %v203 = vld [vmem:[%s202] sm:$0xff]
      %s204 = scalar_lea.vmem %s1, 24
      %v205 = vld [vmem:[%s204] sm:$0xff]
      %207 = vset.pattern.permute.xlu0 0
      %208 = vperm.xlu0 %207, %v205
      %v209 = vpop.permute.xlu0 %208
      %v211 = vmul.f32 %v203, %v209
      %v212 = vadd.f32 %v201, %v211
      %s213 = scalar_lea.vmem %s165, 32
      %v214 = vld [vmem:[%s213] sm:$0xff]
      %s215 = scalar_lea.vmem %s1, 32
      %v216 = vld [vmem:[%s215] sm:$0xff]
      %218 = vset.pattern.permute.xlu0 0
      %219 = vperm.xlu0 %218, %v216
      %v220 = vpop.permute.xlu0 %219
      %v222 = vmul.f32 %v214, %v220
      %v223 = vadd.f32 %v212, %v222
      %s224 = scalar_lea.vmem %s165, 40
      %v225 = vld [vmem:[%s224] sm:$0xff]
      %s226 = scalar_lea.vmem %s1, 40
      %v227 = vld [vmem:[%s226] sm:$0xff]
      %229 = vset.pattern.permute.xlu0 0
      %230 = vperm.xlu0 %229, %v227
      %v231 = vpop.permute.xlu0 %230
      %v233 = vmul.f32 %v225, %v231
      %v234 = vadd.f32 %v223, %v233
      %s235 = scalar_lea.vmem %s165, 48
      %v236 = vld [vmem:[%s235] sm:$0xff]
      %s237 = scalar_lea.vmem %s1, 48
      %v238 = vld [vmem:[%s237] sm:$0xff]
      %240 = vset.pattern.permute.xlu0 0
      %241 = vperm.xlu0 %240, %v238
      %v242 = vpop.permute.xlu0 %241
      %v244 = vmul.f32 %v236, %v242
      %v245 = vadd.f32 %v234, %v244
      %s246 = scalar_lea.vmem %s165, 56
      %v247 = vld [vmem:[%s246] sm:$0xff]
      %s248 = scalar_lea.vmem %s1, 56
      %v249 = vld [vmem:[%s248] sm:$0xff]
      %251 = vset.pattern.permute.xlu0 0
      %252 = vperm.xlu0 %251, %v249
      %v253 = vpop.permute.xlu0 %252
      %v255 = vmul.f32 %v247, %v253
      %v256 = vadd.f32 %v245, %v255
      %s257 = scalar_lea.vmem %s165, 64
      %v258 = vld [vmem:[%s257] sm:$0xff]
      %s259 = scalar_lea.vmem %s1, 64
      %v260 = vld [vmem:[%s259] sm:$0xff]
      %262 = vset.pattern.permute.xlu0 0
      %263 = vperm.xlu0 %262, %v260
      %v264 = vpop.permute.xlu0 %263
      %v266 = vmul.f32 %v258, %v264
      %v267 = vadd.f32 %v256, %v266
      %vm268 = vcmask 293888
      %v269 = vsel %vm268, %v267, 0.0
      %270 = vadd.xlane.f32.xlu0 %v269
      %v271 = vpop.xlane.xlu0 %270
      %v272 = vrcp.pop 36.0
      %v273 = vmul.f32 %v271, %v272
      %v274 = vsub.f32 %v267, %v273
      %v275 = vmul.f32 %v274, %v274
      %v276 = vsel %vm268, %v275, 0.0
      %277 = vadd.xlane.f32.xlu0 %v276
      %v278 = vpop.xlane.xlu0 %277
      %v279 = vmul.f32 %v278, %v272
      %v280 = vadd.f32 %v279, 1e-05
      %v281 = vrsqrt.pop %v280
      %v282 = vmul.f32 %v274, %v281
      %v283 = vld [vmem:[%s2] sm:$0xff]
      %v284 = vld [vmem:[%s2 + $0x8] sm:$0xff]
      %v285 = vld [vmem:[%s2 + $0x10] sm:$0xff]
      %vm286 = vcmask 64512
      %v288 = vsel %vm286, %v283, 0
      %v291 = vsel %vm286, %v284, 0
      %v294 = vsel %vm286, %v285, 0
      %296 = vmatprep.subr.mxu0 0.0
      %297 = vmatpush1.msra.mxu0 %v282
      %298 = vmatprep.subr.mxu0 0.0
      %299 = vmatpush1.msra.mxu0 0.0
      %300 = vmatprep.subr.mxu0 0.0
      %301 = vmatpush1.msra.mxu0 0.0
      %302 = vmatprep.subr.mxu0 0.0
      %303 = vmatpush1.msra.mxu0 0.0
      %304 = vmatprep.subr.mxu0 0.0
      %305 = vmatpush1.msra.mxu0 0.0
      %306 = vmatprep.subr.mxu0 0.0
      %307 = vmatpush1.msra.mxu0 0.0
      %308 = vmatprep.subr.mxu0 0.0
      %309 = vmatpush1.msra.mxu0 0.0
      %310 = vmatprep.subr.mxu0 0.0
      %311 = vmatpush1.msra.mxu0 0.0
      %312 = vmatprep.subr.mxu0 0.0
      %313 = vmatpush1.msra.mxu0 0.0
      %314 = vmatprep.subr.mxu0 0.0
      %315 = vmatpush1.msra.mxu0 0.0
      %316 = vmatprep.subr.mxu0 0.0
      %317 = vmatpush1.msra.mxu0 0.0
      %318 = vmatprep.subr.mxu0 0.0
      %319 = vmatpush1.msra.mxu0 0.0
      %320 = vmatprep.subr.mxu0 0.0
      %321 = vmatpush1.msra.mxu0 0.0
      %322 = vmatprep.subr.mxu0 0.0
      %323 = vmatpush1.msra.mxu0 0.0
      %324 = vmatprep.subr.mxu0 0.0
      %325 = vmatpush1.msra.mxu0 0.0
      %326 = vmatprep.subr.mxu0 0.0
      %327 = vmatpush1.msra.mxu0 0.0
      %328 = vmatprep.subr.mxu0 0.0
      %329 = vmatpush1.msra.mxu0 0.0
      %330 = vmatprep.subr.mxu0 0.0
      %331 = vmatpush1.msra.mxu0 0.0
      %332 = vmatprep.subr.mxu0 0.0
      %333 = vmatpush1.msra.mxu0 0.0
      %334 = vmatprep.subr.mxu0 0.0
      %335 = vmatpush1.msra.mxu0 0.0
      %336 = vmatprep.subr.mxu0 0.0
      %337 = vmatpush1.msra.mxu0 0.0
      %338 = vmatprep.subr.mxu0 0.0
      %339 = vmatpush1.msra.mxu0 0.0
      %340 = vmatprep.subr.mxu0 0.0
      %341 = vmatpush1.msra.mxu0 0.0
      %342 = vmatprep.subr.mxu0 0.0
      %343 = vmatpush1.msra.mxu0 0.0
      %344 = vmatprep.subr.mxu0 0.0
      %345 = vmatpush1.msra.mxu0 0.0
      %346 = vmatprep.subr.mxu0 0.0
      %347 = vmatpush1.msra.mxu0 0.0
      %348 = vmatprep.subr.mxu0 0.0
      %349 = vmatpush1.msra.mxu0 0.0
      %350 = vmatprep.subr.mxu0 0.0
      %351 = vmatpush1.msra.mxu0 0.0
      %352 = vmatprep.subr.mxu0 0.0
      %353 = vmatpush1.msra.mxu0 0.0
      %354 = vmatprep.subr.mxu0 0.0
      %355 = vmatpush1.msra.mxu0 0.0
      %356 = vmatprep.subr.mxu0 0.0
      %357 = vmatpush1.msra.mxu0 0.0
      %358 = vmatprep.subr.mxu0 0.0
      %359 = vmatpush1.msra.mxu0 0.0
      %360 = vmatprep.mubr.f32.mxu0 0.0
      %361 = vmatmul.mubr.f32.gmra.mrb[0].mxu0 %v288
      %v362 = vpop.f32.mrb[0].mxu0
      %v363 = vadd.f32 0.0, %v362
      %v364 = vpop.f32.mrb[0].mxu0
      %365 = vmatprep.mubr.f32.mxu0 0.0
      %366 = vmatmul.mubr.f32.gmra.mrb[0].mxu0 %v291
      %v367 = vpop.f32.mrb[0].mxu0
      %v368 = vadd.f32 0.0, %v367
      %v369 = vpop.f32.mrb[0].mxu0
      %370 = vmatprep.mubr.f32.mxu0 0.0
      %371 = vmatmul.mubr.f32.gmra.mrb[0].mxu0 %v294
      %v372 = vpop.f32.mrb[0].mxu0
      %v373 = vadd.f32 0.0, %v372
      %v374 = vpop.f32.mrb[0].mxu0
      %375 = vdwg.mxu0
      %v376 = vsel %vm268, %v363, 0.0
      %377 = vadd.xlane.f32.xlu0 %v376
      %v378 = vpop.xlane.xlu0 %377
      %v379 = vsel %vm268, %v368, 0.0
      %380 = vadd.xlane.f32.xlu0 %v379
      %v381 = vpop.xlane.xlu0 %380
      %v382 = vsel %vm268, %v373, 0.0
      %383 = vadd.xlane.f32.xlu0 %v382
      %v384 = vpop.xlane.xlu0 %383
      %v385 = vmul.f32 %v378, %v272
      %v386 = vmul.f32 %v381, %v272
      %v387 = vmul.f32 %v384, %v272
      %v388 = vsub.f32 %v363, %v385
      %v389 = vsub.f32 %v368, %v386
      %v390 = vsub.f32 %v373, %v387
      %v391 = vmul.f32 %v388, %v388
      %v392 = vmul.f32 %v389, %v389
      %v393 = vmul.f32 %v390, %v390
      %v394 = vsel %vm268, %v391, 0.0
      %395 = vadd.xlane.f32.xlu0 %v394
      %v396 = vpop.xlane.xlu0 %395
      %v397 = vsel %vm268, %v392, 0.0
      %398 = vadd.xlane.f32.xlu0 %v397
      %v399 = vpop.xlane.xlu0 %398
      %v400 = vsel %vm268, %v393, 0.0
      %401 = vadd.xlane.f32.xlu0 %v400
      %v402 = vpop.xlane.xlu0 %401
      %v403 = vmul.f32 %v396, %v272
      %v404 = vmul.f32 %v399, %v272
      %v405 = vmul.f32 %v402, %v272
      %v406 = vadd.f32 %v403, 1e-05
      %v407 = vadd.f32 %v404, 1e-05
      %v408 = vadd.f32 %v405, 1e-05
      %v409 = vrsqrt.pop %v406
      %v410 = vrsqrt.pop %v407
      %v411 = vrsqrt.pop %v408
      %v412 = vmul.f32 %v388, %v409
      %v413 = vmul.f32 %v389, %v410
      %v414 = vmul.f32 %v390, %v411
      %415 = vst.msk [vmem:[%s170] sm:$0xff] %vm268, %v412
      %416 = vst.msk [vmem:[%s170 + $0x8] sm:$0xff] %vm268, %v413
      %417 = vst.msk [vmem:[%s170 + $0x10] sm:$0xff] %vm268, %v414
      %p418 = scmp.lt.s32.totalorder %s14, 1
      %s419 = scalar_select %p418, %s14, 1
      %s420 = smul.addr %s419, 3
      %s421 = smul.addr %s420, 8
      %s422 = scalar_lea.vmem %s3, %s421
      // Predicated region
      $region33: #{block_mix_forward.13} parent=31 // pred_check
        %p423 = pneg %p100
      $region34: #{block_mix_forward.13} parent=31 // pred_check_branch
        %425 = sbr.rel (%p423) target = $region36
      $region35: #{block_mix_forward.13} parent=31 // pred_region
        _
      $region36: #{block_mix_forward.13} parent=31 // pred_fallthru
        _
    $region32: #{block_mix_forward.13} parent=5 // pred_fallthru
      _
    %p426 = scmp.le.s32.totalorder 2, %s9
    // Predicated region
    $region37: #{block_mix_forward.13} parent=5 // pred_check
      %p427 = pneg %p426
    $region38: #{block_mix_forward.13} parent=5 // pred_check_branch
      %429 = sbr.rel (%p427) target = $region40
    $region39: #{block_mix_forward.13} parent=5 // pred_region
      %s430 = ssub.s32 %s9, 2
      // Predicated region
      $region41: #{block_mix_forward.13} parent=39 // pred_check
        %p431 = pneg %p106
      $region42: #{block_mix_forward.13} parent=39 // pred_check_branch
        %433 = sbr.rel (%p431) target = $region44
      $region43: #{block_mix_forward.13} parent=39 // pred_region
        %p434 = scmp.lt.s32.totalorder %s15, 1
        %s435 = scalar_select %p434, %s15, 1
        %s436 = smul.addr %s435, 3
        %s437 = smul.addr %s436, 8
        %s438 = scalar_lea.vmem %s3, %s437
      $region44: #{block_mix_forward.13} parent=39 // pred_fallthru
        _
    $region40: #{block_mix_forward.13} parent=5 // pred_fallthru
      _
  $region6: #{block_mix_forward.13} parent=0 // loop_footer
    %s13 = sadd.s32 1, %s9
  $region7: #{block_mix_forward.13} parent=0 // loop_footer_branch
    %8 = sbr.rel target = $region3
  $region8: #{block_mix_forward.13} parent=0 // loop_exit
    _

// kernel: block_mix_forward.16
$region0: #{block_mix_forward.16}
  #allocation0 [shape = 'u32[]', space=smem, size = 0x4, offset = 0x4, fixed_abs, tag = 'smem constant byte address 0x4 - core index']
  #allocation1 [shape = 'u32[144,128]{1,0:T(1,128)}', space=vmem, size = 0x12000, scoped, tag = 'internal scratch']
  #allocation2 [shape = 'f32[32,170]{1,0:T(8,128)}', space=vmem, size = 0x8000, scoped, tag = 'scratch operand']
  %s0 = inlined_call_operand.vmem [shape: f32[2,8,144], index: 0, kind: input, shape index: {}]
  %s1 = inlined_call_operand.vmem [shape: f32[32,8], index: 1, kind: input, shape index: {}]
  %s2 = inlined_call_operand.vmem [shape: f32[32,1], index: 2, kind: input, shape index: {}]
  %s3 = inlined_call_operand.vmem [shape: f32[9,32,1], index: 3, kind: input, shape index: {}]
  %s4 = inlined_call_operand.vmem [shape: f32[32,1], index: 4, kind: input, shape index: {}]
  %s5 = inlined_call_operand.vmem [shape: f32[2,144], index: 5, kind: input, shape index: {}]
  %s6 = inlined_call_operand.vmem [shape: f32[8,32], index: 6, kind: input, shape index: {}]
  %s7 = inlined_call_operand.vmem [shape: f32[8,1], index: 7, kind: input, shape index: {}]
  %s8 = inlined_call_operand.vmem [shape: f32[2,8,144], index: 8, kind: output, shape index: {}]
  %s9 = sld [smem:[#allocation0]]
  $region65: #{block_mix_forward.16} parent=0
    _
  %s11 = ssub.s32 1, %s9
  %s12 = scalar_select 0, %s11, %s9
  loop: start=0, step=1, limit=4
  $region2: #{block_mix_forward.16} parent=0 // loop_pre_header
    _
  $region3: #{block_mix_forward.16} parent=0 // loop_header
    %s14 = sphi 0, %s18
    %p15 = scmp.ge.s32.totalorder %s14, 4
    %s24 = sphi 0, %s26
    %s27 = sphi 0, %s24
    %s28 = sphi 0, %s27
    %s44 = sphi 0, %s28
    %s48 = sphi 0, %s48
    %s50 = sphi 0, %s48
    %s51 = sphi 0, %s50
    %s65 = sphi 0, %s51
    %s69 = sphi 0, %s69
    %s71 = sphi 0, %s69
    %s72 = sphi 0, %s71
    %s86 = sphi 0, %s72
    %s90 = sphi 0, %s90
    %s92 = sphi 0, %s90
    %s93 = sphi 0, %s92
    %s107 = sphi 0, %s93
    %s111 = sphi 0, %s111
    %s113 = sphi 0, %s111
    %s114 = sphi 0, %s113
    %s128 = sphi 0, %s114
    %s132 = sphi 0, %s132
    %s134 = sphi 0, %s132
    %s135 = sphi 0, %s134
    %s149 = sphi 0, %s135
    %s153 = sphi 0, %s153
    %s155 = sphi 0, %s153
    %s156 = sphi 0, %s155
    %s170 = sphi 0, %s156
    %s174 = sphi 0, %s174
    %s176 = sphi 0, %s174
    %s177 = sphi 0, %s176
    %s191 = sphi 0, %s177
    %s197 = sphi 0, %s199
    %s200 = sphi 0, %s197
    %s201 = sphi 0, %s200
    %s217 = sphi 0, %s201
  $region4: #{block_mix_forward.16} parent=0 // loop_header_branch
    %17 = sbr.rel (%p15) target = $region8
  $region5: #{block_mix_forward.16} parent=0 // loop_body
    %s19 = ssub.s32 %s14, 1
    %s20 = ssub.s32 %s14, 2
    %s21 = sadd.s32 %s14, 1
    %s22 = ssub.s32 %s14, %s21
    %p23 = scmp.eq.s32.totalorder %s22, 0
    %s25 = sadd.s32 %s24, 1
    %s26 = scalar_select %p23, %s24, %s25
    %p29 = pneg %p23
    %p30 = scmp.eq.s32.totalorder %s14, 1
    %p31 = por %p29, %p30
    %p32 = scmp.ne.s32.totalorder %s24, %s27
    %p33 = scmp.eq.s32.totalorder %s14, 0
    %p34 = por %p32, %p33
    %p35 = scmp.ne.s32.totalorder %s24, %s27
    %p36 = scmp.eq.s32.totalorder %s19, 1
    %p37 = por %p35, %p36
    %p38 = scmp.ne.s32.totalorder %s27, %s28
    %p39 = scmp.eq.s32.totalorder %s19, 0
    %p40 = por %p38, %p39
    %p41 = scmp.ne.s32.totalorder %s27, %s28
    %p42 = scmp.eq.s32.totalorder %s20, 1
    %p43 = por %p41, %p42
    %p45 = scmp.ne.s32.totalorder %s28, %s44
    %p46 = scmp.eq.s32.totalorder %s20, 0
    %p47 = por %p45, %p46
    %s49 = sadd.s32 %s48, 1
    %p52 = scmp.eq.s32.totalorder %s14, 1
    %p53 = scmp.ne.s32.totalorder %s48, %s50
    %p54 = scmp.eq.s32.totalorder %s14, 0
    %p55 = por %p53, %p54
    %p56 = scmp.ne.s32.totalorder %s48, %s50
    %p57 = scmp.eq.s32.totalorder %s19, 1
    %p58 = por %p56, %p57
    %p59 = scmp.ne.s32.totalorder %s50, %s51
    %p60 = scmp.eq.s32.totalorder %s19, 0
    %p61 = por %p59, %p60
    %p62 = scmp.ne.s32.totalorder %s50, %s51
    %p63 = scmp.eq.s32.totalorder %s20, 1
    %p64 = por %p62, %p63
    %p66 = scmp.ne.s32.totalorder %s51, %s65
    %p67 = scmp.eq.s32.totalorder %s20, 0
    %p68 = por %p66, %p67
    %s70 = sadd.s32 %s69, 1
    %p73 = scmp.eq.s32.totalorder %s14, 1
    %p74 = scmp.ne.s32.totalorder %s69, %s71
    %p75 = scmp.eq.s32.totalorder %s14, 0
    %p76 = por %p74, %p75
    %p77 = scmp.ne.s32.totalorder %s69, %s71
    %p78 = scmp.eq.s32.totalorder %s19, 1
    %p79 = por %p77, %p78
    %p80 = scmp.ne.s32.totalorder %s71, %s72
    %p81 = scmp.eq.s32.totalorder %s19, 0
    %p82 = por %p80, %p81
    %p83 = scmp.ne.s32.totalorder %s71, %s72
    %p84 = scmp.eq.s32.totalorder %s20, 1
    %p85 = por %p83, %p84
    %p87 = scmp.ne.s32.totalorder %s72, %s86
    %p88 = scmp.eq.s32.totalorder %s20, 0
    %p89 = por %p87, %p88
    %s91 = sadd.s32 %s90, 1
    %p94 = scmp.eq.s32.totalorder %s14, 1
    %p95 = scmp.ne.s32.totalorder %s90, %s92
    %p96 = scmp.eq.s32.totalorder %s14, 0
    %p97 = por %p95, %p96
    %p98 = scmp.ne.s32.totalorder %s90, %s92
    %p99 = scmp.eq.s32.totalorder %s19, 1
    %p100 = por %p98, %p99
    %p101 = scmp.ne.s32.totalorder %s92, %s93
    %p102 = scmp.eq.s32.totalorder %s19, 0
    %p103 = por %p101, %p102
    %p104 = scmp.ne.s32.totalorder %s92, %s93
    %p105 = scmp.eq.s32.totalorder %s20, 1
    %p106 = por %p104, %p105
    %p108 = scmp.ne.s32.totalorder %s93, %s107
    %p109 = scmp.eq.s32.totalorder %s20, 0
    %p110 = por %p108, %p109
    %s112 = sadd.s32 %s111, 1
    %p115 = scmp.eq.s32.totalorder %s14, 1
    %p116 = scmp.ne.s32.totalorder %s111, %s113
    %p117 = scmp.eq.s32.totalorder %s14, 0
    %p118 = por %p116, %p117
    %p119 = scmp.ne.s32.totalorder %s111, %s113
    %p120 = scmp.eq.s32.totalorder %s19, 1
    %p121 = por %p119, %p120
    %p122 = scmp.ne.s32.totalorder %s113, %s114
    %p123 = scmp.eq.s32.totalorder %s19, 0
    %p124 = por %p122, %p123
    %p125 = scmp.ne.s32.totalorder %s113, %s114
    %p126 = scmp.eq.s32.totalorder %s20, 1
    %p127 = por %p125, %p126
    %p129 = scmp.ne.s32.totalorder %s114, %s128
    %p130 = scmp.eq.s32.totalorder %s20, 0
    %p131 = por %p129, %p130
    %s133 = sadd.s32 %s132, 1
    %p136 = scmp.eq.s32.totalorder %s14, 1
    %p137 = scmp.ne.s32.totalorder %s132, %s134
    %p138 = scmp.eq.s32.totalorder %s14, 0
    %p139 = por %p137, %p138
    %p140 = scmp.ne.s32.totalorder %s132, %s134
    %p141 = scmp.eq.s32.totalorder %s19, 1
    %p142 = por %p140, %p141
    %p143 = scmp.ne.s32.totalorder %s134, %s135
    %p144 = scmp.eq.s32.totalorder %s19, 0
    %p145 = por %p143, %p144
    %p146 = scmp.ne.s32.totalorder %s134, %s135
    %p147 = scmp.eq.s32.totalorder %s20, 1
    %p148 = por %p146, %p147
    %p150 = scmp.ne.s32.totalorder %s135, %s149
    %p151 = scmp.eq.s32.totalorder %s20, 0
    %p152 = por %p150, %p151
    %s154 = sadd.s32 %s153, 1
    %p157 = scmp.eq.s32.totalorder %s14, 1
    %p158 = scmp.ne.s32.totalorder %s153, %s155
    %p159 = scmp.eq.s32.totalorder %s14, 0
    %p160 = por %p158, %p159
    %p161 = scmp.ne.s32.totalorder %s153, %s155
    %p162 = scmp.eq.s32.totalorder %s19, 1
    %p163 = por %p161, %p162
    %p164 = scmp.ne.s32.totalorder %s155, %s156
    %p165 = scmp.eq.s32.totalorder %s19, 0
    %p166 = por %p164, %p165
    %p167 = scmp.ne.s32.totalorder %s155, %s156
    %p168 = scmp.eq.s32.totalorder %s20, 1
    %p169 = por %p167, %p168
    %p171 = scmp.ne.s32.totalorder %s156, %s170
    %p172 = scmp.eq.s32.totalorder %s20, 0
    %p173 = por %p171, %p172
    %s175 = sadd.s32 %s174, 1
    %p178 = scmp.eq.s32.totalorder %s14, 1
    %p179 = scmp.ne.s32.totalorder %s174, %s176
    %p180 = scmp.eq.s32.totalorder %s14, 0
    %p181 = por %p179, %p180
    %p182 = scmp.ne.s32.totalorder %s174, %s176
    %p183 = scmp.eq.s32.totalorder %s19, 1
    %p184 = por %p182, %p183
    %p185 = scmp.ne.s32.totalorder %s176, %s177
    %p186 = scmp.eq.s32.totalorder %s19, 0
    %p187 = por %p185, %p186
    %p188 = scmp.ne.s32.totalorder %s176, %s177
    %p189 = scmp.eq.s32.totalorder %s20, 1
    %p190 = por %p188, %p189
    %p192 = scmp.ne.s32.totalorder %s177, %s191
    %p193 = scmp.eq.s32.totalorder %s20, 0
    %p194 = por %p192, %p193
    %s195 = ssub.s32 %s14, %s21
    %p196 = scmp.eq.s32.totalorder %s195, 0
    %s198 = sadd.s32 %s197, 1
    %s199 = scalar_select %p196, %s197, %s198
    %p202 = pneg %p196
    %p203 = scmp.eq.s32.totalorder %s14, 1
    %p204 = por %p202, %p203
    %p205 = scmp.ne.s32.totalorder %s197, %s200
    %p206 = scmp.eq.s32.totalorder %s14, 0
    %p207 = por %p205, %p206
    %p208 = scmp.ne.s32.totalorder %s197, %s200
    %p209 = scmp.eq.s32.totalorder %s19, 1
    %p210 = por %p208, %p209
    %p211 = scmp.ne.s32.totalorder %s200, %s201
    %p212 = scmp.eq.s32.totalorder %s19, 0
    %p213 = por %p211, %p212
    %p214 = scmp.ne.s32.totalorder %s200, %s201
    %p215 = scmp.eq.s32.totalorder %s20, 1
    %p216 = por %p214, %p215
    %p218 = scmp.ne.s32.totalorder %s201, %s217
    %p219 = scmp.eq.s32.totalorder %s20, 0
    %p220 = por %p218, %p219
    %p221 = scmp.le.s32.totalorder 1, %s14
    %p222 = scmp.lt.s32.totalorder %s14, 3
    %p223 = pnand %p221, %p222
    %p224 = pneg %p223
    // Predicated region
    $region9: #{block_mix_forward.16} parent=5 // pred_check
      _
    $region10: #{block_mix_forward.16} parent=5 // pred_check_branch
      %226 = sbr.rel (%p223) target = $region12
    $region11: #{block_mix_forward.16} parent=5 // pred_region
      %s227 = ssub.s32 %s14, 1
      // Predicated region
      $region13: #{block_mix_forward.16} parent=11 // pred_check
        %p228 = pneg %p61
      $region14: #{block_mix_forward.16} parent=11 // pred_check_branch
        %230 = sbr.rel (%p228) target = $region16
      $region15: #{block_mix_forward.16} parent=11 // pred_region
        _
      $region16: #{block_mix_forward.16} parent=11 // pred_fallthru
        _
      // Predicated region
      $region17: #{block_mix_forward.16} parent=11 // pred_check
        %p231 = pneg %p82
      $region18: #{block_mix_forward.16} parent=11 // pred_check_branch
        %233 = sbr.rel (%p231) target = $region20
      $region19: #{block_mix_forward.16} parent=11 // pred_region
        _
      $region20: #{block_mix_forward.16} parent=11 // pred_fallthru
        _
      // Predicated region
      $region21: #{block_mix_forward.16} parent=11 // pred_check
        %p234 = pneg %p103
      $region22: #{block_mix_forward.16} parent=11 // pred_check_branch
        %236 = sbr.rel (%p234) target = $region24
      $region23: #{block_mix_forward.16} parent=11 // pred_region
        _
      $region24: #{block_mix_forward.16} parent=11 // pred_fallthru
        _
      // Predicated region
      $region25: #{block_mix_forward.16} parent=11 // pred_check
        %p237 = pneg %p124
      $region26: #{block_mix_forward.16} parent=11 // pred_check_branch
        %239 = sbr.rel (%p237) target = $region28
      $region27: #{block_mix_forward.16} parent=11 // pred_region
        _
      $region28: #{block_mix_forward.16} parent=11 // pred_fallthru
        _
      // Predicated region
      $region29: #{block_mix_forward.16} parent=11 // pred_check
        %p240 = pneg %p145
      $region30: #{block_mix_forward.16} parent=11 // pred_check_branch
        %242 = sbr.rel (%p240) target = $region32
      $region31: #{block_mix_forward.16} parent=11 // pred_region
        _
      $region32: #{block_mix_forward.16} parent=11 // pred_fallthru
        _
      // Predicated region
      $region33: #{block_mix_forward.16} parent=11 // pred_check
        %p243 = pneg %p166
      $region34: #{block_mix_forward.16} parent=11 // pred_check_branch
        %245 = sbr.rel (%p243) target = $region36
      $region35: #{block_mix_forward.16} parent=11 // pred_region
        _
      $region36: #{block_mix_forward.16} parent=11 // pred_fallthru
        _
      // Predicated region
      $region37: #{block_mix_forward.16} parent=11 // pred_check
        %p246 = pneg %p187
      $region38: #{block_mix_forward.16} parent=11 // pred_check_branch
        %248 = sbr.rel (%p246) target = $region40
      $region39: #{block_mix_forward.16} parent=11 // pred_region
        _
      $region40: #{block_mix_forward.16} parent=11 // pred_fallthru
        _
    $region12: #{block_mix_forward.16} parent=5 // pred_fallthru
      _
    %p249 = scmp.lt.s32.totalorder %s14, 2
    // Predicated region
    $region41: #{block_mix_forward.16} parent=5 // pred_check
      %p250 = pneg %p249
    $region42: #{block_mix_forward.16} parent=5 // pred_check_branch
      %252 = sbr.rel (%p250) target = $region44
    $region43: #{block_mix_forward.16} parent=5 // pred_region
      // Predicated region
      $region45: #{block_mix_forward.16} parent=43 // pred_check
        %p253 = pneg %p34
      $region46: #{block_mix_forward.16} parent=43 // pred_check_branch
        %255 = sbr.rel (%p253) target = $region48
      $region47: #{block_mix_forward.16} parent=43 // pred_region
        %p256 = scmp.lt.s32.totalorder %s14, 1
        %s257 = scalar_select %p256, %s14, 1
        %s258 = smul.addr %s257, 2
        %s259 = smul.addr %s258, 8
        %s260 = scalar_lea.vmem %s0, %s259
      $region48: #{block_mix_forward.16} parent=43 // pred_fallthru
        _
    $region44: #{block_mix_forward.16} parent=5 // pred_fallthru
      _
    %p261 = scmp.le.s32.totalorder 1, %s14
    %p262 = scmp.lt.s32.totalorder %s14, 3
    %p263 = pnand %p261, %p262
    %p264 = pneg %p263
    // Predicated region
    $region49: #{block_mix_forward.16} parent=5 // pred_check
      _
    $region50: #{block_mix_forward.16} parent=5 // pred_check_branch
      %266 = sbr.rel (%p263) target = $region52
    $region51: #{block_mix_forward.16} parent=5 // pred_region
      %s267 = ssub.s32 %s14, 1
      %p268 = scmp.lt.s32.totalorder %s19, 1
      %s269 = scalar_select %p268, %s19, 1
      %s270 = smul.addr %s269, 2
      %s271 = smul.addr %s270, 8
      %s272 = scalar_lea.vmem %s0, %s271
      %p273 = pneg %p40
      %p274 = pneg %p37
      %p275 = pneg %p61
      %p276 = pneg %p58
      %p277 = pneg %p82
      %p278 = pneg %p79
      %p279 = pneg %p103
      %p280 = pneg %p100
      %p281 = pneg %p124
      %p282 = pneg %p121
      %p283 = pneg %p145
      %p284 = pneg %p142
      %p285 = pneg %p166
      %p286 = pneg %p163
      %p287 = pneg %p187
      %p288 = pneg %p184
      %p289 = pneg %p213
      %p290 = pneg %p210
      %p291 = scmp.lt.s32.totalorder %s19, 1
      %s292 = scalar_select %p291, %s19, 1
      %s293 = smul.addr %s292, 2
      %s294 = smul.addr %s293, 8
      %s295 = scalar_lea.vmem %s8, %s294
      %p296 = scmp.lt.s32.totalorder %s19, 1
      %s297 = scalar_select %p296, %s19, 1
      %s298 = smul.addr %s297, 2
      %s299 = smul.addr %s298, 8
      %s300 = scalar_lea.vmem %s0, %s299
      %p301 = scmp.lt.s32.totalorder %s19, 1
      %s302 = scalar_select %p301, %s19, 1
      %s303 = smul.addr %s302, 2
      %s304 = smul.addr %s303, 8
      %s305 = scalar_lea.vmem %s8, %s304
      %v306 = vld [vmem:[%s300] sm:$0xff]
      %v307 = vld [vmem:[%s300 + $0x8] sm:$0xff]
      %v308 = vld [vmem:[%s1] sm:$0xff]
      %v309 = vld [vmem:[%s1 + $0x8] sm:$0xff]
      %v310 = vld [vmem:[%s1 + $0x10] sm:$0xff]
      %v311 = vld [vmem:[%s1 + $0x18] sm:$0xff]
      %vm312 = vcmask 130048
      %v313 = vsel %vm312, %v307, 0.0
      %v314 = vadd.f32 %v306, %v313
      %315 = vadd.xlane.f32.xlu0 %v314
      %v316 = vpop.xlane.xlu0 %315
      %v317 = vrcp.pop 144.0
      %v318 = vmul.f32 %v316, %v317
      %v319 = vsub.f32 %v306, %v318
      %v320 = vsub.f32 %v307, %v318
      %v321 = vmul.f32 %v319, %v319
      %v322 = vmul.f32 %v320, %v320
      %v323 = vsel %vm312, %v322, 0.0
      %v324 = vadd.f32 %v321, %v323
      %325 = vadd.xlane.f32.xlu0 %v324
      %v326 = vpop.xlane.xlu0 %325
      %v327 = vmul.f32 %v326, %v317
      %v328 = vadd.f32 %v327, 1e-05
      %v329 = vrsqrt.pop %v328
      %v330 = vmul.f32 %v319, %v329
      %v331 = vmul.f32 %v320, %v329
      %v332 = vld [vmem:[%s2] sm:$0xff]
      %v333 = vld [vmem:[%s2 + $0x8] sm:$0xff]
      %v334 = vld [vmem:[%s2 + $0x10] sm:$0xff]
      %v335 = vld [vmem:[%s2 + $0x18] sm:$0xff]
      %337 = vset.pattern.permute.xlu0 0
      %338 = vperm.xlu0 %337, %v332
      %v339 = vpop.permute.xlu0 %338
      %342 = vset.pattern.permute.xlu0 0
      %343 = vperm.xlu0 %342, %v333
      %v344 = vpop.permute.xlu0 %343
      %347 = vset.pattern.permute.xlu0 0
      %348 = vperm.xlu0 %347, %v334
      %v349 = vpop.permute.xlu0 %348
      %352 = vset.pattern.permute.xlu0 0
      %353 = vperm.xlu0 %352, %v335
      %v354 = vpop.permute.xlu0 %353
      %vm356 = vcmask 64512
      %v358 = vsel %vm356, %v308, 0
      %v361 = vsel %vm356, %v309, 0
      %v364 = vsel %vm356, %v310, 0
      %v367 = vsel %vm356, %v311, 0
      %369 = vmatprep.subr.mxu0 %v331
      %370 = vmatpush1.msra.mxu0 %v330
      %371 = vmatprep.subr.mxu0 0.0
      %372 = vmatpush1.msra.mxu0 0.0
      %373 = vmatprep.subr.mxu0 0.0
      %374 = vmatpush1.msra.mxu0 0.0
      %375 = vmatprep.subr.mxu0 0.0
      %376 = vmatpush1.msra.mxu0 0.0
      %377 = vmatprep.subr.mxu0 0.0
      %378 = vmatpush1.msra.mxu0 0.0
      %379 = vmatprep.subr.mxu0 0.0
      %380 = vmatpush1.msra.mxu0 0.0
      %381 = vmatprep.subr.mxu0 0.0
      %382 = vmatpush1.msra.mxu0 0.0
      %383 = vmatprep.subr.mxu0 0.0
      %384 = vmatpush1.msra.mxu0 0.0
      %385 = vmatprep.subr.mxu0 0.0
      %386 = vmatpush1.msra.mxu0 0.0
      %387 = vmatprep.subr.mxu0 0.0
      %388 = vmatpush1.msra.mxu0 0.0
      %389 = vmatprep.subr.mxu0 0.0
      %390 = vmatpush1.msra.mxu0 0.0
      %391 = vmatprep.subr.mxu0 0.0
      %392 = vmatpush1.msra.mxu0 0.0
      %393 = vmatprep.subr.mxu0 0.0
      %394 = vmatpush1.msra.mxu0 0.0
      %395 = vmatprep.subr.mxu0 0.0
      %396 = vmatpush1.msra.mxu0 0.0
      %397 = vmatprep.subr.mxu0 0.0
      %398 = vmatpush1.msra.mxu0 0.0
      %399 = vmatprep.subr.mxu0 0.0
      %400 = vmatpush1.msra.mxu0 0.0
      %401 = vmatprep.subr.mxu0 0.0
      %402 = vmatpush1.msra.mxu0 0.0
      %403 = vmatprep.subr.mxu0 0.0
      %404 = vmatpush1.msra.mxu0 0.0
      %405 = vmatprep.subr.mxu0 0.0
      %406 = vmatpush1.msra.mxu0 0.0
      %407 = vmatprep.subr.mxu0 0.0
      %408 = vmatpush1.msra.mxu0 0.0
      %409 = vmatprep.subr.mxu0 0.0
      %410 = vmatpush1.msra.mxu0 0.0
      %411 = vmatprep.subr.mxu0 0.0
      %412 = vmatpush1.msra.mxu0 0.0
      %413 = vmatprep.subr.mxu0 0.0
      %414 = vmatpush1.msra.mxu0 0.0
      %415 = vmatprep.subr.mxu0 0.0
      %416 = vmatpush1.msra.mxu0 0.0
      %417 = vmatprep.subr.mxu0 0.0
      %418 = vmatpush1.msra.mxu0 0.0
      %419 = vmatprep.subr.mxu0 0.0
      %420 = vmatpush1.msra.mxu0 0.0
      %421 = vmatprep.subr.mxu0 0.0
      %422 = vmatpush1.msra.mxu0 0.0
      %423 = vmatprep.subr.mxu0 0.0
      %424 = vmatpush1.msra.mxu0 0.0
      %425 = vmatprep.subr.mxu0 0.0
      %426 = vmatpush1.msra.mxu0 0.0
      %427 = vmatprep.subr.mxu0 0.0
      %428 = vmatpush1.msra.mxu0 0.0
      %429 = vmatprep.subr.mxu0 0.0
      %430 = vmatpush1.msra.mxu0 0.0
      %431 = vmatprep.subr.mxu0 0.0
      %432 = vmatpush1.msra.mxu0 0.0
      %433 = vmatprep.mubr.f32.mxu0 0.0
      %434 = vmatmul.mubr.f32.gmra.mrb[0].mxu0 %v358
      %v435 = vpop.f32.mrb[0].mxu0
      %v436 = vadd.f32 %v339, %v435
      %v437 = vpop.f32.mrb[0].mxu0
      %v438 = vadd.f32 %v339, %v437
      %439 = vmatprep.mubr.f32.mxu0 0.0
      %440 = vmatmul.mubr.f32.gmra.mrb[0].mxu0 %v361
      %v441 = vpop.f32.mrb[0].mxu0
      %v442 = vadd.f32 %v344, %v441
      %v443 = vpop.f32.mrb[0].mxu0
      %v444 = vadd.f32 %v344, %v443
      %445 = vmatprep.mubr.f32.mxu0 0.0
      %446 = vmatmul.mubr.f32.gmra.mrb[0].mxu0 %v364
      %v447 = vpop.f32.mrb[0].mxu0
      %v448 = vadd.f32 %v349, %v447
      %v449 = vpop.f32.mrb[0].mxu0
      %v450 = vadd.f32 %v349, %v449
      %451 = vmatprep.mubr.f32.mxu0 0.0
      %452 = vmatmul.mubr.f32.gmra.mrb[0].mxu0 %v367
      %v453 = vpop.f32.mrb[0].mxu0
      %v454 = vadd.f32 %v354, %v453
      %v455 = vpop.f32.mrb[0].mxu0
      %v456 = vadd.f32 %v354, %v455
      %457 = vdwg.mxu0
      %v458 = vsel %vm312, %v438, 0.0
      %v459 = vadd.f32 %v436, %v458
      %460 = vadd.xlane.f32.xlu0 %v459
      %v461 = vpop.xlane.xlu0 %460
      %v462 = vsel %vm312, %v444, 0.0
      %v463 = vadd.f32 %v442, %v462
      %464 = vadd.xlane.f32.xlu0 %v463
      %v465 = vpop.xlane.xlu0 %464
      %v466 = vsel %vm312, %v450, 0.0
      %v467 = vadd.f32 %v448, %v466
      %468 = vadd.xlane.f32.xlu0 %v467
      %v469 = vpop.xlane.xlu0 %468
      %v470 = vsel %vm312, %v456, 0.0
      %v471 = vadd.f32 %v454, %v470
      %472 = vadd.xlane.f32.xlu0 %v471
      %v473 = vpop.xlane.xlu0 %472
      %v474 = vmul.f32 %v461, %v317
      %v475 = vmul.f32 %v465, %v317
      %v476 = vmul.f32 %v469, %v317
      %v477 = vmul.f32 %v473, %v317
      %v478 = vsub.f32 %v436, %v474
      %v479 = vsub.f32 %v438, %v474
      %v480 = vsub.f32 %v442, %v475
      %v481 = vsub.f32 %v444, %v475
      %v482 = vsub.f32 %v448, %v476
      %v483 = vsub.f32 %v450, %v476
      %v484 = vsub.f32 %v454, %v477
      %v485 = vsub.f32 %v456, %v477
      %v486 = vmul.f32 %v478, %v478
      %v487 = vmul.f32 %v479, %v479
      %v488 = vmul.f32 %v480, %v480
      %v489 = vmul.f32 %v481, %v481
      %v490 = vmul.f32 %v482, %v482
      %v491 = vmul.f32 %v483, %v483
      %v492 = vmul.f32 %v484, %v484
      %v493 = vmul.f32 %v485, %v485
      %v494 = vsel %vm312, %v487, 0.0
      %v495 = vadd.f32 %v486, %v494
      %496 = vadd.xlane.f32.xlu0 %v495
      %v497 = vpop.xlane.xlu0 %496
      %v498 = vsel %vm312, %v489, 0.0
      %v499 = vadd.f32 %v488, %v498
      %500 = vadd.xlane.f32.xlu0 %v499
      %v501 = vpop.xlane.xlu0 %500
      %v502 = vsel %vm312, %v491, 0.0
      %v503 = vadd.f32 %v490, %v502
      %504 = vadd.xlane.f32.xlu0 %v503
      %v505 = vpop.xlane.xlu0 %504
      %v506 = vsel %vm312, %v493, 0.0
      %v507 = vadd.f32 %v492, %v506
      %508 = vadd.xlane.f32.xlu0 %v507
      %v509 = vpop.xlane.xlu0 %508
      %v510 = vmul.f32 %v497, %v317
      %v511 = vmul.f32 %v501, %v317
      %v512 = vmul.f32 %v505, %v317
      %v513 = vmul.f32 %v509, %v317
      %v514 = vadd.f32 %v510, 1e-05
      %v515 = vadd.f32 %v511, 1e-05
      %v516 = vadd.f32 %v512, 1e-05
      %v517 = vadd.f32 %v513, 1e-05
      %v518 = vrsqrt.pop %v514
      %v519 = vrsqrt.pop %v515
      %v520 = vrsqrt.pop %v516
      %v521 = vrsqrt.pop %v517
      %v522 = vmul.f32 %v478, %v518
      %v523 = vmul.f32 %v479, %v518
      %v524 = vmul.f32 %v480, %v519
      %v525 = vmul.f32 %v481, %v519
      %v526 = vmul.f32 %v482, %v520
      %v527 = vmul.f32 %v483, %v520
      %v528 = vmul.f32 %v484, %v521
      %v529 = vmul.f32 %v485, %v521
      %530 = vst [vmem:[#allocation2] sm:$0xff] 0.0
      %vm531 = vcmask 343040
      %532 = vst.msk [vmem:[#allocation2 + $0x8] sm:$0xff] %vm531, 0.0
      %533 = vst [vmem:[#allocation2 + $0x10] sm:$0xff] 0.0
      %534 = vst.msk [vmem:[#allocation2 + $0x18] sm:$0xff] %vm531, 0.0
      %535 = vst [vmem:[#allocation2 + $0x20] sm:$0xff] 0.0
      %536 = vst.msk [vmem:[#allocation2 + $0x28] sm:$0xff] %vm531, 0.0
      %537 = vst [vmem:[#allocation2 + $0x30] sm:$0xff] 0.0
      %538 = vst.msk [vmem:[#allocation2 + $0x38] sm:$0xff] %vm531, 0.0
      %547 = vrot.lane.b32.xlu0 %v522, 13
      %v548 = vpop.permute.xlu0 %547
      %549 = vrot.lane.b32.xlu0 %v523, 13
      %v550 = vpop.permute.xlu0 %549
      %551 = vrot.lane.b32.xlu0 %v524, 13
      %v552 = vpop.permute.xlu0 %551
      %553 = vrot.lane.b32.xlu0 %v525, 13
      %v554 = vpop.permute.xlu0 %553
      %555 = vrot.lane.b32.xlu0 %v526, 13
      %v556 = vpop.permute.xlu0 %555
      %557 = vrot.lane.b32.xlu0 %v527, 13
      %v558 = vpop.permute.xlu0 %557
      %559 = vrot.lane.b32.xlu0 %v528, 13
      %v560 = vpop.permute.xlu0 %559
      %561 = vrot.lane.b32.xlu0 %v529, 13
      %v562 = vpop.permute.xlu0 %561
      %vm563 = vcmask 105472
      %v564 = vsel %vm563, %v548, %v550
      %v565 = vsel %vm563, %v552, %v554
      %v566 = vsel %vm563, %v556, %v558
      %v567 = vsel %vm563, %v560, %v562
      %vm576 = vcmask 1047656
      %577 = vst.msk [vmem:[#allocation2] sm:$0xff] %vm576, %v548
      %vm578 = vcmask 236544
      %579 = vst.msk [vmem:[#allocation2 + $0x8] sm:$0xff] %vm578, %v564
      %580 = vst.msk [vmem:[#allocation2 + $0x10] sm:$0xff] %vm576, %v552
      %581 = vst.msk [vmem:[#allocation2 + $0x18] sm:$0xff] %vm578, %v565
      %582 = vst.msk [vmem:[#allocation2 + $0x20] sm:$0xff] %vm576, %v556
      %583 = vst.msk [vmem:[#allocation2 + $0x28] sm:$0xff] %vm578, %v566
      %584 = vst.msk [vmem:[#allocation2 + $0x30] sm:$0xff] %vm576, %v560
      %585 = vst.msk [vmem:[#allocation2 + $0x38] sm:$0xff] %vm578, %v567
      %v586 = vld [vmem:[#allocation2] sm:$0xff]
      %v587 = vld [vmem:[#allocation2 + $0x8] sm:$0xff]
      %v588 = vld [vmem:[#allocation2 + $0x10] sm:$0xff]
      %v589 = vld [vmem:[#allocation2 + $0x18] sm:$0xff]
      %v590 = vld [vmem:[#allocation2 + $0x20] sm:$0xff]
      %v591 = vld [vmem:[#allocation2 + $0x28] sm:$0xff]
      %v592 = vld [vmem:[#allocation2 + $0x30] sm:$0xff]
      %v593 = vld [vmem:[#allocation2 + $0x38] sm:$0xff]
      %v594 = vld [vmem:[%s5] ss:$2 sm:$0x3]
      %v596 = vlaneseq
      %v597 = vshrl.u32 %v596, 7
      %v598 = vsub.s32 0, %v597
      %v599 = vrot.slane %v594, %v598
      %v600 = vlaneseq
      %v601 = vshrl.u32 %v600, 7
      %v602 = vsub.s32 1, %v601
      %v603 = vrot.slane %v594, %v602
      %v606 = vmul.f32 %v586, %v599
      %v607 = vmul.f32 %v587, %v603
      %v608 = vmul.f32 %v588, %v599
      %v609 = vmul.f32 %v589, %v603
      %v610 = vmul.f32 %v590, %v599
      %v611 = vmul.f32 %v591, %v603
      %v612 = vmul.f32 %v592, %v599
      %v613 = vmul.f32 %v593, %v603
      %v614 = vld [vmem:[%s3] sm:$0xff]
      %v615 = vld [vmem:[%s3 + $0x8] sm:$0xff]
      %v616 = vld [vmem:[%s3 + $0x10] sm:$0xff]
      %v617 = vld [vmem:[%s3 + $0x18] sm:$0xff]
      %619 = vset.pattern.permute.xlu0 0
      %620 = vperm.xlu0 %619, %v614
      %v621 = vpop.permute.xlu0 %620
      %624 = vset.pattern.permute.xlu0 0
      %625 = vperm.xlu0 %624, %v615
      %v626 = vpop.permute.xlu0 %625
      %629 = vset.pattern.permute.xlu0 0
      %630 = vperm.xlu0 %629, %v616
      %v631 = vpop.permute.xlu0 %630
      %634 = vset.pattern.permute.xlu0 0
      %635 = vperm.xlu0 %634, %v617
      %v636 = vpop.permute.xlu0 %635
      %v638 = vmul.f32 %v606, %v621
      %v639 = vmul.f32 %v607, %v621
      %v640 = vmul.f32 %v608, %v626
      %v641 = vmul.f32 %v609, %v626
      %v642 = vmul.f32 %v610, %v631
      %v643 = vmul.f32 %v611, %v631
      %v644 = vmul.f32 %v612, %v636
      %v645 = vmul.f32 %v613, %v636
      %v646 = vadd.f32 %v638, 0.0
      %v647 = vadd.f32 %v639, 0.0
      %v648 = vadd.f32 %v640, 0.0
      %v649 = vadd.f32 %v641, 0.0
      %v650 = vadd.f32 %v642, 0.0
      %v651 = vadd.f32 %v643, 0.0
      %v652 = vadd.f32 %v644, 0.0
      %v653 = vadd.f32 %v645, 0.0
      %s654 = scalar_lea.vmem %s3, 32
      %v655 = vld [vmem:[%s654] sm:$0xff]
      %v656 = vld [vmem:[%s654 + $0x8] sm:$0xff]
      %v657 = vld [vmem:[%s654 + $0x10] sm:$0xff]
      %v658 = vld [vmem:[%s654 + $0x18] sm:$0xff]
      %660 = vset.pattern.permute.xlu0 0
      %661 = vperm.xlu0 %660, %v655
      %v662 = vpop.permute.xlu0 %661
      %665 = vset.pattern.permute.xlu0 0
      %666 = vperm.xlu0 %665, %v656
      %v667 = vpop.permute.xlu0 %666
      %670 = vset.pattern.permute.xlu0 0
      %671 = vperm.xlu0 %670, %v657
      %v672 = vpop.permute.xlu0 %671
      %675 = vset.pattern.permute.xlu0 0
      %676 = vperm.xlu0 %675, %v658
      %v677 = vpop.permute.xlu0 %676
      %v679 = vmul.f32 %v586, %v662
      %v680 = vmul.f32 %v587, %v662
      %v681 = vmul.f32 %v588, %v667
      %v682 = vmul.f32 %v589, %v667
      %v683 = vmul.f32 %v590, %v672
      %v684 = vmul.f32 %v591, %v672
      %v685 = vmul.f32 %v592, %v677
      %v686 = vmul.f32 %v593, %v677
      %695 = vrot.lane.b32.xlu0 %v679, 127
      %v696 = vpop.permute.xlu0 %695
      %697 = vrot.lane.b32.xlu0 %v680, 127
      %v698 = vpop.permute.xlu0 %697
      %699 = vrot.lane.b32.xlu0 %v681, 127
      %v700 = vpop.permute.xlu0 %699
      %701 = vrot.lane.b32.xlu0 %v682, 127
      %v702 = vpop.permute.xlu0 %701
      %703 = vrot.lane.b32.xlu0 %v683, 127
      %v704 = vpop.permute.xlu0 %703
      %705 = vrot.lane.b32.xlu0 %v684, 127
      %v706 = vpop.permute.xlu0 %705
      %707 = vrot.lane.b32.xlu0 %v685, 127
      %v708 = vpop.permute.xlu0 %707
      %709 = vrot.lane.b32.xlu0 %v686, 127
      %v710 = vpop.permute.xlu0 %709
      %vm711 = vcmask 1039360
      %v712 = vsel %vm711, %v696, %v698
      %v713 = vsel %vm711, %v700, %v702
      %v714 = vsel %vm711, %v704, %v706
      %v715 = vsel %vm711, %v708, %v710
      %v724 = vadd.f32 %v646, %v712
      %v725 = vadd.f32 %v647, %v698
      %v726 = vadd.f32 %v648, %v713
      %v727 = vadd.f32 %v649, %v702
      %v728 = vadd.f32 %v650, %v714
      %v729 = vadd.f32 %v651, %v706
      %v730 = vadd.f32 %v652, %v715
      %v731 = vadd.f32 %v653, %v710
      %s732 = scalar_lea.vmem %s5, 1
      %v733 = vld [vmem:[%s732] ss:$2 sm:$0x3]
      %v735 = vlaneseq
      %v736 = vshrl.u32 %v735, 7
      %v737 = vsub.s32 0, %v736
      %v738 = vrot.slane %v733, %v737
      %v739 = vlaneseq
      %v740 = vshrl.u32 %v739, 7
      %v741 = vsub.s32 1, %v740
      %v742 = vrot.slane %v733, %v741
      %743 = vrot.lane.b32.xlu0 %v738, 2
      %v744 = vpop.permute.xlu0 %743
      %745 = vrot.lane.b32.xlu0 %v742, 2
      %v746 = vpop.permute.xlu0 %745
      %vm747 = vcmask 15360
      %v748 = vsel %vm747, %v744, %v746
      %v751 = vmul.f32 %v586, %v744
      %v752 = vmul.f32 %v587, %v748
      %v753 = vmul.f32 %v588, %v744
      %v754 = vmul.f32 %v589, %v748
      %v755 = vmul.f32 %v590, %v744
      %v756 = vmul.f32 %v591, %v748
      %v757 = vmul.f32 %v592, %v744
      %v758 = vmul.f32 %v593, %v748
      %s759 = scalar_lea.vmem %s3, 64
      %v760 = vld [vmem:[%s759] sm:$0xff]
      %v761 = vld [vmem:[%s759 + $0x8] sm:$0xff]
      %v762 = vld [vmem:[%s759 + $0x10] sm:$0xff]
      %v763 = vld [vmem:[%s759 + $0x18] sm:$0xff]
      %765 = vset.pattern.permute.xlu0 0
      %766 = vperm.xlu0 %765, %v760
      %v767 = vpop.permute.xlu0 %766
      %770 = vset.pattern.permute.xlu0 0
      %771 = vperm.xlu0 %770, %v761
      %v772 = vpop.permute.xlu0 %771
      %775 = vset.pattern.permute.xlu0 0
      %776 = vperm.xlu0 %775, %v762
      %v777 = vpop.permute.xlu0 %776
      %780 = vset.pattern.permute.xlu0 0
      %781 = vperm.xlu0 %780, %v763
      %v782 = vpop.permute.xlu0 %781
      %v784 = vmul.f32 %v751, %v767
      %v785 = vmul.f32 %v752, %v767
      %v786 = vmul.f32 %v753, %v772
      %v787 = vmul.f32 %v754, %v772
      %v788 = vmul.f32 %v755, %v777
      %v789 = vmul.f32 %v756, %v777
      %v790 = vmul.f32 %v757, %v782
      %v791 = vmul.f32 %v758, %v782
      %800 = vrot.lane.b32.xlu0 %v784, 126
      %v801 = vpop.permute.xlu0 %800
      %802 = vrot.lane.b32.xlu0 %v785, 126
      %v803 = vpop.permute.xlu0 %802
      %804 = vrot.lane.b32.xlu0 %v786, 126
      %v805 = vpop.permute.xlu0 %804
      %806 = vrot.lane.b32.xlu0 %v787, 126
      %v807 = vpop.permute.xlu0 %806
      %808 = vrot.lane.b32.xlu0 %v788, 126
      %v809 = vpop.permute.xlu0 %808
      %810 = vrot.lane.b32.xlu0 %v789, 126
      %v811 = vpop.permute.xlu0 %810
      %812 = vrot.lane.b32.xlu0 %v790, 126
      %v813 = vpop.permute.xlu0 %812
      %814 = vrot.lane.b32.xlu0 %v791, 126
      %v815 = vpop.permute.xlu0 %814
      %vm816 = vcmask 1031168
      %v817 = vsel %vm816, %v801, %v803
      %v818 = vsel %vm816, %v805, %v807
      %v819 = vsel %vm816, %v809, %v811
      %v820 = vsel %vm816, %v813, %v815
      %v829 = vadd.f32 %v724, %v817
      %v830 = vadd.f32 %v725, %v803
      %v831 = vadd.f32 %v726, %v818
      %v832 = vadd.f32 %v727, %v807
      %v833 = vadd.f32 %v728, %v819
      %v834 = vadd.f32 %v729, %v811
      %v835 = vadd.f32 %v730, %v820
      %v836 = vadd.f32 %v731, %v815
      %837 = vrot.lane.b32.xlu0 %v599, 12
      %v838 = vpop.permute.xlu0 %837
      %839 = vrot.lane.b32.xlu0 %v603, 12
      %v840 = vpop.permute.xlu0 %839
      %vm841 = vcmask 97280
      %v842 = vsel %vm841, %v838, %v840
      %v845 = vmul.f32 %v586, %v838
      %v846 = vmul.f32 %v587, %v842
      %v847 = vmul.f32 %v588, %v838
      %v848 = vmul.f32 %v589, %v842
      %v849 = vmul.f32 %v590, %v838
      %v850 = vmul.f32 %v591, %v842
      %v851 = vmul.f32 %v592, %v838
      %v852 = vmul.f32 %v593, %v842
      %s853 = scalar_lea.vmem %s3, 96
      %v854 = vld [vmem:[%s853] sm:$0xff]
      %v855 = vld [vmem:[%s853 + $0x8] sm:$0xff]
      %v856 = vld [vmem:[%s853 + $0x10] sm:$0xff]
      %v857 = vld [vmem:[%s853 + $0x18] sm:$0xff]
      %859 = vset.pattern.permute.xlu0 0
      %860 = vperm.xlu0 %859, %v854
      %v861 = vpop.permute.xlu0 %860
      %864 = vset.pattern.permute.xlu0 0
      %865 = vperm.xlu0 %864, %v855
      %v866 = vpop.permute.xlu0 %865
      %869 = vset.pattern.permute.xlu0 0
      %870 = vperm.xlu0 %869, %v856
      %v871 = vpop.permute.xlu0 %870
      %874 = vset.pattern.permute.xlu0 0
      %875 = vperm.xlu0 %874, %v857
      %v876 = vpop.permute.xlu0 %875
      %v878 = vmul.f32 %v845, %v861
      %v879 = vmul.f32 %v846, %v861
      %v880 = vmul.f32 %v847, %v866
      %v881 = vmul.f32 %v848, %v866
      %v882 = vmul.f32 %v849, %v871
      %v883 = vmul.f32 %v850, %v871
      %v884 = vmul.f32 %v851, %v876
      %v885 = vmul.f32 %v852, %v876
      %894 = vrot.lane.b32.xlu0 %v878, 116
      %v895 = vpop.permute.xlu0 %894
      %896 = vrot.lane.b32.xlu0 %v879, 116
      %v897 = vpop.permute.xlu0 %896
      %898 = vrot.lane.b32.xlu0 %v880, 116
      %v899 = vpop.permute.xlu0 %898
      %900 = vrot.lane.b32.xlu0 %v881, 116
      %v901 = vpop.permute.xlu0 %900
      %902 = vrot.lane.b32.xlu0 %v882, 116
      %v903 = vpop.permute.xlu0 %902
      %904 = vrot.lane.b32.xlu0 %v883, 116
      %v905 = vpop.permute.xlu0 %904
      %906 = vrot.lane.b32.xlu0 %v884, 116
      %v907 = vpop.permute.xlu0 %906
      %908 = vrot.lane.b32.xlu0 %v885, 116
      %v909 = vpop.permute.xlu0 %908
      %vm910 = vcmask 949248
      %v911 = vsel %vm910, %v895, %v897
      %v912 = vsel %vm910, %v899, %v901
      %v913 = vsel %vm910, %v903, %v905
      %v914 = vsel %vm910, %v907, %v909
      %v923 = vadd.f32 %v829, %v911
      %v924 = vadd.f32 %v830, %v897
      %v925 = vadd.f32 %v831, %v912
      %v926 = vadd.f32 %v832, %v901
      %v927 = vadd.f32 %v833, %v913
      %v928 = vadd.f32 %v834, %v905
      %v929 = vadd.f32 %v835, %v914
      %v930 = vadd.f32 %v836, %v909
      %s931 = scalar_lea.vmem %s3, 128
      %v932 = vld [vmem:[%s931] sm:$0xff]
      %v933 = vld [vmem:[%s931 + $0x8] sm:$0xff]
      %v934 = vld [vmem:[%s931 + $0x10] sm:$0xff]
      %v935 = vld [vmem:[%s931 + $0x18] sm:$0xff]
      %937 = vset.pattern.permute.xlu0 0
      %938 = vperm.xlu0 %937, %v932
      %v939 = vpop.permute.xlu0 %938
      %942 = vset.pattern.permute.xlu0 0
      %943 = vperm.xlu0 %942, %v933
      %v944 = vpop.permute.xlu0 %943
      %947 = vset.pattern.permute.xlu0 0
      %948 = vperm.xlu0 %947, %v934
      %v949 = vpop.permute.xlu0 %948
      %952 = vset.pattern.permute.xlu0 0
      %953 = vperm.xlu0 %952, %v935
      %v954 = vpop.permute.xlu0 %953
      %v956 = vmul.f32 %v586, %v939
      %v957 = vmul.f32 %v587, %v939
      %v958 = vmul.f32 %v588, %v944
      %v959 = vmul.f32 %v589, %v944
      %v960 = vmul.f32 %v590, %v949
      %v961 = vmul.f32 %v591, %v949
      %v962 = vmul.f32 %v592, %v954
      %v963 = vmul.f32 %v593, %v954
      %972 = vrot.lane.b32.xlu0 %v956, 115
      %v973 = vpop.permute.xlu0 %972
      %974 = vrot.lane.b32.xlu0 %v957, 115
      %v975 = vpop.permute.xlu0 %974
      %976 = vrot.lane.b32.xlu0 %v958, 115
      %v977 = vpop.permute.xlu0 %976
      %978 = vrot.lane.b32.xlu0 %v959, 115
      %v979 = vpop.permute.xlu0 %978
      %980 = vrot.lane.b32.xlu0 %v960, 115
      %v981 = vpop.permute.xlu0 %980
      %982 = vrot.lane.b32.xlu0 %v961, 115
      %v983 = vpop.permute.xlu0 %982
      %984 = vrot.lane.b32.xlu0 %v962, 115
      %v985 = vpop.permute.xlu0 %984
      %986 = vrot.lane.b32.xlu0 %v963, 115
      %v987 = vpop.permute.xlu0 %986
      %vm988 = vcmask 941056
      %v989 = vsel %vm988, %v973, %v975
      %v990 = vsel %vm988, %v977, %v979
      %v991 = vsel %vm988, %v981, %v983
      %v992 = vsel %vm988, %v985, %v987
      %v1001 = vadd.f32 %v923, %v989
      %v1002 = vadd.f32 %v924, %v975
      %v1003 = vadd.f32 %v925, %v990
      %v1004 = vadd.f32 %v926, %v979
      %v1005 = vadd.f32 %v927, %v991
      %v1006 = vadd.f32 %v928, %v983
      %v1007 = vadd.f32 %v929, %v992
      %v1008 = vadd.f32 %v930, %v987
      %1009 = vrot.lane.b32.xlu0 %v738, 14
      %v1010 = vpop.permute.xlu0 %1009
      %1011 = vrot.lane.b32.xlu0 %v742, 14
      %v1012 = vpop.permute.xlu0 %1011
      %vm1013 = vcmask 113664
      %v1014 = vsel %vm1013, %v1010, %v1012
      %v1017 = vmul.f32 %v586, %v1010
      %v1018 = vmul.f32 %v587, %v1014
      %v1019 = vmul.f32 %v588, %v1010
      %v1020 = vmul.f32 %v589, %v1014
      %v1021 = vmul.f32 %v590, %v1010
      %v1022 = vmul.f32 %v591, %v1014
      %v1023 = vmul.f32 %v592, %v1010
      %v1024 = vmul.f32 %v593, %v1014
      %s1025 = scalar_lea.vmem %s3, 160
      %v1026 = vld [vmem:[%s1025] sm:$0xff]
      %v1027 = vld [vmem:[%s1025 + $0x8] sm:$0xff]
      %v1028 = vld [vmem:[%s1025 + $0x10] sm:$0xff]
      %v1029 = vld [vmem:[%s1025 + $0x18] sm:$0xff]
      %1031 = vset.pattern.permute.xlu0 0
      %1032 = vperm.xlu0 %1031, %v1026
      %v1033 = vpop.permute.xlu0 %1032
      %1036 = vset.pattern.permute.xlu0 0
      %1037 = vperm.xlu0 %1036, %v1027
      %v1038 = vpop.permute.xlu0 %1037
      %1041 = vset.pattern.permute.xlu0 0
      %1042 = vperm.xlu0 %1041, %v1028
      %v1043 = vpop.permute.xlu0 %1042
      %1046 = vset.pattern.permute.xlu0 0
      %1047 = vperm.xlu0 %1046, %v1029
      %v1048 = vpop.permute.xlu0 %1047
      %v1050 = vmul.f32 %v1017, %v1033
      %v1051 = vmul.f32 %v1018, %v1033
      %v1052 = vmul.f32 %v1019, %v1038
      %v1053 = vmul.f32 %v1020, %v1038
      %v1054 = vmul.f32 %v1021, %v1043
      %v1055 = vmul.f32 %v1022, %v1043
      %v1056 = vmul.f32 %v1023, %v1048
      %v1057 = vmul.f32 %v1024, %v1048
      %1066 = vrot.lane.b32.xlu0 %v1050, 114
      %v1067 = vpop.permute.xlu0 %1066
      %1068 = vrot.lane.b32.xlu0 %v1051, 114
      %v1069 = vpop.permute.xlu0 %1068
      %1070 = vrot.lane.b32.xlu0 %v1052, 114
      %v1071 = vpop.permute.xlu0 %1070
      %1072 = vrot.lane.b32.xlu0 %v1053, 114
      %v1073 = vpop.permute.xlu0 %1072
      %1074 = vrot.lane.b32.xlu0 %v1054, 114
      %v1075 = vpop.permute.xlu0 %1074
      %1076 = vrot.lane.b32.xlu0 %v1055, 114
      %v1077 = vpop.permute.xlu0 %1076
      %1078 = vrot.lane.b32.xlu0 %v1056, 114
      %v1079 = vpop.permute.xlu0 %1078
      %1080 = vrot.lane.b32.xlu0 %v1057, 114
      %v1081 = vpop.permute.xlu0 %1080
      %vm1082 = vcmask 932864
      %v1083 = vsel %vm1082, %v1067, %v1069
      %v1084 = vsel %vm1082, %v1071, %v1073
      %v1085 = vsel %vm1082, %v1075, %v1077
      %v1086 = vsel %vm1082, %v1079, %v1081
      %v1095 = vadd.f32 %v1001, %v1083
      %v1096 = vadd.f32 %v1002, %v1069
      %v1097 = vadd.f32 %v1003, %v1084
      %v1098 = vadd.f32 %v1004, %v1073
      %v1099 = vadd.f32 %v1005, %v1085
      %v1100 = vadd.f32 %v1006, %v1077
      %v1101 = vadd.f32 %v1007, %v1086
      %v1102 = vadd.f32 %v1008, %v1081
      %1103 = vrot.lane.b32.xlu0 %v599, 24
      %v1104 = vpop.permute.xlu0 %1103
      %1105 = vrot.lane.b32.xlu0 %v603, 24
      %v1106 = vpop.permute.xlu0 %1105
      %vm1107 = vcmask 195584
      %v1108 = vsel %vm1107, %v1104, %v1106
      %v1111 = vmul.f32 %v586, %v1104
      %v1112 = vmul.f32 %v587, %v1108
      %v1113 = vmul.f32 %v588, %v1104
      %v1114 = vmul.f32 %v589, %v1108
      %v1115 = vmul.f32 %v590, %v1104
      %v1116 = vmul.f32 %v591, %v1108
      %v1117 = vmul.f32 %v592, %v1104
      %v1118 = vmul.f32 %v593, %v1108
      %s1119 = scalar_lea.vmem %s3, 192
      %v1120 = vld [vmem:[%s1119] sm:$0xff]
      %v1121 = vld [vmem:[%s1119 + $0x8] sm:$0xff]
      %v1122 = vld [vmem:[%s1119 + $0x10] sm:$0xff]
      %v1123 = vld [vmem:[%s1119 + $0x18] sm:$0xff]
      %1125 = vset.pattern.permute.xlu0 0
      %1126 = vperm.xlu0 %1125, %v1120
      %v1127 = vpop.permute.xlu0 %1126
      %1130 = vset.pattern.permute.xlu0 0
      %1131 = vperm.xlu0 %1130, %v1121
      %v1132 = vpop.permute.xlu0 %1131
      %1135 = vset.pattern.permute.xlu0 0
      %1136 = vperm.xlu0 %1135, %v1122
      %v1137 = vpop.permute.xlu0 %1136
      %1140 = vset.pattern.permute.xlu0 0
      %1141 = vperm.xlu0 %1140, %v1123
      %v1142 = vpop.permute.xlu0 %1141
      %v1144 = vmul.f32 %v1111, %v1127
      %v1145 = vmul.f32 %v1112, %v1127
      %v1146 = vmul.f32 %v1113, %v1132
      %v1147 = vmul.f32 %v1114, %v1132
      %v1148 = vmul.f32 %v1115, %v1137
      %v1149 = vmul.f32 %v1116, %v1137
      %v1150 = vmul.f32 %v1117, %v1142
      %v1151 = vmul.f32 %v1118, %v1142
      %1160 = vrot.lane.b32.xlu0 %v1144, 104
      %v1161 = vpop.permute.xlu0 %1160
      %1162 = vrot.lane.b32.xlu0 %v1145, 104
      %v1163 = vpop.permute.xlu0 %1162
      %1164 = vrot.lane.b32.xlu0 %v1146, 104
      %v1165 = vpop.permute.xlu0 %1164
      %1166 = vrot.lane.b32.xlu0 %v1147, 104
      %v1167 = vpop.permute.xlu0 %1166
      %1168 = vrot.lane.b32.xlu0 %v1148, 104
      %v1169 = vpop.permute.xlu0 %1168
      %1170 = vrot.lane.b32.xlu0 %v1149, 104
      %v1171 = vpop.permute.xlu0 %1170
      %1172 = vrot.lane.b32.xlu0 %v1150, 104
      %v1173 = vpop.permute.xlu0 %1172
      %1174 = vrot.lane.b32.xlu0 %v1151, 104
      %v1175 = vpop.permute.xlu0 %1174
      %vm1176 = vcmask 850944
      %v1177 = vsel %vm1176, %v1161, %v1163
      %v1178 = vsel %vm1176, %v1165, %v1167
      %v1179 = vsel %vm1176, %v1169, %v1171
      %v1180 = vsel %vm1176, %v1173, %v1175
      %v1189 = vadd.f32 %v1095, %v1177
      %v1190 = vadd.f32 %v1096, %v1163
      %v1191 = vadd.f32 %v1097, %v1178
      %v1192 = vadd.f32 %v1098, %v1167
      %v1193 = vadd.f32 %v1099, %v1179
      %v1194 = vadd.f32 %v1100, %v1171
      %v1195 = vadd.f32 %v1101, %v1180
      %v1196 = vadd.f32 %v1102, %v1175
      %s1197 = scalar_lea.vmem %s3, 224
      %v1198 = vld [vmem:[%s1197] sm:$0xff]
      %v1199 = vld [vmem:[%s1197 + $0x8] sm:$0xff]
      %v1200 = vld [vmem:[%s1197 + $0x10] sm:$0xff]
      %v1201 = vld [vmem:[%s1197 + $0x18] sm:$0xff]
      %1203 = vset.pattern.permute.xlu0 0
      %1204 = vperm.xlu0 %1203, %v1198
      %v1205 = vpop.permute.xlu0 %1204
      %1208 = vset.pattern.permute.xlu0 0
      %1209 = vperm.xlu0 %1208, %v1199
      %v1210 = vpop.permute.xlu0 %1209
      %1213 = vset.pattern.permute.xlu0 0
      %1214 = vperm.xlu0 %1213, %v1200
      %v1215 = vpop.permute.xlu0 %1214
      %1218 = vset.pattern.permute.xlu0 0
      %1219 = vperm.xlu0 %1218, %v1201
      %v1220 = vpop.permute.xlu0 %1219
      %v1222 = vmul.f32 %v586, %v1205
      %v1223 = vmul.f32 %v587, %v1205
      %v1224 = vmul.f32 %v588, %v1210
      %v1225 = vmul.f32 %v589, %v1210
      %v1226 = vmul.f32 %v590, %v1215
      %v1227 = vmul.f32 %v591, %v1215
      %v1228 = vmul.f32 %v592, %v1220
      %v1229 = vmul.f32 %v593, %v1220
      %1238 = vrot.lane.b32.xlu0 %v1222, 103
      %v1239 = vpop.permute.xlu0 %1238
      %1240 = vrot.lane.b32.xlu0 %v1223, 103
      %v1241 = vpop.permute.xlu0 %1240
      %1242 = vrot.lane.b32.xlu0 %v1224, 103
      %v1243 = vpop.permute.xlu0 %1242
      %1244 = vrot.lane.b32.xlu0 %v1225, 103
      %v1245 = vpop.permute.xlu0 %1244
      %1246 = vrot.lane.b32.xlu0 %v1226, 103
      %v1247 = vpop.permute.xlu0 %1246
      %1248 = vrot.lane.b32.xlu0 %v1227, 103
      %v1249 = vpop.permute.xlu0 %1248
      %1250 = vrot.lane.b32.xlu0 %v1228, 103
      %v1251 = vpop.permute.xlu0 %1250
      %1252 = vrot.lane.b32.xlu0 %v1229, 103
      %v1253 = vpop.permute.xlu0 %1252
      %vm1254 = vcmask 842752
      %v1255 = vsel %vm1254, %v1239, %v1241
      %v1256 = vsel %vm1254, %v1243, %v1245
      %v1257 = vsel %vm1254, %v1247, %v1249
      %v1258 = vsel %vm1254, %v1251, %v1253
      %v1267 = vadd.f32 %v1189, %v1255
      %v1268 = vadd.f32 %v1190, %v1241
      %v1269 = vadd.f32 %v1191, %v1256
      %v1270 = vadd.f32 %v1192, %v1245
      %v1271 = vadd.f32 %v1193, %v1257
      %v1272 = vadd.f32 %v1194, %v1249
      %v1273 = vadd.f32 %v1195, %v1258
      %v1274 = vadd.f32 %v1196, %v1253
      %1275 = vrot.lane.b32.xlu0 %v738, 26
      %v1276 = vpop.permute.xlu0 %1275
      %1277 = vrot.lane.b32.xlu0 %v742, 26
      %v1278 = vpop.permute.xlu0 %1277
      %vm1279 = vcmask 211968
      %v1280 = vsel %vm1279, %v1276, %v1278
      %v1283 = vmul.f32 %v586, %v1276
      %v1284 = vmul.f32 %v587, %v1280
      %v1285 = vmul.f32 %v588, %v1276
      %v1286 = vmul.f32 %v589, %v1280
      %v1287 = vmul.f32 %v590, %v1276
      %v1288 = vmul.f32 %v591, %v1280
      %v1289 = vmul.f32 %v592, %v1276
      %v1290 = vmul.f32 %v593, %v1280
      %s1291 = scalar_lea.vmem %s3, 256
      %v1292 = vld [vmem:[%s1291] sm:$0xff]
      %v1293 = vld [vmem:[%s1291 + $0x8] sm:$0xff]
      %v1294 = vld [vmem:[%s1291 + $0x10] sm:$0xff]
      %v1295 = vld [vmem:[%s1291 + $0x18] sm:$0xff]
      %1297 = vset.pattern.permute.xlu0 0
      %1298 = vperm.xlu0 %1297, %v1292
      %v1299 = vpop.permute.xlu0 %1298
      %1302 = vset.pattern.permute.xlu0 0
      %1303 = vperm.xlu0 %1302, %v1293
      %v1304 = vpop.permute.xlu0 %1303
      %1307 = vset.pattern.permute.xlu0 0
      %1308 = vperm.xlu0 %1307, %v1294
      %v1309 = vpop.permute.xlu0 %1308
      %1312 = vset.pattern.permute.xlu0 0
      %1313 = vperm.xlu0 %1312, %v1295
      %v1314 = vpop.permute.xlu0 %1313
      %v1316 = vmul.f32 %v1283, %v1299
      %v1317 = vmul.f32 %v1284, %v1299
      %v1318 = vmul.f32 %v1285, %v1304
      %v1319 = vmul.f32 %v1286, %v1304
      %v1320 = vmul.f32 %v1287, %v1309
      %v1321 = vmul.f32 %v1288, %v1309
      %v1322 = vmul.f32 %v1289, %v1314
      %v1323 = vmul.f32 %v1290, %v1314
      %1332 = vrot.lane.b32.xlu0 %v1316, 102
      %v1333 = vpop.permute.xlu0 %1332
      %1334 = vrot.lane.b32.xlu0 %v1317, 102
      %v1335 = vpop.permute.xlu0 %1334
      %1336 = vrot.lane.b32.xlu0 %v1318, 102
      %v1337 = vpop.permute.xlu0 %1336
      %1338 = vrot.lane.b32.xlu0 %v1319, 102
      %v1339 = vpop.permute.xlu0 %1338
      %1340 = vrot.lane.b32.xlu0 %v1320, 102
      %v1341 = vpop.permute.xlu0 %1340
      %1342 = vrot.lane.b32.xlu0 %v1321, 102
      %v1343 = vpop.permute.xlu0 %1342
      %1344 = vrot.lane.b32.xlu0 %v1322, 102
      %v1345 = vpop.permute.xlu0 %1344
      %1346 = vrot.lane.b32.xlu0 %v1323, 102
      %v1347 = vpop.permute.xlu0 %1346
      %vm1348 = vcmask 834560
      %v1349 = vsel %vm1348, %v1333, %v1335
      %v1350 = vsel %vm1348, %v1337, %v1339
      %v1351 = vsel %vm1348, %v1341, %v1343
      %v1352 = vsel %vm1348, %v1345, %v1347
      %v1361 = vadd.f32 %v1267, %v1349
      %v1362 = vadd.f32 %v1268, %v1335
      %v1363 = vadd.f32 %v1269, %v1350
      %v1364 = vadd.f32 %v1270, %v1339
      %v1365 = vadd.f32 %v1271, %v1351
      %v1366 = vadd.f32 %v1272, %v1343
      %v1367 = vadd.f32 %v1273, %v1352
      %v1368 = vadd.f32 %v1274, %v1347
      %v1369 = vld [vmem:[%s4] sm:$0xff]
      %v1370 = vld [vmem:[%s4 + $0x8] sm:$0xff]
      %v1371 = vld [vmem:[%s4 + $0x10] sm:$0xff]
      %v1372 = vld [vmem:[%s4 + $0x18] sm:$0xff]
      %1374 = vset.pattern.permute.xlu0 0
      %1375 = vperm.xlu0 %1374, %v1369
      %v1376 = vpop.permute.xlu0 %1375
      %1379 = vset.pattern.permute.xlu0 0
      %1380 = vperm.xlu0 %1379, %v1370
      %v1381 = vpop.permute.xlu0 %1380
      %1384 = vset.pattern.permute.xlu0 0
      %1385 = vperm.xlu0 %1384, %v1371
      %v1386 = vpop.permute.xlu0 %1385
      %1389 = vset.pattern.permute.xlu0 0
      %1390 = vperm.xlu0 %1389, %v1372
      %v1391 = vpop.permute.xlu0 %1390
      %v1393 = vadd.f32 %v1361, %v1376
      %v1394 = vadd.f32 %v1362, %v1376
      %v1395 = vadd.f32 %v1363, %v1381
      %v1396 = vadd.f32 %v1364, %v1381
      %v1397 = vadd.f32 %v1365, %v1386
      %v1398 = vadd.f32 %v1366, %v1386
      %v1399 = vadd.f32 %v1367, %v1391
      %v1400 = vadd.f32 %v1368, %v1391
      %v1401 = vmax.f32 %v1393, 0.0
      %v1402 = vmax.f32 %v1394, 0.0
      %v1403 = vmax.f32 %v1395, 0.0
      %v1404 = vmax.f32 %v1396, 0.0
      %v1405 = vmax.f32 %v1397, 0.0
      %v1406 = vmax.f32 %v1398, 0.0
      %v1407 = vmax.f32 %v1399, 0.0
      %v1408 = vmax.f32 %v1400, 0.0
      %v1409 = vmin.f32 %v1401, 6.0
      %v1410 = vmin.f32 %v1402, 6.0
      %v1411 = vmin.f32 %v1403, 6.0
      %v1412 = vmin.f32 %v1404, 6.0
      %v1413 = vmin.f32 %v1405, 6.0
      %v1414 = vmin.f32 %v1406, 6.0
      %v1415 = vmin.f32 %v1407, 6.0
      %v1416 = vmin.f32 %v1408, 6.0
      %v1417 = vld [vmem:[%s6] sm:$0xff]
      %v1418 = vld [vmem:[%s7] sm:$0xff]
      %1420 = vset.pattern.permute.xlu0 0
      %1421 = vperm.xlu0 %1420, %v1418
      %v1422 = vpop.permute.xlu0 %1421
      %vm1424 = vcmask 261120
      %v1426 = vsel %vm1424, %v1417, 0
      %1428 = vmatprep.subr.mxu0 %v1410
      %1429 = vmatpush1.msra.mxu0 %v1409
      %1430 = vmatprep.subr.mxu0 %v1412
      %1431 = vmatpush1.msra.mxu0 %v1411
      %1432 = vmatprep.subr.mxu0 %v1414
      %1433 = vmatpush1.msra.mxu0 %v1413
      %1434 = vmatprep.subr.mxu0 %v1416
      %1435 = vmatpush1.msra.mxu0 %v1415
      %1436 = vmatprep.subr.mxu0 0.0
      %1437 = vmatpush1.msra.mxu0 0.0
      %1438 = vmatprep.subr.mxu0 0.0
      %1439 = vmatpush1.msra.mxu0 0.0
      %1440 = vmatprep.subr.mxu0 0.0
      %1441 = vmatpush1.msra.mxu0 0.0
      %1442 = vmatprep.subr.mxu0 0.0
      %1443 = vmatpush1.msra.mxu0 0.0
      %1444 = vmatprep.subr.mxu0 0.0
      %1445 = vmatpush1.msra.mxu0 0.0
      %1446 = vmatprep.subr.mxu0 0.0
      %1447 = vmatpush1.msra.mxu0 0.0
      %1448 = vmatprep.subr.mxu0 0.0
      %1449 = vmatpush1.msra.mxu0 0.0
      %1450 = vmatprep.subr.mxu0 0.0
      %1451 = vmatpush1.msra.mxu0 0.0
      %1452 = vmatprep.subr.mxu0 0.0
      %1453 = vmatpush1.msra.mxu0 0.0
      %1454 = vmatprep.subr.mxu0 0.0
      %1455 = vmatpush1.msra.mxu0 0.0
      %1456 = vmatprep.subr.mxu0 0.0
      %1457 = vmatpush1.msra.mxu0 0.0
      %1458 = vmatprep.subr.mxu0 0.0
      %1459 = vmatpush1.msra.mxu0 0.0
      %1460 = vmatprep.subr.mxu0 0.0
      %1461 = vmatpush1.msra.mxu0 0.0
      %1462 = vmatprep.subr.mxu0 0.0
      %1463 = vmatpush1.msra.mxu0 0.0
      %1464 = vmatprep.subr.mxu0 0.0
      %1465 = vmatpush1.msra.mxu0 0.0
      %1466 = vmatprep.subr.mxu0 0.0
      %1467 = vmatpush1.msra.mxu0 0.0
      %1468 = vmatprep.subr.mxu0 0.0
      %1469 = vmatpush1.msra.mxu0 0.0
      %1470 = vmatprep.subr.mxu0 0.0
      %1471 = vmatpush1.msra.mxu0 0.0
      %1472 = vmatprep.subr.mxu0 0.0
      %1473 = vmatpush1.msra.mxu0 0.0
      %1474 = vmatprep.subr.mxu0 0.0
      %1475 = vmatpush1.msra.mxu0 0.0
      %1476 = vmatprep.subr.mxu0 0.0
      %1477 = vmatpush1.msra.mxu0 0.0
      %1478 = vmatprep.subr.mxu0 0.0
      %1479 = vmatpush1.msra.mxu0 0.0
      %1480 = vmatprep.subr.mxu0 0.0
      %1481 = vmatpush1.msra.mxu0 0.0
      %1482 = vmatprep.subr.mxu0 0.0
      %1483 = vmatpush1.msra.mxu0 0.0
      %1484 = vmatprep.subr.mxu0 0.0
      %1485 = vmatpush1.msra.mxu0 0.0
      %1486 = vmatprep.subr.mxu0 0.0
      %1487 = vmatpush1.msra.mxu0 0.0
      %1488 = vmatprep.subr.mxu0 0.0
      %1489 = vmatpush1.msra.mxu0 0.0
      %1490 = vmatprep.subr.mxu0 0.0
      %1491 = vmatpush1.msra.mxu0 0.0
      %1492 = vmatprep.mubr.f32.mxu0 0.0
      %1493 = vmatmul.mubr.f32.gmra.mrb[0].mxu0 %v1426
      %v1494 = vpop.f32.mrb[0].mxu0
      %v1495 = vadd.f32 %v1422, %v1494
      %v1496 = vpop.f32.mrb[0].mxu0
      %v1497 = vadd.f32 %v1422, %v1496
      %1498 = vdwg.mxu0
      %v1499 = vadd.f32 %v1495, %v306
      %v1500 = vadd.f32 %v1497, %v307
      %1501 = vst [vmem:[%s305] sm:$0xff] %v1499
      %1502 = vst.msk [vmem:[%s305 + $0x8] sm:$0xff] %vm312, %v1500
      %p1503 = scmp.lt.s32.totalorder %s19, 1
      %s1504 = scalar_select %p1503, %s19, 1
      %s1505 = smul.addr %s1504, 2
      %s1506 = smul.addr %s1505, 8
      %s1507 = scalar_lea.vmem %s8, %s1506
      // Predicated region
      $region53: #{block_mix_forward.16} parent=51 // pred_check
        %p1508 = pneg %p210
      $region54: #{block_mix_forward.16} parent=51 // pred_check_branch
        %1510 = sbr.rel (%p1508) target = $region56
      $region55: #{block_mix_forward.16} parent=51 // pred_region
        _
      $region56: #{block_mix_forward.16} parent=51 // pred_fallthru
        _
    $region52: #{block_mix_forward.16} parent=5 // pred_fallthru
      _
    %p1511 = scmp.le.s32.totalorder 2, %s14
    // Predicated region
    $region57: #{block_mix_forward.16} parent=5 // pred_check
      %p1512 = pneg %p1511
    $region58: #{block_mix_forward.16} parent=5 // pred_check_branch
      %1514 = sbr.rel (%p1512) target = $region60
    $region59: #{block_mix_forward.16} parent=5 // pred_region
      %s1515 = ssub.s32 %s14, 2
      // Predicated region
      $region61: #{block_mix_forward.16} parent=59 // pred_check
        %p1516 = pneg %p216
      $region62: #{block_mix_forward.16} parent=59 // pred_check_branch
        %1518 = sbr.rel (%p1516) target = $region64
      $region63: #{block_mix_forward.16} parent=59 // pred_region
        %p1519 = scmp.lt.s32.totalorder %s20, 1
        %s1520 = scalar_select %p1519, %s20, 1
        %s1521 = smul.addr %s1520, 2
        %s1522 = smul.addr %s1521, 8
        %s1523 = scalar_lea.vmem %s8, %s1522
      $region64: #{block_mix_forward.16} parent=59 // pred_fallthru
        _
    $region60: #{block_mix_forward.16} parent=5 // pred_fallthru
      _
  $region6: #{block_mix_forward.16} parent=0 // loop_footer
    %s18 = sadd.s32 1, %s14
  $region7: #{block_mix_forward.16} parent=0 // loop_footer_branch
    %13 = sbr.rel target = $region3
  $region8: #{block_mix_forward.16} parent=0 // loop_exit
    _

// kernel: block_mix_forward.15
$region0: #{block_mix_forward.15}
  #allocation0 [shape = 'u32[]', space=smem, size = 0x4, offset = 0x4, fixed_abs, tag = 'smem constant byte address 0x4 - core index']
  #allocation1 [shape = 'u32[144,128]{1,0:T(1,128)}', space=vmem, size = 0x12000, scoped, tag = 'internal scratch']
  #allocation2 [shape = 'f32[16,170]{1,0:T(8,128)}', space=vmem, size = 0x4000, scoped, tag = 'scratch operand']
  %s0 = inlined_call_operand.vmem [shape: f32[2,2,144,4], index: 0, kind: input, shape index: {}]
  %s1 = inlined_call_operand.vmem [shape: f32[2,2,4,196], index: 1, kind: input, shape index: {}]
  %s2 = inlined_call_operand.vmem [shape: f32[2,2,8,196], index: 2, kind: input, shape index: {}]
  %s3 = inlined_call_operand.vmem [shape: f32[2,16,144], index: 3, kind: input, shape index: {}]
  %s4 = inlined_call_operand.vmem [shape: f32[2,144], index: 4, kind: input, shape index: {}]
  %s5 = inlined_call_operand.vmem [shape: f32[9,16,1], index: 5, kind: input, shape index: {}]
  %s6 = inlined_call_operand.vmem [shape: f32[16,1], index: 6, kind: input, shape index: {}]
  %s7 = inlined_call_operand.vmem [shape: f32[8,16], index: 7, kind: input, shape index: {}]
  %s8 = inlined_call_operand.vmem [shape: f32[8,1], index: 8, kind: input, shape index: {}]
  %s9 = inlined_call_operand.vmem [shape: f32[2,8,144], index: 9, kind: input, shape index: {}]
  %s10 = inlined_call_operand.vmem [shape: f32[2,8,144], index: 10, kind: output, shape index: {}]
  %s11 = sld [smem:[#allocation0]]
  $region73: #{block_mix_forward.15} parent=0
    _
  %s13 = ssub.s32 1, %s11
  %s14 = scalar_select 0, %s13, %s11
  loop: start=0, step=1, limit=4
  $region2: #{block_mix_forward.15} parent=0 // loop_pre_header
    _
  $region3: #{block_mix_forward.15} parent=0 // loop_header
    %s16 = sphi 0, %s20
    %p17 = scmp.ge.s32.totalorder %s16, 4
    %s26 = sphi 0, %s28
    %s29 = sphi 0, %s26
    %s30 = sphi 0, %s29
    %s46 = sphi 0, %s30
    %s52 = sphi 0, %s54
    %s55 = sphi 0, %s52
    %s56 = sphi 0, %s55
    %s72 = sphi 0, %s56
    %s78 = sphi 0, %s80
    %s81 = sphi 0, %s78
    %s82 = sphi 0, %s81
    %s98 = sphi 0, %s82
    %s104 = sphi 0, %s106
    %s107 = sphi 0, %s104
    %s108 = sphi 0, %s107
    %s124 = sphi 0, %s108
    %s128 = sphi 0, %s128
    %s130 = sphi 0, %s128
    %s131 = sphi 0, %s130
    %s145 = sphi 0, %s131
    %s149 = sphi 0, %s149
    %s151 = sphi 0, %s149
    %s152 = sphi 0, %s151
    %s166 = sphi 0, %s152
    %s170 = sphi 0, %s170
    %s172 = sphi 0, %s170
    %s173 = sphi 0, %s172
    %s187 = sphi 0, %s173
    %s191 = sphi 0, %s191
    %s193 = sphi 0, %s191
    %s194 = sphi 0, %s193
    %s208 = sphi 0, %s194
    %s212 = sphi 0, %s212
    %s214 = sphi 0, %s212
    %s215 = sphi 0, %s214
    %s229 = sphi 0, %s215
    %s235 = sphi 0, %s237
    %s238 = sphi 0, %s235
    %s239 = sphi 0, %s238
    %s255 = sphi 0, %s239
    %s261 = sphi 0, %s263
    %s264 = sphi 0, %s261
    %s265 = sphi 0, %s264
    %s281 = sphi 0, %s265
  $region4: #{block_mix_forward.15} parent=0 // loop_header_branch
    %19 = sbr.rel (%p17) target = $region8
  $region5: #{block_mix_forward.15} parent=0 // loop_body
    %s21 = ssub.s32 %s16, 1
    %s22 = ssub.s32 %s16, 2
    %s23 = sadd.s32 %s16, 1
    %s24 = ssub.s32 %s16, %s23
    %p25 = scmp.eq.s32.totalorder %s24, 0
    %s27 = sadd.s32 %s26, 1
    %s28 = scalar_select %p25, %s26, %s27
    %p31 = pneg %p25
    %p32 = scmp.eq.s32.totalorder %s16, 1
    %p33 = por %p31, %p32
    %p34 = scmp.ne.s32.totalorder %s26, %s29
    %p35 = scmp.eq.s32.totalorder %s16, 0
    %p36 = por %p34, %p35
    %p37 = scmp.ne.s32.totalorder %s26, %s29
    %p38 = scmp.eq.s32.totalorder %s21, 1
    %p39 = por %p37, %p38
    %p40 = scmp.ne.s32.totalorder %s29, %s30
    %p41 = scmp.eq.s32.totalorder %s21, 0
    %p42 = por %p40, %p41
    %p43 = scmp.ne.s32.totalorder %s29, %s30
    %p44 = scmp.eq.s32.totalorder %s22, 1
    %p45 = por %p43, %p44
    %p47 = scmp.ne.s32.totalorder %s30, %s46
    %p48 = scmp.eq.s32.totalorder %s22, 0
    %p49 = por %p47, %p48
    %s50 = ssub.s32 %s16, %s23
    %p51 = scmp.eq.s32.totalorder %s50, 0
    %s53 = sadd.s32 %s52, 1
    %s54 = scalar_select %p51, %s52, %s53
    %p57 = pneg %p51
    %p58 = scmp.eq.s32.totalorder %s16, 1
    %p59 = por %p57, %p58
    %p60 = scmp.ne.s32.totalorder %s52, %s55
    %p61 = scmp.eq.s32.totalorder %s16, 0
    %p62 = por %p60, %p61
    %p63 = scmp.ne.s32.totalorder %s52, %s55
    %p64 = scmp.eq.s32.totalorder %s21, 1
    %p65 = por %p63, %p64
    %p66 = scmp.ne.s32.totalorder %s55, %s56
    %p67 = scmp.eq.s32.totalorder %s21, 0
    %p68 = por %p66, %p67
    %p69 = scmp.ne.s32.totalorder %s55, %s56
    %p70 = scmp.eq.s32.totalorder %s22, 1
    %p71 = por %p69, %p70
    %p73 = scmp.ne.s32.totalorder %s56, %s72
    %p74 = scmp.eq.s32.totalorder %s22, 0
    %p75 = por %p73, %p74
    %s76 = ssub.s32 %s16, %s23
    %p77 = scmp.eq.s32.totalorder %s76, 0
    %s79 = sadd.s32 %s78, 1
    %s80 = scalar_select %p77, %s78, %s79
    %p83 = pneg %p77
    %p84 = scmp.eq.s32.totalorder %s16, 1
    %p85 = por %p83, %p84
    %p86 = scmp.ne.s32.totalorder %s78, %s81
    %p87 = scmp.eq.s32.totalorder %s16, 0
    %p88 = por %p86, %p87
    %p89 = scmp.ne.s32.totalorder %s78, %s81
    %p90 = scmp.eq.s32.totalorder %s21, 1
    %p91 = por %p89, %p90
    %p92 = scmp.ne.s32.totalorder %s81, %s82
    %p93 = scmp.eq.s32.totalorder %s21, 0
    %p94 = por %p92, %p93
    %p95 = scmp.ne.s32.totalorder %s81, %s82
    %p96 = scmp.eq.s32.totalorder %s22, 1
    %p97 = por %p95, %p96
    %p99 = scmp.ne.s32.totalorder %s82, %s98
    %p100 = scmp.eq.s32.totalorder %s22, 0
    %p101 = por %p99, %p100
    %s102 = ssub.s32 %s16, %s23
    %p103 = scmp.eq.s32.totalorder %s102, 0
    %s105 = sadd.s32 %s104, 1
    %s106 = scalar_select %p103, %s104, %s105
    %p109 = pneg %p103
    %p110 = scmp.eq.s32.totalorder %s16, 1
    %p111 = por %p109, %p110
    %p112 = scmp.ne.s32.totalorder %s104, %s107
    %p113 = scmp.eq.s32.totalorder %s16, 0
    %p114 = por %p112, %p113
    %p115 = scmp.ne.s32.totalorder %s104, %s107
    %p116 = scmp.eq.s32.totalorder %s21, 1
    %p117 = por %p115, %p116
    %p118 = scmp.ne.s32.totalorder %s107, %s108
    %p119 = scmp.eq.s32.totalorder %s21, 0
    %p120 = por %p118, %p119
    %p121 = scmp.ne.s32.totalorder %s107, %s108
    %p122 = scmp.eq.s32.totalorder %s22, 1
    %p123 = por %p121, %p122
    %p125 = scmp.ne.s32.totalorder %s108, %s124
    %p126 = scmp.eq.s32.totalorder %s22, 0
    %p127 = por %p125, %p126
    %s129 = sadd.s32 %s128, 1
    %p132 = scmp.eq.s32.totalorder %s16, 1
    %p133 = scmp.ne.s32.totalorder %s128, %s130
    %p134 = scmp.eq.s32.totalorder %s16, 0
    %p135 = por %p133, %p134
    %p136 = scmp.ne.s32.totalorder %s128, %s130
    %p137 = scmp.eq.s32.totalorder %s21, 1
    %p138 = por %p136, %p137
    %p139 = scmp.ne.s32.totalorder %s130, %s131
    %p140 = scmp.eq.s32.totalorder %s21, 0
    %p141 = por %p139, %p140
    %p142 = scmp.ne.s32.totalorder %s130, %s131
    %p143 = scmp.eq.s32.totalorder %s22, 1
    %p144 = por %p142, %p143
    %p146 = scmp.ne.s32.totalorder %s131, %s145
    %p147 = scmp.eq.s32.totalorder %s22, 0
    %p148 = por %p146, %p147
    %s150 = sadd.s32 %s149, 1
    %p153 = scmp.eq.s32.totalorder %s16, 1
    %p154 = scmp.ne.s32.totalorder %s149, %s151
    %p155 = scmp.eq.s32.totalorder %s16, 0
    %p156 = por %p154, %p155
    %p157 = scmp.ne.s32.totalorder %s149, %s151
    %p158 = scmp.eq.s32.totalorder %s21, 1
    %p159 = por %p157, %p158
    %p160 = scmp.ne.s32.totalorder %s151, %s152
    %p161 = scmp.eq.s32.totalorder %s21, 0
    %p162 = por %p160, %p161
    %p163 = scmp.ne.s32.totalorder %s151, %s152
    %p164 = scmp.eq.s32.totalorder %s22, 1
    %p165 = por %p163, %p164
    %p167 = scmp.ne.s32.totalorder %s152, %s166
    %p168 = scmp.eq.s32.totalorder %s22, 0
    %p169 = por %p167, %p168
    %s171 = sadd.s32 %s170, 1
    %p174 = scmp.eq.s32.totalorder %s16, 1
    %p175 = scmp.ne.s32.totalorder %s170, %s172
    %p176 = scmp.eq.s32.totalorder %s16, 0
    %p177 = por %p175, %p176
    %p178 = scmp.ne.s32.totalorder %s170, %s172
    %p179 = scmp.eq.s32.totalorder %s21, 1
    %p180 = por %p178, %p179
    %p181 = scmp.ne.s32.totalorder %s172, %s173
    %p182 = scmp.eq.s32.totalorder %s21, 0
    %p183 = por %p181, %p182
    %p184 = scmp.ne.s32.totalorder %s172, %s173
    %p185 = scmp.eq.s32.totalorder %s22, 1
    %p186 = por %p184, %p185
    %p188 = scmp.ne.s32.totalorder %s173, %s187
    %p189 = scmp.eq.s32.totalorder %s22, 0
    %p190 = por %p188, %p189
    %s192 = sadd.s32 %s191, 1
    %p195 = scmp.eq.s32.totalorder %s16, 1
    %p196 = scmp.ne.s32.totalorder %s191, %s193
    %p197 = scmp.eq.s32.totalorder %s16, 0
    %p198 = por %p196, %p197
    %p199 = scmp.ne.s32.totalorder %s191, %s193
    %p200 = scmp.eq.s32.totalorder %s21, 1
    %p201 = por %p199, %p200
    %p202 = scmp.ne.s32.totalorder %s193, %s194
    %p203 = scmp.eq.s32.totalorder %s21, 0
    %p204 = por %p202, %p203
    %p205 = scmp.ne.s32.totalorder %s193, %s194
    %p206 = scmp.eq.s32.totalorder %s22, 1
    %p207 = por %p205, %p206
    %p209 = scmp.ne.s32.totalorder %s194, %s208
    %p210 = scmp.eq.s32.totalorder %s22, 0
    %p211 = por %p209, %p210
    %s213 = sadd.s32 %s212, 1
    %p216 = scmp.eq.s32.totalorder %s16, 1
    %p217 = scmp.ne.s32.totalorder %s212, %s214
    %p218 = scmp.eq.s32.totalorder %s16, 0
    %p219 = por %p217, %p218
    %p220 = scmp.ne.s32.totalorder %s212, %s214
    %p221 = scmp.eq.s32.totalorder %s21, 1
    %p222 = por %p220, %p221
    %p223 = scmp.ne.s32.totalorder %s214, %s215
    %p224 = scmp.eq.s32.totalorder %s21, 0
    %p225 = por %p223, %p224
    %p226 = scmp.ne.s32.totalorder %s214, %s215
    %p227 = scmp.eq.s32.totalorder %s22, 1
    %p228 = por %p226, %p227
    %p230 = scmp.ne.s32.totalorder %s215, %s229
    %p231 = scmp.eq.s32.totalorder %s22, 0
    %p232 = por %p230, %p231
    %s233 = ssub.s32 %s16, %s23
    %p234 = scmp.eq.s32.totalorder %s233, 0
    %s236 = sadd.s32 %s235, 1
    %s237 = scalar_select %p234, %s235, %s236
    %p240 = pneg %p234
    %p241 = scmp.eq.s32.totalorder %s16, 1
    %p242 = por %p240, %p241
    %p243 = scmp.ne.s32.totalorder %s235, %s238
    %p244 = scmp.eq.s32.totalorder %s16, 0
    %p245 = por %p243, %p244
    %p246 = scmp.ne.s32.totalorder %s235, %s238
    %p247 = scmp.eq.s32.totalorder %s21, 1
    %p248 = por %p246, %p247
    %p249 = scmp.ne.s32.totalorder %s238, %s239
    %p250 = scmp.eq.s32.totalorder %s21, 0
    %p251 = por %p249, %p250
    %p252 = scmp.ne.s32.totalorder %s238, %s239
    %p253 = scmp.eq.s32.totalorder %s22, 1
    %p254 = por %p252, %p253
    %p256 = scmp.ne.s32.totalorder %s239, %s255
    %p257 = scmp.eq.s32.totalorder %s22, 0
    %p258 = por %p256, %p257
    %s259 = ssub.s32 %s16, %s23
    %p260 = scmp.eq.s32.totalorder %s259, 0
    %s262 = sadd.s32 %s261, 1
    %s263 = scalar_select %p260, %s261, %s262
    %p266 = pneg %p260
    %p267 = scmp.eq.s32.totalorder %s16, 1
    %p268 = por %p266, %p267
    %p269 = scmp.ne.s32.totalorder %s261, %s264
    %p270 = scmp.eq.s32.totalorder %s16, 0
    %p271 = por %p269, %p270
    %p272 = scmp.ne.s32.totalorder %s261, %s264
    %p273 = scmp.eq.s32.totalorder %s21, 1
    %p274 = por %p272, %p273
    %p275 = scmp.ne.s32.totalorder %s264, %s265
    %p276 = scmp.eq.s32.totalorder %s21, 0
    %p277 = por %p275, %p276
    %p278 = scmp.ne.s32.totalorder %s264, %s265
    %p279 = scmp.eq.s32.totalorder %s22, 1
    %p280 = por %p278, %p279
    %p282 = scmp.ne.s32.totalorder %s265, %s281
    %p283 = scmp.eq.s32.totalorder %s22, 0
    %p284 = por %p282, %p283
    %p285 = scmp.le.s32.totalorder 1, %s16
    %p286 = scmp.lt.s32.totalorder %s16, 3
    %p287 = pnand %p285, %p286
    %p288 = pneg %p287
    // Predicated region
    $region9: #{block_mix_forward.15} parent=5 // pred_check
      _
    $region10: #{block_mix_forward.15} parent=5 // pred_check_branch
      %290 = sbr.rel (%p287) target = $region12
    $region11: #{block_mix_forward.15} parent=5 // pred_region
      %s291 = ssub.s32 %s16, 1
      // Predicated region
      $region13: #{block_mix_forward.15} parent=11 // pred_check
        %p292 = pneg %p141
      $region14: #{block_mix_forward.15} parent=11 // pred_check_branch
        %294 = sbr.rel (%p292) target = $region16
      $region15: #{block_mix_forward.15} parent=11 // pred_region
        _
      $region16: #{block_mix_forward.15} parent=11 // pred_fallthru
        _
      // Predicated region
      $region17: #{block_mix_forward.15} parent=11 // pred_check
        %p295 = pneg %p162
      $region18: #{block_mix_forward.15} parent=11 // pred_check_branch
        %297 = sbr.rel (%p295) target = $region20
      $region19: #{block_mix_forward.15} parent=11 // pred_region
        _
      $region20: #{block_mix_forward.15} parent=11 // pred_fallthru
        _
      // Predicated region
      $region21: #{block_mix_forward.15} parent=11 // pred_check
        %p298 = pneg %p183
      $region22: #{block_mix_forward.15} parent=11 // pred_check_branch
        %300 = sbr.rel (%p298) target = $region24
      $region23: #{block_mix_forward.15} parent=11 // pred_region
        _
      $region24: #{block_mix_forward.15} parent=11 // pred_fallthru
        _
      // Predicated region
      $region25: #{block_mix_forward.15} parent=11 // pred_check
        %p301 = pneg %p204
      $region26: #{block_mix_forward.15} parent=11 // pred_check_branch
        %303 = sbr.rel (%p301) target = $region28
      $region27: #{block_mix_forward.15} parent=11 // pred_region
        _
      $region28: #{block_mix_forward.15} parent=11 // pred_fallthru
        _
      // Predicated region
      $region29: #{block_mix_forward.15} parent=11 // pred_check
        %p304 = pneg %p225
      $region30: #{block_mix_forward.15} parent=11 // pred_check_branch
        %306 = sbr.rel (%p304) target = $region32
      $region31: #{block_mix_forward.15} parent=11 // pred_region
        _
      $region32: #{block_mix_forward.15} parent=11 // pred_fallthru
        _
    $region12: #{block_mix_forward.15} parent=5 // pred_fallthru
      _
    %p307 = scmp.lt.s32.totalorder %s16, 2
    // Predicated region
    $region33: #{block_mix_forward.15} parent=5 // pred_check
      %p308 = pneg %p307
    $region34: #{block_mix_forward.15} parent=5 // pred_check_branch
      %310 = sbr.rel (%p308) target = $region36
    $region35: #{block_mix_forward.15} parent=5 // pred_region
      // Predicated region
      $region37: #{block_mix_forward.15} parent=35 // pred_check
        %p311 = pneg %p36
      $region38: #{block_mix_forward.15} parent=35 // pred_check_branch
        %313 = sbr.rel (%p311) target = $region40
      $region39: #{block_mix_forward.15} parent=35 // pred_region
        %p314 = scmp.lt.s32.totalorder %s16, 1
        %s315 = scalar_select %p314, %s16, 1
        %s316 = smul.addr %s315, 36
        %s317 = smul.addr %s316, 8
        %s318 = scalar_lea.vmem %s0, %s317
      $region40: #{block_mix_forward.15} parent=35 // pred_fallthru
        _
      // Predicated region
      $region41: #{block_mix_forward.15} parent=35 // pred_check
        %p319 = pneg %p62
      $region42: #{block_mix_forward.15} parent=35 // pred_check_branch
        %321 = sbr.rel (%p319) target = $region44
      $region43: #{block_mix_forward.15} parent=35 // pred_region
        %p322 = scmp.lt.s32.totalorder %s16, 1
        %s323 = scalar_select %p322, %s16, 1
        %s324 = smul.addr %s323, 4
        %s325 = smul.addr %s324, 4
        %s326 = scalar_lea.vmem %s1, %s325
      $region44: #{block_mix_forward.15} parent=35 // pred_fallthru
        _
      // Predicated region
      $region45: #{block_mix_forward.15} parent=35 // pred_check
        %p327 = pneg %p88
      $region46: #{block_mix_forward.15} parent=35 // pred_check_branch
        %329 = sbr.rel (%p327) target = $region48
      $region47: #{block_mix_forward.15} parent=35 // pred_region
        %p330 = scmp.lt.s32.totalorder %s16, 1
        %s331 = scalar_select %p330, %s16, 1
        %s332 = smul.addr %s331, 4
        %s333 = smul.addr %s332, 8
        %s334 = scalar_lea.vmem %s2, %s333
      $region48: #{block_mix_forward.15} parent=35 // pred_fallthru
        _
      // Predicated region
      $region49: #{block_mix_forward.15} parent=35 // pred_check
        %p335 = pneg %p114
      $region50: #{block_mix_forward.15} parent=35 // pred_check_branch
        %337 = sbr.rel (%p335) target = $region52
      $region51: #{block_mix_forward.15} parent=35 // pred_region
        %p338 = scmp.lt.s32.totalorder %s16, 1
        %s339 = scalar_select %p338, %s16, 1
        %s340 = smul.addr %s339, 4
        %s341 = smul.addr %s340, 8
        %s342 = scalar_lea.vmem %s3, %s341
      $region52: #{block_mix_forward.15} parent=35 // pred_fallthru
        _
      // Predicated region
      $region53: #{block_mix_forward.15} parent=35 // pred_check
        %p343 = pneg %p245
      $region54: #{block_mix_forward.15} parent=35 // pred_check_branch
        %345 = sbr.rel (%p343) target = $region56
      $region55: #{block_mix_forward.15} parent=35 // pred_region
        %p346 = scmp.lt.s32.totalorder %s16, 1
        %s347 = scalar_select %p346, %s16, 1
        %s348 = smul.addr %s347, 2
        %s349 = smul.addr %s348, 8
        %s350 = scalar_lea.vmem %s9, %s349
      $region56: #{block_mix_forward.15} parent=35 // pred_fallthru
        _
    $region36: #{block_mix_forward.15} parent=5 // pred_fallthru
      _
    %p351 = scmp.le.s32.totalorder 1, %s16
    %p352 = scmp.lt.s32.totalorder %s16, 3
    %p353 = pnand %p351, %p352
    %p354 = pneg %p353
    // Predicated region
    $region57: #{block_mix_forward.15} parent=5 // pred_check
      _
    $region58: #{block_mix_forward.15} parent=5 // pred_check_branch
      %356 = sbr.rel (%p353) target = $region60
    $region59: #{block_mix_forward.15} parent=5 // pred_region
      %s357 = ssub.s32 %s16, 1
      %p358 = scmp.lt.s32.totalorder %s21, 1
      %s359 = scalar_select %p358, %s21, 1
      %s360 = smul.addr %s359, 36
      %s361 = smul.addr %s360, 8
      %s362 = scalar_lea.vmem %s0, %s361
      %p363 = pneg %p42
      %p364 = pneg %p39
      %p365 = scmp.lt.s32.totalorder %s21, 1
      %s366 = scalar_select %p365, %s21, 1
      %s367 = smul.addr %s366, 4
      %s368 = smul.addr %s367, 4
      %s369 = scalar_lea.vmem %s1, %s368
      %p370 = pneg %p68
      %p371 = pneg %p65
      %p372 = scmp.lt.s32.totalorder %s21, 1
      %s373 = scalar_select %p372, %s21, 1
      %s374 = smul.addr %s373, 4
      %s375 = smul.addr %s374, 8
      %s376 = scalar_lea.vmem %s2, %s375
      %p377 = pneg %p94
      %p378 = pneg %p91
      %p379 = scmp.lt.s32.totalorder %s21, 1
      %s380 = scalar_select %p379, %s21, 1
      %s381 = smul.addr %s380, 4
      %s382 = smul.addr %s381, 8
      %s383 = scalar_lea.vmem %s3, %s382
      %p384 = pneg %p120
      %p385 = pneg %p117
      %p386 = pneg %p141
      %p387 = pneg %p138
      %p388 = pneg %p162
      %p389 = pneg %p159
      %p390 = pneg %p183
      %p391 = pneg %p180
      %p392 = pneg %p204
      %p393 = pneg %p201
      %p394 = pneg %p225
      %p395 = pneg %p222
      %p396 = scmp.lt.s32.totalorder %s21, 1
      %s397 = scalar_select %p396, %s21, 1
      %s398 = smul.addr %s397, 2
      %s399 = smul.addr %s398, 8
      %s400 = scalar_lea.vmem %s9, %s399
      %p401 = pneg %p251
      %p402 = pneg %p248
      %p403 = pneg %p277
      %p404 = pneg %p274
      %p405 = scmp.lt.s32.totalorder %s21, 1
      %s406 = scalar_select %p405, %s21, 1
      %s407 = smul.addr %s406, 2
      %s408 = smul.addr %s407, 8
      %s409 = scalar_lea.vmem %s10, %s408
      %p410 = scmp.lt.s32.totalorder %s21, 1
      %s411 = scalar_select %p410, %s21, 1
      %s412 = smul.addr %s411, 36
      %s413 = smul.addr %s412, 8
      %s414 = scalar_lea.vmem %s0, %s413
      %p415 = scmp.lt.s32.totalorder %s21, 1
      %s416 = scalar_select %p415, %s21, 1
      %s417 = smul.addr %s416, 4
      %s418 = smul.addr %s417, 4
      %s419 = scalar_lea.vmem %s1, %s418
      %p420 = scmp.lt.s32.totalorder %s21, 1
      %s421 = scalar_select %p420, %s21, 1
      %s422 = smul.addr %s421, 4
      %s423 = smul.addr %s422, 8
      %s424 = scalar_lea.vmem %s2, %s423
      %p425 = scmp.lt.s32.totalorder %s21, 1
      %s426 = scalar_select %p425, %s21, 1
      %s427 = smul.addr %s426, 4
      %s428 = smul.addr %s427, 8
      %s429 = scalar_lea.vmem %s3, %s428
      %p430 = scmp.lt.s32.totalorder %s21, 1
      %s431 = scalar_select %p430, %s21, 1
      %s432 = smul.addr %s431, 2
      %s433 = smul.addr %s432, 8
      %s434 = scalar_lea.vmem %s9, %s433
      %p435 = scmp.lt.s32.totalorder %s21, 1
      %s436 = scalar_select %p435, %s21, 1
      %s437 = smul.addr %s436, 2
      %s438 = smul.addr %s437, 8
      %s439 = scalar_lea.vmem %s10, %s438
      %v440 = vld [vmem:[%s414] sm:$0xff]
      %v441 = vld [vmem:[%s414 + $0x8] sm:$0xff]
      %v442 = vld [vmem:[%s414 + $0x10] sm:$0xff]
      %v443 = vld [vmem:[%s414 + $0x18] sm:$0xff]
      %v444 = vld [vmem:[%s414 + $0x20] sm:$0xff]
      %v445 = vld [vmem:[%s414 + $0x28] sm:$0xff]
      %v446 = vld [vmem:[%s414 + $0x30] sm:$0xff]
      %v447 = vld [vmem:[%s414 + $0x38] sm:$0xff]
      %v448 = vld [vmem:[%s414 + $0x40] sm:$0xff]
      %v449 = vld [vmem:[%s414 + $0x48] sm:$0xff]
      %v450 = vld [vmem:[%s414 + $0x50] sm:$0xff]
      %v451 = vld [vmem:[%s414 + $0x58] sm:$0xff]
      %v452 = vld [vmem:[%s414 + $0x60] sm:$0xff]
      %v453 = vld [vmem:[%s414 + $0x68] sm:$0xff]
      %v454 = vld [vmem:[%s414 + $0x70] sm:$0xff]
      %v455 = vld [vmem:[%s414 + $0x78] sm:$0xff]
      %v456 = vld [vmem:[%s414 + $0x80] sm:$0xff]
      %v457 = vld [vmem:[%s414 + $0x88] sm:$0xff]
      %v458 = vmul.f32 %v440, 0.5
      %v459 = vmul.f32 %v441, 0.5
      %v460 = vmul.f32 %v442, 0.5
      %v461 = vmul.f32 %v443, 0.5
      %v462 = vmul.f32 %v444, 0.5
      %v463 = vmul.f32 %v445, 0.5
      %v464 = vmul.f32 %v446, 0.5
      %v465 = vmul.f32 %v447, 0.5
      %v466 = vmul.f32 %v448, 0.5
      %v467 = vmul.f32 %v449, 0.5
      %v468 = vmul.f32 %v450, 0.5
      %v469 = vmul.f32 %v451, 0.5
      %v470 = vmul.f32 %v452, 0.5
      %v471 = vmul.f32 %v453, 0.5
      %v472 = vmul.f32 %v454, 0.5
      %v473 = vmul.f32 %v455, 0.5
      %v474 = vmul.f32 %v456, 0.5
      %v475 = vmul.f32 %v457, 0.5
      %v476 = vld [vmem:[%s419] sm:$0xff]
      %v478 = vcombine.high %v476, %v476
      %vm479 = vcmask 31744
      %v481 = vsel %vm479, %v458, 0
      %v484 = vsel %vm479, %v459, 0
      %v487 = vsel %vm479, %v460, 0
      %v490 = vsel %vm479, %v461, 0
      %v493 = vsel %vm479, %v462, 0
      %v496 = vsel %vm479, %v463, 0
      %v499 = vsel %vm479, %v464, 0
      %v502 = vsel %vm479, %v465, 0
      %v505 = vsel %vm479, %v466, 0
      %v508 = vsel %vm479, %v467, 0
      %v511 = vsel %vm479, %v468, 0
      %v514 = vsel %vm479, %v469, 0
      %v517 = vsel %vm479, %v470, 0
      %v520 = vsel %vm479, %v471, 0
      %v523 = vsel %vm479, %v472, 0
      %v526 = vsel %vm479, %v473, 0
      %v529 = vsel %vm479, %v474, 0
      %v532 = vsel %vm479, %v475, 0
      %vm534 = vcmask 1043456
      %v535 = vsel %vm534, %v476, 0
      %v537 = vsel %vm534, %v478, 0
      %539 = vmatprep.subr.mxu0 %v537
      %540 = vmatpush1.msra.mxu0 %v535
      %541 = vmatprep.subr.mxu0 0.0
      %542 = vmatpush1.msra.mxu0 0.0
      %543 = vmatprep.subr.mxu0 0.0
      %544 = vmatpush1.msra.mxu0 0.0
      %545 = vmatprep.subr.mxu0 0.0
      %546 = vmatpush1.msra.mxu0 0.0
      %547 = vmatprep.subr.mxu0 0.0
      %548 = vmatpush1.msra.mxu0 0.0
      %549 = vmatprep.subr.mxu0 0.0
      %550 = vmatpush1.msra.mxu0 0.0
      %551 = vmatprep.subr.mxu0 0.0
      %552 = vmatpush1.msra.mxu0 0.0
      %553 = vmatprep.subr.mxu0 0.0
      %554 = vmatpush1.msra.mxu0 0.0
      %555 = vmatprep.subr.mxu0 0.0
      %556 = vmatpush1.msra.mxu0 0.0
      %557 = vmatprep.subr.mxu0 0.0
      %558 = vmatpush1.msra.mxu0 0.0
      %559 = vmatprep.subr.mxu0 0.0
      %560 = vmatpush1.msra.mxu0 0.0
      %561 = vmatprep.subr.mxu0 0.0
      %562 = vmatpush1.msra.mxu0 0.0
      %563 = vmatprep.subr.mxu0 0.0
      %564 = vmatpush1.msra.mxu0 0.0
      %565 = vmatprep.subr.mxu0 0.0
      %566 = vmatpush1.msra.mxu0 0.0
      %567 = vmatprep.subr.mxu0 0.0
      %568 = vmatpush1.msra.mxu0 0.0
      %569 = vmatprep.subr.mxu0 0.0
      %570 = vmatpush1.msra.mxu0 0.0
      %571 = vmatprep.subr.mxu0 0.0
      %572 = vmatpush1.msra.mxu0 0.0
      %573 = vmatprep.subr.mxu0 0.0
      %574 = vmatpush1.msra.mxu0 0.0
      %575 = vmatprep.subr.mxu0 0.0
      %576 = vmatpush1.msra.mxu0 0.0
      %577 = vmatprep.subr.mxu0 0.0
      %578 = vmatpush1.msra.mxu0 0.0
      %579 = vmatprep.subr.mxu0 0.0
      %580 = vmatpush1.msra.mxu0 0.0
      %581 = vmatprep.subr.mxu0 0.0
      %582 = vmatpush1.msra.mxu0 0.0
      %583 = vmatprep.subr.mxu0 0.0
      %584 = vmatpush1.msra.mxu0 0.0
      %585 = vmatprep.subr.mxu0 0.0
      %586 = vmatpush1.msra.mxu0 0.0
      %587 = vmatprep.subr.mxu0 0.0
      %588 = vmatpush1.msra.mxu0 0.0
      %589 = vmatprep.subr.mxu0 0.0
      %590 = vmatpush1.msra.mxu0 0.0
      %591 = vmatprep.subr.mxu0 0.0
      %592 = vmatpush1.msra.mxu0 0.0
      %593 = vmatprep.subr.mxu0 0.0
      %594 = vmatpush1.msra.mxu0 0.0
      %595 = vmatprep.subr.mxu0 0.0
      %596 = vmatpush1.msra.mxu0 0.0
      %597 = vmatprep.subr.mxu0 0.0
      %598 = vmatpush1.msra.mxu0 0.0
      %599 = vmatprep.subr.mxu0 0.0
      %600 = vmatpush1.msra.mxu0 0.0
      %601 = vmatprep.subr.mxu0 0.0
      %602 = vmatpush1.msra.mxu0 0.0
      %603 = vmatprep.mubr.f32.mxu0 0.0
      %604 = vmatmul.mubr.f32.gmra.mrb[0].mxu0 %v481
      %v605 = vpop.f32.mrb[0].mxu0
      %v606 = vadd.f32 0.0, %v605
      %v607 = vpop.f32.mrb[0].mxu0
      %v608 = vadd.f32 0.0, %v607
      %609 = vmatprep.mubr.f32.mxu0 0.0
      %610 = vmatmul.mubr.f32.gmra.mrb[0].mxu0 %v484
      %v611 = vpop.f32.mrb[0].mxu0
      %v612 = vadd.f32 0.0, %v611
      %v613 = vpop.f32.mrb[0].mxu0
      %v614 = vadd.f32 0.0, %v613
      %615 = vmatprep.mubr.f32.mxu0 0.0
      %616 = vmatmul.mubr.f32.gmra.mrb[0].mxu0 %v487
      %v617 = vpop.f32.mrb[0].mxu0
      %v618 = vadd.f32 0.0, %v617
      %v619 = vpop.f32.mrb[0].mxu0
      %v620 = vadd.f32 0.0, %v619
      %621 = vmatprep.mubr.f32.mxu0 0.0
      %622 = vmatmul.mubr.f32.gmra.mrb[0].mxu0 %v490
      %v623 = vpop.f32.mrb[0].mxu0
      %v624 = vadd.f32 0.0, %v623
      %v625 = vpop.f32.mrb[0].mxu0
      %v626 = vadd.f32 0.0, %v625
      %627 = vmatprep.mubr.f32.mxu0 0.0
      %628 = vmatmul.mubr.f32.gmra.mrb[0].mxu0 %v493
      %v629 = vpop.f32.mrb[0].mxu0
      %v630 = vadd.f32 0.0, %v629
      %v631 = vpop.f32.mrb[0].mxu0
      %v632 = vadd.f32 0.0, %v631
      %633 = vmatprep.mubr.f32.mxu0 0.0
      %634 = vmatmul.mubr.f32.gmra.mrb[0].mxu0 %v496
      %v635 = vpop.f32.mrb[0].mxu0
      %v636 = vadd.f32 0.0, %v635
      %v637 = vpop.f32.mrb[0].mxu0
      %v638 = vadd.f32 0.0, %v637
      %639 = vmatprep.mubr.f32.mxu0 0.0
      %640 = vmatmul.mubr.f32.gmra.mrb[0].mxu0 %v499
      %v641 = vpop.f32.mrb[0].mxu0
      %v642 = vadd.f32 0.0, %v641
      %v643 = vpop.f32.mrb[0].mxu0
      %v644 = vadd.f32 0.0, %v643
      %645 = vmatprep.mubr.f32.mxu0 0.0
      %646 = vmatmul.mubr.f32.gmra.mrb[0].mxu0 %v502
      %v647 = vpop.f32.mrb[0].mxu0
      %v648 = vadd.f32 0.0, %v647
      %v649 = vpop.f32.mrb[0].mxu0
      %v650 = vadd.f32 0.0, %v649
      %651 = vmatprep.mubr.f32.mxu0 0.0
      %652 = vmatmul.mubr.f32.gmra.mrb[0].mxu0 %v505
      %v653 = vpop.f32.mrb[0].mxu0
      %v654 = vadd.f32 0.0, %v653
      %v655 = vpop.f32.mrb[0].mxu0
      %v656 = vadd.f32 0.0, %v655
      %657 = vmatprep.mubr.f32.mxu0 0.0
      %658 = vmatmul.mubr.f32.gmra.mrb[0].mxu0 %v508
      %v659 = vpop.f32.mrb[0].mxu0
      %v660 = vadd.f32 0.0, %v659
      %v661 = vpop.f32.mrb[0].mxu0
      %v662 = vadd.f32 0.0, %v661
      %663 = vmatprep.mubr.f32.mxu0 0.0
      %664 = vmatmul.mubr.f32.gmra.mrb[0].mxu0 %v511
      %v665 = vpop.f32.mrb[0].mxu0
      %v666 = vadd.f32 0.0, %v665
      %v667 = vpop.f32.mrb[0].mxu0
      %v668 = vadd.f32 0.0, %v667
      %669 = vmatprep.mubr.f32.mxu0 0.0
      %670 = vmatmul.mubr.f32.gmra.mrb[0].mxu0 %v514
      %v671 = vpop.f32.mrb[0].mxu0
      %v672 = vadd.f32 0.0, %v671
      %v673 = vpop.f32.mrb[0].mxu0
      %v674 = vadd.f32 0.0, %v673
      %675 = vmatprep.mubr.f32.mxu0 0.0
      %676 = vmatmul.mubr.f32.gmra.mrb[0].mxu0 %v517
      %v677 = vpop.f32.mrb[0].mxu0
      %v678 = vadd.f32 0.0, %v677
      %v679 = vpop.f32.mrb[0].mxu0
      %v680 = vadd.f32 0.0, %v679
      %681 = vmatprep.mubr.f32.mxu0 0.0
      %682 = vmatmul.mubr.f32.gmra.mrb[0].mxu0 %v520
      %v683 = vpop.f32.mrb[0].mxu0
      %v684 = vadd.f32 0.0, %v683
      %v685 = vpop.f32.mrb[0].mxu0
      %v686 = vadd.f32 0.0, %v685
      %687 = vmatprep.mubr.f32.mxu0 0.0
      %688 = vmatmul.mubr.f32.gmra.mrb[0].mxu0 %v523
      %v689 = vpop.f32.mrb[0].mxu0
      %v690 = vadd.f32 0.0, %v689
      %v691 = vpop.f32.mrb[0].mxu0
      %v692 = vadd.f32 0.0, %v691
      %693 = vmatprep.mubr.f32.mxu0 0.0
      %694 = vmatmul.mubr.f32.gmra.mrb[0].mxu0 %v526
      %v695 = vpop.f32.mrb[0].mxu0
      %v696 = vadd.f32 0.0, %v695
      %v697 = vpop.f32.mrb[0].mxu0
      %v698 = vadd.f32 0.0, %v697
      %699 = vmatprep.mubr.f32.mxu0 0.0
      %700 = vmatmul.mubr.f32.gmra.mrb[0].mxu0 %v529
      %v701 = vpop.f32.mrb[0].mxu0
      %v702 = vadd.f32 0.0, %v701
      %v703 = vpop.f32.mrb[0].mxu0
      %v704 = vadd.f32 0.0, %v703
      %705 = vmatprep.mubr.f32.mxu0 0.0
      %706 = vmatmul.mubr.f32.gmra.mrb[0].mxu0 %v532
      %v707 = vpop.f32.mrb[0].mxu0
      %v708 = vadd.f32 0.0, %v707
      %v709 = vpop.f32.mrb[0].mxu0
      %v710 = vadd.f32 0.0, %v709
      %711 = vdwg.mxu0
      %vm712 = vcmask 556032
      %v713 = vsel %vm712, %v608, -inf
      %v714 = vmax.f32 %v606, %v713
      %715 = vmax.xlane.f32.xlu0 %v714
      %v716 = vpop.xlane.xlu0 %715
      %v717 = vsel %vm712, %v614, -inf
      %v718 = vmax.f32 %v612, %v717
      %719 = vmax.xlane.f32.xlu0 %v718
      %v720 = vpop.xlane.xlu0 %719
      %v721 = vsel %vm712, %v620, -inf
      %v722 = vmax.f32 %v618, %v721
      %723 = vmax.xlane.f32.xlu0 %v722
      %v724 = vpop.xlane.xlu0 %723
      %v725 = vsel %vm712, %v626, -inf
      %v726 = vmax.f32 %v624, %v725
      %727 = vmax.xlane.f32.xlu0 %v726
      %v728 = vpop.xlane.xlu0 %727
      %v729 = vsel %vm712, %v632, -inf
      %v730 = vmax.f32 %v630, %v729
      %731 = vmax.xlane.f32.xlu0 %v730
      %v732 = vpop.xlane.xlu0 %731
      %v733 = vsel %vm712, %v638, -inf
      %v734 = vmax.f32 %v636, %v733
      %735 = vmax.xlane.f32.xlu0 %v734
      %v736 = vpop.xlane.xlu0 %735
      %v737 = vsel %vm712, %v644, -inf
      %v738 = vmax.f32 %v642, %v737
      %739 = vmax.xlane.f32.xlu0 %v738
      %v740 = vpop.xlane.xlu0 %739
      %v741 = vsel %vm712, %v650, -inf
      %v742 = vmax.f32 %v648, %v741
      %743 = vmax.xlane.f32.xlu0 %v742
      %v744 = vpop.xlane.xlu0 %743
      %v745 = vsel %vm712, %v656, -inf
      %v746 = vmax.f32 %v654, %v745
      %747 = vmax.xlane.f32.xlu0 %v746
      %v748 = vpop.xlane.xlu0 %747
      %v749 = vsel %vm712, %v662, -inf
      %v750 = vmax.f32 %v660, %v749
      %751 = vmax.xlane.f32.xlu0 %v750
      %v752 = vpop.xlane.xlu0 %751
      %v753 = vsel %vm712, %v668, -inf
      %v754 = vmax.f32 %v666, %v753
      %755 = vmax.xlane.f32.xlu0 %v754
      %v756 = vpop.xlane.xlu0 %755
      %v757 = vsel %vm712, %v674, -inf
      %v758 = vmax.f32 %v672, %v757
      %759 = vmax.xlane.f32.xlu0 %v758
      %v760 = vpop.xlane.xlu0 %759
      %v761 = vsel %vm712, %v680, -inf
      %v762 = vmax.f32 %v678, %v761
      %763 = vmax.xlane.f32.xlu0 %v762
      %v764 = vpop.xlane.xlu0 %763
      %v765 = vsel %vm712, %v686, -inf
      %v766 = vmax.f32 %v684, %v765
      %767 = vmax.xlane.f32.xlu0 %v766
      %v768 = vpop.xlane.xlu0 %767
      %v769 = vsel %vm712, %v692, -inf
      %v770 = vmax.f32 %v690, %v769
      %771 = vmax.xlane.f32.xlu0 %v770
      %v772 = vpop.xlane.xlu0 %771
      %v773 = vsel %vm712, %v698, -inf
      %v774 = vmax.f32 %v696, %v773
      %775 = vmax.xlane.f32.xlu0 %v774
      %v776 = vpop.xlane.xlu0 %775
      %v777 = vsel %vm712, %v704, -inf
      %v778 = vmax.f32 %v702, %v777
      %779 = vmax.xlane.f32.xlu0 %v778
      %v780 = vpop.xlane.xlu0 %779
      %v781 = vsel %vm712, %v710, -inf
      %v782 = vmax.f32 %v708, %v781
      %783 = vmax.xlane.f32.xlu0 %v782
      %v784 = vpop.xlane.xlu0 %783
      %v785 = vsub.f32 %v606, %v716
      %v786 = vsub.f32 %v608, %v716
      %v787 = vsub.f32 %v612, %v720
      %v788 = vsub.f32 %v614, %v720
      %v789 = vsub.f32 %v618, %v724
      %v790 = vsub.f32 %v620, %v724
      %v791 = vsub.f32 %v624, %v728
      %v792 = vsub.f32 %v626, %v728
      %v793 = vsub.f32 %v630, %v732
      %v794 = vsub.f32 %v632, %v732
      %v795 = vsub.f32 %v636, %v736
      %v796 = vsub.f32 %v638, %v736
      %v797 = vsub.f32 %v642, %v740
      %v798 = vsub.f32 %v644, %v740
      %v799 = vsub.f32 %v648, %v744
      %v800 = vsub.f32 %v650, %v744
      %v801 = vsub.f32 %v654, %v748
      %v802 = vsub.f32 %v656, %v748
      %v803 = vsub.f32 %v660, %v752
      %v804 = vsub.f32 %v662, %v752
      %v805 = vsub.f32 %v666, %v756
      %v806 = vsub.f32 %v668, %v756
      %v807 = vsub.f32 %v672, %v760
      %v808 = vsub.f32 %v674, %v760
      %v809 = vsub.f32 %v678, %v764
      %v810 = vsub.f32 %v680, %v764
      %v811 = vsub.f32 %v684, %v768
      %v812 = vsub.f32 %v686, %v768
      %v813 = vsub.f32 %v690, %v772
      %v814 = vsub.f32 %v692, %v772
      %v815 = vsub.f32 %v696, %v776
      %v816 = vsub.f32 %v698, %v776
      %v817 = vsub.f32 %v702, %v780
      %v818 = vsub.f32 %v704, %v780
      %v819 = vsub.f32 %v708, %v784
      %v820 = vsub.f32 %v710, %v784
      %v821 = vmul.f32 %v785, 1.442695
      %v822 = vpow.pop %v821
      %v823 = vmul.f32 %v786, 1.442695
      %v824 = vpow.pop %v823
      %v825 = vmul.f32 %v787, 1.442695
      %v826 = vpow.pop %v825
      %v827 = vmul.f32 %v788, 1.442695
      %v828 = vpow.pop %v827
      %v829 = vmul.f32 %v789, 1.442695
      %v830 = vpow.pop %v829
      %v831 = vmul.f32 %v790, 1.442695
      %v832 = vpow.pop %v831
      %v833 = vmul.f32 %v791, 1.442695
      %v834 = vpow.pop %v833
      %v835 = vmul.f32 %v792, 1.442695
      %v836 = vpow.pop %v835
      %v837 = vmul.f32 %v793, 1.442695
      %v838 = vpow.pop %v837
      %v839 = vmul.f32 %v794, 1.442695
      %v840 = vpow.pop %v839
      %v841 = vmul.f32 %v795, 1.442695
      %v842 = vpow.pop %v841
      %v843 = vmul.f32 %v796, 1.442695
      %v844 = vpow.pop %v843
      %v845 = vmul.f32 %v797, 1.442695
      %v846 = vpow.pop %v845
      %v847 = vmul.f32 %v798, 1.442695
      %v848 = vpow.pop %v847
      %v849 = vmul.f32 %v799, 1.442695
      %v850 = vpow.pop %v849
      %v851 = vmul.f32 %v800, 1.442695
      %v852 = vpow.pop %v851
      %v853 = vmul.f32 %v801, 1.442695
      %v854 = vpow.pop %v853
      %v855 = vmul.f32 %v802, 1.442695
      %v856 = vpow.pop %v855
      %v857 = vmul.f32 %v803, 1.442695
      %v858 = vpow.pop %v857
      %v859 = vmul.f32 %v804, 1.442695
      %v860 = vpow.pop %v859
      %v861 = vmul.f32 %v805, 1.442695
      %v862 = vpow.pop %v861
      %v863 = vmul.f32 %v806, 1.442695
      %v864 = vpow.pop %v863
      %v865 = vmul.f32 %v807, 1.442695
      %v866 = vpow.pop %v865
      %v867 = vmul.f32 %v808, 1.442695
      %v868 = vpow.pop %v867
      %v869 = vmul.f32 %v809, 1.442695
      %v870 = vpow.pop %v869
      %v871 = vmul.f32 %v810, 1.442695
      %v872 = vpow.pop %v871
      %v873 = vmul.f32 %v811, 1.442695
      %v874 = vpow.pop %v873
      %v875 = vmul.f32 %v812, 1.442695
      %v876 = vpow.pop %v875
      %v877 = vmul.f32 %v813, 1.442695
      %v878 = vpow.pop %v877
      %v879 = vmul.f32 %v814, 1.442695
      %v880 = vpow.pop %v879
      %v881 = vmul.f32 %v815, 1.442695
      %v882 = vpow.pop %v881
      %v883 = vmul.f32 %v816, 1.442695
      %v884 = vpow.pop %v883
      %v885 = vmul.f32 %v817, 1.442695
      %v886 = vpow.pop %v885
      %v887 = vmul.f32 %v818, 1.442695
      %v888 = vpow.pop %v887
      %v889 = vmul.f32 %v819, 1.442695
      %v890 = vpow.pop %v889
      %v891 = vmul.f32 %v820, 1.442695
      %v892 = vpow.pop %v891
      %v893 = vsel %vm712, %v824, 0.0
      %v894 = vadd.f32 %v822, %v893
      %895 = vadd.xlane.f32.xlu0 %v894
      %v896 = vpop.xlane.xlu0 %895
      %v897 = vsel %vm712, %v828, 0.0
      %v898 = vadd.f32 %v826, %v897
      %899 = vadd.xlane.f32.xlu0 %v898
      %v900 = vpop.xlane.xlu0 %899
      %v901 = vsel %vm712, %v832, 0.0
      %v902 = vadd.f32 %v830, %v901
      %903 = vadd.xlane.f32.xlu0 %v902
      %v904 = vpop.xlane.xlu0 %903
      %v905 = vsel %vm712, %v836, 0.0
      %v906 = vadd.f32 %v834, %v905
      %907 = vadd.xlane.f32.xlu0 %v906
      %v908 = vpop.xlane.xlu0 %907
      %v909 = vsel %vm712, %v840, 0.0
      %v910 = vadd.f32 %v838, %v909
      %911 = vadd.xlane.f32.xlu0 %v910
      %v912 = vpop.xlane.xlu0 %911
      %v913 = vsel %vm712, %v844, 0.0
      %v914 = vadd.f32 %v842, %v913
      %915 = vadd.xlane.f32.xlu0 %v914
      %v916 = vpop.xlane.xlu0 %915
      %v917 = vsel %vm712, %v848, 0.0
      %v918 = vadd.f32 %v846, %v917
      %919 = vadd.xlane.f32.xlu0 %v918
      %v920 = vpop.xlane.xlu0 %919
      %v921 = vsel %vm712, %v852, 0.0
      %v922 = vadd.f32 %v850, %v921
      %923 = vadd.xlane.f32.xlu0 %v922
      %v924 = vpop.xlane.xlu0 %923
      %v925 = vsel %vm712, %v856, 0.0
      %v926 = vadd.f32 %v854, %v925
      %927 = vadd.xlane.f32.xlu0 %v926
      %v928 = vpop.xlane.xlu0 %927
      %v929 = vsel %vm712, %v860, 0.0
      %v930 = vadd.f32 %v858, %v929
      %931 = vadd.xlane.f32.xlu0 %v930
      %v932 = vpop.xlane.xlu0 %931
      %v933 = vsel %vm712, %v864, 0.0
      %v934 = vadd.f32 %v862, %v933
      %935 = vadd.xlane.f32.xlu0 %v934
      %v936 = vpop.xlane.xlu0 %935
      %v937 = vsel %vm712, %v868, 0.0
      %v938 = vadd.f32 %v866, %v937
      %939 = vadd.xlane.f32.xlu0 %v938
      %v940 = vpop.xlane.xlu0 %939
      %v941 = vsel %vm712, %v872, 0.0
      %v942 = vadd.f32 %v870, %v941
      %943 = vadd.xlane.f32.xlu0 %v942
      %v944 = vpop.xlane.xlu0 %943
      %v945 = vsel %vm712, %v876, 0.0
      %v946 = vadd.f32 %v874, %v945
      %947 = vadd.xlane.f32.xlu0 %v946
      %v948 = vpop.xlane.xlu0 %947
      %v949 = vsel %vm712, %v880, 0.0
      %v950 = vadd.f32 %v878, %v949
      %951 = vadd.xlane.f32.xlu0 %v950
      %v952 = vpop.xlane.xlu0 %951
      %v953 = vsel %vm712, %v884, 0.0
      %v954 = vadd.f32 %v882, %v953
      %955 = vadd.xlane.f32.xlu0 %v954
      %v956 = vpop.xlane.xlu0 %955
      %v957 = vsel %vm712, %v888, 0.0
      %v958 = vadd.f32 %v886, %v957
      %959 = vadd.xlane.f32.xlu0 %v958
      %v960 = vpop.xlane.xlu0 %959
      %v961 = vsel %vm712, %v892, 0.0
      %v962 = vadd.f32 %v890, %v961
      %963 = vadd.xlane.f32.xlu0 %v962
      %v964 = vpop.xlane.xlu0 %963
      %v965 = vrcp.pop %v896
      %v966 = vrcp.pop %v900
      %v967 = vrcp.pop %v904
      %v968 = vrcp.pop %v908
      %v969 = vrcp.pop %v912
      %v970 = vrcp.pop %v916
      %v971 = vrcp.pop %v920
      %v972 = vrcp.pop %v924
      %v973 = vrcp.pop %v928
      %v974 = vrcp.pop %v932
      %v975 = vrcp.pop %v936
      %v976 = vrcp.pop %v940
      %v977 = vrcp.pop %v944
      %v978 = vrcp.pop %v948
      %v979 = vrcp.pop %v952
      %v980 = vrcp.pop %v956
      %v981 = vrcp.pop %v960
      %v982 = vrcp.pop %v964
      %v983 = vmul.f32 %v822, %v965
      %v984 = vmul.f32 %v824, %v965
      %v985 = vmul.f32 %v826, %v966
      %v986 = vmul.f32 %v828, %v966
      %v987 = vmul.f32 %v830, %v967
      %v988 = vmul.f32 %v832, %v967
      %v989 = vmul.f32 %v834, %v968
      %v990 = vmul.f32 %v836, %v968
      %v991 = vmul.f32 %v838, %v969
      %v992 = vmul.f32 %v840, %v969
      %v993 = vmul.f32 %v842, %v970
      %v994 = vmul.f32 %v844, %v970
      %v995 = vmul.f32 %v846, %v971
      %v996 = vmul.f32 %v848, %v971
      %v997 = vmul.f32 %v850, %v972
      %v998 = vmul.f32 %v852, %v972
      %v999 = vmul.f32 %v854, %v973
      %v1000 = vmul.f32 %v856, %v973
      %v1001 = vmul.f32 %v858, %v974
      %v1002 = vmul.f32 %v860, %v974
      %v1003 = vmul.f32 %v862, %v975
      %v1004 = vmul.f32 %v864, %v975
      %v1005 = vmul.f32 %v866, %v976
      %v1006 = vmul.f32 %v868, %v976
      %v1007 = vmul.f32 %v870, %v977
      %v1008 = vmul.f32 %v872, %v977
      %v1009 = vmul.f32 %v874, %v978
      %v1010 = vmul.f32 %v876, %v978
      %v1011 = vmul.f32 %v878, %v979
      %v1012 = vmul.f32 %v880, %v979
      %v1013 = vmul.f32 %v882, %v980
      %v1014 = vmul.f32 %v884, %v980
      %v1015 = vmul.f32 %v886, %v981
      %v1016 = vmul.f32 %v888, %v981
      %v1017 = vmul.f32 %v890, %v982
      %v1018 = vmul.f32 %v892, %v982
      %v1019 = vld [vmem:[%s424] sm:$0xff]
      %v1020 = vld [vmem:[%s424 + $0x8] sm:$0xff]
      %v1022 = vsel %vm712, %v1020, 0
      %v1025 = vsel %vm712, %v984, 0
      %v1028 = vsel %vm712, %v986, 0
      %v1031 = vsel %vm712, %v988, 0
      %v1034 = vsel %vm712, %v990, 0
      %v1037 = vsel %vm712, %v992, 0
      %v1040 = vsel %vm712, %v994, 0
      %v1043 = vsel %vm712, %v996, 0
      %v1046 = vsel %vm712, %v998, 0
      %v1049 = vsel %vm712, %v1000, 0
      %v1052 = vsel %vm712, %v1002, 0
      %v1055 = vsel %vm712, %v1004, 0
      %v1058 = vsel %vm712, %v1006, 0
      %v1061 = vsel %vm712, %v1008, 0
      %v1064 = vsel %vm712, %v1010, 0
      %v1067 = vsel %vm712, %v1012, 0
      %v1070 = vsel %vm712, %v1014, 0
      %v1073 = vsel %vm712, %v1016, 0
      %v1076 = vsel %vm712, %v1018, 0
      %1078 = vmatprep.subr.mxu0 %v1025
      %1079 = vmatpush1.xpose.msra.mxu0 %v983
      %1080 = vmatprep.subr.mxu0 %v1028
      %1081 = vmatpush1.xpose.msra.mxu0 %v985
      %1082 = vmatprep.subr.mxu0 %v1031
      %1083 = vmatpush1.xpose.msra.mxu0 %v987
      %1084 = vmatprep.subr.mxu0 %v1034
      %1085 = vmatpush1.xpose.msra.mxu0 %v989
      %1086 = vmatprep.subr.mxu0 %v1037
      %1087 = vmatpush1.xpose.msra.mxu0 %v991
      %1088 = vmatprep.subr.mxu0 %v1040
      %1089 = vmatpush1.xpose.msra.mxu0 %v993
      %1090 = vmatprep.subr.mxu0 %v1043
      %1091 = vmatpush1.xpose.msra.mxu0 %v995
      %1092 = vmatprep.subr.mxu0 %v1046
      %1093 = vmatpush1.xpose.msra.mxu0 %v997
      %1094 = vmatprep.subr.mxu0 %v1049
      %1095 = vmatpush1.xpose.msra.mxu0 %v999
      %1096 = vmatprep.subr.mxu0 %v1052
      %1097 = vmatpush1.xpose.msra.mxu0 %v1001
      %1098 = vmatprep.subr.mxu0 %v1055
      %1099 = vmatpush1.xpose.msra.mxu0 %v1003
      %1100 = vmatprep.subr.mxu0 %v1058
      %1101 = vmatpush1.xpose.msra.mxu0 %v1005
      %1102 = vmatprep.subr.mxu0 %v1061
      %1103 = vmatpush1.xpose.msra.mxu0 %v1007
      %1104 = vmatprep.subr.mxu0 %v1064
      %1105 = vmatpush1.xpose.msra.mxu0 %v1009
      %1106 = vmatprep.subr.mxu0 %v1067
      %1107 = vmatpush1.xpose.msra.mxu0 %v1011
      %1108 = vmatprep.subr.mxu0 %v1070
      %1109 = vmatpush1.xpose.msra.mxu0 %v1013
      %1110 = vmatprep.subr.mxu0 %v1073
      %1111 = vmatpush1.xpose.msra.mxu0 %v1015
      %1112 = vmatprep.subr.mxu0 %v1076
      %1113 = vmatpush1.xpose.msra.mxu0 %v1017
      %1114 = vmatprep.subr.mxu0 0.0
      %1115 = vmatpush1.xpose.msra.mxu0 0.0
      %1116 = vmatprep.subr.mxu0 0.0
      %1117 = vmatpush1.xpose.msra.mxu0 0.0
      %1118 = vmatprep.subr.mxu0 0.0
      %1119 = vmatpush1.xpose.msra.mxu0 0.0
      %1120 = vmatprep.subr.mxu0 0.0
      %1121 = vmatpush1.xpose.msra.mxu0 0.0
      %1122 = vmatprep.subr.mxu0 0.0
      %1123 = vmatpush1.xpose.msra.mxu0 0.0
      %1124 = vmatprep.subr.mxu0 0.0
      %1125 = vmatpush1.xpose.msra.mxu0 0.0
      %1126 = vmatprep.subr.mxu0 0.0
      %1127 = vmatpush1.xpose.msra.mxu0 0.0
      %1128 = vmatprep.subr.mxu0 0.0
      %1129 = vmatpush1.xpose.msra.mxu0 0.0
      %1130 = vmatprep.subr.mxu0 0.0
      %1131 = vmatpush1.xpose.msra.mxu0 0.0
      %1132 = vmatprep.subr.mxu0 0.0
      %1133 = vmatpush1.xpose.msra.mxu0 0.0
      %1134 = vmatprep.subr.mxu0 0.0
      %1135 = vmatpush1.xpose.msra.mxu0 0.0
      %1136 = vmatprep.subr.mxu0 0.0
      %1137 = vmatpush1.xpose.msra.mxu0 0.0
      %1138 = vmatprep.subr.mxu0 0.0
      %1139 = vmatpush1.xpose.msra.mxu0 0.0
      %1140 = vmatprep.subr.mxu0 0.0
      %1141 = vmatpush1.xpose.msra.mxu0 0.0
      %1142 = vmatprep.mubr.f32.mxu0 %v1022
      %1143 = vmatmul.mubr.f32.gmra.mrb[0].mxu0 %v1019
      %v1144 = vpop.f32.mrb[0].mxu0
      %v1145 = vadd.f32 0.0, %v1144
      %v1146 = vpop.f32.mrb[0].mxu0
      %v1147 = vadd.f32 0.0, %v1146
      %1148 = vdwg.mxu0
      %s1149 = scalar_lea.vmem %s414, 144
      %v1150 = vld [vmem:[%s1149] sm:$0xff]
      %v1151 = vld [vmem:[%s1149 + $0x8] sm:$0xff]
      %v1152 = vld [vmem:[%s1149 + $0x10] sm:$0xff]
      %v1153 = vld [vmem:[%s1149 + $0x18] sm:$0xff]
      %v1154 = vld [vmem:[%s1149 + $0x20] sm:$0xff]
      %v1155 = vld [vmem:[%s1149 + $0x28] sm:$0xff]
      %v1156 = vld [vmem:[%s1149 + $0x30] sm:$0xff]
      %v1157 = vld [vmem:[%s1149 + $0x38] sm:$0xff]
      %v1158 = vld [vmem:[%s1149 + $0x40] sm:$0xff]
      %v1159 = vld [vmem:[%s1149 + $0x48] sm:$0xff]
      %v1160 = vld [vmem:[%s1149 + $0x50] sm:$0xff]
      %v1161 = vld [vmem:[%s1149 + $0x58] sm:$0xff]
      %v1162 = vld [vmem:[%s1149 + $0x60] sm:$0xff]
      %v1163 = vld [vmem:[%s1149 + $0x68] sm:$0xff]
      %v1164 = vld [vmem:[%s1149 + $0x70] sm:$0xff]
      %v1165 = vld [vmem:[%s1149 + $0x78] sm:$0xff]
      %v1166 = vld [vmem:[%s1149 + $0x80] sm:$0xff]
      %v1167 = vld [vmem:[%s1149 + $0x88] sm:$0xff]
      %v1168 = vmul.f32 %v1150, 0.5
      %v1169 = vmul.f32 %v1151, 0.5
      %v1170 = vmul.f32 %v1152, 0.5
      %v1171 = vmul.f32 %v1153, 0.5
      %v1172 = vmul.f32 %v1154, 0.5
      %v1173 = vmul.f32 %v1155, 0.5
      %v1174 = vmul.f32 %v1156, 0.5
      %v1175 = vmul.f32 %v1157, 0.5
      %v1176 = vmul.f32 %v1158, 0.5
      %v1177 = vmul.f32 %v1159, 0.5
      %v1178 = vmul.f32 %v1160, 0.5
      %v1179 = vmul.f32 %v1161, 0.5
      %v1180 = vmul.f32 %v1162, 0.5
      %v1181 = vmul.f32 %v1163, 0.5
      %v1182 = vmul.f32 %v1164, 0.5
      %v1183 = vmul.f32 %v1165, 0.5
      %v1184 = vmul.f32 %v1166, 0.5
      %v1185 = vmul.f32 %v1167, 0.5
      %s1186 = scalar_lea.vmem %s419, 8
      %v1187 = vld [vmem:[%s1186] sm:$0xff]
      %v1189 = vcombine.high %v1187, %v1187
      %v1191 = vsel %vm479, %v1168, 0
      %v1194 = vsel %vm479, %v1169, 0
      %v1197 = vsel %vm479, %v1170, 0
      %v1200 = vsel %vm479, %v1171, 0
      %v1203 = vsel %vm479, %v1172, 0
      %v1206 = vsel %vm479, %v1173, 0
      %v1209 = vsel %vm479, %v1174, 0
      %v1212 = vsel %vm479, %v1175, 0
      %v1215 = vsel %vm479, %v1176, 0
      %v1218 = vsel %vm479, %v1177, 0
      %v1221 = vsel %vm479, %v1178, 0
      %v1224 = vsel %vm479, %v1179, 0
      %v1227 = vsel %vm479, %v1180, 0
      %v1230 = vsel %vm479, %v1181, 0
      %v1233 = vsel %vm479, %v1182, 0
      %v1236 = vsel %vm479, %v1183, 0
      %v1239 = vsel %vm479, %v1184, 0
      %v1242 = vsel %vm479, %v1185, 0
      %v1244 = vsel %vm534, %v1187, 0
      %v1246 = vsel %vm534, %v1189, 0
      %1248 = vmatprep.subr.mxu0 %v1246
      %1249 = vmatpush1.msra.mxu0 %v1244
      %1250 = vmatprep.subr.mxu0 0.0
      %1251 = vmatpush1.msra.mxu0 0.0
      %1252 = vmatprep.subr.mxu0 0.0
      %1253 = vmatpush1.msra.mxu0 0.0
      %1254 = vmatprep.subr.mxu0 0.0
      %1255 = vmatpush1.msra.mxu0 0.0
      %1256 = vmatprep.subr.mxu0 0.0
      %1257 = vmatpush1.msra.mxu0 0.0
      %1258 = vmatprep.subr.mxu0 0.0
      %1259 = vmatpush1.msra.mxu0 0.0
      %1260 = vmatprep.subr.mxu0 0.0
      %1261 = vmatpush1.msra.mxu0 0.0
      %1262 = vmatprep.subr.mxu0 0.0
      %1263 = vmatpush1.msra.mxu0 0.0
      %1264 = vmatprep.subr.mxu0 0.0
      %1265 = vmatpush1.msra.mxu0 0.0
      %1266 = vmatprep.subr.mxu0 0.0
      %1267 = vmatpush1.msra.mxu0 0.0
      %1268 = vmatprep.subr.mxu0 0.0
      %1269 = vmatpush1.msra.mxu0 0.0
      %1270 = vmatprep.subr.mxu0 0.0
      %1271 = vmatpush1.msra.mxu0 0.0
      %1272 = vmatprep.subr.mxu0 0.0
      %1273 = vmatpush1.msra.mxu0 0.0
      %1274 = vmatprep.subr.mxu0 0.0
      %1275 = vmatpush1.msra.mxu0 0.0
      %1276 = vmatprep.subr.mxu0 0.0
      %1277 = vmatpush1.msra.mxu0 0.0
      %1278 = vmatprep.subr.mxu0 0.0
      %1279 = vmatpush1.msra.mxu0 0.0
      %1280 = vmatprep.subr.mxu0 0.0
      %1281 = vmatpush1.msra.mxu0 0.0
      %1282 = vmatprep.subr.mxu0 0.0
      %1283 = vmatpush1.msra.mxu0 0.0
      %1284 = vmatprep.subr.mxu0 0.0
      %1285 = vmatpush1.msra.mxu0 0.0
      %1286 = vmatprep.subr.mxu0 0.0
      %1287 = vmatpush1.msra.mxu0 0.0
      %1288 = vmatprep.subr.mxu0 0.0
      %1289 = vmatpush1.msra.mxu0 0.0
      %1290 = vmatprep.subr.mxu0 0.0
      %1291 = vmatpush1.msra.mxu0 0.0
      %1292 = vmatprep.subr.mxu0 0.0
      %1293 = vmatpush1.msra.mxu0 0.0
      %1294 = vmatprep.subr.mxu0 0.0
      %1295 = vmatpush1.msra.mxu0 0.0
      %1296 = vmatprep.subr.mxu0 0.0
      %1297 = vmatpush1.msra.mxu0 0.0
      %1298 = vmatprep.subr.mxu0 0.0
      %1299 = vmatpush1.msra.mxu0 0.0
      %1300 = vmatprep.subr.mxu0 0.0
      %1301 = vmatpush1.msra.mxu0 0.0
      %1302 = vmatprep.subr.mxu0 0.0
      %1303 = vmatpush1.msra.mxu0 0.0
      %1304 = vmatprep.subr.mxu0 0.0
      %1305 = vmatpush1.msra.mxu0 0.0
      %1306 = vmatprep.subr.mxu0 0.0
      %1307 = vmatpush1.msra.mxu0 0.0
      %1308 = vmatprep.subr.mxu0 0.0
      %1309 = vmatpush1.msra.mxu0 0.0
      %1310 = vmatprep.subr.mxu0 0.0
      %1311 = vmatpush1.msra.mxu0 0.0
      %1312 = vmatprep.mubr.f32.mxu0 0.0
      %1313 = vmatmul.mubr.f32.gmra.mrb[0].mxu0 %v1191
      %v1314 = vpop.f32.mrb[0].mxu0
      %v1315 = vadd.f32 0.0, %v1314
      %v1316 = vpop.f32.mrb[0].mxu0
      %v1317 = vadd.f32 0.0, %v1316
      %1318 = vmatprep.mubr.f32.mxu0 0.0
      %1319 = vmatmul.mubr.f32.gmra.mrb[0].mxu0 %v1194
      %v1320 = vpop.f32.mrb[0].mxu0
      %v1321 = vadd.f32 0.0, %v1320
      %v1322 = vpop.f32.mrb[0].mxu0
      %v1323 = vadd.f32 0.0, %v1322
      %1324 = vmatprep.mubr.f32.mxu0 0.0
      %1325 = vmatmul.mubr.f32.gmra.mrb[0].mxu0 %v1197
      %v1326 = vpop.f32.mrb[0].mxu0
      %v1327 = vadd.f32 0.0, %v1326
      %v1328 = vpop.f32.mrb[0].mxu0
      %v1329 = vadd.f32 0.0, %v1328
      %1330 = vmatprep.mubr.f32.mxu0 0.0
      %1331 = vmatmul.mubr.f32.gmra.mrb[0].mxu0 %v1200
      %v1332 = vpop.f32.mrb[0].mxu0
      %v1333 = vadd.f32 0.0, %v1332
      %v1334 = vpop.f32.mrb[0].mxu0
      %v1335 = vadd.f32 0.0, %v1334
      %1336 = vmatprep.mubr.f32.mxu0 0.0
      %1337 = vmatmul.mubr.f32.gmra.mrb[0].mxu0 %v1203
      %v1338 = vpop.f32.mrb[0].mxu0
      %v1339 = vadd.f32 0.0, %v1338
      %v1340 = vpop.f32.mrb[0].mxu0
      %v1341 = vadd.f32 0.0, %v1340
      %1342 = vmatprep.mubr.f32.mxu0 0.0
      %1343 = vmatmul.mubr.f32.gmra.mrb[0].mxu0 %v1206
      %v1344 = vpop.f32.mrb[0].mxu0
      %v1345 = vadd.f32 0.0, %v1344
      %v1346 = vpop.f32.mrb[0].mxu0
      %v1347 = vadd.f32 0.0, %v1346
      %1348 = vmatprep.mubr.f32.mxu0 0.0
      %1349 = vmatmul.mubr.f32.gmra.mrb[0].mxu0 %v1209
      %v1350 = vpop.f32.mrb[0].mxu0
      %v1351 = vadd.f32 0.0, %v1350
      %v1352 = vpop.f32.mrb[0].mxu0
      %v1353 = vadd.f32 0.0, %v1352
      %1354 = vmatprep.mubr.f32.mxu0 0.0
      %1355 = vmatmul.mubr.f32.gmra.mrb[0].mxu0 %v1212
      %v1356 = vpop.f32.mrb[0].mxu0
      %v1357 = vadd.f32 0.0, %v1356
      %v1358 = vpop.f32.mrb[0].mxu0
      %v1359 = vadd.f32 0.0, %v1358
      %1360 = vmatprep.mubr.f32.mxu0 0.0
      %1361 = vmatmul.mubr.f32.gmra.mrb[0].mxu0 %v1215
      %v1362 = vpop.f32.mrb[0].mxu0
      %v1363 = vadd.f32 0.0, %v1362
      %v1364 = vpop.f32.mrb[0].mxu0
      %v1365 = vadd.f32 0.0, %v1364
      %1366 = vmatprep.mubr.f32.mxu0 0.0
      %1367 = vmatmul.mubr.f32.gmra.mrb[0].mxu0 %v1218
      %v1368 = vpop.f32.mrb[0].mxu0
      %v1369 = vadd.f32 0.0, %v1368
      %v1370 = vpop.f32.mrb[0].mxu0
      %v1371 = vadd.f32 0.0, %v1370
      %1372 = vmatprep.mubr.f32.mxu0 0.0
      %1373 = vmatmul.mubr.f32.gmra.mrb[0].mxu0 %v1221
      %v1374 = vpop.f32.mrb[0].mxu0
      %v1375 = vadd.f32 0.0, %v1374
      %v1376 = vpop.f32.mrb[0].mxu0
      %v1377 = vadd.f32 0.0, %v1376
      %1378 = vmatprep.mubr.f32.mxu0 0.0
      %1379 = vmatmul.mubr.f32.gmra.mrb[0].mxu0 %v1224
      %v1380 = vpop.f32.mrb[0].mxu0
      %v1381 = vadd.f32 0.0, %v1380
      %v1382 = vpop.f32.mrb[0].mxu0
      %v1383 = vadd.f32 0.0, %v1382
      %1384 = vmatprep.mubr.f32.mxu0 0.0
      %1385 = vmatmul.mubr.f32.gmra.mrb[0].mxu0 %v1227
      %v1386 = vpop.f32.mrb[0].mxu0
      %v1387 = vadd.f32 0.0, %v1386
      %v1388 = vpop.f32.mrb[0].mxu0
      %v1389 = vadd.f32 0.0, %v1388
      %1390 = vmatprep.mubr.f32.mxu0 0.0
      %1391 = vmatmul.mubr.f32.gmra.mrb[0].mxu0 %v1230
      %v1392 = vpop.f32.mrb[0].mxu0
      %v1393 = vadd.f32 0.0, %v1392
      %v1394 = vpop.f32.mrb[0].mxu0
      %v1395 = vadd.f32 0.0, %v1394
      %1396 = vmatprep.mubr.f32.mxu0 0.0
      %1397 = vmatmul.mubr.f32.gmra.mrb[0].mxu0 %v1233
      %v1398 = vpop.f32.mrb[0].mxu0
      %v1399 = vadd.f32 0.0, %v1398
      %v1400 = vpop.f32.mrb[0].mxu0
      %v1401 = vadd.f32 0.0, %v1400
      %1402 = vmatprep.mubr.f32.mxu0 0.0
      %1403 = vmatmul.mubr.f32.gmra.mrb[0].mxu0 %v1236
      %v1404 = vpop.f32.mrb[0].mxu0
      %v1405 = vadd.f32 0.0, %v1404
      %v1406 = vpop.f32.mrb[0].mxu0
      %v1407 = vadd.f32 0.0, %v1406
      %1408 = vmatprep.mubr.f32.mxu0 0.0
      %1409 = vmatmul.mubr.f32.gmra.mrb[0].mxu0 %v1239
      %v1410 = vpop.f32.mrb[0].mxu0
      %v1411 = vadd.f32 0.0, %v1410
      %v1412 = vpop.f32.mrb[0].mxu0
      %v1413 = vadd.f32 0.0, %v1412
      %1414 = vmatprep.mubr.f32.mxu0 0.0
      %1415 = vmatmul.mubr.f32.gmra.mrb[0].mxu0 %v1242
      %v1416 = vpop.f32.mrb[0].mxu0
      %v1417 = vadd.f32 0.0, %v1416
      %v1418 = vpop.f32.mrb[0].mxu0
      %v1419 = vadd.f32 0.0, %v1418
      %1420 = vdwg.mxu0
      %v1421 = vsel %vm712, %v1317, -inf
      %v1422 = vmax.f32 %v1315, %v1421
      %1423 = vmax.xlane.f32.xlu0 %v1422
      %v1424 = vpop.xlane.xlu0 %1423
      %v1425 = vsel %vm712, %v1323, -inf
      %v1426 = vmax.f32 %v1321, %v1425
      %1427 = vmax.xlane.f32.xlu0 %v1426
      %v1428 = vpop.xlane.xlu0 %1427
      %v1429 = vsel %vm712, %v1329, -inf
      %v1430 = vmax.f32 %v1327, %v1429
      %1431 = vmax.xlane.f32.xlu0 %v1430
      %v1432 = vpop.xlane.xlu0 %1431
      %v1433 = vsel %vm712, %v1335, -inf
      %v1434 = vmax.f32 %v1333, %v1433
      %1435 = vmax.xlane.f32.xlu0 %v1434
      %v1436 = vpop.xlane.xlu0 %1435
      %v1437 = vsel %vm712, %v1341, -inf
      %v1438 = vmax.f32 %v1339, %v1437
      %1439 = vmax.xlane.f32.xlu0 %v1438
      %v1440 = vpop.xlane.xlu0 %1439
      %v1441 = vsel %vm712, %v1347, -inf
      %v1442 = vmax.f32 %v1345, %v1441
      %1443 = vmax.xlane.f32.xlu0 %v1442
      %v1444 = vpop.xlane.xlu0 %1443
      %v1445 = vsel %vm712, %v1353, -inf
      %v1446 = vmax.f32 %v1351, %v1445
      %1447 = vmax.xlane.f32.xlu0 %v1446
      %v1448 = vpop.xlane.xlu0 %1447
      %v1449 = vsel %vm712, %v1359, -inf
      %v1450 = vmax.f32 %v1357, %v1449
      %1451 = vmax.xlane.f32.xlu0 %v1450
      %v1452 = vpop.xlane.xlu0 %1451
      %v1453 = vsel %vm712, %v1365, -inf
      %v1454 = vmax.f32 %v1363, %v1453
      %1455 = vmax.xlane.f32.xlu0 %v1454
      %v1456 = vpop.xlane.xlu0 %1455
      %v1457 = vsel %vm712, %v1371, -inf
      %v1458 = vmax.f32 %v1369, %v1457
      %1459 = vmax.xlane.f32.xlu0 %v1458
      %v1460 = vpop.xlane.xlu0 %1459
      %v1461 = vsel %vm712, %v1377, -inf
      %v1462 = vmax.f32 %v1375, %v1461
      %1463 = vmax.xlane.f32.xlu0 %v1462
      %v1464 = vpop.xlane.xlu0 %1463
      %v1465 = vsel %vm712, %v1383, -inf
      %v1466 = vmax.f32 %v1381, %v1465
      %1467 = vmax.xlane.f32.xlu0 %v1466
      %v1468 = vpop.xlane.xlu0 %1467
      %v1469 = vsel %vm712, %v1389, -inf
      %v1470 = vmax.f32 %v1387, %v1469
      %1471 = vmax.xlane.f32.xlu0 %v1470
      %v1472 = vpop.xlane.xlu0 %1471
      %v1473 = vsel %vm712, %v1395, -inf
      %v1474 = vmax.f32 %v1393, %v1473
      %1475 = vmax.xlane.f32.xlu0 %v1474
      %v1476 = vpop.xlane.xlu0 %1475
      %v1477 = vsel %vm712, %v1401, -inf
      %v1478 = vmax.f32 %v1399, %v1477
      %1479 = vmax.xlane.f32.xlu0 %v1478
      %v1480 = vpop.xlane.xlu0 %1479
      %v1481 = vsel %vm712, %v1407, -inf
      %v1482 = vmax.f32 %v1405, %v1481
      %1483 = vmax.xlane.f32.xlu0 %v1482
      %v1484 = vpop.xlane.xlu0 %1483
      %v1485 = vsel %vm712, %v1413, -inf
      %v1486 = vmax.f32 %v1411, %v1485
      %1487 = vmax.xlane.f32.xlu0 %v1486
      %v1488 = vpop.xlane.xlu0 %1487
      %v1489 = vsel %vm712, %v1419, -inf
      %v1490 = vmax.f32 %v1417, %v1489
      %1491 = vmax.xlane.f32.xlu0 %v1490
      %v1492 = vpop.xlane.xlu0 %1491
      %v1493 = vsub.f32 %v1315, %v1424
      %v1494 = vsub.f32 %v1317, %v1424
      %v1495 = vsub.f32 %v1321, %v1428
      %v1496 = vsub.f32 %v1323, %v1428
      %v1497 = vsub.f32 %v1327, %v1432
      %v1498 = vsub.f32 %v1329, %v1432
      %v1499 = vsub.f32 %v1333, %v1436
      %v1500 = vsub.f32 %v1335, %v1436
      %v1501 = vsub.f32 %v1339, %v1440
      %v1502 = vsub.f32 %v1341, %v1440
      %v1503 = vsub.f32 %v1345, %v1444
      %v1504 = vsub.f32 %v1347, %v1444
      %v1505 = vsub.f32 %v1351, %v1448
      %v1506 = vsub.f32 %v1353, %v1448
      %v1507 = vsub.f32 %v1357, %v1452
      %v1508 = vsub.f32 %v1359, %v1452
      %v1509 = vsub.f32 %v1363, %v1456
      %v1510 = vsub.f32 %v1365, %v1456
      %v1511 = vsub.f32 %v1369, %v1460
      %v1512 = vsub.f32 %v1371, %v1460
      %v1513 = vsub.f32 %v1375, %v1464
      %v1514 = vsub.f32 %v1377, %v1464
      %v1515 = vsub.f32 %v1381, %v1468
      %v1516 = vsub.f32 %v1383, %v1468
      %v1517 = vsub.f32 %v1387, %v1472
      %v1518 = vsub.f32 %v1389, %v1472
      %v1519 = vsub.f32 %v1393, %v1476
      %v1520 = vsub.f32 %v1395, %v1476
      %v1521 = vsub.f32 %v1399, %v1480
      %v1522 = vsub.f32 %v1401, %v1480
      %v1523 = vsub.f32 %v1405, %v1484
      %v1524 = vsub.f32 %v1407, %v1484
      %v1525 = vsub.f32 %v1411, %v1488
      %v1526 = vsub.f32 %v1413, %v1488
      %v1527 = vsub.f32 %v1417, %v1492
      %v1528 = vsub.f32 %v1419, %v1492
      %v1529 = vmul.f32 %v1493, 1.442695
      %v1530 = vpow.pop %v1529
      %v1531 = vmul.f32 %v1494, 1.442695
      %v1532 = vpow.pop %v1531
      %v1533 = vmul.f32 %v1495, 1.442695
      %v1534 = vpow.pop %v1533
      %v1535 = vmul.f32 %v1496, 1.442695
      %v1536 = vpow.pop %v1535
      %v1537 = vmul.f32 %v1497, 1.442695
      %v1538 = vpow.pop %v1537
      %v1539 = vmul.f32 %v1498, 1.442695
      %v1540 = vpow.pop %v1539
      %v1541 = vmul.f32 %v1499, 1.442695
      %v1542 = vpow.pop %v1541
      %v1543 = vmul.f32 %v1500, 1.442695
      %v1544 = vpow.pop %v1543
      %v1545 = vmul.f32 %v1501, 1.442695
      %v1546 = vpow.pop %v1545
      %v1547 = vmul.f32 %v1502, 1.442695
      %v1548 = vpow.pop %v1547
      %v1549 = vmul.f32 %v1503, 1.442695
      %v1550 = vpow.pop %v1549
      %v1551 = vmul.f32 %v1504, 1.442695
      %v1552 = vpow.pop %v1551
      %v1553 = vmul.f32 %v1505, 1.442695
      %v1554 = vpow.pop %v1553
      %v1555 = vmul.f32 %v1506, 1.442695
      %v1556 = vpow.pop %v1555
      %v1557 = vmul.f32 %v1507, 1.442695
      %v1558 = vpow.pop %v1557
      %v1559 = vmul.f32 %v1508, 1.442695
      %v1560 = vpow.pop %v1559
      %v1561 = vmul.f32 %v1509, 1.442695
      %v1562 = vpow.pop %v1561
      %v1563 = vmul.f32 %v1510, 1.442695
      %v1564 = vpow.pop %v1563
      %v1565 = vmul.f32 %v1511, 1.442695
      %v1566 = vpow.pop %v1565
      %v1567 = vmul.f32 %v1512, 1.442695
      %v1568 = vpow.pop %v1567
      %v1569 = vmul.f32 %v1513, 1.442695
      %v1570 = vpow.pop %v1569
      %v1571 = vmul.f32 %v1514, 1.442695
      %v1572 = vpow.pop %v1571
      %v1573 = vmul.f32 %v1515, 1.442695
      %v1574 = vpow.pop %v1573
      %v1575 = vmul.f32 %v1516, 1.442695
      %v1576 = vpow.pop %v1575
      %v1577 = vmul.f32 %v1517, 1.442695
      %v1578 = vpow.pop %v1577
      %v1579 = vmul.f32 %v1518, 1.442695
      %v1580 = vpow.pop %v1579
      %v1581 = vmul.f32 %v1519, 1.442695
      %v1582 = vpow.pop %v1581
      %v1583 = vmul.f32 %v1520, 1.442695
      %v1584 = vpow.pop %v1583
      %v1585 = vmul.f32 %v1521, 1.442695
      %v1586 = vpow.pop %v1585
      %v1587 = vmul.f32 %v1522, 1.442695
      %v1588 = vpow.pop %v1587
      %v1589 = vmul.f32 %v1523, 1.442695
      %v1590 = vpow.pop %v1589
      %v1591 = vmul.f32 %v1524, 1.442695
      %v1592 = vpow.pop %v1591
      %v1593 = vmul.f32 %v1525, 1.442695
      %v1594 = vpow.pop %v1593
      %v1595 = vmul.f32 %v1526, 1.442695
      %v1596 = vpow.pop %v1595
      %v1597 = vmul.f32 %v1527, 1.442695
      %v1598 = vpow.pop %v1597
      %v1599 = vmul.f32 %v1528, 1.442695
      %v1600 = vpow.pop %v1599
      %v1601 = vsel %vm712, %v1532, 0.0
      %v1602 = vadd.f32 %v1530, %v1601
      %1603 = vadd.xlane.f32.xlu0 %v1602
      %v1604 = vpop.xlane.xlu0 %1603
      %v1605 = vsel %vm712, %v1536, 0.0
      %v1606 = vadd.f32 %v1534, %v1605
      %1607 = vadd.xlane.f32.xlu0 %v1606
      %v1608 = vpop.xlane.xlu0 %1607
      %v1609 = vsel %vm712, %v1540, 0.0
      %v1610 = vadd.f32 %v1538, %v1609
      %1611 = vadd.xlane.f32.xlu0 %v1610
      %v1612 = vpop.xlane.xlu0 %1611
      %v1613 = vsel %vm712, %v1544, 0.0
      %v1614 = vadd.f32 %v1542, %v1613
      %1615 = vadd.xlane.f32.xlu0 %v1614
      %v1616 = vpop.xlane.xlu0 %1615
      %v1617 = vsel %vm712, %v1548, 0.0
      %v1618 = vadd.f32 %v1546, %v1617
      %1619 = vadd.xlane.f32.xlu0 %v1618
      %v1620 = vpop.xlane.xlu0 %1619
      %v1621 = vsel %vm712, %v1552, 0.0
      %v1622 = vadd.f32 %v1550, %v1621
      %1623 = vadd.xlane.f32.xlu0 %v1622
      %v1624 = vpop.xlane.xlu0 %1623
      %v1625 = vsel %vm712, %v1556, 0.0
      %v1626 = vadd.f32 %v1554, %v1625
      %1627 = vadd.xlane.f32.xlu0 %v1626
      %v1628 = vpop.xlane.xlu0 %1627
      %v1629 = vsel %vm712, %v1560, 0.0
      %v1630 = vadd.f32 %v1558, %v1629
      %1631 = vadd.xlane.f32.xlu0 %v1630
      %v1632 = vpop.xlane.xlu0 %1631
      %v1633 = vsel %vm712, %v1564, 0.0
      %v1634 = vadd.f32 %v1562, %v1633
      %1635 = vadd.xlane.f32.xlu0 %v1634
      %v1636 = vpop.xlane.xlu0 %1635
      %v1637 = vsel %vm712, %v1568, 0.0
      %v1638 = vadd.f32 %v1566, %v1637
      %1639 = vadd.xlane.f32.xlu0 %v1638
      %v1640 = vpop.xlane.xlu0 %1639
      %v1641 = vsel %vm712, %v1572, 0.0
      %v1642 = vadd.f32 %v1570, %v1641
      %1643 = vadd.xlane.f32.xlu0 %v1642
      %v1644 = vpop.xlane.xlu0 %1643
      %v1645 = vsel %vm712, %v1576, 0.0
      %v1646 = vadd.f32 %v1574, %v1645
      %1647 = vadd.xlane.f32.xlu0 %v1646
      %v1648 = vpop.xlane.xlu0 %1647
      %v1649 = vsel %vm712, %v1580, 0.0
      %v1650 = vadd.f32 %v1578, %v1649
      %1651 = vadd.xlane.f32.xlu0 %v1650
      %v1652 = vpop.xlane.xlu0 %1651
      %v1653 = vsel %vm712, %v1584, 0.0
      %v1654 = vadd.f32 %v1582, %v1653
      %1655 = vadd.xlane.f32.xlu0 %v1654
      %v1656 = vpop.xlane.xlu0 %1655
      %v1657 = vsel %vm712, %v1588, 0.0
      %v1658 = vadd.f32 %v1586, %v1657
      %1659 = vadd.xlane.f32.xlu0 %v1658
      %v1660 = vpop.xlane.xlu0 %1659
      %v1661 = vsel %vm712, %v1592, 0.0
      %v1662 = vadd.f32 %v1590, %v1661
      %1663 = vadd.xlane.f32.xlu0 %v1662
      %v1664 = vpop.xlane.xlu0 %1663
      %v1665 = vsel %vm712, %v1596, 0.0
      %v1666 = vadd.f32 %v1594, %v1665
      %1667 = vadd.xlane.f32.xlu0 %v1666
      %v1668 = vpop.xlane.xlu0 %1667
      %v1669 = vsel %vm712, %v1600, 0.0
      %v1670 = vadd.f32 %v1598, %v1669
      %1671 = vadd.xlane.f32.xlu0 %v1670
      %v1672 = vpop.xlane.xlu0 %1671
      %v1673 = vrcp.pop %v1604
      %v1674 = vrcp.pop %v1608
      %v1675 = vrcp.pop %v1612
      %v1676 = vrcp.pop %v1616
      %v1677 = vrcp.pop %v1620
      %v1678 = vrcp.pop %v1624
      %v1679 = vrcp.pop %v1628
      %v1680 = vrcp.pop %v1632
      %v1681 = vrcp.pop %v1636
      %v1682 = vrcp.pop %v1640
      %v1683 = vrcp.pop %v1644
      %v1684 = vrcp.pop %v1648
      %v1685 = vrcp.pop %v1652
      %v1686 = vrcp.pop %v1656
      %v1687 = vrcp.pop %v1660
      %v1688 = vrcp.pop %v1664
      %v1689 = vrcp.pop %v1668
      %v1690 = vrcp.pop %v1672
      %v1691 = vmul.f32 %v1530, %v1673
      %v1692 = vmul.f32 %v1532, %v1673
      %v1693 = vmul.f32 %v1534, %v1674
      %v1694 = vmul.f32 %v1536, %v1674
      %v1695 = vmul.f32 %v1538, %v1675
      %v1696 = vmul.f32 %v1540, %v1675
      %v1697 = vmul.f32 %v1542, %v1676
      %v1698 = vmul.f32 %v1544, %v1676
      %v1699 = vmul.f32 %v1546, %v1677
      %v1700 = vmul.f32 %v1548, %v1677
      %v1701 = vmul.f32 %v1550, %v1678
      %v1702 = vmul.f32 %v1552, %v1678
      %v1703 = vmul.f32 %v1554, %v1679
      %v1704 = vmul.f32 %v1556, %v1679
      %v1705 = vmul.f32 %v1558, %v1680
      %v1706 = vmul.f32 %v1560, %v1680
      %v1707 = vmul.f32 %v1562, %v1681
      %v1708 = vmul.f32 %v1564, %v1681
      %v1709 = vmul.f32 %v1566, %v1682
      %v1710 = vmul.f32 %v1568, %v1682
      %v1711 = vmul.f32 %v1570, %v1683
      %v1712 = vmul.f32 %v1572, %v1683
      %v1713 = vmul.f32 %v1574, %v1684
      %v1714 = vmul.f32 %v1576, %v1684
      %v1715 = vmul.f32 %v1578, %v1685
      %v1716 = vmul.f32 %v1580, %v1685
      %v1717 = vmul.f32 %v1582, %v1686
      %v1718 = vmul.f32 %v1584, %v1686
      %v1719 = vmul.f32 %v1586, %v1687
      %v1720 = vmul.f32 %v1588, %v1687
      %v1721 = vmul.f32 %v1590, %v1688
      %v1722 = vmul.f32 %v1592, %v1688
      %v1723 = vmul.f32 %v1594, %v1689
      %v1724 = vmul.f32 %v1596, %v1689
      %v1725 = vmul.f32 %v1598, %v1690
      %v1726 = vmul.f32 %v1600, %v1690
      %s1727 = scalar_lea.vmem %s424, 16
      %v1728 = vld [vmem:[%s1727] sm:$0xff]
      %v1729 = vld [vmem:[%s1727 + $0x8] sm:$0xff]
      %v1731 = vsel %vm712, %v1729, 0
      %v1734 = vsel %vm712, %v1692, 0
      %v1737 = vsel %vm712, %v1694, 0
      %v1740 = vsel %vm712, %v1696, 0
      %v1743 = vsel %vm712, %v1698, 0
      %v1746 = vsel %vm712, %v1700, 0
      %v1749 = vsel %vm712, %v1702, 0
      %v1752 = vsel %vm712, %v1704, 0
      %v1755 = vsel %vm712, %v1706, 0
      %v1758 = vsel %vm712, %v1708, 0
      %v1761 = vsel %vm712, %v1710, 0
      %v1764 = vsel %vm712, %v1712, 0
      %v1767 = vsel %vm712, %v1714, 0
      %v1770 = vsel %vm712, %v1716, 0
      %v1773 = vsel %vm712, %v1718, 0
      %v1776 = vsel %vm712, %v1720, 0
      %v1779 = vsel %vm712, %v1722, 0
      %v1782 = vsel %vm712, %v1724, 0
      %v1785 = vsel %vm712, %v1726, 0
      %1787 = vmatprep.subr.mxu0 %v1734
      %1788 = vmatpush1.xpose.msra.mxu0 %v1691
      %1789 = vmatprep.subr.mxu0 %v1737
      %1790 = vmatpush1.xpose.msra.mxu0 %v1693
      %1791 = vmatprep.subr.mxu0 %v1740
      %1792 = vmatpush1.xpose.msra.mxu0 %v1695
      %1793 = vmatprep.subr.mxu0 %v1743
      %1794 = vmatpush1.xpose.msra.mxu0 %v1697
      %1795 = vmatprep.subr.mxu0 %v1746
      %1796 = vmatpush1.xpose.msra.mxu0 %v1699
      %1797 = vmatprep.subr.mxu0 %v1749
      %1798 = vmatpush1.xpose.msra.mxu0 %v1701
      %1799 = vmatprep.subr.mxu0 %v1752
      %1800 = vmatpush1.xpose.msra.mxu0 %v1703
      %1801 = vmatprep.subr.mxu0 %v1755
      %1802 = vmatpush1.xpose.msra.mxu0 %v1705
      %1803 = vmatprep.subr.mxu0 %v1758
      %1804 = vmatpush1.xpose.msra.mxu0 %v1707
      %1805 = vmatprep.subr.mxu0 %v1761
      %1806 = vmatpush1.xpose.msra.mxu0 %v1709
      %1807 = vmatprep.subr.mxu0 %v1764
      %1808 = vmatpush1.xpose.msra.mxu0 %v1711
      %1809 = vmatprep.subr.mxu0 %v1767
      %1810 = vmatpush1.xpose.msra.mxu0 %v1713
      %1811 = vmatprep.subr.mxu0 %v1770
      %1812 = vmatpush1.xpose.msra.mxu0 %v1715
      %1813 = vmatprep.subr.mxu0 %v1773
      %1814 = vmatpush1.xpose.msra.mxu0 %v1717
      %1815 = vmatprep.subr.mxu0 %v1776
      %1816 = vmatpush1.xpose.msra.mxu0 %v1719
      %1817 = vmatprep.subr.mxu0 %v1779
      %1818 = vmatpush1.xpose.msra.mxu0 %v1721
      %1819 = vmatprep.subr.mxu0 %v1782
      %1820 = vmatpush1.xpose.msra.mxu0 %v1723
      %1821 = vmatprep.subr.mxu0 %v1785
      %1822 = vmatpush1.xpose.msra.mxu0 %v1725
      %1823 = vmatprep.subr.mxu0 0.0
      %1824 = vmatpush1.xpose.msra.mxu0 0.0
      %1825 = vmatprep.subr.mxu0 0.0
      %1826 = vmatpush1.xpose.msra.mxu0 0.0
      %1827 = vmatprep.subr.mxu0 0.0
      %1828 = vmatpush1.xpose.msra.mxu0 0.0
      %1829 = vmatprep.subr.mxu0 0.0
      %1830 = vmatpush1.xpose.msra.mxu0 0.0
      %1831 = vmatprep.subr.mxu0 0.0
      %1832 = vmatpush1.xpose.msra.mxu0 0.0
      %1833 = vmatprep.subr.mxu0 0.0
      %1834 = vmatpush1.xpose.msra.mxu0 0.0
      %1835 = vmatprep.subr.mxu0 0.0
      %1836 = vmatpush1.xpose.msra.mxu0 0.0
      %1837 = vmatprep.subr.mxu0 0.0
      %1838 = vmatpush1.xpose.msra.mxu0 0.0
      %1839 = vmatprep.subr.mxu0 0.0
      %1840 = vmatpush1.xpose.msra.mxu0 0.0
      %1841 = vmatprep.subr.mxu0 0.0
      %1842 = vmatpush1.xpose.msra.mxu0 0.0
      %1843 = vmatprep.subr.mxu0 0.0
      %1844 = vmatpush1.xpose.msra.mxu0 0.0
      %1845 = vmatprep.subr.mxu0 0.0
      %1846 = vmatpush1.xpose.msra.mxu0 0.0
      %1847 = vmatprep.subr.mxu0 0.0
      %1848 = vmatpush1.xpose.msra.mxu0 0.0
      %1849 = vmatprep.subr.mxu0 0.0
      %1850 = vmatpush1.xpose.msra.mxu0 0.0
      %1851 = vmatprep.mubr.f32.mxu0 %v1731
      %1852 = vmatmul.mubr.f32.gmra.mrb[0].mxu0 %v1728
      %v1853 = vpop.f32.mrb[0].mxu0
      %v1854 = vadd.f32 0.0, %v1853
      %v1855 = vpop.f32.mrb[0].mxu0
      %v1856 = vadd.f32 0.0, %v1855
      %1857 = vdwg.mxu0
      %v1858 = vld [vmem:[%s429] sm:$0xff]
      %v1859 = vld [vmem:[%s429 + $0x8] sm:$0xff]
      %v1860 = vld [vmem:[%s429 + $0x10] sm:$0xff]
      %v1861 = vld [vmem:[%s429 + $0x18] sm:$0xff]
      %v1862 = vadd.f32 %v1858, 3.0
      %v1863 = vadd.f32 %v1859, 3.0
      %v1864 = vadd.f32 %v1860, 3.0
      %v1865 = vadd.f32 %v1861, 3.0
      %v1866 = vmax.f32 %v1862, 0.0
      %v1867 = vmax.f32 %v1863, 0.0
      %v1868 = vmax.f32 %v1864, 0.0
      %v1869 = vmax.f32 %v1865, 0.0
      %v1870 = vmin.f32 %v1866, 6.0
      %v1871 = vmin.f32 %v1867, 6.0
      %v1872 = vmin.f32 %v1868, 6.0
      %v1873 = vmin.f32 %v1869, 6.0
      %v1874 = vmul.f32 %v1858, %v1870
      %v1875 = vmul.f32 %v1859, %v1871
      %v1876 = vmul.f32 %v1860, %v1872
      %v1877 = vmul.f32 %v1861, %v1873
      %v1878 = vmul.f32 %v1874, 0.16666667
      %v1879 = vmul.f32 %v1875, 0.16666667
      %v1880 = vmul.f32 %v1876, 0.16666667
      %v1881 = vmul.f32 %v1877, 0.16666667
      %1882 = vst [vmem:[#allocation2] sm:$0xff] 0.0
      %vm1883 = vcmask 343040
      %1884 = vst.msk [vmem:[#allocation2 + $0x8] sm:$0xff] %vm1883, 0.0
      %1885 = vst [vmem:[#allocation2 + $0x10] sm:$0xff] 0.0
      %1886 = vst.msk [vmem:[#allocation2 + $0x18] sm:$0xff] %vm1883, 0.0
      %1891 = vrot.lane.b32.xlu0 %v1878, 13
      %v1892 = vpop.permute.xlu0 %1891
      %1893 = vrot.lane.b32.xlu0 %v1879, 13
      %v1894 = vpop.permute.xlu0 %1893
      %1895 = vrot.lane.b32.xlu0 %v1880, 13
      %v1896 = vpop.permute.xlu0 %1895
      %1897 = vrot.lane.b32.xlu0 %v1881, 13
      %v1898 = vpop.permute.xlu0 %1897
      %vm1899 = vcmask 105472
      %v1900 = vsel %vm1899, %v1892, %v1894
      %v1901 = vsel %vm1899, %v1896, %v1898
      %vm1906 = vcmask 1047656
      %1907 = vst.msk [vmem:[#allocation2] sm:$0xff] %vm1906, %v1892
      %vm1908 = vcmask 236544
      %1909 = vst.msk [vmem:[#allocation2 + $0x8] sm:$0xff] %vm1908, %v1900
      %1910 = vst.msk [vmem:[#allocation2 + $0x10] sm:$0xff] %vm1906, %v1896
      %1911 = vst.msk [vmem:[#allocation2 + $0x18] sm:$0xff] %vm1908, %v1901
      %v1912 = vld [vmem:[#allocation2] sm:$0xff]
      %v1913 = vld [vmem:[#allocation2 + $0x8] sm:$0xff]
      %v1914 = vld [vmem:[#allocation2 + $0x10] sm:$0xff]
      %v1915 = vld [vmem:[#allocation2 + $0x18] sm:$0xff]
      %v1916 = vld [vmem:[%s4] ss:$2 sm:$0x3]
      %v1918 = vlaneseq
      %v1919 = vshrl.u32 %v1918, 7
      %v1920 = vsub.s32 0, %v1919
      %v1921 = vrot.slane %v1916, %v1920
      %v1922 = vlaneseq
      %v1923 = vshrl.u32 %v1922, 7
      %v1924 = vsub.s32 1, %v1923
      %v1925 = vrot.slane %v1916, %v1924
      %v1928 = vmul.f32 %v1912, %v1921
      %v1929 = vmul.f32 %v1913, %v1925
      %v1930 = vmul.f32 %v1914, %v1921
      %v1931 = vmul.f32 %v1915, %v1925
      %v1932 = vld [vmem:[%s5] sm:$0xff]
      %v1933 = vld [vmem:[%s5 + $0x8] sm:$0xff]
      %1935 = vset.pattern.permute.xlu0 0
      %1936 = vperm.xlu0 %1935, %v1932
      %v1937 = vpop.permute.xlu0 %1936
      %1940 = vset.pattern.permute.xlu0 0
      %1941 = vperm.xlu0 %1940, %v1933
      %v1942 = vpop.permute.xlu0 %1941
      %v1944 = vmul.f32 %v1928, %v1937
      %v1945 = vmul.f32 %v1929, %v1937
      %v1946 = vmul.f32 %v1930, %v1942
      %v1947 = vmul.f32 %v1931, %v1942
      %v1948 = vadd.f32 %v1944, 0.0
      %v1949 = vadd.f32 %v1945, 0.0
      %v1950 = vadd.f32 %v1946, 0.0
      %v1951 = vadd.f32 %v1947, 0.0
      %s1952 = scalar_lea.vmem %s5, 16
      %v1953 = vld [vmem:[%s1952] sm:$0xff]
      %v1954 = vld [vmem:[%s1952 + $0x8] sm:$0xff]
      %1956 = vset.pattern.permute.xlu0 0
      %1957 = vperm.xlu0 %1956, %v1953
      %v1958 = vpop.permute.xlu0 %1957
      %1961 = vset.pattern.permute.xlu0 0
      %1962 = vperm.xlu0 %1961, %v1954
      %v1963 = vpop.permute.xlu0 %1962
      %v1965 = vmul.f32 %v1912, %v1958
      %v1966 = vmul.f32 %v1913, %v1958
      %v1967 = vmul.f32 %v1914, %v1963
      %v1968 = vmul.f32 %v1915, %v1963
      %1973 = vrot.lane.b32.xlu0 %v1965, 127
      %v1974 = vpop.permute.xlu0 %1973
      %1975 = vrot.lane.b32.xlu0 %v1966, 127
      %v1976 = vpop.permute.xlu0 %1975
      %1977 = vrot.lane.b32.xlu0 %v1967, 127
      %v1978 = vpop.permute.xlu0 %1977
      %1979 = vrot.lane.b32.xlu0 %v1968, 127
      %v1980 = vpop.permute.xlu0 %1979
      %vm1981 = vcmask 1039360
      %v1982 = vsel %vm1981, %v1974, %v1976
      %v1983 = vsel %vm1981, %v1978, %v1980
      %v1988 = vadd.f32 %v1948, %v1982
      %v1989 = vadd.f32 %v1949, %v1976
      %v1990 = vadd.f32 %v1950, %v1983
      %v1991 = vadd.f32 %v1951, %v1980
      %s1992 = scalar_lea.vmem %s4, 1
      %v1993 = vld [vmem:[%s1992] ss:$2 sm:$0x3]
      %v1995 = vlaneseq
      %v1996 = vshrl.u32 %v1995, 7
      %v1997 = vsub.s32 0, %v1996
      %v1998 = vrot.slane %v1993, %v1997
      %v1999 = vlaneseq
      %v2000 = vshrl.u32 %v1999, 7
      %v2001 = vsub.s32 1, %v2000
      %v2002 = vrot.slane %v1993, %v2001
      %2003 = vrot.lane.b32.xlu0 %v1998, 2
      %v2004 = vpop.permute.xlu0 %2003
      %2005 = vrot.lane.b32.xlu0 %v2002, 2
      %v2006 = vpop.permute.xlu0 %2005
      %vm2007 = vcmask 15360
      %v2008 = vsel %vm2007, %v2004, %v2006
      %v2011 = vmul.f32 %v1912, %v2004
      %v2012 = vmul.f32 %v1913, %v2008
      %v2013 = vmul.f32 %v1914, %v2004
      %v2014 = vmul.f32 %v1915, %v2008
      %s2015 = scalar_lea.vmem %s5, 32
      %v2016 = vld [vmem:[%s2015] sm:$0xff]
      %v2017 = vld [vmem:[%s2015 + $0x8] sm:$0xff]
      %2019 = vset.pattern.permute.xlu0 0
      %2020 = vperm.xlu0 %2019, %v2016
      %v2021 = vpop.permute.xlu0 %2020
      %2024 = vset.pattern.permute.xlu0 0
      %2025 = vperm.xlu0 %2024, %v2017
      %v2026 = vpop.permute.xlu0 %2025
      %v2028 = vmul.f32 %v2011, %v2021
      %v2029 = vmul.f32 %v2012, %v2021
      %v2030 = vmul.f32 %v2013, %v2026
      %v2031 = vmul.f32 %v2014, %v2026
      %2036 = vrot.lane.b32.xlu0 %v2028, 126
      %v2037 = vpop.permute.xlu0 %2036
      %2038 = vrot.lane.b32.xlu0 %v2029, 126
      %v2039 = vpop.permute.xlu0 %2038
      %2040 = vrot.lane.b32.xlu0 %v2030, 126
      %v2041 = vpop.permute.xlu0 %2040
      %2042 = vrot.lane.b32.xlu0 %v2031, 126
      %v2043 = vpop.permute.xlu0 %2042
      %vm2044 = vcmask 1031168
      %v2045 = vsel %vm2044, %v2037, %v2039
      %v2046 = vsel %vm2044, %v2041, %v2043
      %v2051 = vadd.f32 %v1988, %v2045
      %v2052 = vadd.f32 %v1989, %v2039
      %v2053 = vadd.f32 %v1990, %v2046
      %v2054 = vadd.f32 %v1991, %v2043
      %2055 = vrot.lane.b32.xlu0 %v1921, 12
      %v2056 = vpop.permute.xlu0 %2055
      %2057 = vrot.lane.b32.xlu0 %v1925, 12
      %v2058 = vpop.permute.xlu0 %2057
      %vm2059 = vcmask 97280
      %v2060 = vsel %vm2059, %v2056, %v2058
      %v2063 = vmul.f32 %v1912, %v2056
      %v2064 = vmul.f32 %v1913, %v2060
      %v2065 = vmul.f32 %v1914, %v2056
      %v2066 = vmul.f32 %v1915, %v2060
      %s2067 = scalar_lea.vmem %s5, 48
      %v2068 = vld [vmem:[%s2067] sm:$0xff]
      %v2069 = vld [vmem:[%s2067 + $0x8] sm:$0xff]
      %2071 = vset.pattern.permute.xlu0 0
      %2072 = vperm.xlu0 %2071, %v2068
      %v2073 = vpop.permute.xlu0 %2072
      %2076 = vset.pattern.permute.xlu0 0
      %2077 = vperm.xlu0 %2076, %v2069
      %v2078 = vpop.permute.xlu0 %2077
      %v2080 = vmul.f32 %v2063, %v2073
      %v2081 = vmul.f32 %v2064, %v2073
      %v2082 = vmul.f32 %v2065, %v2078
      %v2083 = vmul.f32 %v2066, %v2078
      %2088 = vrot.lane.b32.xlu0 %v2080, 116
      %v2089 = vpop.permute.xlu0 %2088
      %2090 = vrot.lane.b32.xlu0 %v2081, 116
      %v2091 = vpop.permute.xlu0 %2090
      %2092 = vrot.lane.b32.xlu0 %v2082, 116
      %v2093 = vpop.permute.xlu0 %2092
      %2094 = vrot.lane.b32.xlu0 %v2083, 116
      %v2095 = vpop.permute.xlu0 %2094
      %vm2096 = vcmask 949248
      %v2097 = vsel %vm2096, %v2089, %v2091
      %v2098 = vsel %vm2096, %v2093, %v2095
      %v2103 = vadd.f32 %v2051, %v2097
      %v2104 = vadd.f32 %v2052, %v2091
      %v2105 = vadd.f32 %v2053, %v2098
      %v2106 = vadd.f32 %v2054, %v2095
      %s2107 = scalar_lea.vmem %s5, 64
      %v2108 = vld [vmem:[%s2107] sm:$0xff]
      %v2109 = vld [vmem:[%s2107 + $0x8] sm:$0xff]
      %2111 = vset.pattern.permute.xlu0 0
      %2112 = vperm.xlu0 %2111, %v2108
      %v2113 = vpop.permute.xlu0 %2112
      %2116 = vset.pattern.permute.xlu0 0
      %2117 = vperm.xlu0 %2116, %v2109
      %v2118 = vpop.permute.xlu0 %2117
      %v2120 = vmul.f32 %v1912, %v2113
      %v2121 = vmul.f32 %v1913, %v2113
      %v2122 = vmul.f32 %v1914, %v2118
      %v2123 = vmul.f32 %v1915, %v2118
      %2128 = vrot.lane.b32.xlu0 %v2120, 115
      %v2129 = vpop.permute.xlu0 %2128
      %2130 = vrot.lane.b32.xlu0 %v2121, 115
      %v2131 = vpop.permute.xlu0 %2130
      %2132 = vrot.lane.b32.xlu0 %v2122, 115
      %v2133 = vpop.permute.xlu0 %2132
      %2134 = vrot.lane.b32.xlu0 %v2123, 115
      %v2135 = vpop.permute.xlu0 %2134
      %vm2136 = vcmask 941056
      %v2137 = vsel %vm2136, %v2129, %v2131
      %v2138 = vsel %vm2136, %v2133, %v2135
      %v2143 = vadd.f32 %v2103, %v2137
      %v2144 = vadd.f32 %v2104, %v2131
      %v2145 = vadd.f32 %v2105, %v2138
      %v2146 = vadd.f32 %v2106, %v2135
      %2147 = vrot.lane.b32.xlu0 %v1998, 14
      %v2148 = vpop.permute.xlu0 %2147
      %2149 = vrot.lane.b32.xlu0 %v2002, 14
      %v2150 = vpop.permute.xlu0 %2149
      %vm2151 = vcmask 113664
      %v2152 = vsel %vm2151, %v2148, %v2150
      %v2155 = vmul.f32 %v1912, %v2148
      %v2156 = vmul.f32 %v1913, %v2152
      %v2157 = vmul.f32 %v1914, %v2148
      %v2158 = vmul.f32 %v1915, %v2152
      %s2159 = scalar_lea.vmem %s5, 80
      %v2160 = vld [vmem:[%s2159] sm:$0xff]
      %v2161 = vld [vmem:[%s2159 + $0x8] sm:$0xff]
      %2163 = vset.pattern.permute.xlu0 0
      %2164 = vperm.xlu0 %2163, %v2160
      %v2165 = vpop.permute.xlu0 %2164
      %2168 = vset.pattern.permute.xlu0 0
      %2169 = vperm.xlu0 %2168, %v2161
      %v2170 = vpop.permute.xlu0 %2169
      %v2172 = vmul.f32 %v2155, %v2165
      %v2173 = vmul.f32 %v2156, %v2165
      %v2174 = vmul.f32 %v2157, %v2170
      %v2175 = vmul.f32 %v2158, %v2170
      %2180 = vrot.lane.b32.xlu0 %v2172, 114
      %v2181 = vpop.permute.xlu0 %2180
      %2182 = vrot.lane.b32.xlu0 %v2173, 114
      %v2183 = vpop.permute.xlu0 %2182
      %2184 = vrot.lane.b32.xlu0 %v2174, 114
      %v2185 = vpop.permute.xlu0 %2184
      %2186 = vrot.lane.b32.xlu0 %v2175, 114
      %v2187 = vpop.permute.xlu0 %2186
      %vm2188 = vcmask 932864
      %v2189 = vsel %vm2188, %v2181, %v2183
      %v2190 = vsel %vm2188, %v2185, %v2187
      %v2195 = vadd.f32 %v2143, %v2189
      %v2196 = vadd.f32 %v2144, %v2183
      %v2197 = vadd.f32 %v2145, %v2190
      %v2198 = vadd.f32 %v2146, %v2187
      %2199 = vrot.lane.b32.xlu0 %v1921, 24
      %v2200 = vpop.permute.xlu0 %2199
      %2201 = vrot.lane.b32.xlu0 %v1925, 24
      %v2202 = vpop.permute.xlu0 %2201
      %vm2203 = vcmask 195584
      %v2204 = vsel %vm2203, %v2200, %v2202
      %v2207 = vmul.f32 %v1912, %v2200
      %v2208 = vmul.f32 %v1913, %v2204
      %v2209 = vmul.f32 %v1914, %v2200
      %v2210 = vmul.f32 %v1915, %v2204
      %s2211 = scalar_lea.vmem %s5, 96
      %v2212 = vld [vmem:[%s2211] sm:$0xff]
      %v2213 = vld [vmem:[%s2211 + $0x8] sm:$0xff]
      %2215 = vset.pattern.permute.xlu0 0
      %2216 = vperm.xlu0 %2215, %v2212
      %v2217 = vpop.permute.xlu0 %2216
      %2220 = vset.pattern.permute.xlu0 0
      %2221 = vperm.xlu0 %2220, %v2213
      %v2222 = vpop.permute.xlu0 %2221
      %v2224 = vmul.f32 %v2207, %v2217
      %v2225 = vmul.f32 %v2208, %v2217
      %v2226 = vmul.f32 %v2209, %v2222
      %v2227 = vmul.f32 %v2210, %v2222
      %2232 = vrot.lane.b32.xlu0 %v2224, 104
      %v2233 = vpop.permute.xlu0 %2232
      %2234 = vrot.lane.b32.xlu0 %v2225, 104
      %v2235 = vpop.permute.xlu0 %2234
      %2236 = vrot.lane.b32.xlu0 %v2226, 104
      %v2237 = vpop.permute.xlu0 %2236
      %2238 = vrot.lane.b32.xlu0 %v2227, 104
      %v2239 = vpop.permute.xlu0 %2238
      %vm2240 = vcmask 850944
      %v2241 = vsel %vm2240, %v2233, %v2235
      %v2242 = vsel %vm2240, %v2237, %v2239
      %v2247 = vadd.f32 %v2195, %v2241
      %v2248 = vadd.f32 %v2196, %v2235
      %v2249 = vadd.f32 %v2197, %v2242
      %v2250 = vadd.f32 %v2198, %v2239
      %s2251 = scalar_lea.vmem %s5, 112
      %v2252 = vld [vmem:[%s2251] sm:$0xff]
      %v2253 = vld [vmem:[%s2251 + $0x8] sm:$0xff]
      %2255 = vset.pattern.permute.xlu0 0
      %2256 = vperm.xlu0 %2255, %v2252
      %v2257 = vpop.permute.xlu0 %2256
      %2260 = vset.pattern.permute.xlu0 0
      %2261 = vperm.xlu0 %2260, %v2253
      %v2262 = vpop.permute.xlu0 %2261
      %v2264 = vmul.f32 %v1912, %v2257
      %v2265 = vmul.f32 %v1913, %v2257
      %v2266 = vmul.f32 %v1914, %v2262
      %v2267 = vmul.f32 %v1915, %v2262
      %2272 = vrot.lane.b32.xlu0 %v2264, 103
      %v2273 = vpop.permute.xlu0 %2272
      %2274 = vrot.lane.b32.xlu0 %v2265, 103
      %v2275 = vpop.permute.xlu0 %2274
      %2276 = vrot.lane.b32.xlu0 %v2266, 103
      %v2277 = vpop.permute.xlu0 %2276
      %2278 = vrot.lane.b32.xlu0 %v2267, 103
      %v2279 = vpop.permute.xlu0 %2278
      %vm2280 = vcmask 842752
      %v2281 = vsel %vm2280, %v2273, %v2275
      %v2282 = vsel %vm2280, %v2277, %v2279
      %v2287 = vadd.f32 %v2247, %v2281
      %v2288 = vadd.f32 %v2248, %v2275
      %v2289 = vadd.f32 %v2249, %v2282
      %v2290 = vadd.f32 %v2250, %v2279
      %2291 = vrot.lane.b32.xlu0 %v1998, 26
      %v2292 = vpop.permute.xlu0 %2291
      %2293 = vrot.lane.b32.xlu0 %v2002, 26
      %v2294 = vpop.permute.xlu0 %2293
      %vm2295 = vcmask 211968
      %v2296 = vsel %vm2295, %v2292, %v2294
      %v2299 = vmul.f32 %v1912, %v2292
      %v2300 = vmul.f32 %v1913, %v2296
      %v2301 = vmul.f32 %v1914, %v2292
      %v2302 = vmul.f32 %v1915, %v2296
      %s2303 = scalar_lea.vmem %s5, 128
      %v2304 = vld [vmem:[%s2303] sm:$0xff]
      %v2305 = vld [vmem:[%s2303 + $0x8] sm:$0xff]
      %2307 = vset.pattern.permute.xlu0 0
      %2308 = vperm.xlu0 %2307, %v2304
      %v2309 = vpop.permute.xlu0 %2308
      %2312 = vset.pattern.permute.xlu0 0
      %2313 = vperm.xlu0 %2312, %v2305
      %v2314 = vpop.permute.xlu0 %2313
      %v2316 = vmul.f32 %v2299, %v2309
      %v2317 = vmul.f32 %v2300, %v2309
      %v2318 = vmul.f32 %v2301, %v2314
      %v2319 = vmul.f32 %v2302, %v2314
      %2324 = vrot.lane.b32.xlu0 %v2316, 102
      %v2325 = vpop.permute.xlu0 %2324
      %2326 = vrot.lane.b32.xlu0 %v2317, 102
      %v2327 = vpop.permute.xlu0 %2326
      %2328 = vrot.lane.b32.xlu0 %v2318, 102
      %v2329 = vpop.permute.xlu0 %2328
      %2330 = vrot.lane.b32.xlu0 %v2319, 102
      %v2331 = vpop.permute.xlu0 %2330
      %vm2332 = vcmask 834560
      %v2333 = vsel %vm2332, %v2325, %v2327
      %v2334 = vsel %vm2332, %v2329, %v2331
      %v2339 = vadd.f32 %v2287, %v2333
      %v2340 = vadd.f32 %v2288, %v2327
      %v2341 = vadd.f32 %v2289, %v2334
      %v2342 = vadd.f32 %v2290, %v2331
      %v2343 = vld [vmem:[%s6] sm:$0xff]
      %v2344 = vld [vmem:[%s6 + $0x8] sm:$0xff]
      %2346 = vset.pattern.permute.xlu0 0
      %2347 = vperm.xlu0 %2346, %v2343
      %v2348 = vpop.permute.xlu0 %2347
      %2351 = vset.pattern.permute.xlu0 0
      %2352 = vperm.xlu0 %2351, %v2344
      %v2353 = vpop.permute.xlu0 %2352
      %v2355 = vadd.f32 %v2339, %v2348
      %v2356 = vadd.f32 %v2340, %v2348
      %v2357 = vadd.f32 %v2341, %v2353
      %v2358 = vadd.f32 %v2342, %v2353
      %v2359 = vadd.f32 %v1145, %v2355
      %v2360 = vadd.f32 %v1147, %v2356
      %v2361 = vadd.f32 %v1854, %v2357
      %v2362 = vadd.f32 %v1856, %v2358
      %vm2363 = vcmask 130048
      %v2364 = vsel %vm2363, %v2360, 0.0
      %v2365 = vadd.f32 %v2359, %v2364
      %2366 = vadd.xlane.f32.xlu0 %v2365
      %v2367 = vpop.xlane.xlu0 %2366
      %v2368 = vsel %vm2363, %v2362, 0.0
      %v2369 = vadd.f32 %v2361, %v2368
      %2370 = vadd.xlane.f32.xlu0 %v2369
      %v2371 = vpop.xlane.xlu0 %2370
      %v2372 = vrcp.pop 144.0
      %v2373 = vmul.f32 %v2367, %v2372
      %v2374 = vmul.f32 %v2371, %v2372
      %v2375 = vsub.f32 %v2359, %v2373
      %v2376 = vsub.f32 %v2360, %v2373
      %v2377 = vsub.f32 %v2361, %v2374
      %v2378 = vsub.f32 %v2362, %v2374
      %v2379 = vmul.f32 %v2375, %v2375
      %v2380 = vmul.f32 %v2376, %v2376
      %v2381 = vmul.f32 %v2377, %v2377
      %v2382 = vmul.f32 %v2378, %v2378
      %v2383 = vsel %vm2363, %v2380, 0.0
      %v2384 = vadd.f32 %v2379, %v2383
      %2385 = vadd.xlane.f32.xlu0 %v2384
      %v2386 = vpop.xlane.xlu0 %2385
      %v2387 = vsel %vm2363, %v2382, 0.0
      %v2388 = vadd.f32 %v2381, %v2387
      %2389 = vadd.xlane.f32.xlu0 %v2388
      %v2390 = vpop.xlane.xlu0 %2389
      %v2391 = vmul.f32 %v2386, %v2372
      %v2392 = vmul.f32 %v2390, %v2372
      %v2393 = vadd.f32 %v2391, 1e-05
      %v2394 = vadd.f32 %v2392, 1e-05
      %v2395 = vrsqrt.pop %v2393
      %v2396 = vrsqrt.pop %v2394
      %v2397 = vmul.f32 %v2375, %v2395
      %v2398 = vmul.f32 %v2376, %v2395
      %v2399 = vmul.f32 %v2377, %v2396
      %v2400 = vmul.f32 %v2378, %v2396
      %v2401 = vadd.f32 %v2397, 3.0
      %v2402 = vadd.f32 %v2398, 3.0
      %v2403 = vadd.f32 %v2399, 3.0
      %v2404 = vadd.f32 %v2400, 3.0
      %v2405 = vmax.f32 %v2401, 0.0
      %v2406 = vmax.f32 %v2402, 0.0
      %v2407 = vmax.f32 %v2403, 0.0
      %v2408 = vmax.f32 %v2404, 0.0
      %v2409 = vmin.f32 %v2405, 6.0
      %v2410 = vmin.f32 %v2406, 6.0
      %v2411 = vmin.f32 %v2407, 6.0
      %v2412 = vmin.f32 %v2408, 6.0
      %v2413 = vmul.f32 %v2397, %v2409
      %v2414 = vmul.f32 %v2398, %v2410
      %v2415 = vmul.f32 %v2399, %v2411
      %v2416 = vmul.f32 %v2400, %v2412
      %v2417 = vmul.f32 %v2413, 0.16666667
      %v2418 = vmul.f32 %v2414, 0.16666667
      %v2419 = vmul.f32 %v2415, 0.16666667
      %v2420 = vmul.f32 %v2416, 0.16666667
      %v2421 = vld [vmem:[%s7] sm:$0xff]
      %v2422 = vld [vmem:[%s8] sm:$0xff]
      %2424 = vset.pattern.permute.xlu0 0
      %2425 = vperm.xlu0 %2424, %v2422
      %v2426 = vpop.permute.xlu0 %2425
      %v2429 = vsel %vm2363, %v2421, 0
      %2431 = vmatprep.subr.mxu0 %v2418
      %2432 = vmatpush1.msra.mxu0 %v2417
      %2433 = vmatprep.subr.mxu0 %v2420
      %2434 = vmatpush1.msra.mxu0 %v2419
      %2435 = vmatprep.subr.mxu0 0.0
      %2436 = vmatpush1.msra.mxu0 0.0
      %2437 = vmatprep.subr.mxu0 0.0
      %2438 = vmatpush1.msra.mxu0 0.0
      %2439 = vmatprep.subr.mxu0 0.0
      %2440 = vmatpush1.msra.mxu0 0.0
      %2441 = vmatprep.subr.mxu0 0.0
      %2442 = vmatpush1.msra.mxu0 0.0
      %2443 = vmatprep.subr.mxu0 0.0
      %2444 = vmatpush1.msra.mxu0 0.0
      %2445 = vmatprep.subr.mxu0 0.0
      %2446 = vmatpush1.msra.mxu0 0.0
      %2447 = vmatprep.subr.mxu0 0.0
      %2448 = vmatpush1.msra.mxu0 0.0
      %2449 = vmatprep.subr.mxu0 0.0
      %2450 = vmatpush1.msra.mxu0 0.0
      %2451 = vmatprep.subr.mxu0 0.0
      %2452 = vmatpush1.msra.mxu0 0.0
      %2453 = vmatprep.subr.mxu0 0.0
      %2454 = vmatpush1.msra.mxu0 0.0
      %2455 = vmatprep.subr.mxu0 0.0
      %2456 = vmatpush1.msra.mxu0 0.0
      %2457 = vmatprep.subr.mxu0 0.0
      %2458 = vmatpush1.msra.mxu0 0.0
      %2459 = vmatprep.subr.mxu0 0.0
      %2460 = vmatpush1.msra.mxu0 0.0
      %2461 = vmatprep.subr.mxu0 0.0
      %2462 = vmatpush1.msra.mxu0 0.0
      %2463 = vmatprep.subr.mxu0 0.0
      %2464 = vmatpush1.msra.mxu0 0.0
      %2465 = vmatprep.subr.mxu0 0.0
      %2466 = vmatpush1.msra.mxu0 0.0
      %2467 = vmatprep.subr.mxu0 0.0
      %2468 = vmatpush1.msra.mxu0 0.0
      %2469 = vmatprep.subr.mxu0 0.0
      %2470 = vmatpush1.msra.mxu0 0.0
      %2471 = vmatprep.subr.mxu0 0.0
      %2472 = vmatpush1.msra.mxu0 0.0
      %2473 = vmatprep.subr.mxu0 0.0
      %2474 = vmatpush1.msra.mxu0 0.0
      %2475 = vmatprep.subr.mxu0 0.0
      %2476 = vmatpush1.msra.mxu0 0.0
      %2477 = vmatprep.subr.mxu0 0.0
      %2478 = vmatpush1.msra.mxu0 0.0
      %2479 = vmatprep.subr.mxu0 0.0
      %2480 = vmatpush1.msra.mxu0 0.0
      %2481 = vmatprep.subr.mxu0 0.0
      %2482 = vmatpush1.msra.mxu0 0.0
      %2483 = vmatprep.subr.mxu0 0.0
      %2484 = vmatpush1.msra.mxu0 0.0
      %2485 = vmatprep.subr.mxu0 0.0
      %2486 = vmatpush1.msra.mxu0 0.0
      %2487 = vmatprep.subr.mxu0 0.0
      %2488 = vmatpush1.msra.mxu0 0.0
      %2489 = vmatprep.subr.mxu0 0.0
      %2490 = vmatpush1.msra.mxu0 0.0
      %2491 = vmatprep.subr.mxu0 0.0
      %2492 = vmatpush1.msra.mxu0 0.0
      %2493 = vmatprep.subr.mxu0 0.0
      %2494 = vmatpush1.msra.mxu0 0.0
      %2495 = vmatprep.mubr.f32.mxu0 0.0
      %2496 = vmatmul.mubr.f32.gmra.mrb[0].mxu0 %v2429
      %v2497 = vpop.f32.mrb[0].mxu0
      %v2498 = vadd.f32 %v2426, %v2497
      %v2499 = vpop.f32.mrb[0].mxu0
      %v2500 = vadd.f32 %v2426, %v2499
      %2501 = vdwg.mxu0
      %v2502 = vld [vmem:[%s434] sm:$0xff]
      %v2503 = vld [vmem:[%s434 + $0x8] sm:$0xff]
      %v2504 = vadd.f32 %v2498, %v2502
      %v2505 = vadd.f32 %v2500, %v2503
      %2506 = vst [vmem:[%s439] sm:$0xff] %v2504
      %2507 = vst.msk [vmem:[%s439 + $0x8] sm:$0xff] %vm2363, %v2505
      %p2508 = scmp.lt.s32.totalorder %s21, 1
      %s2509 = scalar_select %p2508, %s21, 1
      %s2510 = smul.addr %s2509, 2
      %s2511 = smul.addr %s2510, 8
      %s2512 = scalar_lea.vmem %s10, %s2511
      // Predicated region
      $region61: #{block_mix_forward.15} parent=59 // pred_check
        %p2513 = pneg %p274
      $region62: #{block_mix_forward.15} parent=59 // pred_check_branch
        %2515 = sbr.rel (%p2513) target = $region64
      $region63: #{block_mix_forward.15} parent=59 // pred_region
        _
      $region64: #{block_mix_forward.15} parent=59 // pred_fallthru
        _
    $region60: #{block_mix_forward.15} parent=5 // pred_fallthru
      _
    %p2516 = scmp.le.s32.totalorder 2, %s16
    // Predicated region
    $region65: #{block_mix_forward.15} parent=5 // pred_check
      %p2517 = pneg %p2516
    $region66: #{block_mix_forward.15} parent=5 // pred_check_branch
      %2519 = sbr.rel (%p2517) target = $region68
    $region67: #{block_mix_forward.15} parent=5 // pred_region
      %s2520 = ssub.s32 %s16, 2
      // Predicated region
      $region69: #{block_mix_forward.15} parent=67 // pred_check
        %p2521 = pneg %p280
      $region70: #{block_mix_forward.15} parent=67 // pred_check_branch
        %2523 = sbr.rel (%p2521) target = $region72
      $region71: #{block_mix_forward.15} parent=67 // pred_region
        %p2524 = scmp.lt.s32.totalorder %s22, 1
        %s2525 = scalar_select %p2524, %s22, 1
        %s2526 = smul.addr %s2525, 2
        %s2527 = smul.addr %s2526, 8
        %s2528 = scalar_lea.vmem %s10, %s2527
      $region72: #{block_mix_forward.15} parent=67 // pred_fallthru
        _
    $region68: #{block_mix_forward.15} parent=5 // pred_fallthru
      _
  $region6: #{block_mix_forward.15} parent=0 // loop_footer
    %s20 = sadd.s32 1, %s16
  $region7: #{block_mix_forward.15} parent=0 // loop_footer_branch
    %15 = sbr.rel target = $region3
  $region8: #{block_mix_forward.15} parent=0 // loop_exit
    _

// kernel: block_mix_forward.22
$region0: #{block_mix_forward.22}
  #allocation0 [shape = 'u32[]', space=smem, size = 0x4, offset = 0x4, fixed_abs, tag = 'smem constant byte address 0x4 - core index']
  #allocation1 [shape = 'u32[144,128]{1,0:T(1,128)}', space=vmem, size = 0x12000, scoped, tag = 'internal scratch']
  #allocation2 [shape = 'f32[8,170]{1,0:T(8,128)}', space=vmem, size = 0x2000, scoped, tag = 'scratch operand']
  %s0 = inlined_call_operand.vmem [shape: f32[2,2,144], index: 0, kind: input, shape index: {}]
  %s1 = inlined_call_operand.vmem [shape: f32[8,2], index: 1, kind: input, shape index: {}]
  %s2 = inlined_call_operand.vmem [shape: f32[8,1], index: 2, kind: input, shape index: {}]
  %s3 = inlined_call_operand.vmem [shape: f32[9,8,1], index: 3, kind: input, shape index: {}]
  %s4 = inlined_call_operand.vmem [shape: f32[8,1], index: 4, kind: input, shape index: {}]
  %s5 = inlined_call_operand.vmem [shape: f32[2,144], index: 5, kind: input, shape index: {}]
  %s6 = inlined_call_operand.vmem [shape: f32[2,8], index: 6, kind: input, shape index: {}]
  %s7 = inlined_call_operand.vmem [shape: f32[2,1], index: 7, kind: input, shape index: {}]
  %s8 = inlined_call_operand.vmem [shape: f32[2,2,144], index: 8, kind: output, shape index: {}]
  %s9 = sld [smem:[#allocation0]]
  $region65: #{block_mix_forward.22} parent=0
    _
  %s11 = ssub.s32 1, %s9
  %s12 = scalar_select 0, %s11, %s9
  loop: start=0, step=1, limit=4
  $region2: #{block_mix_forward.22} parent=0 // loop_pre_header
    _
  $region3: #{block_mix_forward.22} parent=0 // loop_header
    %s14 = sphi 0, %s18
    %p15 = scmp.ge.s32.totalorder %s14, 4
    %s24 = sphi 0, %s26
    %s27 = sphi 0, %s24
    %s28 = sphi 0, %s27
    %s44 = sphi 0, %s28
    %s48 = sphi 0, %s48
    %s50 = sphi 0, %s48
    %s51 = sphi 0, %s50
    %s65 = sphi 0, %s51
    %s69 = sphi 0, %s69
    %s71 = sphi 0, %s69
    %s72 = sphi 0, %s71
    %s86 = sphi 0, %s72
    %s90 = sphi 0, %s90
    %s92 = sphi 0, %s90
    %s93 = sphi 0, %s92
    %s107 = sphi 0, %s93
    %s111 = sphi 0, %s111
    %s113 = sphi 0, %s111
    %s114 = sphi 0, %s113
    %s128 = sphi 0, %s114
    %s132 = sphi 0, %s132
    %s134 = sphi 0, %s132
    %s135 = sphi 0, %s134
    %s149 = sphi 0, %s135
    %s153 = sphi 0, %s153
    %s155 = sphi 0, %s153
    %s156 = sphi 0, %s155
    %s170 = sphi 0, %s156
    %s174 = sphi 0, %s174
    %s176 = sphi 0, %s174
    %s177 = sphi 0, %s176
    %s191 = sphi 0, %s177
    %s197 = sphi 0, %s199
    %s200 = sphi 0, %s197
    %s201 = sphi 0, %s200
    %s217 = sphi 0, %s201
  $region4: #{block_mix_forward.22} parent=0 // loop_header_branch
    %17 = sbr.rel (%p15) target = $region8
  $region5: #{block_mix_forward.22} parent=0 // loop_body
    %s19 = ssub.s32 %s14, 1
    %s20 = ssub.s32 %s14, 2
    %s21 = sadd.s32 %s14, 1
    %s22 = ssub.s32 %s14, %s21
    %p23 = scmp.eq.s32.totalorder %s22, 0
    %s25 = sadd.s32 %s24, 1
    %s26 = scalar_select %p23, %s24, %s25
    %p29 = pneg %p23
    %p30 = scmp.eq.s32.totalorder %s14, 1
    %p31 = por %p29, %p30
    %p32 = scmp.ne.s32.totalorder %s24, %s27
    %p33 = scmp.eq.s32.totalorder %s14, 0
    %p34 = por %p32, %p33
    %p35 = scmp.ne.s32.totalorder %s24, %s27
    %p36 = scmp.eq.s32.totalorder %s19, 1
    %p37 = por %p35, %p36
    %p38 = scmp.ne.s32.totalorder %s27, %s28
    %p39 = scmp.eq.s32.totalorder %s19, 0
    %p40 = por %p38, %p39
    %p41 = scmp.ne.s32.totalorder %s27, %s28
    %p42 = scmp.eq.s32.totalorder %s20, 1
    %p43 = por %p41, %p42
    %p45 = scmp.ne.s32.totalorder %s28, %s44
    %p46 = scmp.eq.s32.totalorder %s20, 0
    %p47 = por %p45, %p46
    %s49 = sadd.s32 %s48, 1
    %p52 = scmp.eq.s32.totalorder %s14, 1
    %p53 = scmp.ne.s32.totalorder %s48, %s50
    %p54 = scmp.eq.s32.totalorder %s14, 0
    %p55 = por %p53, %p54
    %p56 = scmp.ne.s32.totalorder %s48, %s50
    %p57 = scmp.eq.s32.totalorder %s19, 1
    %p58 = por %p56, %p57
    %p59 = scmp.ne.s32.totalorder %s50, %s51
    %p60 = scmp.eq.s32.totalorder %s19, 0
    %p61 = por %p59, %p60
    %p62 = scmp.ne.s32.totalorder %s50, %s51
    %p63 = scmp.eq.s32.totalorder %s20, 1
    %p64 = por %p62, %p63
    %p66 = scmp.ne.s32.totalorder %s51, %s65
    %p67 = scmp.eq.s32.totalorder %s20, 0
    %p68 = por %p66, %p67
    %s70 = sadd.s32 %s69, 1
    %p73 = scmp.eq.s32.totalorder %s14, 1
    %p74 = scmp.ne.s32.totalorder %s69, %s71
    %p75 = scmp.eq.s32.totalorder %s14, 0
    %p76 = por %p74, %p75
    %p77 = scmp.ne.s32.totalorder %s69, %s71
    %p78 = scmp.eq.s32.totalorder %s19, 1
    %p79 = por %p77, %p78
    %p80 = scmp.ne.s32.totalorder %s71, %s72
    %p81 = scmp.eq.s32.totalorder %s19, 0
    %p82 = por %p80, %p81
    %p83 = scmp.ne.s32.totalorder %s71, %s72
    %p84 = scmp.eq.s32.totalorder %s20, 1
    %p85 = por %p83, %p84
    %p87 = scmp.ne.s32.totalorder %s72, %s86
    %p88 = scmp.eq.s32.totalorder %s20, 0
    %p89 = por %p87, %p88
    %s91 = sadd.s32 %s90, 1
    %p94 = scmp.eq.s32.totalorder %s14, 1
    %p95 = scmp.ne.s32.totalorder %s90, %s92
    %p96 = scmp.eq.s32.totalorder %s14, 0
    %p97 = por %p95, %p96
    %p98 = scmp.ne.s32.totalorder %s90, %s92
    %p99 = scmp.eq.s32.totalorder %s19, 1
    %p100 = por %p98, %p99
    %p101 = scmp.ne.s32.totalorder %s92, %s93
    %p102 = scmp.eq.s32.totalorder %s19, 0
    %p103 = por %p101, %p102
    %p104 = scmp.ne.s32.totalorder %s92, %s93
    %p105 = scmp.eq.s32.totalorder %s20, 1
    %p106 = por %p104, %p105
    %p108 = scmp.ne.s32.totalorder %s93, %s107
    %p109 = scmp.eq.s32.totalorder %s20, 0
    %p110 = por %p108, %p109
    %s112 = sadd.s32 %s111, 1
    %p115 = scmp.eq.s32.totalorder %s14, 1
    %p116 = scmp.ne.s32.totalorder %s111, %s113
    %p117 = scmp.eq.s32.totalorder %s14, 0
    %p118 = por %p116, %p117
    %p119 = scmp.ne.s32.totalorder %s111, %s113
    %p120 = scmp.eq.s32.totalorder %s19, 1
    %p121 = por %p119, %p120
    %p122 = scmp.ne.s32.totalorder %s113, %s114
    %p123 = scmp.eq.s32.totalorder %s19, 0
    %p124 = por %p122, %p123
    %p125 = scmp.ne.s32.totalorder %s113, %s114
    %p126 = scmp.eq.s32.totalorder %s20, 1
    %p127 = por %p125, %p126
    %p129 = scmp.ne.s32.totalorder %s114, %s128
    %p130 = scmp.eq.s32.totalorder %s20, 0
    %p131 = por %p129, %p130
    %s133 = sadd.s32 %s132, 1
    %p136 = scmp.eq.s32.totalorder %s14, 1
    %p137 = scmp.ne.s32.totalorder %s132, %s134
    %p138 = scmp.eq.s32.totalorder %s14, 0
    %p139 = por %p137, %p138
    %p140 = scmp.ne.s32.totalorder %s132, %s134
    %p141 = scmp.eq.s32.totalorder %s19, 1
    %p142 = por %p140, %p141
    %p143 = scmp.ne.s32.totalorder %s134, %s135
    %p144 = scmp.eq.s32.totalorder %s19, 0
    %p145 = por %p143, %p144
    %p146 = scmp.ne.s32.totalorder %s134, %s135
    %p147 = scmp.eq.s32.totalorder %s20, 1
    %p148 = por %p146, %p147
    %p150 = scmp.ne.s32.totalorder %s135, %s149
    %p151 = scmp.eq.s32.totalorder %s20, 0
    %p152 = por %p150, %p151
    %s154 = sadd.s32 %s153, 1
    %p157 = scmp.eq.s32.totalorder %s14, 1
    %p158 = scmp.ne.s32.totalorder %s153, %s155
    %p159 = scmp.eq.s32.totalorder %s14, 0
    %p160 = por %p158, %p159
    %p161 = scmp.ne.s32.totalorder %s153, %s155
    %p162 = scmp.eq.s32.totalorder %s19, 1
    %p163 = por %p161, %p162
    %p164 = scmp.ne.s32.totalorder %s155, %s156
    %p165 = scmp.eq.s32.totalorder %s19, 0
    %p166 = por %p164, %p165
    %p167 = scmp.ne.s32.totalorder %s155, %s156
    %p168 = scmp.eq.s32.totalorder %s20, 1
    %p169 = por %p167, %p168
    %p171 = scmp.ne.s32.totalorder %s156, %s170
    %p172 = scmp.eq.s32.totalorder %s20, 0
    %p173 = por %p171, %p172
    %s175 = sadd.s32 %s174, 1
    %p178 = scmp.eq.s32.totalorder %s14, 1
    %p179 = scmp.ne.s32.totalorder %s174, %s176
    %p180 = scmp.eq.s32.totalorder %s14, 0
    %p181 = por %p179, %p180
    %p182 = scmp.ne.s32.totalorder %s174, %s176
    %p183 = scmp.eq.s32.totalorder %s19, 1
    %p184 = por %p182, %p183
    %p185 = scmp.ne.s32.totalorder %s176, %s177
    %p186 = scmp.eq.s32.totalorder %s19, 0
    %p187 = por %p185, %p186
    %p188 = scmp.ne.s32.totalorder %s176, %s177
    %p189 = scmp.eq.s32.totalorder %s20, 1
    %p190 = por %p188, %p189
    %p192 = scmp.ne.s32.totalorder %s177, %s191
    %p193 = scmp.eq.s32.totalorder %s20, 0
    %p194 = por %p192, %p193
    %s195 = ssub.s32 %s14, %s21
    %p196 = scmp.eq.s32.totalorder %s195, 0
    %s198 = sadd.s32 %s197, 1
    %s199 = scalar_select %p196, %s197, %s198
    %p202 = pneg %p196
    %p203 = scmp.eq.s32.totalorder %s14, 1
    %p204 = por %p202, %p203
    %p205 = scmp.ne.s32.totalorder %s197, %s200
    %p206 = scmp.eq.s32.totalorder %s14, 0
    %p207 = por %p205, %p206
    %p208 = scmp.ne.s32.totalorder %s197, %s200
    %p209 = scmp.eq.s32.totalorder %s19, 1
    %p210 = por %p208, %p209
    %p211 = scmp.ne.s32.totalorder %s200, %s201
    %p212 = scmp.eq.s32.totalorder %s19, 0
    %p213 = por %p211, %p212
    %p214 = scmp.ne.s32.totalorder %s200, %s201
    %p215 = scmp.eq.s32.totalorder %s20, 1
    %p216 = por %p214, %p215
    %p218 = scmp.ne.s32.totalorder %s201, %s217
    %p219 = scmp.eq.s32.totalorder %s20, 0
    %p220 = por %p218, %p219
    %p221 = scmp.le.s32.totalorder 1, %s14
    %p222 = scmp.lt.s32.totalorder %s14, 3
    %p223 = pnand %p221, %p222
    %p224 = pneg %p223
    // Predicated region
    $region9: #{block_mix_forward.22} parent=5 // pred_check
      _
    $region10: #{block_mix_forward.22} parent=5 // pred_check_branch
      %226 = sbr.rel (%p223) target = $region12
    $region11: #{block_mix_forward.22} parent=5 // pred_region
      %s227 = ssub.s32 %s14, 1
      // Predicated region
      $region13: #{block_mix_forward.22} parent=11 // pred_check
        %p228 = pneg %p61
      $region14: #{block_mix_forward.22} parent=11 // pred_check_branch
        %230 = sbr.rel (%p228) target = $region16
      $region15: #{block_mix_forward.22} parent=11 // pred_region
        _
      $region16: #{block_mix_forward.22} parent=11 // pred_fallthru
        _
      // Predicated region
      $region17: #{block_mix_forward.22} parent=11 // pred_check
        %p231 = pneg %p82
      $region18: #{block_mix_forward.22} parent=11 // pred_check_branch
        %233 = sbr.rel (%p231) target = $region20
      $region19: #{block_mix_forward.22} parent=11 // pred_region
        _
      $region20: #{block_mix_forward.22} parent=11 // pred_fallthru
        _
      // Predicated region
      $region21: #{block_mix_forward.22} parent=11 // pred_check
        %p234 = pneg %p103
      $region22: #{block_mix_forward.22} parent=11 // pred_check_branch
        %236 = sbr.rel (%p234) target = $region24
      $region23: #{block_mix_forward.22} parent=11 // pred_region
        _
      $region24: #{block_mix_forward.22} parent=11 // pred_fallthru
        _
      // Predicated region
      $region25: #{block_mix_forward.22} parent=11 // pred_check
        %p237 = pneg %p124
      $region26: #{block_mix_forward.22} parent=11 // pred_check_branch
        %239 = sbr.rel (%p237) target = $region28
      $region27: #{block_mix_forward.22} parent=11 // pred_region
        _
      $region28: #{block_mix_forward.22} parent=11 // pred_fallthru
        _
      // Predicated region
      $region29: #{block_mix_forward.22} parent=11 // pred_check
        %p240 = pneg %p145
      $region30: #{block_mix_forward.22} parent=11 // pred_check_branch
        %242 = sbr.rel (%p240) target = $region32
      $region31: #{block_mix_forward.22} parent=11 // pred_region
        _
      $region32: #{block_mix_forward.22} parent=11 // pred_fallthru
        _
      // Predicated region
      $region33: #{block_mix_forward.22} parent=11 // pred_check
        %p243 = pneg %p166
      $region34: #{block_mix_forward.22} parent=11 // pred_check_branch
        %245 = sbr.rel (%p243) target = $region36
      $region35: #{block_mix_forward.22} parent=11 // pred_region
        _
      $region36: #{block_mix_forward.22} parent=11 // pred_fallthru
        _
      // Predicated region
      $region37: #{block_mix_forward.22} parent=11 // pred_check
        %p246 = pneg %p187
      $region38: #{block_mix_forward.22} parent=11 // pred_check_branch
        %248 = sbr.rel (%p246) target = $region40
      $region39: #{block_mix_forward.22} parent=11 // pred_region
        _
      $region40: #{block_mix_forward.22} parent=11 // pred_fallthru
        _
    $region12: #{block_mix_forward.22} parent=5 // pred_fallthru
      _
    %p249 = scmp.lt.s32.totalorder %s14, 2
    // Predicated region
    $region41: #{block_mix_forward.22} parent=5 // pred_check
      %p250 = pneg %p249
    $region42: #{block_mix_forward.22} parent=5 // pred_check_branch
      %252 = sbr.rel (%p250) target = $region44
    $region43: #{block_mix_forward.22} parent=5 // pred_region
      // Predicated region
      $region45: #{block_mix_forward.22} parent=43 // pred_check
        %p253 = pneg %p34
      $region46: #{block_mix_forward.22} parent=43 // pred_check_branch
        %255 = sbr.rel (%p253) target = $region48
      $region47: #{block_mix_forward.22} parent=43 // pred_region
        %p256 = scmp.lt.s32.totalorder %s14, 1
        %s257 = scalar_select %p256, %s14, 1
        %s258 = smul.addr %s257, 2
        %s259 = smul.addr %s258, 2
        %s260 = scalar_lea.vmem %s0, %s259
      $region48: #{block_mix_forward.22} parent=43 // pred_fallthru
        _
    $region44: #{block_mix_forward.22} parent=5 // pred_fallthru
      _
    %p261 = scmp.le.s32.totalorder 1, %s14
    %p262 = scmp.lt.s32.totalorder %s14, 3
    %p263 = pnand %p261, %p262
    %p264 = pneg %p263
    // Predicated region
    $region49: #{block_mix_forward.22} parent=5 // pred_check
      _
    $region50: #{block_mix_forward.22} parent=5 // pred_check_branch
      %266 = sbr.rel (%p263) target = $region52
    $region51: #{block_mix_forward.22} parent=5 // pred_region
      %s267 = ssub.s32 %s14, 1
      %p268 = scmp.lt.s32.totalorder %s19, 1
      %s269 = scalar_select %p268, %s19, 1
      %s270 = smul.addr %s269, 2
      %s271 = smul.addr %s270, 2
      %s272 = scalar_lea.vmem %s0, %s271
      %p273 = pneg %p40
      %p274 = pneg %p37
      %p275 = pneg %p61
      %p276 = pneg %p58
      %p277 = pneg %p82
      %p278 = pneg %p79
      %p279 = pneg %p103
      %p280 = pneg %p100
      %p281 = pneg %p124
      %p282 = pneg %p121
      %p283 = pneg %p145
      %p284 = pneg %p142
      %p285 = pneg %p166
      %p286 = pneg %p163
      %p287 = pneg %p187
      %p288 = pneg %p184
      %p289 = pneg %p213
      %p290 = pneg %p210
      %p291 = scmp.lt.s32.totalorder %s19, 1
      %s292 = scalar_select %p291, %s19, 1
      %s293 = smul.addr %s292, 2
      %s294 = smul.addr %s293, 2
      %s295 = scalar_lea.vmem %s8, %s294
      %p296 = scmp.lt.s32.totalorder %s19, 1
      %s297 = scalar_select %p296, %s19, 1
      %s298 = smul.addr %s297, 2
      %s299 = smul.addr %s298, 2
      %s300 = scalar_lea.vmem %s0, %s299
      %p301 = scmp.lt.s32.totalorder %s19, 1
      %s302 = scalar_select %p301, %s19, 1
      %s303 = smul.addr %s302, 2
      %s304 = smul.addr %s303, 2
      %s305 = scalar_lea.vmem %s8, %s304
      %v306 = vld [vmem:[%s300] sm:$0xf]
      %v307 = vld [vmem:[%s1] sm:$0xff]
      %v310 = vunpack.c.l.s4 1983009808
      %v311 = vunpack.c.0.s8 %v310
      %v312 = vlaneseq
      %v313 = vshrl.u32 %v312, 7
      %v314 = vsub.s32 %v311, %v313
      %v315 = vrot.slane %v306, %v314
      %v316 = vcombine.high %v315, %v315
      %vm319 = vcmask 1041408
      %v320 = vsel %vm319, %v315, 0.0
      %vm321 = vcmask 123904
      %v322 = vsel %vm321, %v316, 0.0
      %v323 = vadd.f32 %v320, %v322
      %324 = vadd.xlane.f32.xlu0 %v323
      %v325 = vpop.xlane.xlu0 %324
      %v326 = vrcp.pop 144.0
      %v327 = vmul.f32 %v325, %v326
      %v330 = vunpack.c.l.s4 269488144
      %v331 = vunpack.c.0.s8 %v330
      %v332 = vlaneseq
      %v333 = vshrl.u32 %v332, 7
      %v334 = vsub.s32 %v331, %v333
      %v335 = vrot.slane %v327, %v334
      %v337 = vsub.f32 %v306, %v335
      %v338 = vmul.f32 %v337, %v337
      %v341 = vunpack.c.l.s4 1983009808
      %v342 = vunpack.c.0.s8 %v341
      %v343 = vlaneseq
      %v344 = vshrl.u32 %v343, 7
      %v345 = vsub.s32 %v342, %v344
      %v346 = vrot.slane %v338, %v345
      %v347 = vcombine.high %v346, %v346
      %v350 = vsel %vm319, %v346, 0.0
      %v351 = vsel %vm321, %v347, 0.0
      %v352 = vadd.f32 %v350, %v351
      %353 = vadd.xlane.f32.xlu0 %v352
      %v354 = vpop.xlane.xlu0 %353
      %v355 = vmul.f32 %v354, %v326
      %v356 = vadd.f32 %v355, 1e-05
      %v357 = vrsqrt.pop %v356
      %v360 = vunpack.c.l.s4 269488144
      %v361 = vunpack.c.0.s8 %v360
      %v362 = vlaneseq
      %v363 = vshrl.u32 %v362, 7
      %v364 = vsub.s32 %v361, %v363
      %v365 = vrot.slane %v357, %v364
      %v367 = vmul.f32 %v337, %v365
      %v368 = vld [vmem:[%s2] sm:$0xff]
      %370 = vset.pattern.permute.xlu0 0
      %371 = vperm.xlu0 %370, %v368
      %v372 = vpop.permute.xlu0 %371
      %v376 = vunpack.c.l.s4 1983009808
      %v377 = vunpack.c.0.s8 %v376
      %v378 = vlaneseq
      %v379 = vshrl.u32 %v378, 7
      %v380 = vsub.s32 %v377, %v379
      %v381 = vrot.slane %v367, %v380
      %v382 = vcombine.high %v381, %v381
      %vm383 = vcmask 15360
      %v385 = vsel %vm383, %v307, 0
      %v387 = vsel %vm319, %v381, 0
      %v389 = vsel %vm319, %v382, 0
      %391 = vmatprep.subr.mxu0 %v389
      %392 = vmatpush1.msra.mxu0 %v387
      %393 = vmatprep.subr.mxu0 0.0
      %394 = vmatpush1.msra.mxu0 0.0
      %395 = vmatprep.subr.mxu0 0.0
      %396 = vmatpush1.msra.mxu0 0.0
      %397 = vmatprep.subr.mxu0 0.0
      %398 = vmatpush1.msra.mxu0 0.0
      %399 = vmatprep.subr.mxu0 0.0
      %400 = vmatpush1.msra.mxu0 0.0
      %401 = vmatprep.subr.mxu0 0.0
      %402 = vmatpush1.msra.mxu0 0.0
      %403 = vmatprep.subr.mxu0 0.0
      %404 = vmatpush1.msra.mxu0 0.0
      %405 = vmatprep.subr.mxu0 0.0
      %406 = vmatpush1.msra.mxu0 0.0
      %407 = vmatprep.subr.mxu0 0.0
      %408 = vmatpush1.msra.mxu0 0.0
      %409 = vmatprep.subr.mxu0 0.0
      %410 = vmatpush1.msra.mxu0 0.0
      %411 = vmatprep.subr.mxu0 0.0
      %412 = vmatpush1.msra.mxu0 0.0
      %413 = vmatprep.subr.mxu0 0.0
      %414 = vmatpush1.msra.mxu0 0.0
      %415 = vmatprep.subr.mxu0 0.0
      %416 = vmatpush1.msra.mxu0 0.0
      %417 = vmatprep.subr.mxu0 0.0
      %418 = vmatpush1.msra.mxu0 0.0
      %419 = vmatprep.subr.mxu0 0.0
      %420 = vmatpush1.msra.mxu0 0.0
      %421 = vmatprep.subr.mxu0 0.0
      %422 = vmatpush1.msra.mxu0 0.0
      %423 = vmatprep.subr.mxu0 0.0
      %424 = vmatpush1.msra.mxu0 0.0
      %425 = vmatprep.subr.mxu0 0.0
      %426 = vmatpush1.msra.mxu0 0.0
      %427 = vmatprep.subr.mxu0 0.0
      %428 = vmatpush1.msra.mxu0 0.0
      %429 = vmatprep.subr.mxu0 0.0
      %430 = vmatpush1.msra.mxu0 0.0
      %431 = vmatprep.subr.mxu0 0.0
      %432 = vmatpush1.msra.mxu0 0.0
      %433 = vmatprep.subr.mxu0 0.0
      %434 = vmatpush1.msra.mxu0 0.0
      %435 = vmatprep.subr.mxu0 0.0
      %436 = vmatpush1.msra.mxu0 0.0
      %437 = vmatprep.subr.mxu0 0.0
      %438 = vmatpush1.msra.mxu0 0.0
      %439 = vmatprep.subr.mxu0 0.0
      %440 = vmatpush1.msra.mxu0 0.0
      %441 = vmatprep.subr.mxu0 0.0
      %442 = vmatpush1.msra.mxu0 0.0
      %443 = vmatprep.subr.mxu0 0.0
      %444 = vmatpush1.msra.mxu0 0.0
      %445 = vmatprep.subr.mxu0 0.0
      %446 = vmatpush1.msra.mxu0 0.0
      %447 = vmatprep.subr.mxu0 0.0
      %448 = vmatpush1.msra.mxu0 0.0
      %449 = vmatprep.subr.mxu0 0.0
      %450 = vmatpush1.msra.mxu0 0.0
      %451 = vmatprep.subr.mxu0 0.0
      %452 = vmatpush1.msra.mxu0 0.0
      %453 = vmatprep.subr.mxu0 0.0
      %454 = vmatpush1.msra.mxu0 0.0
      %455 = vmatprep.mubr.f32.mxu0 0.0
      %456 = vmatmul.mubr.f32.gmra.mrb[0].mxu0 %v385
      %v457 = vpop.f32.mrb[0].mxu0
      %v458 = vadd.f32 %v372, %v457
      %v459 = vpop.f32.mrb[0].mxu0
      %v460 = vadd.f32 %v372, %v459
      %461 = vdwg.mxu0
      %vm462 = vcmask 130048
      %v463 = vsel %vm462, %v460, 0.0
      %v464 = vadd.f32 %v458, %v463
      %465 = vadd.xlane.f32.xlu0 %v464
      %v466 = vpop.xlane.xlu0 %465
      %v467 = vmul.f32 %v466, %v326
      %v468 = vsub.f32 %v458, %v467
      %v469 = vsub.f32 %v460, %v467
      %v470 = vmul.f32 %v468, %v468
      %v471 = vmul.f32 %v469, %v469
      %v472 = vsel %vm462, %v471, 0.0
      %v473 = vadd.f32 %v470, %v472
      %474 = vadd.xlane.f32.xlu0 %v473
      %v475 = vpop.xlane.xlu0 %474
      %v476 = vmul.f32 %v475, %v326
      %v477 = vadd.f32 %v476, 1e-05
      %v478 = vrsqrt.pop %v477
      %v479 = vmul.f32 %v468, %v478
      %v480 = vmul.f32 %v469, %v478
      %481 = vst [vmem:[#allocation2] sm:$0xff] 0.0
      %vm482 = vcmask 343040
      %483 = vst.msk [vmem:[#allocation2 + $0x8] sm:$0xff] %vm482, 0.0
      %486 = vrot.lane.b32.xlu0 %v479, 13
      %v487 = vpop.permute.xlu0 %486
      %488 = vrot.lane.b32.xlu0 %v480, 13
      %v489 = vpop.permute.xlu0 %488
      %vm490 = vcmask 105472
      %v491 = vsel %vm490, %v487, %v489
      %vm494 = vcmask 1047656
      %495 = vst.msk [vmem:[#allocation2] sm:$0xff] %vm494, %v487
      %vm496 = vcmask 236544
      %497 = vst.msk [vmem:[#allocation2 + $0x8] sm:$0xff] %vm496, %v491
      %v498 = vld [vmem:[#allocation2] sm:$0xff]
      %v499 = vld [vmem:[#allocation2 + $0x8] sm:$0xff]
      %v500 = vld [vmem:[%s5] ss:$2 sm:$0x3]
      %v502 = vlaneseq
      %v503 = vshrl.u32 %v502, 7
      %v504 = vsub.s32 0, %v503
      %v505 = vrot.slane %v500, %v504
      %v506 = vlaneseq
      %v507 = vshrl.u32 %v506, 7
      %v508 = vsub.s32 1, %v507
      %v509 = vrot.slane %v500, %v508
      %v512 = vmul.f32 %v498, %v505
      %v513 = vmul.f32 %v499, %v509
      %v514 = vld [vmem:[%s3] sm:$0xff]
      %516 = vset.pattern.permute.xlu0 0
      %517 = vperm.xlu0 %516, %v514
      %v518 = vpop.permute.xlu0 %517
      %v520 = vmul.f32 %v512, %v518
      %v521 = vmul.f32 %v513, %v518
      %v522 = vadd.f32 %v520, 0.0
      %v523 = vadd.f32 %v521, 0.0
      %s524 = scalar_lea.vmem %s3, 8
      %v525 = vld [vmem:[%s524] sm:$0xff]
      %527 = vset.pattern.permute.xlu0 0
      %528 = vperm.xlu0 %527, %v525
      %v529 = vpop.permute.xlu0 %528
      %v531 = vmul.f32 %v498, %v529
      %v532 = vmul.f32 %v499, %v529
      %535 = vrot.lane.b32.xlu0 %v531, 127
      %v536 = vpop.permute.xlu0 %535
      %537 = vrot.lane.b32.xlu0 %v532, 127
      %v538 = vpop.permute.xlu0 %537
      %vm539 = vcmask 1039360
      %v540 = vsel %vm539, %v536, %v538
      %v543 = vadd.f32 %v522, %v540
      %v544 = vadd.f32 %v523, %v538
      %s545 = scalar_lea.vmem %s5, 1
      %v546 = vld [vmem:[%s545] ss:$2 sm:$0x3]
      %v548 = vlaneseq
      %v549 = vshrl.u32 %v548, 7
      %v550 = vsub.s32 0, %v549
      %v551 = vrot.slane %v546, %v550
      %v552 = vlaneseq
      %v553 = vshrl.u32 %v552, 7
      %v554 = vsub.s32 1, %v553
      %v555 = vrot.slane %v546, %v554
      %556 = vrot.lane.b32.xlu0 %v551, 2
      %v557 = vpop.permute.xlu0 %556
      %558 = vrot.lane.b32.xlu0 %v555, 2
      %v559 = vpop.permute.xlu0 %558
      %v560 = vsel %vm383, %v557, %v559
      %v563 = vmul.f32 %v498, %v557
      %v564 = vmul.f32 %v499, %v560
      %s565 = scalar_lea.vmem %s3, 16
      %v566 = vld [vmem:[%s565] sm:$0xff]
      %568 = vset.pattern.permute.xlu0 0
      %569 = vperm.xlu0 %568, %v566
      %v570 = vpop.permute.xlu0 %569
      %v572 = vmul.f32 %v563, %v570
      %v573 = vmul.f32 %v564, %v570
      %576 = vrot.lane.b32.xlu0 %v572, 126
      %v577 = vpop.permute.xlu0 %576
      %578 = vrot.lane.b32.xlu0 %v573, 126
      %v579 = vpop.permute.xlu0 %578
      %vm580 = vcmask 1031168
      %v581 = vsel %vm580, %v577, %v579
      %v584 = vadd.f32 %v543, %v581
      %v585 = vadd.f32 %v544, %v579
      %586 = vrot.lane.b32.xlu0 %v505, 12
      %v587 = vpop.permute.xlu0 %586
      %588 = vrot.lane.b32.xlu0 %v509, 12
      %v589 = vpop.permute.xlu0 %588
      %vm590 = vcmask 97280
      %v591 = vsel %vm590, %v587, %v589
      %v594 = vmul.f32 %v498, %v587
      %v595 = vmul.f32 %v499, %v591
      %s596 = scalar_lea.vmem %s3, 24
      %v597 = vld [vmem:[%s596] sm:$0xff]
      %599 = vset.pattern.permute.xlu0 0
      %600 = vperm.xlu0 %599, %v597
      %v601 = vpop.permute.xlu0 %600
      %v603 = vmul.f32 %v594, %v601
      %v604 = vmul.f32 %v595, %v601
      %607 = vrot.lane.b32.xlu0 %v603, 116
      %v608 = vpop.permute.xlu0 %607
      %609 = vrot.lane.b32.xlu0 %v604, 116
      %v610 = vpop.permute.xlu0 %609
      %vm611 = vcmask 949248
      %v612 = vsel %vm611, %v608, %v610
      %v615 = vadd.f32 %v584, %v612
      %v616 = vadd.f32 %v585, %v610
      %s617 = scalar_lea.vmem %s3, 32
      %v618 = vld [vmem:[%s617] sm:$0xff]
      %620 = vset.pattern.permute.xlu0 0
      %621 = vperm.xlu0 %620, %v618
      %v622 = vpop.permute.xlu0 %621
      %v624 = vmul.f32 %v498, %v622
      %v625 = vmul.f32 %v499, %v622
      %628 = vrot.lane.b32.xlu0 %v624, 115
      %v629 = vpop.permute.xlu0 %628
      %630 = vrot.lane.b32.xlu0 %v625, 115
      %v631 = vpop.permute.xlu0 %630
      %vm632 = vcmask 941056
      %v633 = vsel %vm632, %v629, %v631
      %v636 = vadd.f32 %v615, %v633
      %v637 = vadd.f32 %v616, %v631
      %638 = vrot.lane.b32.xlu0 %v551, 14
      %v639 = vpop.permute.xlu0 %638
      %640 = vrot.lane.b32.xlu0 %v555, 14
      %v641 = vpop.permute.xlu0 %640
      %vm642 = vcmask 113664
      %v643 = vsel %vm642, %v639, %v641
      %v646 = vmul.f32 %v498, %v639
      %v647 = vmul.f32 %v499, %v643
      %s648 = scalar_lea.vmem %s3, 40
      %v649 = vld [vmem:[%s648] sm:$0xff]
      %651 = vset.pattern.permute.xlu0 0
      %652 = vperm.xlu0 %651, %v649
      %v653 = vpop.permute.xlu0 %652
      %v655 = vmul.f32 %v646, %v653
      %v656 = vmul.f32 %v647, %v653
      %659 = vrot.lane.b32.xlu0 %v655, 114
      %v660 = vpop.permute.xlu0 %659
      %661 = vrot.lane.b32.xlu0 %v656, 114
      %v662 = vpop.permute.xlu0 %661
      %vm663 = vcmask 932864
      %v664 = vsel %vm663, %v660, %v662
      %v667 = vadd.f32 %v636, %v664
      %v668 = vadd.f32 %v637, %v662
      %669 = vrot.lane.b32.xlu0 %v505, 24
      %v670 = vpop.permute.xlu0 %669
      %671 = vrot.lane.b32.xlu0 %v509, 24
      %v672 = vpop.permute.xlu0 %671
      %vm673 = vcmask 195584
      %v674 = vsel %vm673, %v670, %v672
      %v677 = vmul.f32 %v498, %v670
      %v678 = vmul.f32 %v499, %v674
      %s679 = scalar_lea.vmem %s3, 48
      %v680 = vld [vmem:[%s679] sm:$0xff]
      %682 = vset.pattern.permute.xlu0 0
      %683 = vperm.xlu0 %682, %v680
      %v684 = vpop.permute.xlu0 %683
      %v686 = vmul.f32 %v677, %v684
      %v687 = vmul.f32 %v678, %v684
      %690 = vrot.lane.b32.xlu0 %v686, 104
      %v691 = vpop.permute.xlu0 %690
      %692 = vrot.lane.b32.xlu0 %v687, 104
      %v693 = vpop.permute.xlu0 %692
      %vm694 = vcmask 850944
      %v695 = vsel %vm694, %v691, %v693
      %v698 = vadd.f32 %v667, %v695
      %v699 = vadd.f32 %v668, %v693
      %s700 = scalar_lea.vmem %s3, 56
      %v701 = vld [vmem:[%s700] sm:$0xff]
      %703 = vset.pattern.permute.xlu0 0
      %704 = vperm.xlu0 %703, %v701
      %v705 = vpop.permute.xlu0 %704
      %v707 = vmul.f32 %v498, %v705
      %v708 = vmul.f32 %v499, %v705
      %711 = vrot.lane.b32.xlu0 %v707, 103
      %v712 = vpop.permute.xlu0 %711
      %713 = vrot.lane.b32.xlu0 %v708, 103
      %v714 = vpop.permute.xlu0 %713
      %vm715 = vcmask 842752
      %v716 = vsel %vm715, %v712, %v714
      %v719 = vadd.f32 %v698, %v716
      %v720 = vadd.f32 %v699, %v714
      %721 = vrot.lane.b32.xlu0 %v551, 26
      %v722 = vpop.permute.xlu0 %721
      %723 = vrot.lane.b32.xlu0 %v555, 26
      %v724 = vpop.permute.xlu0 %723
      %vm725 = vcmask 211968
      %v726 = vsel %vm725, %v722, %v724
      %v729 = vmul.f32 %v498, %v722
      %v730 = vmul.f32 %v499, %v726
      %s731 = scalar_lea.vmem %s3, 64
      %v732 = vld [vmem:[%s731] sm:$0xff]
      %734 = vset.pattern.permute.xlu0 0
      %735 = vperm.xlu0 %734, %v732
      %v736 = vpop.permute.xlu0 %735
      %v738 = vmul.f32 %v729, %v736
      %v739 = vmul.f32 %v730, %v736
      %742 = vrot.lane.b32.xlu0 %v738, 102
      %v743 = vpop.permute.xlu0 %742
      %744 = vrot.lane.b32.xlu0 %v739, 102
      %v745 = vpop.permute.xlu0 %744
      %vm746 = vcmask 834560
      %v747 = vsel %vm746, %v743, %v745
      %v750 = vadd.f32 %v719, %v747
      %v751 = vadd.f32 %v720, %v745
      %v752 = vld [vmem:[%s4] sm:$0xff]
      %754 = vset.pattern.permute.xlu0 0
      %755 = vperm.xlu0 %754, %v752
      %v756 = vpop.permute.xlu0 %755
      %v758 = vadd.f32 %v750, %v756
      %v759 = vadd.f32 %v751, %v756
      %v760 = vmax.f32 %v758, 0.0
      %v761 = vmax.f32 %v759, 0.0
      %v762 = vmin.f32 %v760, 6.0
      %v763 = vmin.f32 %v761, 6.0
      %v764 = vld [vmem:[%s6] sm:$0x3]
      %v765 = vld [vmem:[%s7] sm:$0x3]
      %767 = vset.pattern.permute.xlu0 0
      %768 = vperm.xlu0 %767, %v765
      %v769 = vpop.permute.xlu0 %768
      %vm771 = vcmask 64512
      %v773 = vsel %vm771, %v764, 0
      %775 = vmatprep.subr.mxu0 %v763
      %776 = vmatpush1.msra.mxu0 %v762
      %777 = vmatprep.subr.mxu0 0.0
      %778 = vmatpush1.msra.mxu0 0.0
      %779 = vmatprep.subr.mxu0 0.0
      %780 = vmatpush1.msra.mxu0 0.0
      %781 = vmatprep.subr.mxu0 0.0
      %782 = vmatpush1.msra.mxu0 0.0
      %783 = vmatprep.subr.mxu0 0.0
      %784 = vmatpush1.msra.mxu0 0.0
      %785 = vmatprep.subr.mxu0 0.0
      %786 = vmatpush1.msra.mxu0 0.0
      %787 = vmatprep.subr.mxu0 0.0
      %788 = vmatpush1.msra.mxu0 0.0
      %789 = vmatprep.subr.mxu0 0.0
      %790 = vmatpush1.msra.mxu0 0.0
      %791 = vmatprep.subr.mxu0 0.0
      %792 = vmatpush1.msra.mxu0 0.0
      %793 = vmatprep.subr.mxu0 0.0
      %794 = vmatpush1.msra.mxu0 0.0
      %795 = vmatprep.subr.mxu0 0.0
      %796 = vmatpush1.msra.mxu0 0.0
      %797 = vmatprep.subr.mxu0 0.0
      %798 = vmatpush1.msra.mxu0 0.0
      %799 = vmatprep.subr.mxu0 0.0
      %800 = vmatpush1.msra.mxu0 0.0
      %801 = vmatprep.subr.mxu0 0.0
      %802 = vmatpush1.msra.mxu0 0.0
      %803 = vmatprep.subr.mxu0 0.0
      %804 = vmatpush1.msra.mxu0 0.0
      %805 = vmatprep.subr.mxu0 0.0
      %806 = vmatpush1.msra.mxu0 0.0
      %807 = vmatprep.subr.mxu0 0.0
      %808 = vmatpush1.msra.mxu0 0.0
      %809 = vmatprep.subr.mxu0 0.0
      %810 = vmatpush1.msra.mxu0 0.0
      %811 = vmatprep.subr.mxu0 0.0
      %812 = vmatpush1.msra.mxu0 0.0
      %813 = vmatprep.subr.mxu0 0.0
      %814 = vmatpush1.msra.mxu0 0.0
      %815 = vmatprep.subr.mxu0 0.0
      %816 = vmatpush1.msra.mxu0 0.0
      %817 = vmatprep.subr.mxu0 0.0
      %818 = vmatpush1.msra.mxu0 0.0
      %819 = vmatprep.subr.mxu0 0.0
      %820 = vmatpush1.msra.mxu0 0.0
      %821 = vmatprep.subr.mxu0 0.0
      %822 = vmatpush1.msra.mxu0 0.0
      %823 = vmatprep.subr.mxu0 0.0
      %824 = vmatpush1.msra.mxu0 0.0
      %825 = vmatprep.subr.mxu0 0.0
      %826 = vmatpush1.msra.mxu0 0.0
      %827 = vmatprep.subr.mxu0 0.0
      %828 = vmatpush1.msra.mxu0 0.0
      %829 = vmatprep.subr.mxu0 0.0
      %830 = vmatpush1.msra.mxu0 0.0
      %831 = vmatprep.subr.mxu0 0.0
      %832 = vmatpush1.msra.mxu0 0.0
      %833 = vmatprep.subr.mxu0 0.0
      %834 = vmatpush1.msra.mxu0 0.0
      %835 = vmatprep.subr.mxu0 0.0
      %836 = vmatpush1.msra.mxu0 0.0
      %837 = vmatprep.subr.mxu0 0.0
      %838 = vmatpush1.msra.mxu0 0.0
      %839 = vmatprep.mubr.f32.mxu0 0.0
      %840 = vmatmul.mubr.f32.gmra.mrb[0].mxu0 %v773
      %v841 = vpop.f32.mrb[0].mxu0
      %v842 = vadd.f32 %v769, %v841
      %v843 = vpop.f32.mrb[0].mxu0
      %v844 = vadd.f32 %v769, %v843
      %845 = vdwg.mxu0
      %v846 = vadd.f32 %v842, %v315
      %v847 = vadd.f32 %v844, %v316
      %v850 = vcombine.low %v846, %v847
      %v852 = vunpack.c.l.s4 1983009808
      %v853 = vunpack.c.0.s8 %v852
      %v854 = vlaneseq
      %v855 = vshrl.u32 %v854, 7
      %v856 = vsub.s32 %v853, %v855
      %v857 = vrot.slane %v850, %v856
      %vm859 = vcmask 125954
      %vm860 = vmor %vm859, %vm319
      %861 = vst.msk [vmem:[%s305] sm:$0xf] %vm860, %v857
      %p862 = scmp.lt.s32.totalorder %s19, 1
      %s863 = scalar_select %p862, %s19, 1
      %s864 = smul.addr %s863, 2
      %s865 = smul.addr %s864, 2
      %s866 = scalar_lea.vmem %s8, %s865
      // Predicated region
      $region53: #{block_mix_forward.22} parent=51 // pred_check
        %p867 = pneg %p210
      $region54: #{block_mix_forward.22} parent=51 // pred_check_branch
        %869 = sbr.rel (%p867) target = $region56
      $region55: #{block_mix_forward.22} parent=51 // pred_region
        _
      $region56: #{block_mix_forward.22} parent=51 // pred_fallthru
        _
    $region52: #{block_mix_forward.22} parent=5 // pred_fallthru
      _
    %p870 = scmp.le.s32.totalorder 2, %s14
    // Predicated region
    $region57: #{block_mix_forward.22} parent=5 // pred_check
      %p871 = pneg %p870
    $region58: #{block_mix_forward.22} parent=5 // pred_check_branch
      %873 = sbr.rel (%p871) target = $region60
    $region59: #{block_mix_forward.22} parent=5 // pred_region
      %s874 = ssub.s32 %s14, 2
      // Predicated region
      $region61: #{block_mix_forward.22} parent=59 // pred_check
        %p875 = pneg %p216
      $region62: #{block_mix_forward.22} parent=59 // pred_check_branch
        %877 = sbr.rel (%p875) target = $region64
      $region63: #{block_mix_forward.22} parent=59 // pred_region
        %p878 = scmp.lt.s32.totalorder %s20, 1
        %s879 = scalar_select %p878, %s20, 1
        %s880 = smul.addr %s879, 2
        %s881 = smul.addr %s880, 2
        %s882 = scalar_lea.vmem %s8, %s881
      $region64: #{block_mix_forward.22} parent=59 // pred_fallthru
        _
    $region60: #{block_mix_forward.22} parent=5 // pred_fallthru
      _
  $region6: #{block_mix_forward.22} parent=0 // loop_footer
    %s18 = sadd.s32 1, %s14
  $region7: #{block_mix_forward.22} parent=0 // loop_footer_branch
    %13 = sbr.rel target = $region3
  $region8: #{block_mix_forward.22} parent=0 // loop_exit
    _

// kernel: block_mix_forward.23
$region0: #{block_mix_forward.23}
  #allocation0 [shape = 'u32[]', space=smem, size = 0x4, offset = 0x4, fixed_abs, tag = 'smem constant byte address 0x4 - core index']
  #allocation1 [shape = 'u32[144,128]{1,0:T(1,128)}', space=vmem, size = 0x12000, scoped, tag = 'internal scratch']
  #allocation2 [shape = 'f32[16,170]{1,0:T(8,128)}', space=vmem, size = 0x4000, scoped, tag = 'scratch operand']
  %s0 = inlined_call_operand.vmem [shape: f32[2,4,144], index: 0, kind: input, shape index: {}]
  %s1 = inlined_call_operand.vmem [shape: f32[16,4], index: 1, kind: input, shape index: {}]
  %s2 = inlined_call_operand.vmem [shape: f32[16,1], index: 2, kind: input, shape index: {}]
  %s3 = inlined_call_operand.vmem [shape: f32[9,16,1], index: 3, kind: input, shape index: {}]
  %s4 = inlined_call_operand.vmem [shape: f32[16,1], index: 4, kind: input, shape index: {}]
  %s5 = inlined_call_operand.vmem [shape: f32[2,144], index: 5, kind: input, shape index: {}]
  %s6 = inlined_call_operand.vmem [shape: f32[4,16], index: 6, kind: input, shape index: {}]
  %s7 = inlined_call_operand.vmem [shape: f32[4,1], index: 7, kind: input, shape index: {}]
  %s8 = inlined_call_operand.vmem [shape: f32[2,4,144], index: 8, kind: output, shape index: {}]
  %s9 = sld [smem:[#allocation0]]
  $region65: #{block_mix_forward.23} parent=0
    _
  %s11 = ssub.s32 1, %s9
  %s12 = scalar_select 0, %s11, %s9
  loop: start=0, step=1, limit=4
  $region2: #{block_mix_forward.23} parent=0 // loop_pre_header
    _
  $region3: #{block_mix_forward.23} parent=0 // loop_header
    %s14 = sphi 0, %s18
    %p15 = scmp.ge.s32.totalorder %s14, 4
    %s24 = sphi 0, %s26
    %s27 = sphi 0, %s24
    %s28 = sphi 0, %s27
    %s44 = sphi 0, %s28
    %s48 = sphi 0, %s48
    %s50 = sphi 0, %s48
    %s51 = sphi 0, %s50
    %s65 = sphi 0, %s51
    %s69 = sphi 0, %s69
    %s71 = sphi 0, %s69
    %s72 = sphi 0, %s71
    %s86 = sphi 0, %s72
    %s90 = sphi 0, %s90
    %s92 = sphi 0, %s90
    %s93 = sphi 0, %s92
    %s107 = sphi 0, %s93
    %s111 = sphi 0, %s111
    %s113 = sphi 0, %s111
    %s114 = sphi 0, %s113
    %s128 = sphi 0, %s114
    %s132 = sphi 0, %s132
    %s134 = sphi 0, %s132
    %s135 = sphi 0, %s134
    %s149 = sphi 0, %s135
    %s153 = sphi 0, %s153
    %s155 = sphi 0, %s153
    %s156 = sphi 0, %s155
    %s170 = sphi 0, %s156
    %s174 = sphi 0, %s174
    %s176 = sphi 0, %s174
    %s177 = sphi 0, %s176
    %s191 = sphi 0, %s177
    %s197 = sphi 0, %s199
    %s200 = sphi 0, %s197
    %s201 = sphi 0, %s200
    %s217 = sphi 0, %s201
  $region4: #{block_mix_forward.23} parent=0 // loop_header_branch
    %17 = sbr.rel (%p15) target = $region8
  $region5: #{block_mix_forward.23} parent=0 // loop_body
    %s19 = ssub.s32 %s14, 1
    %s20 = ssub.s32 %s14, 2
    %s21 = sadd.s32 %s14, 1
    %s22 = ssub.s32 %s14, %s21
    %p23 = scmp.eq.s32.totalorder %s22, 0
    %s25 = sadd.s32 %s24, 1
    %s26 = scalar_select %p23, %s24, %s25
    %p29 = pneg %p23
    %p30 = scmp.eq.s32.totalorder %s14, 1
    %p31 = por %p29, %p30
    %p32 = scmp.ne.s32.totalorder %s24, %s27
    %p33 = scmp.eq.s32.totalorder %s14, 0
    %p34 = por %p32, %p33
    %p35 = scmp.ne.s32.totalorder %s24, %s27
    %p36 = scmp.eq.s32.totalorder %s19, 1
    %p37 = por %p35, %p36
    %p38 = scmp.ne.s32.totalorder %s27, %s28
    %p39 = scmp.eq.s32.totalorder %s19, 0
    %p40 = por %p38, %p39
    %p41 = scmp.ne.s32.totalorder %s27, %s28
    %p42 = scmp.eq.s32.totalorder %s20, 1
    %p43 = por %p41, %p42
    %p45 = scmp.ne.s32.totalorder %s28, %s44
    %p46 = scmp.eq.s32.totalorder %s20, 0
    %p47 = por %p45, %p46
    %s49 = sadd.s32 %s48, 1
    %p52 = scmp.eq.s32.totalorder %s14, 1
    %p53 = scmp.ne.s32.totalorder %s48, %s50
    %p54 = scmp.eq.s32.totalorder %s14, 0
    %p55 = por %p53, %p54
    %p56 = scmp.ne.s32.totalorder %s48, %s50
    %p57 = scmp.eq.s32.totalorder %s19, 1
    %p58 = por %p56, %p57
    %p59 = scmp.ne.s32.totalorder %s50, %s51
    %p60 = scmp.eq.s32.totalorder %s19, 0
    %p61 = por %p59, %p60
    %p62 = scmp.ne.s32.totalorder %s50, %s51
    %p63 = scmp.eq.s32.totalorder %s20, 1
    %p64 = por %p62, %p63
    %p66 = scmp.ne.s32.totalorder %s51, %s65
    %p67 = scmp.eq.s32.totalorder %s20, 0
    %p68 = por %p66, %p67
    %s70 = sadd.s32 %s69, 1
    %p73 = scmp.eq.s32.totalorder %s14, 1
    %p74 = scmp.ne.s32.totalorder %s69, %s71
    %p75 = scmp.eq.s32.totalorder %s14, 0
    %p76 = por %p74, %p75
    %p77 = scmp.ne.s32.totalorder %s69, %s71
    %p78 = scmp.eq.s32.totalorder %s19, 1
    %p79 = por %p77, %p78
    %p80 = scmp.ne.s32.totalorder %s71, %s72
    %p81 = scmp.eq.s32.totalorder %s19, 0
    %p82 = por %p80, %p81
    %p83 = scmp.ne.s32.totalorder %s71, %s72
    %p84 = scmp.eq.s32.totalorder %s20, 1
    %p85 = por %p83, %p84
    %p87 = scmp.ne.s32.totalorder %s72, %s86
    %p88 = scmp.eq.s32.totalorder %s20, 0
    %p89 = por %p87, %p88
    %s91 = sadd.s32 %s90, 1
    %p94 = scmp.eq.s32.totalorder %s14, 1
    %p95 = scmp.ne.s32.totalorder %s90, %s92
    %p96 = scmp.eq.s32.totalorder %s14, 0
    %p97 = por %p95, %p96
    %p98 = scmp.ne.s32.totalorder %s90, %s92
    %p99 = scmp.eq.s32.totalorder %s19, 1
    %p100 = por %p98, %p99
    %p101 = scmp.ne.s32.totalorder %s92, %s93
    %p102 = scmp.eq.s32.totalorder %s19, 0
    %p103 = por %p101, %p102
    %p104 = scmp.ne.s32.totalorder %s92, %s93
    %p105 = scmp.eq.s32.totalorder %s20, 1
    %p106 = por %p104, %p105
    %p108 = scmp.ne.s32.totalorder %s93, %s107
    %p109 = scmp.eq.s32.totalorder %s20, 0
    %p110 = por %p108, %p109
    %s112 = sadd.s32 %s111, 1
    %p115 = scmp.eq.s32.totalorder %s14, 1
    %p116 = scmp.ne.s32.totalorder %s111, %s113
    %p117 = scmp.eq.s32.totalorder %s14, 0
    %p118 = por %p116, %p117
    %p119 = scmp.ne.s32.totalorder %s111, %s113
    %p120 = scmp.eq.s32.totalorder %s19, 1
    %p121 = por %p119, %p120
    %p122 = scmp.ne.s32.totalorder %s113, %s114
    %p123 = scmp.eq.s32.totalorder %s19, 0
    %p124 = por %p122, %p123
    %p125 = scmp.ne.s32.totalorder %s113, %s114
    %p126 = scmp.eq.s32.totalorder %s20, 1
    %p127 = por %p125, %p126
    %p129 = scmp.ne.s32.totalorder %s114, %s128
    %p130 = scmp.eq.s32.totalorder %s20, 0
    %p131 = por %p129, %p130
    %s133 = sadd.s32 %s132, 1
    %p136 = scmp.eq.s32.totalorder %s14, 1
    %p137 = scmp.ne.s32.totalorder %s132, %s134
    %p138 = scmp.eq.s32.totalorder %s14, 0
    %p139 = por %p137, %p138
    %p140 = scmp.ne.s32.totalorder %s132, %s134
    %p141 = scmp.eq.s32.totalorder %s19, 1
    %p142 = por %p140, %p141
    %p143 = scmp.ne.s32.totalorder %s134, %s135
    %p144 = scmp.eq.s32.totalorder %s19, 0
    %p145 = por %p143, %p144
    %p146 = scmp.ne.s32.totalorder %s134, %s135
    %p147 = scmp.eq.s32.totalorder %s20, 1
    %p148 = por %p146, %p147
    %p150 = scmp.ne.s32.totalorder %s135, %s149
    %p151 = scmp.eq.s32.totalorder %s20, 0
    %p152 = por %p150, %p151
    %s154 = sadd.s32 %s153, 1
    %p157 = scmp.eq.s32.totalorder %s14, 1
    %p158 = scmp.ne.s32.totalorder %s153, %s155
    %p159 = scmp.eq.s32.totalorder %s14, 0
    %p160 = por %p158, %p159
    %p161 = scmp.ne.s32.totalorder %s153, %s155
    %p162 = scmp.eq.s32.totalorder %s19, 1
    %p163 = por %p161, %p162
    %p164 = scmp.ne.s32.totalorder %s155, %s156
    %p165 = scmp.eq.s32.totalorder %s19, 0
    %p166 = por %p164, %p165
    %p167 = scmp.ne.s32.totalorder %s155, %s156
    %p168 = scmp.eq.s32.totalorder %s20, 1
    %p169 = por %p167, %p168
    %p171 = scmp.ne.s32.totalorder %s156, %s170
    %p172 = scmp.eq.s32.totalorder %s20, 0
    %p173 = por %p171, %p172
    %s175 = sadd.s32 %s174, 1
    %p178 = scmp.eq.s32.totalorder %s14, 1
    %p179 = scmp.ne.s32.totalorder %s174, %s176
    %p180 = scmp.eq.s32.totalorder %s14, 0
    %p181 = por %p179, %p180
    %p182 = scmp.ne.s32.totalorder %s174, %s176
    %p183 = scmp.eq.s32.totalorder %s19, 1
    %p184 = por %p182, %p183
    %p185 = scmp.ne.s32.totalorder %s176, %s177
    %p186 = scmp.eq.s32.totalorder %s19, 0
    %p187 = por %p185, %p186
    %p188 = scmp.ne.s32.totalorder %s176, %s177
    %p189 = scmp.eq.s32.totalorder %s20, 1
    %p190 = por %p188, %p189
    %p192 = scmp.ne.s32.totalorder %s177, %s191
    %p193 = scmp.eq.s32.totalorder %s20, 0
    %p194 = por %p192, %p193
    %s195 = ssub.s32 %s14, %s21
    %p196 = scmp.eq.s32.totalorder %s195, 0
    %s198 = sadd.s32 %s197, 1
    %s199 = scalar_select %p196, %s197, %s198
    %p202 = pneg %p196
    %p203 = scmp.eq.s32.totalorder %s14, 1
    %p204 = por %p202, %p203
    %p205 = scmp.ne.s32.totalorder %s197, %s200
    %p206 = scmp.eq.s32.totalorder %s14, 0
    %p207 = por %p205, %p206
    %p208 = scmp.ne.s32.totalorder %s197, %s200
    %p209 = scmp.eq.s32.totalorder %s19, 1
    %p210 = por %p208, %p209
    %p211 = scmp.ne.s32.totalorder %s200, %s201
    %p212 = scmp.eq.s32.totalorder %s19, 0
    %p213 = por %p211, %p212
    %p214 = scmp.ne.s32.totalorder %s200, %s201
    %p215 = scmp.eq.s32.totalorder %s20, 1
    %p216 = por %p214, %p215
    %p218 = scmp.ne.s32.totalorder %s201, %s217
    %p219 = scmp.eq.s32.totalorder %s20, 0
    %p220 = por %p218, %p219
    %p221 = scmp.le.s32.totalorder 1, %s14
    %p222 = scmp.lt.s32.totalorder %s14, 3
    %p223 = pnand %p221, %p222
    %p224 = pneg %p223
    // Predicated region
    $region9: #{block_mix_forward.23} parent=5 // pred_check
      _
    $region10: #{block_mix_forward.23} parent=5 // pred_check_branch
      %226 = sbr.rel (%p223) target = $region12
    $region11: #{block_mix_forward.23} parent=5 // pred_region
      %s227 = ssub.s32 %s14, 1
      // Predicated region
      $region13: #{block_mix_forward.23} parent=11 // pred_check
        %p228 = pneg %p61
      $region14: #{block_mix_forward.23} parent=11 // pred_check_branch
        %230 = sbr.rel (%p228) target = $region16
      $region15: #{block_mix_forward.23} parent=11 // pred_region
        _
      $region16: #{block_mix_forward.23} parent=11 // pred_fallthru
        _
      // Predicated region
      $region17: #{block_mix_forward.23} parent=11 // pred_check
        %p231 = pneg %p82
      $region18: #{block_mix_forward.23} parent=11 // pred_check_branch
        %233 = sbr.rel (%p231) target = $region20
      $region19: #{block_mix_forward.23} parent=11 // pred_region
        _
      $region20: #{block_mix_forward.23} parent=11 // pred_fallthru
        _
      // Predicated region
      $region21: #{block_mix_forward.23} parent=11 // pred_check
        %p234 = pneg %p103
      $region22: #{block_mix_forward.23} parent=11 // pred_check_branch
        %236 = sbr.rel (%p234) target = $region24
      $region23: #{block_mix_forward.23} parent=11 // pred_region
        _
      $region24: #{block_mix_forward.23} parent=11 // pred_fallthru
        _
      // Predicated region
      $region25: #{block_mix_forward.23} parent=11 // pred_check
        %p237 = pneg %p124
      $region26: #{block_mix_forward.23} parent=11 // pred_check_branch
        %239 = sbr.rel (%p237) target = $region28
      $region27: #{block_mix_forward.23} parent=11 // pred_region
        _
      $region28: #{block_mix_forward.23} parent=11 // pred_fallthru
        _
      // Predicated region
      $region29: #{block_mix_forward.23} parent=11 // pred_check
        %p240 = pneg %p145
      $region30: #{block_mix_forward.23} parent=11 // pred_check_branch
        %242 = sbr.rel (%p240) target = $region32
      $region31: #{block_mix_forward.23} parent=11 // pred_region
        _
      $region32: #{block_mix_forward.23} parent=11 // pred_fallthru
        _
      // Predicated region
      $region33: #{block_mix_forward.23} parent=11 // pred_check
        %p243 = pneg %p166
      $region34: #{block_mix_forward.23} parent=11 // pred_check_branch
        %245 = sbr.rel (%p243) target = $region36
      $region35: #{block_mix_forward.23} parent=11 // pred_region
        _
      $region36: #{block_mix_forward.23} parent=11 // pred_fallthru
        _
      // Predicated region
      $region37: #{block_mix_forward.23} parent=11 // pred_check
        %p246 = pneg %p187
      $region38: #{block_mix_forward.23} parent=11 // pred_check_branch
        %248 = sbr.rel (%p246) target = $region40
      $region39: #{block_mix_forward.23} parent=11 // pred_region
        _
      $region40: #{block_mix_forward.23} parent=11 // pred_fallthru
        _
    $region12: #{block_mix_forward.23} parent=5 // pred_fallthru
      _
    %p249 = scmp.lt.s32.totalorder %s14, 2
    // Predicated region
    $region41: #{block_mix_forward.23} parent=5 // pred_check
      %p250 = pneg %p249
    $region42: #{block_mix_forward.23} parent=5 // pred_check_branch
      %252 = sbr.rel (%p250) target = $region44
    $region43: #{block_mix_forward.23} parent=5 // pred_region
      // Predicated region
      $region45: #{block_mix_forward.23} parent=43 // pred_check
        %p253 = pneg %p34
      $region46: #{block_mix_forward.23} parent=43 // pred_check_branch
        %255 = sbr.rel (%p253) target = $region48
      $region47: #{block_mix_forward.23} parent=43 // pred_region
        %p256 = scmp.lt.s32.totalorder %s14, 1
        %s257 = scalar_select %p256, %s14, 1
        %s258 = smul.addr %s257, 2
        %s259 = smul.addr %s258, 4
        %s260 = scalar_lea.vmem %s0, %s259
      $region48: #{block_mix_forward.23} parent=43 // pred_fallthru
        _
    $region44: #{block_mix_forward.23} parent=5 // pred_fallthru
      _
    %p261 = scmp.le.s32.totalorder 1, %s14
    %p262 = scmp.lt.s32.totalorder %s14, 3
    %p263 = pnand %p261, %p262
    %p264 = pneg %p263
    // Predicated region
    $region49: #{block_mix_forward.23} parent=5 // pred_check
      _
    $region50: #{block_mix_forward.23} parent=5 // pred_check_branch
      %266 = sbr.rel (%p263) target = $region52
    $region51: #{block_mix_forward.23} parent=5 // pred_region
      %s267 = ssub.s32 %s14, 1
      %p268 = scmp.lt.s32.totalorder %s19, 1
      %s269 = scalar_select %p268, %s19, 1
      %s270 = smul.addr %s269, 2
      %s271 = smul.addr %s270, 4
      %s272 = scalar_lea.vmem %s0, %s271
      %p273 = pneg %p40
      %p274 = pneg %p37
      %p275 = pneg %p61
      %p276 = pneg %p58
      %p277 = pneg %p82
      %p278 = pneg %p79
      %p279 = pneg %p103
      %p280 = pneg %p100
      %p281 = pneg %p124
      %p282 = pneg %p121
      %p283 = pneg %p145
      %p284 = pneg %p142
      %p285 = pneg %p166
      %p286 = pneg %p163
      %p287 = pneg %p187
      %p288 = pneg %p184
      %p289 = pneg %p213
      %p290 = pneg %p210
      %p291 = scmp.lt.s32.totalorder %s19, 1
      %s292 = scalar_select %p291, %s19, 1
      %s293 = smul.addr %s292, 2
      %s294 = smul.addr %s293, 4
      %s295 = scalar_lea.vmem %s8, %s294
      %p296 = scmp.lt.s32.totalorder %s19, 1
      %s297 = scalar_select %p296, %s19, 1
      %s298 = smul.addr %s297, 2
      %s299 = smul.addr %s298, 4
      %s300 = scalar_lea.vmem %s0, %s299
      %p301 = scmp.lt.s32.totalorder %s19, 1
      %s302 = scalar_select %p301, %s19, 1
      %s303 = smul.addr %s302, 2
      %s304 = smul.addr %s303, 4
      %s305 = scalar_lea.vmem %s8, %s304
      %v306 = vld [vmem:[%s300] sm:$0xff]
      %v307 = vld [vmem:[%s1] sm:$0xff]
      %v308 = vld [vmem:[%s1 + $0x8] sm:$0xff]
      %v310 = vcombine.high %v306, %v306
      %vm312 = vcmask 1043456
      %v313 = vsel %vm312, %v306, 0.0
      %vm314 = vcmask 125952
      %v315 = vsel %vm314, %v310, 0.0
      %v316 = vadd.f32 %v313, %v315
      %317 = vadd.xlane.f32.xlu0 %v316
      %v318 = vpop.xlane.xlu0 %317
      %v319 = vrcp.pop 144.0
      %v320 = vmul.f32 %v318, %v319
      %v323 = vunpack.c.l.s4 839922192
      %v324 = vunpack.c.0.s8 %v323
      %v325 = vlaneseq
      %v326 = vshrl.u32 %v325, 7
      %v327 = vsub.s32 %v324, %v326
      %v328 = vrot.slane %v320, %v327
      %v330 = vsub.f32 %v306, %v328
      %v331 = vmul.f32 %v330, %v330
      %v333 = vcombine.high %v331, %v331
      %v335 = vsel %vm312, %v331, 0.0
      %v336 = vsel %vm314, %v333, 0.0
      %v337 = vadd.f32 %v335, %v336
      %338 = vadd.xlane.f32.xlu0 %v337
      %v339 = vpop.xlane.xlu0 %338
      %v340 = vmul.f32 %v339, %v319
      %v341 = vadd.f32 %v340, 1e-05
      %v342 = vrsqrt.pop %v341
      %v345 = vunpack.c.l.s4 839922192
      %v346 = vunpack.c.0.s8 %v345
      %v347 = vlaneseq
      %v348 = vshrl.u32 %v347, 7
      %v349 = vsub.s32 %v346, %v348
      %v350 = vrot.slane %v342, %v349
      %v352 = vmul.f32 %v330, %v350
      %v353 = vld [vmem:[%s2] sm:$0xff]
      %v354 = vld [vmem:[%s2 + $0x8] sm:$0xff]
      %356 = vset.pattern.permute.xlu0 0
      %357 = vperm.xlu0 %356, %v353
      %v358 = vpop.permute.xlu0 %357
      %361 = vset.pattern.permute.xlu0 0
      %362 = vperm.xlu0 %361, %v354
      %v363 = vpop.permute.xlu0 %362
      %v366 = vcombine.high %v352, %v352
      %vm367 = vcmask 31744
      %v369 = vsel %vm367, %v307, 0
      %v372 = vsel %vm367, %v308, 0
      %v374 = vsel %vm312, %v352, 0
      %v376 = vsel %vm312, %v366, 0
      %378 = vmatprep.subr.mxu0 %v376
      %379 = vmatpush1.msra.mxu0 %v374
      %380 = vmatprep.subr.mxu0 0.0
      %381 = vmatpush1.msra.mxu0 0.0
      %382 = vmatprep.subr.mxu0 0.0
      %383 = vmatpush1.msra.mxu0 0.0
      %384 = vmatprep.subr.mxu0 0.0
      %385 = vmatpush1.msra.mxu0 0.0
      %386 = vmatprep.subr.mxu0 0.0
      %387 = vmatpush1.msra.mxu0 0.0
      %388 = vmatprep.subr.mxu0 0.0
      %389 = vmatpush1.msra.mxu0 0.0
      %390 = vmatprep.subr.mxu0 0.0
      %391 = vmatpush1.msra.mxu0 0.0
      %392 = vmatprep.subr.mxu0 0.0
      %393 = vmatpush1.msra.mxu0 0.0
      %394 = vmatprep.subr.mxu0 0.0
      %395 = vmatpush1.msra.mxu0 0.0
      %396 = vmatprep.subr.mxu0 0.0
      %397 = vmatpush1.msra.mxu0 0.0
      %398 = vmatprep.subr.mxu0 0.0
      %399 = vmatpush1.msra.mxu0 0.0
      %400 = vmatprep.subr.mxu0 0.0
      %401 = vmatpush1.msra.mxu0 0.0
      %402 = vmatprep.subr.mxu0 0.0
      %403 = vmatpush1.msra.mxu0 0.0
      %404 = vmatprep.subr.mxu0 0.0
      %405 = vmatpush1.msra.mxu0 0.0
      %406 = vmatprep.subr.mxu0 0.0
      %407 = vmatpush1.msra.mxu0 0.0
      %408 = vmatprep.subr.mxu0 0.0
      %409 = vmatpush1.msra.mxu0 0.0
      %410 = vmatprep.subr.mxu0 0.0
      %411 = vmatpush1.msra.mxu0 0.0
      %412 = vmatprep.subr.mxu0 0.0
      %413 = vmatpush1.msra.mxu0 0.0
      %414 = vmatprep.subr.mxu0 0.0
      %415 = vmatpush1.msra.mxu0 0.0
      %416 = vmatprep.subr.mxu0 0.0
      %417 = vmatpush1.msra.mxu0 0.0
      %418 = vmatprep.subr.mxu0 0.0
      %419 = vmatpush1.msra.mxu0 0.0
      %420 = vmatprep.subr.mxu0 0.0
      %421 = vmatpush1.msra.mxu0 0.0
      %422 = vmatprep.subr.mxu0 0.0
      %423 = vmatpush1.msra.mxu0 0.0
      %424 = vmatprep.subr.mxu0 0.0
      %425 = vmatpush1.msra.mxu0 0.0
      %426 = vmatprep.subr.mxu0 0.0
      %427 = vmatpush1.msra.mxu0 0.0
      %428 = vmatprep.subr.mxu0 0.0
      %429 = vmatpush1.msra.mxu0 0.0
      %430 = vmatprep.subr.mxu0 0.0
      %431 = vmatpush1.msra.mxu0 0.0
      %432 = vmatprep.subr.mxu0 0.0
      %433 = vmatpush1.msra.mxu0 0.0
      %434 = vmatprep.subr.mxu0 0.0
      %435 = vmatpush1.msra.mxu0 0.0
      %436 = vmatprep.subr.mxu0 0.0
      %437 = vmatpush1.msra.mxu0 0.0
      %438 = vmatprep.subr.mxu0 0.0
      %439 = vmatpush1.msra.mxu0 0.0
      %440 = vmatprep.subr.mxu0 0.0
      %441 = vmatpush1.msra.mxu0 0.0
      %442 = vmatprep.mubr.f32.mxu0 0.0
      %443 = vmatmul.mubr.f32.gmra.mrb[0].mxu0 %v369
      %v444 = vpop.f32.mrb[0].mxu0
      %v445 = vadd.f32 %v358, %v444
      %v446 = vpop.f32.mrb[0].mxu0
      %v447 = vadd.f32 %v358, %v446
      %448 = vmatprep.mubr.f32.mxu0 0.0
      %449 = vmatmul.mubr.f32.gmra.mrb[0].mxu0 %v372
      %v450 = vpop.f32.mrb[0].mxu0
      %v451 = vadd.f32 %v363, %v450
      %v452 = vpop.f32.mrb[0].mxu0
      %v453 = vadd.f32 %v363, %v452
      %454 = vdwg.mxu0
      %vm455 = vcmask 130048
      %v456 = vsel %vm455, %v447, 0.0
      %v457 = vadd.f32 %v445, %v456
      %458 = vadd.xlane.f32.xlu0 %v457
      %v459 = vpop.xlane.xlu0 %458
      %v460 = vsel %vm455, %v453, 0.0
      %v461 = vadd.f32 %v451, %v460
      %462 = vadd.xlane.f32.xlu0 %v461
      %v463 = vpop.xlane.xlu0 %462
      %v464 = vmul.f32 %v459, %v319
      %v465 = vmul.f32 %v463, %v319
      %v466 = vsub.f32 %v445, %v464
      %v467 = vsub.f32 %v447, %v464
      %v468 = vsub.f32 %v451, %v465
      %v469 = vsub.f32 %v453, %v465
      %v470 = vmul.f32 %v466, %v466
      %v471 = vmul.f32 %v467, %v467
      %v472 = vmul.f32 %v468, %v468
      %v473 = vmul.f32 %v469, %v469
      %v474 = vsel %vm455, %v471, 0.0
      %v475 = vadd.f32 %v470, %v474
      %476 = vadd.xlane.f32.xlu0 %v475
      %v477 = vpop.xlane.xlu0 %476
      %v478 = vsel %vm455, %v473, 0.0
      %v479 = vadd.f32 %v472, %v478
      %480 = vadd.xlane.f32.xlu0 %v479
      %v481 = vpop.xlane.xlu0 %480
      %v482 = vmul.f32 %v477, %v319
      %v483 = vmul.f32 %v481, %v319
      %v484 = vadd.f32 %v482, 1e-05
      %v485 = vadd.f32 %v483, 1e-05
      %v486 = vrsqrt.pop %v484
      %v487 = vrsqrt.pop %v485
      %v488 = vmul.f32 %v466, %v486
      %v489 = vmul.f32 %v467, %v486
      %v490 = vmul.f32 %v468, %v487
      %v491 = vmul.f32 %v469, %v487
      %492 = vst [vmem:[#allocation2] sm:$0xff] 0.0
      %vm493 = vcmask 343040
      %494 = vst.msk [vmem:[#allocation2 + $0x8] sm:$0xff] %vm493, 0.0
      %495 = vst [vmem:[#allocation2 + $0x10] sm:$0xff] 0.0
      %496 = vst.msk [vmem:[#allocation2 + $0x18] sm:$0xff] %vm493, 0.0
      %501 = vrot.lane.b32.xlu0 %v488, 13
      %v502 = vpop.permute.xlu0 %501
      %503 = vrot.lane.b32.xlu0 %v489, 13
      %v504 = vpop.permute.xlu0 %503
      %505 = vrot.lane.b32.xlu0 %v490, 13
      %v506 = vpop.permute.xlu0 %505
      %507 = vrot.lane.b32.xlu0 %v491, 13
      %v508 = vpop.permute.xlu0 %507
      %vm509 = vcmask 105472
      %v510 = vsel %vm509, %v502, %v504
      %v511 = vsel %vm509, %v506, %v508
      %vm516 = vcmask 1047656
      %517 = vst.msk [vmem:[#allocation2] sm:$0xff] %vm516, %v502
      %vm518 = vcmask 236544
      %519 = vst.msk [vmem:[#allocation2 + $0x8] sm:$0xff] %vm518, %v510
      %520 = vst.msk [vmem:[#allocation2 + $0x10] sm:$0xff] %vm516, %v506
      %521 = vst.msk [vmem:[#allocation2 + $0x18] sm:$0xff] %vm518, %v511
      %v522 = vld [vmem:[#allocation2] sm:$0xff]
      %v523 = vld [vmem:[#allocation2 + $0x8] sm:$0xff]
      %v524 = vld [vmem:[#allocation2 + $0x10] sm:$0xff]
      %v525 = vld [vmem:[#allocation2 + $0x18] sm:$0xff]
      %v526 = vld [vmem:[%s5] ss:$2 sm:$0x3]
      %v528 = vlaneseq
      %v529 = vshrl.u32 %v528, 7
      %v530 = vsub.s32 0, %v529
      %v531 = vrot.slane %v526, %v530
      %v532 = vlaneseq
      %v533 = vshrl.u32 %v532, 7
      %v534 = vsub.s32 1, %v533
      %v535 = vrot.slane %v526, %v534
      %v538 = vmul.f32 %v522, %v531
      %v539 = vmul.f32 %v523, %v535
      %v540 = vmul.f32 %v524, %v531
      %v541 = vmul.f32 %v525, %v535
      %v542 = vld [vmem:[%s3] sm:$0xff]
      %v543 = vld [vmem:[%s3 + $0x8] sm:$0xff]
      %545 = vset.pattern.permute.xlu0 0
      %546 = vperm.xlu0 %545, %v542
      %v547 = vpop.permute.xlu0 %546
      %550 = vset.pattern.permute.xlu0 0
      %551 = vperm.xlu0 %550, %v543
      %v552 = vpop.permute.xlu0 %551
      %v554 = vmul.f32 %v538, %v547
      %v555 = vmul.f32 %v539, %v547
      %v556 = vmul.f32 %v540, %v552
      %v557 = vmul.f32 %v541, %v552
      %v558 = vadd.f32 %v554, 0.0
      %v559 = vadd.f32 %v555, 0.0
      %v560 = vadd.f32 %v556, 0.0
      %v561 = vadd.f32 %v557, 0.0
      %s562 = scalar_lea.vmem %s3, 16
      %v563 = vld [vmem:[%s562] sm:$0xff]
      %v564 = vld [vmem:[%s562 + $0x8] sm:$0xff]
      %566 = vset.pattern.permute.xlu0 0
      %567 = vperm.xlu0 %566, %v563
      %v568 = vpop.permute.xlu0 %567
      %571 = vset.pattern.permute.xlu0 0
      %572 = vperm.xlu0 %571, %v564
      %v573 = vpop.permute.xlu0 %572
      %v575 = vmul.f32 %v522, %v568
      %v576 = vmul.f32 %v523, %v568
      %v577 = vmul.f32 %v524, %v573
      %v578 = vmul.f32 %v525, %v573
      %583 = vrot.lane.b32.xlu0 %v575, 127
      %v584 = vpop.permute.xlu0 %583
      %585 = vrot.lane.b32.xlu0 %v576, 127
      %v586 = vpop.permute.xlu0 %585
      %587 = vrot.lane.b32.xlu0 %v577, 127
      %v588 = vpop.permute.xlu0 %587
      %589 = vrot.lane.b32.xlu0 %v578, 127
      %v590 = vpop.permute.xlu0 %589
      %vm591 = vcmask 1039360
      %v592 = vsel %vm591, %v584, %v586
      %v593 = vsel %vm591, %v588, %v590
      %v598 = vadd.f32 %v558, %v592
      %v599 = vadd.f32 %v559, %v586
      %v600 = vadd.f32 %v560, %v593
      %v601 = vadd.f32 %v561, %v590
      %s602 = scalar_lea.vmem %s5, 1
      %v603 = vld [vmem:[%s602] ss:$2 sm:$0x3]
      %v605 = vlaneseq
      %v606 = vshrl.u32 %v605, 7
      %v607 = vsub.s32 0, %v606
      %v608 = vrot.slane %v603, %v607
      %v609 = vlaneseq
      %v610 = vshrl.u32 %v609, 7
      %v611 = vsub.s32 1, %v610
      %v612 = vrot.slane %v603, %v611
      %613 = vrot.lane.b32.xlu0 %v608, 2
      %v614 = vpop.permute.xlu0 %613
      %615 = vrot.lane.b32.xlu0 %v612, 2
      %v616 = vpop.permute.xlu0 %615
      %vm617 = vcmask 15360
      %v618 = vsel %vm617, %v614, %v616
      %v621 = vmul.f32 %v522, %v614
      %v622 = vmul.f32 %v523, %v618
      %v623 = vmul.f32 %v524, %v614
      %v624 = vmul.f32 %v525, %v618
      %s625 = scalar_lea.vmem %s3, 32
      %v626 = vld [vmem:[%s625] sm:$0xff]
      %v627 = vld [vmem:[%s625 + $0x8] sm:$0xff]
      %629 = vset.pattern.permute.xlu0 0
      %630 = vperm.xlu0 %629, %v626
      %v631 = vpop.permute.xlu0 %630
      %634 = vset.pattern.permute.xlu0 0
      %635 = vperm.xlu0 %634, %v627
      %v636 = vpop.permute.xlu0 %635
      %v638 = vmul.f32 %v621, %v631
      %v639 = vmul.f32 %v622, %v631
      %v640 = vmul.f32 %v623, %v636
      %v641 = vmul.f32 %v624, %v636
      %646 = vrot.lane.b32.xlu0 %v638, 126
      %v647 = vpop.permute.xlu0 %646
      %648 = vrot.lane.b32.xlu0 %v639, 126
      %v649 = vpop.permute.xlu0 %648
      %650 = vrot.lane.b32.xlu0 %v640, 126
      %v651 = vpop.permute.xlu0 %650
      %652 = vrot.lane.b32.xlu0 %v641, 126
      %v653 = vpop.permute.xlu0 %652
      %vm654 = vcmask 1031168
      %v655 = vsel %vm654, %v647, %v649
      %v656 = vsel %vm654, %v651, %v653
      %v661 = vadd.f32 %v598, %v655
      %v662 = vadd.f32 %v599, %v649
      %v663 = vadd.f32 %v600, %v656
      %v664 = vadd.f32 %v601, %v653
      %665 = vrot.lane.b32.xlu0 %v531, 12
      %v666 = vpop.permute.xlu0 %665
      %667 = vrot.lane.b32.xlu0 %v535, 12
      %v668 = vpop.permute.xlu0 %667
      %vm669 = vcmask 97280
      %v670 = vsel %vm669, %v666, %v668
      %v673 = vmul.f32 %v522, %v666
      %v674 = vmul.f32 %v523, %v670
      %v675 = vmul.f32 %v524, %v666
      %v676 = vmul.f32 %v525, %v670
      %s677 = scalar_lea.vmem %s3, 48
      %v678 = vld [vmem:[%s677] sm:$0xff]
      %v679 = vld [vmem:[%s677 + $0x8] sm:$0xff]
      %681 = vset.pattern.permute.xlu0 0
      %682 = vperm.xlu0 %681, %v678
      %v683 = vpop.permute.xlu0 %682
      %686 = vset.pattern.permute.xlu0 0
      %687 = vperm.xlu0 %686, %v679
      %v688 = vpop.permute.xlu0 %687
      %v690 = vmul.f32 %v673, %v683
      %v691 = vmul.f32 %v674, %v683
      %v692 = vmul.f32 %v675, %v688
      %v693 = vmul.f32 %v676, %v688
      %698 = vrot.lane.b32.xlu0 %v690, 116
      %v699 = vpop.permute.xlu0 %698
      %700 = vrot.lane.b32.xlu0 %v691, 116
      %v701 = vpop.permute.xlu0 %700
      %702 = vrot.lane.b32.xlu0 %v692, 116
      %v703 = vpop.permute.xlu0 %702
      %704 = vrot.lane.b32.xlu0 %v693, 116
      %v705 = vpop.permute.xlu0 %704
      %vm706 = vcmask 949248
      %v707 = vsel %vm706, %v699, %v701
      %v708 = vsel %vm706, %v703, %v705
      %v713 = vadd.f32 %v661, %v707
      %v714 = vadd.f32 %v662, %v701
      %v715 = vadd.f32 %v663, %v708
      %v716 = vadd.f32 %v664, %v705
      %s717 = scalar_lea.vmem %s3, 64
      %v718 = vld [vmem:[%s717] sm:$0xff]
      %v719 = vld [vmem:[%s717 + $0x8] sm:$0xff]
      %721 = vset.pattern.permute.xlu0 0
      %722 = vperm.xlu0 %721, %v718
      %v723 = vpop.permute.xlu0 %722
      %726 = vset.pattern.permute.xlu0 0
      %727 = vperm.xlu0 %726, %v719
      %v728 = vpop.permute.xlu0 %727
      %v730 = vmul.f32 %v522, %v723
      %v731 = vmul.f32 %v523, %v723
      %v732 = vmul.f32 %v524, %v728
      %v733 = vmul.f32 %v525, %v728
      %738 = vrot.lane.b32.xlu0 %v730, 115
      %v739 = vpop.permute.xlu0 %738
      %740 = vrot.lane.b32.xlu0 %v731, 115
      %v741 = vpop.permute.xlu0 %740
      %742 = vrot.lane.b32.xlu0 %v732, 115
      %v743 = vpop.permute.xlu0 %742
      %744 = vrot.lane.b32.xlu0 %v733, 115
      %v745 = vpop.permute.xlu0 %744
      %vm746 = vcmask 941056
      %v747 = vsel %vm746, %v739, %v741
      %v748 = vsel %vm746, %v743, %v745
      %v753 = vadd.f32 %v713, %v747
      %v754 = vadd.f32 %v714, %v741
      %v755 = vadd.f32 %v715, %v748
      %v756 = vadd.f32 %v716, %v745
      %757 = vrot.lane.b32.xlu0 %v608, 14
      %v758 = vpop.permute.xlu0 %757
      %759 = vrot.lane.b32.xlu0 %v612, 14
      %v760 = vpop.permute.xlu0 %759
      %vm761 = vcmask 113664
      %v762 = vsel %vm761, %v758, %v760
      %v765 = vmul.f32 %v522, %v758
      %v766 = vmul.f32 %v523, %v762
      %v767 = vmul.f32 %v524, %v758
      %v768 = vmul.f32 %v525, %v762
      %s769 = scalar_lea.vmem %s3, 80
      %v770 = vld [vmem:[%s769] sm:$0xff]
      %v771 = vld [vmem:[%s769 + $0x8] sm:$0xff]
      %773 = vset.pattern.permute.xlu0 0
      %774 = vperm.xlu0 %773, %v770
      %v775 = vpop.permute.xlu0 %774
      %778 = vset.pattern.permute.xlu0 0
      %779 = vperm.xlu0 %778, %v771
      %v780 = vpop.permute.xlu0 %779
      %v782 = vmul.f32 %v765, %v775
      %v783 = vmul.f32 %v766, %v775
      %v784 = vmul.f32 %v767, %v780
      %v785 = vmul.f32 %v768, %v780
      %790 = vrot.lane.b32.xlu0 %v782, 114
      %v791 = vpop.permute.xlu0 %790
      %792 = vrot.lane.b32.xlu0 %v783, 114
      %v793 = vpop.permute.xlu0 %792
      %794 = vrot.lane.b32.xlu0 %v784, 114
      %v795 = vpop.permute.xlu0 %794
      %796 = vrot.lane.b32.xlu0 %v785, 114
      %v797 = vpop.permute.xlu0 %796
      %vm798 = vcmask 932864
      %v799 = vsel %vm798, %v791, %v793
      %v800 = vsel %vm798, %v795, %v797
      %v805 = vadd.f32 %v753, %v799
      %v806 = vadd.f32 %v754, %v793
      %v807 = vadd.f32 %v755, %v800
      %v808 = vadd.f32 %v756, %v797
      %809 = vrot.lane.b32.xlu0 %v531, 24
      %v810 = vpop.permute.xlu0 %809
      %811 = vrot.lane.b32.xlu0 %v535, 24
      %v812 = vpop.permute.xlu0 %811
      %vm813 = vcmask 195584
      %v814 = vsel %vm813, %v810, %v812
      %v817 = vmul.f32 %v522, %v810
      %v818 = vmul.f32 %v523, %v814
      %v819 = vmul.f32 %v524, %v810
      %v820 = vmul.f32 %v525, %v814
      %s821 = scalar_lea.vmem %s3, 96
      %v822 = vld [vmem:[%s821] sm:$0xff]
      %v823 = vld [vmem:[%s821 + $0x8] sm:$0xff]
      %825 = vset.pattern.permute.xlu0 0
      %826 = vperm.xlu0 %825, %v822
      %v827 = vpop.permute.xlu0 %826
      %830 = vset.pattern.permute.xlu0 0
      %831 = vperm.xlu0 %830, %v823
      %v832 = vpop.permute.xlu0 %831
      %v834 = vmul.f32 %v817, %v827
      %v835 = vmul.f32 %v818, %v827
      %v836 = vmul.f32 %v819, %v832
      %v837 = vmul.f32 %v820, %v832
      %842 = vrot.lane.b32.xlu0 %v834, 104
      %v843 = vpop.permute.xlu0 %842
      %844 = vrot.lane.b32.xlu0 %v835, 104
      %v845 = vpop.permute.xlu0 %844
      %846 = vrot.lane.b32.xlu0 %v836, 104
      %v847 = vpop.permute.xlu0 %846
      %848 = vrot.lane.b32.xlu0 %v837, 104
      %v849 = vpop.permute.xlu0 %848
      %vm850 = vcmask 850944
      %v851 = vsel %vm850, %v843, %v845
      %v852 = vsel %vm850, %v847, %v849
      %v857 = vadd.f32 %v805, %v851
      %v858 = vadd.f32 %v806, %v845
      %v859 = vadd.f32 %v807, %v852
      %v860 = vadd.f32 %v808, %v849
      %s861 = scalar_lea.vmem %s3, 112
      %v862 = vld [vmem:[%s861] sm:$0xff]
      %v863 = vld [vmem:[%s861 + $0x8] sm:$0xff]
      %865 = vset.pattern.permute.xlu0 0
      %866 = vperm.xlu0 %865, %v862
      %v867 = vpop.permute.xlu0 %866
      %870 = vset.pattern.permute.xlu0 0
      %871 = vperm.xlu0 %870, %v863
      %v872 = vpop.permute.xlu0 %871
      %v874 = vmul.f32 %v522, %v867
      %v875 = vmul.f32 %v523, %v867
      %v876 = vmul.f32 %v524, %v872
      %v877 = vmul.f32 %v525, %v872
      %882 = vrot.lane.b32.xlu0 %v874, 103
      %v883 = vpop.permute.xlu0 %882
      %884 = vrot.lane.b32.xlu0 %v875, 103
      %v885 = vpop.permute.xlu0 %884
      %886 = vrot.lane.b32.xlu0 %v876, 103
      %v887 = vpop.permute.xlu0 %886
      %888 = vrot.lane.b32.xlu0 %v877, 103
      %v889 = vpop.permute.xlu0 %888
      %vm890 = vcmask 842752
      %v891 = vsel %vm890, %v883, %v885
      %v892 = vsel %vm890, %v887, %v889
      %v897 = vadd.f32 %v857, %v891
      %v898 = vadd.f32 %v858, %v885
      %v899 = vadd.f32 %v859, %v892
      %v900 = vadd.f32 %v860, %v889
      %901 = vrot.lane.b32.xlu0 %v608, 26
      %v902 = vpop.permute.xlu0 %901
      %903 = vrot.lane.b32.xlu0 %v612, 26
      %v904 = vpop.permute.xlu0 %903
      %vm905 = vcmask 211968
      %v906 = vsel %vm905, %v902, %v904
      %v909 = vmul.f32 %v522, %v902
      %v910 = vmul.f32 %v523, %v906
      %v911 = vmul.f32 %v524, %v902
      %v912 = vmul.f32 %v525, %v906
      %s913 = scalar_lea.vmem %s3, 128
      %v914 = vld [vmem:[%s913] sm:$0xff]
      %v915 = vld [vmem:[%s913 + $0x8] sm:$0xff]
      %917 = vset.pattern.permute.xlu0 0
      %918 = vperm.xlu0 %917, %v914
      %v919 = vpop.permute.xlu0 %918
      %922 = vset.pattern.permute.xlu0 0
      %923 = vperm.xlu0 %922, %v915
      %v924 = vpop.permute.xlu0 %923
      %v926 = vmul.f32 %v909, %v919
      %v927 = vmul.f32 %v910, %v919
      %v928 = vmul.f32 %v911, %v924
      %v929 = vmul.f32 %v912, %v924
      %934 = vrot.lane.b32.xlu0 %v926, 102
      %v935 = vpop.permute.xlu0 %934
      %936 = vrot.lane.b32.xlu0 %v927, 102
      %v937 = vpop.permute.xlu0 %936
      %938 = vrot.lane.b32.xlu0 %v928, 102
      %v939 = vpop.permute.xlu0 %938
      %940 = vrot.lane.b32.xlu0 %v929, 102
      %v941 = vpop.permute.xlu0 %940
      %vm942 = vcmask 834560
      %v943 = vsel %vm942, %v935, %v937
      %v944 = vsel %vm942, %v939, %v941
      %v949 = vadd.f32 %v897, %v943
      %v950 = vadd.f32 %v898, %v937
      %v951 = vadd.f32 %v899, %v944
      %v952 = vadd.f32 %v900, %v941
      %v953 = vld [vmem:[%s4] sm:$0xff]
      %v954 = vld [vmem:[%s4 + $0x8] sm:$0xff]
      %956 = vset.pattern.permute.xlu0 0
      %957 = vperm.xlu0 %956, %v953
      %v958 = vpop.permute.xlu0 %957
      %961 = vset.pattern.permute.xlu0 0
      %962 = vperm.xlu0 %961, %v954
      %v963 = vpop.permute.xlu0 %962
      %v965 = vadd.f32 %v949, %v958
      %v966 = vadd.f32 %v950, %v958
      %v967 = vadd.f32 %v951, %v963
      %v968 = vadd.f32 %v952, %v963
      %v969 = vmax.f32 %v965, 0.0
      %v970 = vmax.f32 %v966, 0.0
      %v971 = vmax.f32 %v967, 0.0
      %v972 = vmax.f32 %v968, 0.0
      %v973 = vmin.f32 %v969, 6.0
      %v974 = vmin.f32 %v970, 6.0
      %v975 = vmin.f32 %v971, 6.0
      %v976 = vmin.f32 %v972, 6.0
      %v977 = vld [vmem:[%s6] sm:$0xf]
      %v978 = vld [vmem:[%s7] sm:$0xf]
      %980 = vset.pattern.permute.xlu0 0
      %981 = vperm.xlu0 %980, %v978
      %v982 = vpop.permute.xlu0 %981
      %v985 = vsel %vm455, %v977, 0
      %987 = vmatprep.subr.mxu0 %v974
      %988 = vmatpush1.msra.mxu0 %v973
      %989 = vmatprep.subr.mxu0 %v976
      %990 = vmatpush1.msra.mxu0 %v975
      %991 = vmatprep.subr.mxu0 0.0
      %992 = vmatpush1.msra.mxu0 0.0
      %993 = vmatprep.subr.mxu0 0.0
      %994 = vmatpush1.msra.mxu0 0.0
      %995 = vmatprep.subr.mxu0 0.0
      %996 = vmatpush1.msra.mxu0 0.0
      %997 = vmatprep.subr.mxu0 0.0
      %998 = vmatpush1.msra.mxu0 0.0
      %999 = vmatprep.subr.mxu0 0.0
      %1000 = vmatpush1.msra.mxu0 0.0
      %1001 = vmatprep.subr.mxu0 0.0
      %1002 = vmatpush1.msra.mxu0 0.0
      %1003 = vmatprep.subr.mxu0 0.0
      %1004 = vmatpush1.msra.mxu0 0.0
      %1005 = vmatprep.subr.mxu0 0.0
      %1006 = vmatpush1.msra.mxu0 0.0
      %1007 = vmatprep.subr.mxu0 0.0
      %1008 = vmatpush1.msra.mxu0 0.0
      %1009 = vmatprep.subr.mxu0 0.0
      %1010 = vmatpush1.msra.mxu0 0.0
      %1011 = vmatprep.subr.mxu0 0.0
      %1012 = vmatpush1.msra.mxu0 0.0
      %1013 = vmatprep.subr.mxu0 0.0
      %1014 = vmatpush1.msra.mxu0 0.0
      %1015 = vmatprep.subr.mxu0 0.0
      %1016 = vmatpush1.msra.mxu0 0.0
      %1017 = vmatprep.subr.mxu0 0.0
      %1018 = vmatpush1.msra.mxu0 0.0
      %1019 = vmatprep.subr.mxu0 0.0
      %1020 = vmatpush1.msra.mxu0 0.0
      %1021 = vmatprep.subr.mxu0 0.0
      %1022 = vmatpush1.msra.mxu0 0.0
      %1023 = vmatprep.subr.mxu0 0.0
      %1024 = vmatpush1.msra.mxu0 0.0
      %1025 = vmatprep.subr.mxu0 0.0
      %1026 = vmatpush1.msra.mxu0 0.0
      %1027 = vmatprep.subr.mxu0 0.0
      %1028 = vmatpush1.msra.mxu0 0.0
      %1029 = vmatprep.subr.mxu0 0.0
      %1030 = vmatpush1.msra.mxu0 0.0
      %1031 = vmatprep.subr.mxu0 0.0
      %1032 = vmatpush1.msra.mxu0 0.0
      %1033 = vmatprep.subr.mxu0 0.0
      %1034 = vmatpush1.msra.mxu0 0.0
      %1035 = vmatprep.subr.mxu0 0.0
      %1036 = vmatpush1.msra.mxu0 0.0
      %1037 = vmatprep.subr.mxu0 0.0
      %1038 = vmatpush1.msra.mxu0 0.0
      %1039 = vmatprep.subr.mxu0 0.0
      %1040 = vmatpush1.msra.mxu0 0.0
      %1041 = vmatprep.subr.mxu0 0.0
      %1042 = vmatpush1.msra.mxu0 0.0
      %1043 = vmatprep.subr.mxu0 0.0
      %1044 = vmatpush1.msra.mxu0 0.0
      %1045 = vmatprep.subr.mxu0 0.0
      %1046 = vmatpush1.msra.mxu0 0.0
      %1047 = vmatprep.subr.mxu0 0.0
      %1048 = vmatpush1.msra.mxu0 0.0
      %1049 = vmatprep.subr.mxu0 0.0
      %1050 = vmatpush1.msra.mxu0 0.0
      %1051 = vmatprep.mubr.f32.mxu0 0.0
      %1052 = vmatmul.mubr.f32.gmra.mrb[0].mxu0 %v985
      %v1053 = vpop.f32.mrb[0].mxu0
      %v1054 = vadd.f32 %v982, %v1053
      %v1055 = vpop.f32.mrb[0].mxu0
      %v1056 = vadd.f32 %v982, %v1055
      %1057 = vdwg.mxu0
      %v1058 = vadd.f32 %v1054, %v306
      %v1059 = vadd.f32 %v1056, %v310
      %v1062 = vcombine.low %v1058, %v1059
      %vm1064 = vcmask 130052
      %vm1065 = vmor %vm1064, %vm312
      %1066 = vst.msk [vmem:[%s305] sm:$0xff] %vm1065, %v1062
      %p1067 = scmp.lt.s32.totalorder %s19, 1
      %s1068 = scalar_select %p1067, %s19, 1
      %s1069 = smul.addr %s1068, 2
      %s1070 = smul.addr %s1069, 4
      %s1071 = scalar_lea.vmem %s8, %s1070
      // Predicated region
      $region53: #{block_mix_forward.23} parent=51 // pred_check
        %p1072 = pneg %p210
      $region54: #{block_mix_forward.23} parent=51 // pred_check_branch
        %1074 = sbr.rel (%p1072) target = $region56
      $region55: #{block_mix_forward.23} parent=51 // pred_region
        _
      $region56: #{block_mix_forward.23} parent=51 // pred_fallthru
        _
    $region52: #{block_mix_forward.23} parent=5 // pred_fallthru
      _
    %p1075 = scmp.le.s32.totalorder 2, %s14
    // Predicated region
    $region57: #{block_mix_forward.23} parent=5 // pred_check
      %p1076 = pneg %p1075
    $region58: #{block_mix_forward.23} parent=5 // pred_check_branch
      %1078 = sbr.rel (%p1076) target = $region60
    $region59: #{block_mix_forward.23} parent=5 // pred_region
      %s1079 = ssub.s32 %s14, 2
      // Predicated region
      $region61: #{block_mix_forward.23} parent=59 // pred_check
        %p1080 = pneg %p216
      $region62: #{block_mix_forward.23} parent=59 // pred_check_branch
        %1082 = sbr.rel (%p1080) target = $region64
      $region63: #{block_mix_forward.23} parent=59 // pred_region
        %p1083 = scmp.lt.s32.totalorder %s20, 1
        %s1084 = scalar_select %p1083, %s20, 1
        %s1085 = smul.addr %s1084, 2
        %s1086 = smul.addr %s1085, 4
        %s1087 = scalar_lea.vmem %s8, %s1086
      $region64: #{block_mix_forward.23} parent=59 // pred_fallthru
        _
    $region60: #{block_mix_forward.23} parent=5 // pred_fallthru
      _
  $region6: #{block_mix_forward.23} parent=0 // loop_footer
    %s18 = sadd.s32 1, %s14
  $region7: #{block_mix_forward.23} parent=0 // loop_footer_branch
    %13 = sbr.rel target = $region3
  $region8: #{block_mix_forward.23} parent=0 // loop_exit
    _

</llo_original>
